<compile_context>
chip_gen: v6e
topology: v6e:2x2x1
jax: 0.10.0
libtpu: 0.0.40
codegen_flags: <defaults>
</compile_context>

<pallas_src>
import functools
from collections import namedtuple

import jax
import jax.numpy as jnp
from jax.experimental import pallas as pl
from jax.experimental.pallas import tpu as pltpu

EPS = 1e-5      # nn.InstanceNorm2d default eps
LANE = 128


def _round_up(n, m):
    return ((n + m - 1) // m) * m


def _pad_weight(w, cin_p, cout_p):
    """Zero-pad an HWIO conv weight to padded channel counts."""
    K1, K2, cin, cout = w.shape
    if cin == cin_p and cout == cout_p:
        return w
    wp = jnp.zeros((K1, K2, cin_p, cout_p), w.dtype)
    return wp.at[:, :, :cin, :cout].set(w)


# --------------------- KxK conv: in-kernel tap accumulation ------------------

def _conv_tap_kernel(x_ref, w_ref, b_ref, o_ref, acc_ref, *, K, stride, Wo):
    # grid = (B, Ho, K); last axis (ky) is the 'arbitrary' reduction axis.
    ky = pl.program_id(2)

    @pl.when(ky == 0)
    def _init():
        acc_ref[...] = jnp.zeros_like(acc_ref)

    acc = acc_ref[...]
    for kx in range(K):                                   # kx taps inside body
        # phase de-interleaved input: column (wo*stride + kx) lives at
        # phase kx % stride, position kx // stride + wo  -> unit-stride load.
        xs = x_ref[0, kx % stride, pl.ds(kx // stride, Wo), :]   # (Wo, Cin) bf16
        wk = w_ref[ky * K + kx]                                  # (Cin, Cout) bf16
        acc = acc + jnp.dot(xs, wk, preferred_element_type=jnp.float32)
    acc_ref[...] = acc

    @pl.when(ky == K - 1)
    def _finalize():
        o_ref[0] = (acc_ref[...] + b_ref[...]).astype(o_ref.dtype)


def _prep_conv_input(x, K, stride, pad):
    """Spatially pad and de-interleave W into `stride` phases so that the tap
    kernel only needs unit-stride loads.  Returns (B*Hp, stride, Wq, C)."""
    B, H, W, C = x.shape
    Hp, Wp = H + 2 * pad, W + 2 * pad
    Ho = (Hp - K) // stride + 1
    Wo = (Wp - K) // stride + 1
    Wq = (K - 1) // stride + Wo            # per-phase width the kernel needs
    Wt = stride * Wq
    xp = jnp.pad(x, ((0, 0), (pad, pad), (pad, pad), (0, 0)))
    if Wt > Wp:
        xp = jnp.pad(xp, ((0, 0), (0, 0), (0, Wt - Wp), (0, 0)))
    elif Wt < Wp:
        xp = xp[:, :, :Wt, :]              # right padding that is never read
    xph = xp.reshape(B, Hp, Wq, stride, C).transpose(0, 1, 3, 2, 4)
    return xph.reshape(B * Hp, stride, Wq, C), Hp, Ho, Wo, Wq


def conv_tap(x, w, b, stride=1, pad=0, out_dtype=jnp.bfloat16):
    """KxK conv (stride 1 or 2) via tap accumulation on the MXU (no im2col)."""
    B, H, W, Cin = x.shape
    K = int(w.shape[0])
    cout_true = int(w.shape[3])
    Cout = _round_up(cout_true, LANE)

    w_p = _pad_weight(w, Cin, Cout).reshape(K * K, Cin, Cout).astype(jnp.bfloat16)
    b_p = jnp.zeros((1, Cout), jnp.float32).at[0, :cout_true].set(
        b.astype(jnp.float32))
    xph, Hp, Ho, Wo, Wq = _prep_conv_input(x.astype(jnp.bfloat16), K, stride, pad)

    flops = 2 * B * Ho * Wo * K * K * Cin * Cout
    bytes_accessed = int(B * Ho * K * stride * Wq * Cin * 2     # activations
                         + K * K * Cin * Cout * 2               # resident weights
                         + B * Ho * Wo * Cout * jnp.dtype(out_dtype).itemsize)

    out = pl.pallas_call(
        functools.partial(_conv_tap_kernel, K=K, stride=stride, Wo=Wo),
        out_shape=jax.ShapeDtypeStruct((B * Ho, Wo, Cout), out_dtype),
        grid=(B, Ho, K),
        in_specs=[
            # one padded input row per (ho, ky): block index granularity 1 lets
            # the index_map apply the per-tap row offset directly.
            pl.BlockSpec((1, stride, Wq, Cin),
                         lambda bb, ho, ky: (bb * Hp + ho * stride + ky, 0, 0, 0)),
            # full weight stays resident (constant index_map -> fetched once).
            pl.BlockSpec((K * K, Cin, Cout), lambda bb, ho, ky: (0, 0, 0)),
            pl.BlockSpec((1, Cout), lambda bb, ho, ky: (0, 0)),
        ],
        out_specs=pl.BlockSpec((1, Wo, Cout), lambda bb, ho, ky: (bb * Ho + ho, 0, 0)),
        scratch_shapes=[pltpu.VMEM((Wo, Cout), jnp.float32)],
        compiler_params=pltpu.CompilerParams(
            dimension_semantics=("parallel", "parallel", "arbitrary")),
        cost_estimate=pl.CostEstimate(flops=flops, transcendentals=0,
                                      bytes_accessed=bytes_accessed),
    )(xph, w_p, b_p)
    return out.reshape(B, Ho, Wo, Cout)


# ------------------------- 1x1 conv: tiled GEMM + bias -----------------------

def _gemm_bias_kernel(x_ref, w_ref, b_ref, o_ref):
    o_ref[...] = (
        jnp.dot(x_ref[...], w_ref[...], preferred_element_type=jnp.float32)
        + b_ref[...]
    ).astype(o_ref.dtype)


def _gemm_bias(x2, w2, b, out_dtype, tm=256):
    M, Kd = x2.shape
    N = w2.shape[1]
    Mp = _round_up(M, tm)                  # never fall back to TM=M
    if Mp != M:
        x2 = jnp.pad(x2, ((0, Mp - M), (0, 0)))
    out = pl.pallas_call(
        _gemm_bias_kernel,
        out_shape=jax.ShapeDtypeStruct((Mp, N), out_dtype),
        grid=(Mp // tm,),
        in_specs=[
            pl.BlockSpec((tm, Kd), lambda i: (i, 0)),
            pl.BlockSpec((Kd, N), lambda i: (0, 0)),     # resident weights
            pl.BlockSpec((1, N), lambda i: (0, 0)),
        ],
        out_specs=pl.BlockSpec((tm, N), lambda i: (i, 0)),
        compiler_params=pltpu.CompilerParams(dimension_semantics=("parallel",)),
        cost_estimate=pl.CostEstimate(
            flops=2 * Mp * Kd * N, transcendentals=0,
            bytes_accessed=int(Mp * Kd * 2 + Kd * N * 2 + N * 4
                               + Mp * N * jnp.dtype(out_dtype).itemsize)),
    )(x2.astype(jnp.bfloat16), w2.astype(jnp.bfloat16),
      b.reshape(1, N).astype(jnp.float32))
    return out[:M] if Mp != M else out


def conv1x1(x, w, b, out_dtype=jnp.bfloat16):
    B, H, W, Cin = x.shape
    cout_true = int(w.shape[3])
    Cout = _round_up(cout_true, LANE)
    w_p = _pad_weight(w, Cin, Cout).reshape(Cin, Cout)
    b_p = jnp.zeros((Cout,), jnp.float32).at[:cout_true].set(b.astype(jnp.float32))
    y = _gemm_bias(x.reshape(B * H * W, Cin), w_p, b_p, out_dtype)
    return y.reshape(B, H, W, Cout)


# ------------------- instance norm (two-pass, tiled, fusable) ----------------

def _in_stats_kernel(x_ref, sum_ref, ssq_ref, *, ts, hw, need_mask):
    t = pl.program_id(1)

    @pl.when(t == 0)
    def _init():
        sum_ref[...] = jnp.zeros_like(sum_ref)
        ssq_ref[...] = jnp.zeros_like(ssq_ref)

    x = x_ref[0].astype(jnp.float32)                        # (TS, C)
    if need_mask:                                           # tail tile masking
        rows = jax.lax.broadcasted_iota(jnp.int32, x.shape, 0) + t * ts
        x = jnp.where(rows < hw, x, 0.0)
    sum_ref[0] += jnp.sum(x, axis=0, keepdims=True)
    ssq_ref[0] += jnp.sum(x * x, axis=0, keepdims=True)


def _in_stats(x3):
    B, HW, C = x3.shape
    ts = HW if HW <= 512 else 512
    nt = pl.cdiv(HW, ts)
    return pl.pallas_call(
        functools.partial(_in_stats_kernel, ts=ts, hw=HW,
                          need_mask=(HW % ts) != 0),
        out_shape=(jax.ShapeDtypeStruct((B, 1, C), jnp.float32),
                   jax.ShapeDtypeStruct((B, 1, C), jnp.float32)),
        grid=(B, nt),
        in_specs=[pl.BlockSpec((1, ts, C), lambda b, t: (b, t, 0))],
        out_specs=(pl.BlockSpec((1, 1, C), lambda b, t: (b, 0, 0)),
                   pl.BlockSpec((1, 1, C), lambda b, t: (b, 0, 0))),
        compiler_params=pltpu.CompilerParams(
            dimension_semantics=("parallel", "arbitrary")),
    )(x3)


def _mean_rstd(sum_ref, ssq_ref, inv_n):
    mean = sum_ref[0] * inv_n                               # (1, C)
    var = jnp.maximum(ssq_ref[0] * inv_n - mean * mean, 0.0)  # biased (PyTorch)
    return mean, jax.lax.rsqrt(var + EPS)


def _in_apply_kernel(x_ref, sum_ref, ssq_ref, o_ref, *, inv_n, relu):
    mean, rstd = _mean_rstd(sum_ref, ssq_ref, inv_n)
    y = (x_ref[0].astype(jnp.float32) - mean) * rstd
    if relu:
        y = jnp.maximum(y, 0.0)
    o_ref[0] = y.astype(o_ref.dtype)


def _in_apply_res_kernel(x_ref, sum_ref, ssq_ref, res_ref, o_ref, *, inv_n):
    mean, rstd = _mean_rstd(sum_ref, ssq_ref, inv_n)
    y = jnp.maximum((x_ref[0].astype(jnp.float32) - mean) * rstd, 0.0)  # relu(IN(y))
    y = jnp.maximum(y + res_ref[0].astype(jnp.float32), 0.0)  # relu(shortcut + y)
    o_ref[0] = y.astype(o_ref.dtype)


def instance_norm(x, relu=True, residual=None, out_dtype=jnp.bfloat16):
    """InstanceNorm2d(affine=False) (+ optional ReLU, + optional fused
    residual-add + ReLU epilogue of the ResidualBlock)."""
    B, H, W, C = x.shape
    HW = H * W
    x3 = x.reshape(B, HW, C)
    sums, ssqs = _in_stats(x3)

    ts = HW if HW <= 512 else 512
    nt = pl.cdiv(HW, ts)
    inv_n = 1.0 / float(HW)

    x_spec = pl.BlockSpec((1, ts, C), lambda b, t: (b, t, 0))
    s_spec = pl.BlockSpec((1, 1, C), lambda b, t: (b, 0, 0))

    if residual is None:
        kernel = functools.partial(_in_apply_kernel, inv_n=inv_n, relu=relu)
        in_specs = [x_spec, s_spec, s_spec]
        args = (x3, sums, ssqs)
    else:
        # fused: out = relu(shortcut + relu(IN(x)))  (ResidualBlock epilogue)
        r3 = residual.astype(jnp.bfloat16).reshape(B, HW, C)
        kernel = functools.partial(_in_apply_res_kernel, inv_n=inv_n)
        in_specs = [x_spec, s_spec, s_spec, x_spec]
        args = (x3, sums, ssqs, r3)

    out = pl.pallas_call(
        kernel,
        out_shape=jax.ShapeDtypeStruct((B, HW, C), out_dtype),
        grid=(B, nt),
        in_specs=in_specs,
        out_specs=pl.BlockSpec((1, ts, C), lambda b, t: (b, t, 0)),
        compiler_params=pltpu.CompilerParams(
            dimension_semantics=("parallel", "parallel")),
    )(*args)
    return out.reshape(B, H, W, C)


# --------------------------- parameters (synthetic) --------------------------

def _conv_params(key, K, cin, cout):
    kw, kb = jax.random.split(key)
    fan_in = K * K * cin
    w = jax.random.normal(kw, (K, K, cin, cout), jnp.float32) / jnp.sqrt(float(fan_in))
    b = 0.01 * jax.random.normal(kb, (cout,), jnp.float32)
    return {"w": w, "b": b}


def init_crestereo_params(key, output_dim=256):
    keys = iter(jax.random.split(key, 64))

    def res_block(cin, cout, stride):
        blk = {
            "conv1": _conv_params(next(keys), 3, cin, cout),
            "conv2": _conv_params(next(keys), 3, cout, cout),
            "stride": stride,
        }
        if stride != 1 or cin != cout:
            blk["down"] = _conv_params(next(keys), 1, cin, cout)
        return blk

    p = {}
    p["conv1"] = _conv_params(next(keys), 7, 3, 64)
    p["layer1"] = [res_block(64, 64, 1), res_block(64, 64, 1)]
    p["layer2"] = [res_block(64, 96, 2), res_block(96, 96, 1)]
    p["layer3"] = [res_block(96, 128, 1), res_block(128, 128, 1)]
    p["conv2"] = _conv_params(next(keys), 1, 128, output_dim)       # dw4 head
    p["conv_dw2"] = _conv_params(next(keys), 1, 64, output_dim)     # dw2 head
    return p


# --------------------------------- forward -----------------------------------

def residual_block(x, blk):
    s = blk["stride"]
    y = conv_tap(x, blk["conv1"]["w"], blk["conv1"]["b"], stride=s, pad=1)
    y = instance_norm(y, relu=True)
    y = conv_tap(y, blk["conv2"]["w"], blk["conv2"]["b"], stride=1, pad=1)
    if "down" in blk:
        xs = x if s == 1 else x[:, ::s, ::s, :]        # 1x1/s conv == subsample + GEMM
        sc = conv1x1(xs, blk["down"]["w"], blk["down"]["b"])
        sc = instance_norm(sc, relu=False)
    else:
        sc = x
    # fused IN + ReLU + residual-add + ReLU epilogue
    return instance_norm(y, relu=True, residual=sc)


Outputs2 = namedtuple("Outputs", ["fmap_dw2", "fmap_dw4"])
Outputs3 = namedtuple("Outputs", ["fmap_dw2", "fmap_dw4", "fmap_dw8"])


def crestereo_forward(params, x_nchw, downsample=False):
    x = jnp.transpose(x_nchw, (0, 2, 3, 1)).astype(jnp.bfloat16)   # NCHW -> NHWC
    cin = x.shape[-1]
    x = jnp.pad(x, ((0, 0), (0, 0), (0, 0), (0, _round_up(cin, 8) - cin)))

    x = conv_tap(x, params["conv1"]["w"], params["conv1"]["b"], stride=2, pad=3)
    x = instance_norm(x, relu=True)
    for blk in params["layer1"]:
        x = residual_block(x, blk)

    # TODO(synk): the exact dw2 output head of this repo's modified BasicEncoder
    # is not in the snippet; a 1x1 conv to output_dim (mirroring conv2) is used.
    fmap_dw2 = conv1x1(x, params["conv_dw2"]["w"], params["conv_dw2"]["b"],
                       out_dtype=jnp.float32)

    for blk in params["layer2"]:
        x = residual_block(x, blk)
    for blk in params["layer3"]:
        x = residual_block(x, blk)
    fmap_dw4 = conv1x1(x, params["conv2"]["w"], params["conv2"]["b"],
                       out_dtype=jnp.float32)

    # back to NCHW to match the PyTorch module
    fmap_dw2 = jnp.transpose(fmap_dw2, (0, 3, 1, 2))
    fmap_dw4 = jnp.transpose(fmap_dw4, (0, 3, 1, 2))

    if downsample:
        B, C, H, W = fmap_dw4.shape        # F.avg_pool2d(fmap_dw4, 2, 2) (glue)
        fmap_dw8 = fmap_dw4.reshape(B, C, H // 2, 2, W // 2, 2).mean(axis=(3, 5))
        return Outputs3(fmap_dw2, fmap_dw4, fmap_dw8)
    return Outputs2(fmap_dw2, fmap_dw4)


# ----------------------------------- main -------------------------------------

if __name__ == "__main__":
    key = jax.random.PRNGKey(0)
    pkey, xkey = jax.random.split(key)
    params = init_crestereo_params(pkey, output_dim=256)

    # small NCHW input consistent with the module (RGB image)
    x = jax.random.normal(xkey, (2, 3, 32, 32), jnp.float32)

    # params are closed over so block strides stay static Python ints under jit
    fwd = jax.jit(functools.partial(crestereo_forward, params))
    out = fwd(x)
    jax.block_until_ready(out.fmap_dw2)
    jax.block_until_ready(out.fmap_dw4)

    assert out.fmap_dw2.shape == (2, 256, 16, 16), out.fmap_dw2.shape
    assert out.fmap_dw4.shape == (2, 256, 8, 8), out.fmap_dw4.shape
    assert bool(jnp.all(jnp.isfinite(out.fmap_dw2)))
    assert bool(jnp.all(jnp.isfinite(out.fmap_dw4)))
    print("KERNEL_OK")
</pallas_src>

<mosaic_0001>
module attributes {stable_mosaic.version = 11 : i64} {
  func.func @_conv_tap_kernel(%arg0: i32, %arg1: i32, %arg2: i32, %arg3: memref<1x2x19x8xbf16, #tpu.memory_space<vmem>>, %arg4: memref<49x8x128xbf16, #tpu.memory_space<vmem>>, %arg5: memref<1x128xf32, #tpu.memory_space<vmem>>, %arg6: memref<1x16x128xbf16, #tpu.memory_space<vmem>>, %arg7: memref<16x128xf32, #tpu.memory_space<vmem>>) attributes {dimension_semantics = [#tpu.dimension_semantics<parallel>, #tpu.dimension_semantics<parallel>, #tpu.dimension_semantics<arbitrary>], iteration_bounds = array<i64: 2, 16, 7>, scalar_prefetch = 0 : i64, scratch_operands = 1 : i64, tpu.core_type = #tpu.core_type<tc>, window_params = [{transform_indices = @transform_0, window_bounds = array<i64: 1, 2, 19, 8>}, {pipeline_mode = #tpu.pipeline_mode<synchronous>, transform_indices = @transform_1, window_bounds = array<i64: 49, 8, 128>}, {pipeline_mode = #tpu.pipeline_mode<synchronous>, transform_indices = @transform_2, window_bounds = array<i64: 1, 128>}, {transform_indices = @transform_3, window_bounds = array<i64: 1, 16, 128>}]} {
    %c0_i32 = arith.constant 0 : i32
    %0 = arith.cmpi eq, %arg2, %c0_i32 : i32
    %1 = arith.extui %0 : i1 to i32
    %c0_i32_0 = arith.constant 0 : i32
    %2 = arith.cmpi ne, %1, %c0_i32_0 : i32
    scf.if %2 {
      %cst_58 = arith.constant 0.000000e+00 : f32
      %71 = vector.broadcast %cst_58 : f32 to vector<16x128xf32>
      %c0_59 = arith.constant 0 : index
      %c0_60 = arith.constant 0 : index
      %72 = vector.load %arg7[%c0_59, %c0_60] : memref<16x128xf32, #tpu.memory_space<vmem>>, vector<16x128xf32>
      tpu.vector_store %arg7[%c0_59, %c0_60], %71 {strides = array<i32>} : memref<16x128xf32, #tpu.memory_space<vmem>>, vector<16x128xf32>,
    } else {
    }
    %c0 = arith.constant 0 : index
    %c0_1 = arith.constant 0 : index
    %3 = vector.load %arg7[%c0, %c0_1] : memref<16x128xf32, #tpu.memory_space<vmem>>, vector<16x128xf32>
    %c0_2 = arith.constant 0 : index
    %c0_3 = arith.constant 0 : index
    %c0_4 = arith.constant 0 : index
    %c0_5 = arith.constant 0 : index
    %4 = vector.load %arg3[%c0_2, %c0_3, %c0_4, %c0_5] : memref<1x2x19x8xbf16, #tpu.memory_space<vmem>>, vector<1x1x16x8xbf16>
    %5 = vector.shape_cast %4 : vector<1x1x16x8xbf16> to vector<16x8xbf16>
    %c7_i32 = arith.constant 7 : i32
    %6 = arith.muli %arg2, %c7_i32 : i32
    %c0_i32_6 = arith.constant 0 : i32
    %7 = arith.addi %6, %c0_i32_6 : i32
    %8 = arith.index_cast %7 : i32 to index
    %c0_7 = arith.constant 0 : index
    %c0_8 = arith.constant 0 : index
    %9 = vector.load %arg4[%8, %c0_7, %c0_8] : memref<49x8x128xbf16, #tpu.memory_space<vmem>>, vector<1x8x128xbf16>
    %10 = vector.shape_cast %9 : vector<1x8x128xbf16> to vector<8x128xbf16>
    %cst = arith.constant dense<0.000000e+00> : vector<16x128xf32>
    %11 = tpu.matmul %5, %10, %cst {dimension_numbers = #tpu.dot_dimension_numbers<[1], [0], [0], [1], [0, 0, 1, 1], [], []>} : vector<16x8xbf16>, vector<8x128xbf16>, vector<16x128xf32> -> vector<16x128xf32>
    %12 = arith.addf %3, %11 : vector<16x128xf32>
    %c0_9 = arith.constant 0 : index
    %c1 = arith.constant 1 : index
    %c0_10 = arith.constant 0 : index
    %c0_11 = arith.constant 0 : index
    %13 = vector.load %arg3[%c0_9, %c1, %c0_10, %c0_11] : memref<1x2x19x8xbf16, #tpu.memory_space<vmem>>, vector<1x1x16x8xbf16>
    %14 = vector.shape_cast %13 : vector<1x1x16x8xbf16> to vector<16x8xbf16>
    %c7_i32_12 = arith.constant 7 : i32
    %15 = arith.muli %arg2, %c7_i32_12 : i32
    %c1_i32 = arith.constant 1 : i32
    %16 = arith.addi %15, %c1_i32 : i32
    %17 = arith.index_cast %16 : i32 to index
    %c0_13 = arith.constant 0 : index
    %c0_14 = arith.constant 0 : index
    %18 = vector.load %arg4[%17, %c0_13, %c0_14] : memref<49x8x128xbf16, #tpu.memory_space<vmem>>, vector<1x8x128xbf16>
    %19 = vector.shape_cast %18 : vector<1x8x128xbf16> to vector<8x128xbf16>
    %cst_15 = arith.constant dense<0.000000e+00> : vector<16x128xf32>
    %20 = tpu.matmul %14, %19, %cst_15 {dimension_numbers = #tpu.dot_dimension_numbers<[1], [0], [0], [1], [0, 0, 1, 1], [], []>} : vector<16x8xbf16>, vector<8x128xbf16>, vector<16x128xf32> -> vector<16x128xf32>
    %21 = arith.addf %12, %20 : vector<16x128xf32>
    %c0_16 = arith.constant 0 : index
    %c0_17 = arith.constant 0 : index
    %c1_18 = arith.constant 1 : index
    %c0_19 = arith.constant 0 : index
    %22 = vector.load %arg3[%c0_16, %c0_17, %c1_18, %c0_19] : memref<1x2x19x8xbf16, #tpu.memory_space<vmem>>, vector<1x1x16x8xbf16>
    %23 = vector.shape_cast %22 : vector<1x1x16x8xbf16> to vector<16x8xbf16>
    %c7_i32_20 = arith.constant 7 : i32
    %24 = arith.muli %arg2, %c7_i32_20 : i32
    %c2_i32 = arith.constant 2 : i32
    %25 = arith.addi %24, %c2_i32 : i32
    %26 = arith.index_cast %25 : i32 to index
    %c0_21 = arith.constant 0 : index
    %c0_22 = arith.constant 0 : index
    %27 = vector.load %arg4[%26, %c0_21, %c0_22] : memref<49x8x128xbf16, #tpu.memory_space<vmem>>, vector<1x8x128xbf16>
    %28 = vector.shape_cast %27 : vector<1x8x128xbf16> to vector<8x128xbf16>
    %cst_23 = arith.constant dense<0.000000e+00> : vector<16x128xf32>
    %29 = tpu.matmul %23, %28, %cst_23 {dimension_numbers = #tpu.dot_dimension_numbers<[1], [0], [0], [1], [0, 0, 1, 1], [], []>} : vector<16x8xbf16>, vector<8x128xbf16>, vector<16x128xf32> -> vector<16x128xf32>
    %30 = arith.addf %21, %29 : vector<16x128xf32>
    %c0_24 = arith.constant 0 : index
    %c1_25 = arith.constant 1 : index
    %c1_26 = arith.constant 1 : index
    %c0_27 = arith.constant 0 : index
    %31 = vector.load %arg3[%c0_24, %c1_25, %c1_26, %c0_27] : memref<1x2x19x8xbf16, #tpu.memory_space<vmem>>, vector<1x1x16x8xbf16>
    %32 = vector.shape_cast %31 : vector<1x1x16x8xbf16> to vector<16x8xbf16>
    %c7_i32_28 = arith.constant 7 : i32
    %33 = arith.muli %arg2, %c7_i32_28 : i32
    %c3_i32 = arith.constant 3 : i32
    %34 = arith.addi %33, %c3_i32 : i32
    %35 = arith.index_cast %34 : i32 to index
    %c0_29 = arith.constant 0 : index
    %c0_30 = arith.constant 0 : index
    %36 = vector.load %arg4[%35, %c0_29, %c0_30] : memref<49x8x128xbf16, #tpu.memory_space<vmem>>, vector<1x8x128xbf16>
    %37 = vector.shape_cast %36 : vector<1x8x128xbf16> to vector<8x128xbf16>
    %cst_31 = arith.constant dense<0.000000e+00> : vector<16x128xf32>
    %38 = tpu.matmul %32, %37, %cst_31 {dimension_numbers = #tpu.dot_dimension_numbers<[1], [0], [0], [1], [0, 0, 1, 1], [], []>} : vector<16x8xbf16>, vector<8x128xbf16>, vector<16x128xf32> -> vector<16x128xf32>
    %39 = arith.addf %30, %38 : vector<16x128xf32>
    %c0_32 = arith.constant 0 : index
    %c0_33 = arith.constant 0 : index
    %c2 = arith.constant 2 : index
    %c0_34 = arith.constant 0 : index
    %40 = vector.load %arg3[%c0_32, %c0_33, %c2, %c0_34] : memref<1x2x19x8xbf16, #tpu.memory_space<vmem>>, vector<1x1x16x8xbf16>
    %41 = vector.shape_cast %40 : vector<1x1x16x8xbf16> to vector<16x8xbf16>
    %c7_i32_35 = arith.constant 7 : i32
    %42 = arith.muli %arg2, %c7_i32_35 : i32
    %c4_i32 = arith.constant 4 : i32
    %43 = arith.addi %42, %c4_i32 : i32
    %44 = arith.index_cast %43 : i32 to index
    %c0_36 = arith.constant 0 : index
    %c0_37 = arith.constant 0 : index
    %45 = vector.load %arg4[%44, %c0_36, %c0_37] : memref<49x8x128xbf16, #tpu.memory_space<vmem>>, vector<1x8x128xbf16>
    %46 = vector.shape_cast %45 : vector<1x8x128xbf16> to vector<8x128xbf16>
    %cst_38 = arith.constant dense<0.000000e+00> : vector<16x128xf32>
    %47 = tpu.matmul %41, %46, %cst_38 {dimension_numbers = #tpu.dot_dimension_numbers<[1], [0], [0], [1], [0, 0, 1, 1], [], []>} : vector<16x8xbf16>, vector<8x128xbf16>, vector<16x128xf32> -> vector<16x128xf32>
    %48 = arith.addf %39, %47 : vector<16x128xf32>
    %c0_39 = arith.constant 0 : index
    %c1_40 = arith.constant 1 : index
    %c2_41 = arith.constant 2 : index
    %c0_42 = arith.constant 0 : index
    %49 = vector.load %arg3[%c0_39, %c1_40, %c2_41, %c0_42] : memref<1x2x19x8xbf16, #tpu.memory_space<vmem>>, vector<1x1x16x8xbf16>
    %50 = vector.shape_cast %49 : vector<1x1x16x8xbf16> to vector<16x8xbf16>
    %c7_i32_43 = arith.constant 7 : i32
    %51 = arith.muli %arg2, %c7_i32_43 : i32
    %c5_i32 = arith.constant 5 : i32
    %52 = arith.addi %51, %c5_i32 : i32
    %53 = arith.index_cast %52 : i32 to index
    %c0_44 = arith.constant 0 : index
    %c0_45 = arith.constant 0 : index
    %54 = vector.load %arg4[%53, %c0_44, %c0_45] : memref<49x8x128xbf16, #tpu.memory_space<vmem>>, vector<1x8x128xbf16>
    %55 = vector.shape_cast %54 : vector<1x8x128xbf16> to vector<8x128xbf16>
    %cst_46 = arith.constant dense<0.000000e+00> : vector<16x128xf32>
    %56 = tpu.matmul %50, %55, %cst_46 {dimension_numbers = #tpu.dot_dimension_numbers<[1], [0], [0], [1], [0, 0, 1, 1], [], []>} : vector<16x8xbf16>, vector<8x128xbf16>, vector<16x128xf32> -> vector<16x128xf32>
    %57 = arith.addf %48, %56 : vector<16x128xf32>
    %c0_47 = arith.constant 0 : index
    %c0_48 = arith.constant 0 : index
    %c3 = arith.constant 3 : index
    %c0_49 = arith.constant 0 : index
    %58 = vector.load %arg3[%c0_47, %c0_48, %c3, %c0_49] : memref<1x2x19x8xbf16, #tpu.memory_space<vmem>>, vector<1x1x16x8xbf16>
    %59 = vector.shape_cast %58 : vector<1x1x16x8xbf16> to vector<16x8xbf16>
    %c7_i32_50 = arith.constant 7 : i32
    %60 = arith.muli %arg2, %c7_i32_50 : i32
    %c6_i32 = arith.constant 6 : i32
    %61 = arith.addi %60, %c6_i32 : i32
    %62 = arith.index_cast %61 : i32 to index
    %c0_51 = arith.constant 0 : index
    %c0_52 = arith.constant 0 : index
    %63 = vector.load %arg4[%62, %c0_51, %c0_52] : memref<49x8x128xbf16, #tpu.memory_space<vmem>>, vector<1x8x128xbf16>
    %64 = vector.shape_cast %63 : vector<1x8x128xbf16> to vector<8x128xbf16>
    %cst_53 = arith.constant dense<0.000000e+00> : vector<16x128xf32>
    %65 = tpu.matmul %59, %64, %cst_53 {dimension_numbers = #tpu.dot_dimension_numbers<[1], [0], [0], [1], [0, 0, 1, 1], [], []>} : vector<16x8xbf16>, vector<8x128xbf16>, vector<16x128xf32> -> vector<16x128xf32>
    %66 = arith.addf %57, %65 : vector<16x128xf32>
    %c0_54 = arith.constant 0 : index
    %c0_55 = arith.constant 0 : index
    %67 = vector.load %arg7[%c0_54, %c0_55] : memref<16x128xf32, #tpu.memory_space<vmem>>, vector<16x128xf32>
    tpu.vector_store %arg7[%c0_54, %c0_55], %66 {strides = array<i32>} : memref<16x128xf32, #tpu.memory_space<vmem>>, vector<16x128xf32>,
    %c6_i32_56 = arith.constant 6 : i32
    %68 = arith.cmpi eq, %arg2, %c6_i32_56 : i32
    %69 = arith.extui %68 : i1 to i32
    %c0_i32_57 = arith.constant 0 : i32
    %70 = arith.cmpi ne, %69, %c0_i32_57 : i32
    scf.if %70 {
      %c0_58 = arith.constant 0 : index
      %c0_59 = arith.constant 0 : index
      %71 = vector.load %arg7[%c0_58, %c0_59] : memref<16x128xf32, #tpu.memory_space<vmem>>, vector<16x128xf32>
      %c0_60 = arith.constant 0 : index
      %c0_61 = arith.constant 0 : index
      %72 = vector.load %arg5[%c0_60, %c0_61] : memref<1x128xf32, #tpu.memory_space<vmem>>, vector<1x128xf32>
      %73 = vector.broadcast %72 : vector<1x128xf32> to vector<16x128xf32>
      %74 = arith.addf %71, %73 : vector<16x128xf32>
      %75 = arith.truncf %74 : vector<16x128xf32> to vector<16x128xbf16>
      %c0_62 = arith.constant 0 : index
      %c0_63 = arith.constant 0 : index
      %c0_64 = arith.constant 0 : index
      %76 = vector.load %arg6[%c0_62, %c0_63, %c0_64] : memref<1x16x128xbf16, #tpu.memory_space<vmem>>, vector<1x16x128xbf16>
      %77 = vector.shape_cast %76 : vector<1x16x128xbf16> to vector<16x128xbf16>
      %78 = vector.shape_cast %75 : vector<16x128xbf16> to vector<1x16x128xbf16>
      tpu.vector_store %arg6[%c0_62, %c0_63, %c0_64], %78 {strides = array<i32>} : memref<1x16x128xbf16, #tpu.memory_space<vmem>>, vector<1x16x128xbf16>,
    } else {
    }
    return
  }
  func.func @transform_0(%arg0: i32, %arg1: i32, %arg2: i32) -> (i32, i32, i32, i32) {
    %c38_i32 = arith.constant 38 : i32
    %0 = arith.muli %arg0, %c38_i32 : i32
    %c2_i32 = arith.constant 2 : i32
    %1 = arith.muli %arg1, %c2_i32 : i32
    %2 = arith.addi %0, %1 : i32
    %3 = arith.addi %2, %arg2 : i32
    %c0_i32 = arith.constant 0 : i32
    %c0_i32_0 = arith.constant 0 : i32
    %c0_i32_1 = arith.constant 0 : i32
    %c0_i32_2 = arith.constant 0 : i32
    return %3, %c0_i32, %c0_i32_0, %c0_i32_1 : i32, i32, i32, i32
  }
  func.func @transform_1(%arg0: i32, %arg1: i32, %arg2: i32) -> (i32, i32, i32) {
    %c0_i32 = arith.constant 0 : i32
    %c0_i32_0 = arith.constant 0 : i32
    %c0_i32_1 = arith.constant 0 : i32
    %c0_i32_2 = arith.constant 0 : i32
    return %c0_i32, %c0_i32_0, %c0_i32_1 : i32, i32, i32
  }
  func.func @transform_2(%arg0: i32, %arg1: i32, %arg2: i32) -> (i32, i32) {
    %c0_i32 = arith.constant 0 : i32
    %c0_i32_0 = arith.constant 0 : i32
    %c0_i32_1 = arith.constant 0 : i32
    return %c0_i32, %c0_i32_0 : i32, i32
  }
  func.func @transform_3(%arg0: i32, %arg1: i32, %arg2: i32) -> (i32, i32, i32) {
    %c16_i32 = arith.constant 16 : i32
    %0 = arith.muli %arg0, %c16_i32 : i32
    %1 = arith.addi %0, %arg1 : i32
    %c0_i32 = arith.constant 0 : i32
    %c0_i32_0 = arith.constant 0 : i32
    %c0_i32_1 = arith.constant 0 : i32
    return %1, %c0_i32, %c0_i32_0 : i32, i32, i32
  }
}

module attributes {stable_mosaic.version = 11 : i64} {
  func.func @_in_stats_kernel(%arg0: i32, %arg1: i32, %arg2: memref<1x256x128xbf16, #tpu.memory_space<vmem>>, %arg3: memref<1x1x128xf32, #tpu.memory_space<vmem>>, %arg4: memref<1x1x128xf32, #tpu.memory_space<vmem>>) attributes {dimension_semantics = [#tpu.dimension_semantics<parallel>, #tpu.dimension_semantics<arbitrary>], iteration_bounds = array<i64: 2, 1>, scalar_prefetch = 0 : i64, scratch_operands = 0 : i64, tpu.core_type = #tpu.core_type<tc>, window_params = [{transform_indices = @transform_0, window_bounds = array<i64: 1, 256, 128>}, {transform_indices = @transform_1, window_bounds = array<i64: 1, 1, 128>}, {transform_indices = @transform_2, window_bounds = array<i64: 1, 1, 128>}]} {
    %c0_i32 = arith.constant 0 : i32
    %0 = arith.cmpi eq, %arg1, %c0_i32 : i32
    %1 = arith.extui %0 : i1 to i32
    %c0_i32_0 = arith.constant 0 : i32
    %2 = arith.cmpi ne, %1, %c0_i32_0 : i32
    scf.if %2 {
      %cst_16 = arith.constant 0.000000e+00 : f32
      %23 = vector.broadcast %cst_16 : f32 to vector<1x1x128xf32>
      %c0_17 = arith.constant 0 : index
      %c0_18 = arith.constant 0 : index
      %c0_19 = arith.constant 0 : index
      %24 = vector.load %arg3[%c0_17, %c0_18, %c0_19] : memref<1x1x128xf32, #tpu.memory_space<vmem>>, vector<1x1x128xf32>
      tpu.vector_store %arg3[%c0_17, %c0_18, %c0_19], %23 {strides = array<i32>} : memref<1x1x128xf32, #tpu.memory_space<vmem>>, vector<1x1x128xf32>,
      %cst_20 = arith.constant 0.000000e+00 : f32
      %25 = vector.broadcast %cst_20 : f32 to vector<1x1x128xf32>
      %c0_21 = arith.constant 0 : index
      %c0_22 = arith.constant 0 : index
      %c0_23 = arith.constant 0 : index
      %26 = vector.load %arg4[%c0_21, %c0_22, %c0_23] : memref<1x1x128xf32, #tpu.memory_space<vmem>>, vector<1x1x128xf32>
      tpu.vector_store %arg4[%c0_21, %c0_22, %c0_23], %25 {strides = array<i32>} : memref<1x1x128xf32, #tpu.memory_space<vmem>>, vector<1x1x128xf32>,
    } else {
    }
    %c0 = arith.constant 0 : index
    %c0_1 = arith.constant 0 : index
    %c0_2 = arith.constant 0 : index
    %3 = vector.load %arg2[%c0, %c0_1, %c0_2] : memref<1x256x128xbf16, #tpu.memory_space<vmem>>, vector<1x256x128xbf16>
    %4 = vector.shape_cast %3 : vector<1x256x128xbf16> to vector<256x128xbf16>
    %5 = arith.extf %4 : vector<256x128xbf16> to vector<256x128xf32>
    %c0_3 = arith.constant 0 : index
    %c0_4 = arith.constant 0 : index
    %c0_5 = arith.constant 0 : index
    %6 = vector.load %arg3[%c0_3, %c0_4, %c0_5] : memref<1x1x128xf32, #tpu.memory_space<vmem>>, vector<1x1x128xf32>
    %7 = vector.shape_cast %6 : vector<1x1x128xf32> to vector<1x128xf32>
    %cst = arith.constant dense<0.000000e+00> : vector<128xf32>
    %8 = vector.multi_reduction <add>, %5, %cst [0] : vector<256x128xf32> to vector<128xf32>
    %9 = vector.shape_cast %8 : vector<128xf32> to vector<1x128xf32>
    %10 = arith.addf %7, %9 : vector<1x128xf32>
    %c0_6 = arith.constant 0 : index
    %c0_7 = arith.constant 0 : index
    %c0_8 = arith.constant 0 : index
    %11 = vector.load %arg3[%c0_6, %c0_7, %c0_8] : memref<1x1x128xf32, #tpu.memory_space<vmem>>, vector<1x1x128xf32>
    %12 = vector.shape_cast %11 : vector<1x1x128xf32> to vector<1x128xf32>
    %13 = vector.shape_cast %10 : vector<1x128xf32> to vector<1x1x128xf32>
    tpu.vector_store %arg3[%c0_6, %c0_7, %c0_8], %13 {strides = array<i32>} : memref<1x1x128xf32, #tpu.memory_space<vmem>>, vector<1x1x128xf32>,
    %c0_9 = arith.constant 0 : index
    %c0_10 = arith.constant 0 : index
    %c0_11 = arith.constant 0 : index
    %14 = vector.load %arg4[%c0_9, %c0_10, %c0_11] : memref<1x1x128xf32, #tpu.memory_space<vmem>>, vector<1x1x128xf32>
    %15 = vector.shape_cast %14 : vector<1x1x128xf32> to vector<1x128xf32>
    %16 = arith.mulf %5, %5 : vector<256x128xf32>
    %cst_12 = arith.constant dense<0.000000e+00> : vector<128xf32>
    %17 = vector.multi_reduction <add>, %16, %cst_12 [0] : vector<256x128xf32> to vector<128xf32>
    %18 = vector.shape_cast %17 : vector<128xf32> to vector<1x128xf32>
    %19 = arith.addf %15, %18 : vector<1x128xf32>
    %c0_13 = arith.constant 0 : index
    %c0_14 = arith.constant 0 : index
    %c0_15 = arith.constant 0 : index
    %20 = vector.load %arg4[%c0_13, %c0_14, %c0_15] : memref<1x1x128xf32, #tpu.memory_space<vmem>>, vector<1x1x128xf32>
    %21 = vector.shape_cast %20 : vector<1x1x128xf32> to vector<1x128xf32>
    %22 = vector.shape_cast %19 : vector<1x128xf32> to vector<1x1x128xf32>
    tpu.vector_store %arg4[%c0_13, %c0_14, %c0_15], %22 {strides = array<i32>} : memref<1x1x128xf32, #tpu.memory_space<vmem>>, vector<1x1x128xf32>,
    return
  }
  func.func @transform_0(%arg0: i32, %arg1: i32) -> (i32, i32, i32) {
    %c0_i32 = arith.constant 0 : i32
    %c0_i32_0 = arith.constant 0 : i32
    return %arg0, %arg1, %c0_i32 : i32, i32, i32
  }
  func.func @transform_1(%arg0: i32, %arg1: i32) -> (i32, i32, i32) {
    %c0_i32 = arith.constant 0 : i32
    %c0_i32_0 = arith.constant 0 : i32
    %c0_i32_1 = arith.constant 0 : i32
    return %arg0, %c0_i32, %c0_i32_0 : i32, i32, i32
  }
  func.func @transform_2(%arg0: i32, %arg1: i32) -> (i32, i32, i32) {
    %c0_i32 = arith.constant 0 : i32
    %c0_i32_0 = arith.constant 0 : i32
    %c0_i32_1 = arith.constant 0 : i32
    return %arg0, %c0_i32, %c0_i32_0 : i32, i32, i32
  }
}

module attributes {stable_mosaic.version = 11 : i64} {
  func.func @_in_apply_kernel(%arg0: i32, %arg1: i32, %arg2: memref<1x256x128xbf16, #tpu.memory_space<vmem>>, %arg3: memref<1x1x128xf32, #tpu.memory_space<vmem>>, %arg4: memref<1x1x128xf32, #tpu.memory_space<vmem>>, %arg5: memref<1x256x128xbf16, #tpu.memory_space<vmem>>) attributes {dimension_semantics = [#tpu.dimension_semantics<parallel>, #tpu.dimension_semantics<parallel>], iteration_bounds = array<i64: 2, 1>, scalar_prefetch = 0 : i64, scratch_operands = 0 : i64, tpu.core_type = #tpu.core_type<tc>, window_params = [{transform_indices = @transform_0, window_bounds = array<i64: 1, 256, 128>}, {transform_indices = @transform_1, window_bounds = array<i64: 1, 1, 128>}, {transform_indices = @transform_2, window_bounds = array<i64: 1, 1, 128>}, {transform_indices = @transform_3, window_bounds = array<i64: 1, 256, 128>}]} {
    %c0 = arith.constant 0 : index
    %c0_0 = arith.constant 0 : index
    %c0_1 = arith.constant 0 : index
    %0 = vector.load %arg3[%c0, %c0_0, %c0_1] : memref<1x1x128xf32, #tpu.memory_space<vmem>>, vector<1x1x128xf32>
    %1 = vector.shape_cast %0 : vector<1x1x128xf32> to vector<1x128xf32>
    %cst = arith.constant 3.906250e-03 : f32
    %2 = vector.broadcast %cst : f32 to vector<1x128xf32>
    %3 = arith.mulf %1, %2 : vector<1x128xf32>
    %c0_2 = arith.constant 0 : index
    %c0_3 = arith.constant 0 : index
    %c0_4 = arith.constant 0 : index
    %4 = vector.load %arg4[%c0_2, %c0_3, %c0_4] : memref<1x1x128xf32, #tpu.memory_space<vmem>>, vector<1x1x128xf32>
    %5 = vector.shape_cast %4 : vector<1x1x128xf32> to vector<1x128xf32>
    %cst_5 = arith.constant 3.906250e-03 : f32
    %6 = vector.broadcast %cst_5 : f32 to vector<1x128xf32>
    %7 = arith.mulf %5, %6 : vector<1x128xf32>
    %8 = arith.mulf %3, %3 : vector<1x128xf32>
    %9 = arith.subf %7, %8 : vector<1x128xf32>
    %cst_6 = arith.constant 0.000000e+00 : f32
    %10 = vector.broadcast %cst_6 : f32 to vector<1x128xf32>
    %11 = arith.maximumf %9, %10 : vector<1x128xf32>
    %cst_7 = arith.constant 9.99999974E-6 : f32
    %12 = vector.broadcast %cst_7 : f32 to vector<1x128xf32>
    %13 = arith.addf %11, %12 : vector<1x128xf32>
    %14 = math.rsqrt %13 : vector<1x128xf32>
    %c0_8 = arith.constant 0 : index
    %c0_9 = arith.constant 0 : index
    %c0_10 = arith.constant 0 : index
    %15 = vector.load %arg2[%c0_8, %c0_9, %c0_10] : memref<1x256x128xbf16, #tpu.memory_space<vmem>>, vector<1x256x128xbf16>
    %16 = vector.shape_cast %15 : vector<1x256x128xbf16> to vector<256x128xbf16>
    %17 = arith.extf %16 : vector<256x128xbf16> to vector<256x128xf32>
    %18 = vector.broadcast %3 : vector<1x128xf32> to vector<256x128xf32>
    %19 = arith.subf %17, %18 : vector<256x128xf32>
    %20 = vector.broadcast %14 : vector<1x128xf32> to vector<256x128xf32>
    %21 = arith.mulf %19, %20 : vector<256x128xf32>
    %cst_11 = arith.constant 0.000000e+00 : f32
    %22 = vector.broadcast %cst_11 : f32 to vector<256x128xf32>
    %23 = arith.maximumf %21, %22 : vector<256x128xf32>
    %24 = arith.truncf %23 : vector<256x128xf32> to vector<256x128xbf16>
    %c0_12 = arith.constant 0 : index
    %c0_13 = arith.constant 0 : index
    %c0_14 = arith.constant 0 : index
    %25 = vector.load %arg5[%c0_12, %c0_13, %c0_14] : memref<1x256x128xbf16, #tpu.memory_space<vmem>>, vector<1x256x128xbf16>
    %26 = vector.shape_cast %25 : vector<1x256x128xbf16> to vector<256x128xbf16>
    %27 = vector.shape_cast %24 : vector<256x128xbf16> to vector<1x256x128xbf16>
    tpu.vector_store %arg5[%c0_12, %c0_13, %c0_14], %27 {strides = array<i32>} : memref<1x256x128xbf16, #tpu.memory_space<vmem>>, vector<1x256x128xbf16>,
    return
  }
  func.func @transform_0(%arg0: i32, %arg1: i32) -> (i32, i32, i32) {
    %c0_i32 = arith.constant 0 : i32
    %c0_i32_0 = arith.constant 0 : i32
    return %arg0, %arg1, %c0_i32 : i32, i32, i32
  }
  func.func @transform_1(%arg0: i32, %arg1: i32) -> (i32, i32, i32) {
    %c0_i32 = arith.constant 0 : i32
    %c0_i32_0 = arith.constant 0 : i32
    %c0_i32_1 = arith.constant 0 : i32
    return %arg0, %c0_i32, %c0_i32_0 : i32, i32, i32
  }
  func.func @transform_2(%arg0: i32, %arg1: i32) -> (i32, i32, i32) {
    %c0_i32 = arith.constant 0 : i32
    %c0_i32_0 = arith.constant 0 : i32
    %c0_i32_1 = arith.constant 0 : i32
    return %arg0, %c0_i32, %c0_i32_0 : i32, i32, i32
  }
  func.func @transform_3(%arg0: i32, %arg1: i32) -> (i32, i32, i32) {
    %c0_i32 = arith.constant 0 : i32
    %c0_i32_0 = arith.constant 0 : i32
    return %arg0, %arg1, %c0_i32 : i32, i32, i32
  }
}

module attributes {stable_mosaic.version = 11 : i64} {
  func.func @_conv_tap_kernel(%arg0: i32, %arg1: i32, %arg2: i32, %arg3: memref<1x1x18x128xbf16, #tpu.memory_space<vmem>>, %arg4: memref<9x128x128xbf16, #tpu.memory_space<vmem>>, %arg5: memref<1x128xf32, #tpu.memory_space<vmem>>, %arg6: memref<1x16x128xbf16, #tpu.memory_space<vmem>>, %arg7: memref<16x128xf32, #tpu.memory_space<vmem>>) attributes {dimension_semantics = [#tpu.dimension_semantics<parallel>, #tpu.dimension_semantics<parallel>, #tpu.dimension_semantics<arbitrary>], iteration_bounds = array<i64: 2, 16, 3>, scalar_prefetch = 0 : i64, scratch_operands = 1 : i64, tpu.core_type = #tpu.core_type<tc>, window_params = [{transform_indices = @transform_0, window_bounds = array<i64: 1, 1, 18, 128>}, {pipeline_mode = #tpu.pipeline_mode<synchronous>, transform_indices = @transform_1, window_bounds = array<i64: 9, 128, 128>}, {pipeline_mode = #tpu.pipeline_mode<synchronous>, transform_indices = @transform_2, window_bounds = array<i64: 1, 128>}, {transform_indices = @transform_3, window_bounds = array<i64: 1, 16, 128>}]} {
    %c0_i32 = arith.constant 0 : i32
    %0 = arith.cmpi eq, %arg2, %c0_i32 : i32
    %1 = arith.extui %0 : i1 to i32
    %c0_i32_0 = arith.constant 0 : i32
    %2 = arith.cmpi ne, %1, %c0_i32_0 : i32
    scf.if %2 {
      %cst_27 = arith.constant 0.000000e+00 : f32
      %35 = vector.broadcast %cst_27 : f32 to vector<16x128xf32>
      %c0_28 = arith.constant 0 : index
      %c0_29 = arith.constant 0 : index
      %36 = vector.load %arg7[%c0_28, %c0_29] : memref<16x128xf32, #tpu.memory_space<vmem>>, vector<16x128xf32>
      tpu.vector_store %arg7[%c0_28, %c0_29], %35 {strides = array<i32>} : memref<16x128xf32, #tpu.memory_space<vmem>>, vector<16x128xf32>,
    } else {
    }
    %c0 = arith.constant 0 : index
    %c0_1 = arith.constant 0 : index
    %3 = vector.load %arg7[%c0, %c0_1] : memref<16x128xf32, #tpu.memory_space<vmem>>, vector<16x128xf32>
    %c0_2 = arith.constant 0 : index
    %c0_3 = arith.constant 0 : index
    %c0_4 = arith.constant 0 : index
    %c0_5 = arith.constant 0 : index
    %4 = vector.load %arg3[%c0_2, %c0_3, %c0_4, %c0_5] : memref<1x1x18x128xbf16, #tpu.memory_space<vmem>>, vector<1x1x16x128xbf16>
    %5 = vector.shape_cast %4 : vector<1x1x16x128xbf16> to vector<16x128xbf16>
    %c3_i32 = arith.constant 3 : i32
    %6 = arith.muli %arg2, %c3_i32 : i32
    %c0_i32_6 = arith.constant 0 : i32
    %7 = arith.addi %6, %c0_i32_6 : i32
    %8 = arith.index_cast %7 : i32 to index
    %c0_7 = arith.constant 0 : index
    %c0_8 = arith.constant 0 : index
    %9 = vector.load %arg4[%8, %c0_7, %c0_8] : memref<9x128x128xbf16, #tpu.memory_space<vmem>>, vector<1x128x128xbf16>
    %10 = vector.shape_cast %9 : vector<1x128x128xbf16> to vector<128x128xbf16>
    %cst = arith.constant dense<0.000000e+00> : vector<16x128xf32>
    %11 = tpu.matmul %5, %10, %cst {dimension_numbers = #tpu.dot_dimension_numbers<[1], [0], [0], [1], [0, 0, 1, 1], [], []>} : vector<16x128xbf16>, vector<128x128xbf16>, vector<16x128xf32> -> vector<16x128xf32>
    %12 = arith.addf %3, %11 : vector<16x128xf32>
    %c0_9 = arith.constant 0 : index
    %c0_10 = arith.constant 0 : index
    %c1 = arith.constant 1 : index
    %c0_11 = arith.constant 0 : index
    %13 = vector.load %arg3[%c0_9, %c0_10, %c1, %c0_11] : memref<1x1x18x128xbf16, #tpu.memory_space<vmem>>, vector<1x1x16x128xbf16>
    %14 = vector.shape_cast %13 : vector<1x1x16x128xbf16> to vector<16x128xbf16>
    %c3_i32_12 = arith.constant 3 : i32
    %15 = arith.muli %arg2, %c3_i32_12 : i32
    %c1_i32 = arith.constant 1 : i32
    %16 = arith.addi %15, %c1_i32 : i32
    %17 = arith.index_cast %16 : i32 to index
    %c0_13 = arith.constant 0 : index
    %c0_14 = arith.constant 0 : index
    %18 = vector.load %arg4[%17, %c0_13, %c0_14] : memref<9x128x128xbf16, #tpu.memory_space<vmem>>, vector<1x128x128xbf16>
    %19 = vector.shape_cast %18 : vector<1x128x128xbf16> to vector<128x128xbf16>
    %cst_15 = arith.constant dense<0.000000e+00> : vector<16x128xf32>
    %20 = tpu.matmul %14, %19, %cst_15 {dimension_numbers = #tpu.dot_dimension_numbers<[1], [0], [0], [1], [0, 0, 1, 1], [], []>} : vector<16x128xbf16>, vector<128x128xbf16>, vector<16x128xf32> -> vector<16x128xf32>
    %21 = arith.addf %12, %20 : vector<16x128xf32>
    %c0_16 = arith.constant 0 : index
    %c0_17 = arith.constant 0 : index
    %c2 = arith.constant 2 : index
    %c0_18 = arith.constant 0 : index
    %22 = vector.load %arg3[%c0_16, %c0_17, %c2, %c0_18] : memref<1x1x18x128xbf16, #tpu.memory_space<vmem>>, vector<1x1x16x128xbf16>
    %23 = vector.shape_cast %22 : vector<1x1x16x128xbf16> to vector<16x128xbf16>
    %c3_i32_19 = arith.constant 3 : i32
    %24 = arith.muli %arg2, %c3_i32_19 : i32
    %c2_i32 = arith.constant 2 : i32
    %25 = arith.addi %24, %c2_i32 : i32
    %26 = arith.index_cast %25 : i32 to index
    %c0_20 = arith.constant 0 : index
    %c0_21 = arith.constant 0 : index
    %27 = vector.load %arg4[%26, %c0_20, %c0_21] : memref<9x128x128xbf16, #tpu.memory_space<vmem>>, vector<1x128x128xbf16>
    %28 = vector.shape_cast %27 : vector<1x128x128xbf16> to vector<128x128xbf16>
    %cst_22 = arith.constant dense<0.000000e+00> : vector<16x128xf32>
    %29 = tpu.matmul %23, %28, %cst_22 {dimension_numbers = #tpu.dot_dimension_numbers<[1], [0], [0], [1], [0, 0, 1, 1], [], []>} : vector<16x128xbf16>, vector<128x128xbf16>, vector<16x128xf32> -> vector<16x128xf32>
    %30 = arith.addf %21, %29 : vector<16x128xf32>
    %c0_23 = arith.constant 0 : index
    %c0_24 = arith.constant 0 : index
    %31 = vector.load %arg7[%c0_23, %c0_24] : memref<16x128xf32, #tpu.memory_space<vmem>>, vector<16x128xf32>
    tpu.vector_store %arg7[%c0_23, %c0_24], %30 {strides = array<i32>} : memref<16x128xf32, #tpu.memory_space<vmem>>, vector<16x128xf32>,
    %c2_i32_25 = arith.constant 2 : i32
    %32 = arith.cmpi eq, %arg2, %c2_i32_25 : i32
    %33 = arith.extui %32 : i1 to i32
    %c0_i32_26 = arith.constant 0 : i32
    %34 = arith.cmpi ne, %33, %c0_i32_26 : i32
    scf.if %34 {
      %c0_27 = arith.constant 0 : index
      %c0_28 = arith.constant 0 : index
      %35 = vector.load %arg7[%c0_27, %c0_28] : memref<16x128xf32, #tpu.memory_space<vmem>>, vector<16x128xf32>
      %c0_29 = arith.constant 0 : index
      %c0_30 = arith.constant 0 : index
      %36 = vector.load %arg5[%c0_29, %c0_30] : memref<1x128xf32, #tpu.memory_space<vmem>>, vector<1x128xf32>
      %37 = vector.broadcast %36 : vector<1x128xf32> to vector<16x128xf32>
      %38 = arith.addf %35, %37 : vector<16x128xf32>
      %39 = arith.truncf %38 : vector<16x128xf32> to vector<16x128xbf16>
      %c0_31 = arith.constant 0 : index
      %c0_32 = arith.constant 0 : index
      %c0_33 = arith.constant 0 : index
      %40 = vector.load %arg6[%c0_31, %c0_32, %c0_33] : memref<1x16x128xbf16, #tpu.memory_space<vmem>>, vector<1x16x128xbf16>
      %41 = vector.shape_cast %40 : vector<1x16x128xbf16> to vector<16x128xbf16>
      %42 = vector.shape_cast %39 : vector<16x128xbf16> to vector<1x16x128xbf16>
      tpu.vector_store %arg6[%c0_31, %c0_32, %c0_33], %42 {strides = array<i32>} : memref<1x16x128xbf16, #tpu.memory_space<vmem>>, vector<1x16x128xbf16>,
    } else {
    }
    return
  }
  func.func @transform_0(%arg0: i32, %arg1: i32, %arg2: i32) -> (i32, i32, i32, i32) {
    %c18_i32 = arith.constant 18 : i32
    %0 = arith.muli %arg0, %c18_i32 : i32
    %c1_i32 = arith.constant 1 : i32
    %1 = arith.muli %arg1, %c1_i32 : i32
    %2 = arith.addi %0, %1 : i32
    %3 = arith.addi %2, %arg2 : i32
    %c0_i32 = arith.constant 0 : i32
    %c0_i32_0 = arith.constant 0 : i32
    %c0_i32_1 = arith.constant 0 : i32
    %c0_i32_2 = arith.constant 0 : i32
    return %3, %c0_i32, %c0_i32_0, %c0_i32_1 : i32, i32, i32, i32
  }
  func.func @transform_1(%arg0: i32, %arg1: i32, %arg2: i32) -> (i32, i32, i32) {
    %c0_i32 = arith.constant 0 : i32
    %c0_i32_0 = arith.constant 0 : i32
    %c0_i32_1 = arith.constant 0 : i32
    %c0_i32_2 = arith.constant 0 : i32
    return %c0_i32, %c0_i32_0, %c0_i32_1 : i32, i32, i32
  }
  func.func @transform_2(%arg0: i32, %arg1: i32, %arg2: i32) -> (i32, i32) {
    %c0_i32 = arith.constant 0 : i32
    %c0_i32_0 = arith.constant 0 : i32
    %c0_i32_1 = arith.constant 0 : i32
    return %c0_i32, %c0_i32_0 : i32, i32
  }
  func.func @transform_3(%arg0: i32, %arg1: i32, %arg2: i32) -> (i32, i32, i32) {
    %c16_i32 = arith.constant 16 : i32
    %0 = arith.muli %arg0, %c16_i32 : i32
    %1 = arith.addi %0, %arg1 : i32
    %c0_i32 = arith.constant 0 : i32
    %c0_i32_0 = arith.constant 0 : i32
    %c0_i32_1 = arith.constant 0 : i32
    return %1, %c0_i32, %c0_i32_0 : i32, i32, i32
  }
}

module attributes {stable_mosaic.version = 11 : i64} {
  func.func @_in_apply_res_kernel(%arg0: i32, %arg1: i32, %arg2: memref<1x256x128xbf16, #tpu.memory_space<vmem>>, %arg3: memref<1x1x128xf32, #tpu.memory_space<vmem>>, %arg4: memref<1x1x128xf32, #tpu.memory_space<vmem>>, %arg5: memref<1x256x128xbf16, #tpu.memory_space<vmem>>, %arg6: memref<1x256x128xbf16, #tpu.memory_space<vmem>>) attributes {dimension_semantics = [#tpu.dimension_semantics<parallel>, #tpu.dimension_semantics<parallel>], iteration_bounds = array<i64: 2, 1>, scalar_prefetch = 0 : i64, scratch_operands = 0 : i64, tpu.core_type = #tpu.core_type<tc>, window_params = [{transform_indices = @transform_0, window_bounds = array<i64: 1, 256, 128>}, {transform_indices = @transform_1, window_bounds = array<i64: 1, 1, 128>}, {transform_indices = @transform_2, window_bounds = array<i64: 1, 1, 128>}, {transform_indices = @transform_3, window_bounds = array<i64: 1, 256, 128>}, {transform_indices = @transform_4, window_bounds = array<i64: 1, 256, 128>}]} {
    %c0 = arith.constant 0 : index
    %c0_0 = arith.constant 0 : index
    %c0_1 = arith.constant 0 : index
    %0 = vector.load %arg3[%c0, %c0_0, %c0_1] : memref<1x1x128xf32, #tpu.memory_space<vmem>>, vector<1x1x128xf32>
    %1 = vector.shape_cast %0 : vector<1x1x128xf32> to vector<1x128xf32>
    %cst = arith.constant 3.906250e-03 : f32
    %2 = vector.broadcast %cst : f32 to vector<1x128xf32>
    %3 = arith.mulf %1, %2 : vector<1x128xf32>
    %c0_2 = arith.constant 0 : index
    %c0_3 = arith.constant 0 : index
    %c0_4 = arith.constant 0 : index
    %4 = vector.load %arg4[%c0_2, %c0_3, %c0_4] : memref<1x1x128xf32, #tpu.memory_space<vmem>>, vector<1x1x128xf32>
    %5 = vector.shape_cast %4 : vector<1x1x128xf32> to vector<1x128xf32>
    %cst_5 = arith.constant 3.906250e-03 : f32
    %6 = vector.broadcast %cst_5 : f32 to vector<1x128xf32>
    %7 = arith.mulf %5, %6 : vector<1x128xf32>
    %8 = arith.mulf %3, %3 : vector<1x128xf32>
    %9 = arith.subf %7, %8 : vector<1x128xf32>
    %cst_6 = arith.constant 0.000000e+00 : f32
    %10 = vector.broadcast %cst_6 : f32 to vector<1x128xf32>
    %11 = arith.maximumf %9, %10 : vector<1x128xf32>
    %cst_7 = arith.constant 9.99999974E-6 : f32
    %12 = vector.broadcast %cst_7 : f32 to vector<1x128xf32>
    %13 = arith.addf %11, %12 : vector<1x128xf32>
    %14 = math.rsqrt %13 : vector<1x128xf32>
    %c0_8 = arith.constant 0 : index
    %c0_9 = arith.constant 0 : index
    %c0_10 = arith.constant 0 : index
    %15 = vector.load %arg2[%c0_8, %c0_9, %c0_10] : memref<1x256x128xbf16, #tpu.memory_space<vmem>>, vector<1x256x128xbf16>
    %16 = vector.shape_cast %15 : vector<1x256x128xbf16> to vector<256x128xbf16>
    %17 = arith.extf %16 : vector<256x128xbf16> to vector<256x128xf32>
    %18 = vector.broadcast %3 : vector<1x128xf32> to vector<256x128xf32>
    %19 = arith.subf %17, %18 : vector<256x128xf32>
    %20 = vector.broadcast %14 : vector<1x128xf32> to vector<256x128xf32>
    %21 = arith.mulf %19, %20 : vector<256x128xf32>
    %cst_11 = arith.constant 0.000000e+00 : f32
    %22 = vector.broadcast %cst_11 : f32 to vector<256x128xf32>
    %23 = arith.maximumf %21, %22 : vector<256x128xf32>
    %c0_12 = arith.constant 0 : index
    %c0_13 = arith.constant 0 : index
    %c0_14 = arith.constant 0 : index
    %24 = vector.load %arg5[%c0_12, %c0_13, %c0_14] : memref<1x256x128xbf16, #tpu.memory_space<vmem>>, vector<1x256x128xbf16>
    %25 = vector.shape_cast %24 : vector<1x256x128xbf16> to vector<256x128xbf16>
    %26 = arith.extf %25 : vector<256x128xbf16> to vector<256x128xf32>
    %27 = arith.addf %23, %26 : vector<256x128xf32>
    %cst_15 = arith.constant 0.000000e+00 : f32
    %28 = vector.broadcast %cst_15 : f32 to vector<256x128xf32>
    %29 = arith.maximumf %27, %28 : vector<256x128xf32>
    %30 = arith.truncf %29 : vector<256x128xf32> to vector<256x128xbf16>
    %c0_16 = arith.constant 0 : index
    %c0_17 = arith.constant 0 : index
    %c0_18 = arith.constant 0 : index
    %31 = vector.load %arg6[%c0_16, %c0_17, %c0_18] : memref<1x256x128xbf16, #tpu.memory_space<vmem>>, vector<1x256x128xbf16>
    %32 = vector.shape_cast %31 : vector<1x256x128xbf16> to vector<256x128xbf16>
    %33 = vector.shape_cast %30 : vector<256x128xbf16> to vector<1x256x128xbf16>
    tpu.vector_store %arg6[%c0_16, %c0_17, %c0_18], %33 {strides = array<i32>} : memref<1x256x128xbf16, #tpu.memory_space<vmem>>, vector<1x256x128xbf16>,
    return
  }
  func.func @transform_0(%arg0: i32, %arg1: i32) -> (i32, i32, i32) {
    %c0_i32 = arith.constant 0 : i32
    %c0_i32_0 = arith.constant 0 : i32
    return %arg0, %arg1, %c0_i32 : i32, i32, i32
  }
  func.func @transform_1(%arg0: i32, %arg1: i32) -> (i32, i32, i32) {
    %c0_i32 = arith.constant 0 : i32
    %c0_i32_0 = arith.constant 0 : i32
    %c0_i32_1 = arith.constant 0 : i32
    return %arg0, %c0_i32, %c0_i32_0 : i32, i32, i32
  }
  func.func @transform_2(%arg0: i32, %arg1: i32) -> (i32, i32, i32) {
    %c0_i32 = arith.constant 0 : i32
    %c0_i32_0 = arith.constant 0 : i32
    %c0_i32_1 = arith.constant 0 : i32
    return %arg0, %c0_i32, %c0_i32_0 : i32, i32, i32
  }
  func.func @transform_3(%arg0: i32, %arg1: i32) -> (i32, i32, i32) {
    %c0_i32 = arith.constant 0 : i32
    %c0_i32_0 = arith.constant 0 : i32
    return %arg0, %arg1, %c0_i32 : i32, i32, i32
  }
  func.func @transform_4(%arg0: i32, %arg1: i32) -> (i32, i32, i32) {
    %c0_i32 = arith.constant 0 : i32
    %c0_i32_0 = arith.constant 0 : i32
    return %arg0, %arg1, %c0_i32 : i32, i32, i32
  }
}

module attributes {stable_mosaic.version = 11 : i64} {
  func.func @_gemm_bias_kernel(%arg0: i32, %arg1: memref<256x128xbf16, #tpu.memory_space<vmem>>, %arg2: memref<128x128xbf16, #tpu.memory_space<vmem>>, %arg3: memref<1x128xf32, #tpu.memory_space<vmem>>, %arg4: memref<256x128xbf16, #tpu.memory_space<vmem>>) attributes {dimension_semantics = [#tpu.dimension_semantics<parallel>], iteration_bounds = array<i64: 1>, scalar_prefetch = 0 : i64, scratch_operands = 0 : i64, tpu.core_type = #tpu.core_type<tc>, window_params = [{transform_indices = @transform_0, window_bounds = array<i64: 256, 128>}, {pipeline_mode = #tpu.pipeline_mode<synchronous>, transform_indices = @transform_1, window_bounds = array<i64: 128, 128>}, {pipeline_mode = #tpu.pipeline_mode<synchronous>, transform_indices = @transform_2, window_bounds = array<i64: 1, 128>}, {transform_indices = @transform_3, window_bounds = array<i64: 256, 128>}]} {
    %c0 = arith.constant 0 : index
    %c0_0 = arith.constant 0 : index
    %0 = vector.load %arg1[%c0, %c0_0] : memref<256x128xbf16, #tpu.memory_space<vmem>>, vector<256x128xbf16>
    %c0_1 = arith.constant 0 : index
    %c0_2 = arith.constant 0 : index
    %1 = vector.load %arg2[%c0_1, %c0_2] : memref<128x128xbf16, #tpu.memory_space<vmem>>, vector<128x128xbf16>
    %cst = arith.constant dense<0.000000e+00> : vector<256x128xf32>
    %2 = tpu.matmul %0, %1, %cst {dimension_numbers = #tpu.dot_dimension_numbers<[1], [0], [0], [1], [0, 0, 1, 1], [], []>} : vector<256x128xbf16>, vector<128x128xbf16>, vector<256x128xf32> -> vector<256x128xf32>
    %c0_3 = arith.constant 0 : index
    %c0_4 = arith.constant 0 : index
    %3 = vector.load %arg3[%c0_3, %c0_4] : memref<1x128xf32, #tpu.memory_space<vmem>>, vector<1x128xf32>
    %4 = vector.broadcast %3 : vector<1x128xf32> to vector<256x128xf32>
    %5 = arith.addf %2, %4 : vector<256x128xf32>
    %6 = arith.truncf %5 : vector<256x128xf32> to vector<256x128xbf16>
    %c0_5 = arith.constant 0 : index
    %c0_6 = arith.constant 0 : index
    %7 = vector.load %arg4[%c0_5, %c0_6] : memref<256x128xbf16, #tpu.memory_space<vmem>>, vector<256x128xbf16>
    tpu.vector_store %arg4[%c0_5, %c0_6], %6 {strides = array<i32>} : memref<256x128xbf16, #tpu.memory_space<vmem>>, vector<256x128xbf16>,
    return
  }
  func.func @transform_0(%arg0: i32) -> (i32, i32) {
    %c0_i32 = arith.constant 0 : i32
    %c0_i32_0 = arith.constant 0 : i32
    return %arg0, %c0_i32 : i32, i32
  }
  func.func @transform_1(%arg0: i32) -> (i32, i32) {
    %c0_i32 = arith.constant 0 : i32
    %c0_i32_0 = arith.constant 0 : i32
    %c0_i32_1 = arith.constant 0 : i32
    return %c0_i32, %c0_i32_0 : i32, i32
  }
  func.func @transform_2(%arg0: i32) -> (i32, i32) {
    %c0_i32 = arith.constant 0 : i32
    %c0_i32_0 = arith.constant 0 : i32
    %c0_i32_1 = arith.constant 0 : i32
    return %c0_i32, %c0_i32_0 : i32, i32
  }
  func.func @transform_3(%arg0: i32) -> (i32, i32) {
    %c0_i32 = arith.constant 0 : i32
    %c0_i32_0 = arith.constant 0 : i32
    return %arg0, %c0_i32 : i32, i32
  }
}

module attributes {stable_mosaic.version = 11 : i64} {
  func.func @_in_stats_kernel(%arg0: i32, %arg1: i32, %arg2: memref<1x64x128xbf16, #tpu.memory_space<vmem>>, %arg3: memref<1x1x128xf32, #tpu.memory_space<vmem>>, %arg4: memref<1x1x128xf32, #tpu.memory_space<vmem>>) attributes {dimension_semantics = [#tpu.dimension_semantics<parallel>, #tpu.dimension_semantics<arbitrary>], iteration_bounds = array<i64: 2, 1>, scalar_prefetch = 0 : i64, scratch_operands = 0 : i64, tpu.core_type = #tpu.core_type<tc>, window_params = [{transform_indices = @transform_0, window_bounds = array<i64: 1, 64, 128>}, {transform_indices = @transform_1, window_bounds = array<i64: 1, 1, 128>}, {transform_indices = @transform_2, window_bounds = array<i64: 1, 1, 128>}]} {
    %c0_i32 = arith.constant 0 : i32
    %0 = arith.cmpi eq, %arg1, %c0_i32 : i32
    %1 = arith.extui %0 : i1 to i32
    %c0_i32_0 = arith.constant 0 : i32
    %2 = arith.cmpi ne, %1, %c0_i32_0 : i32
    scf.if %2 {
      %cst_16 = arith.constant 0.000000e+00 : f32
      %23 = vector.broadcast %cst_16 : f32 to vector<1x1x128xf32>
      %c0_17 = arith.constant 0 : index
      %c0_18 = arith.constant 0 : index
      %c0_19 = arith.constant 0 : index
      %24 = vector.load %arg3[%c0_17, %c0_18, %c0_19] : memref<1x1x128xf32, #tpu.memory_space<vmem>>, vector<1x1x128xf32>
      tpu.vector_store %arg3[%c0_17, %c0_18, %c0_19], %23 {strides = array<i32>} : memref<1x1x128xf32, #tpu.memory_space<vmem>>, vector<1x1x128xf32>,
      %cst_20 = arith.constant 0.000000e+00 : f32
      %25 = vector.broadcast %cst_20 : f32 to vector<1x1x128xf32>
      %c0_21 = arith.constant 0 : index
      %c0_22 = arith.constant 0 : index
      %c0_23 = arith.constant 0 : index
      %26 = vector.load %arg4[%c0_21, %c0_22, %c0_23] : memref<1x1x128xf32, #tpu.memory_space<vmem>>, vector<1x1x128xf32>
      tpu.vector_store %arg4[%c0_21, %c0_22, %c0_23], %25 {strides = array<i32>} : memref<1x1x128xf32, #tpu.memory_space<vmem>>, vector<1x1x128xf32>,
    } else {
    }
    %c0 = arith.constant 0 : index
    %c0_1 = arith.constant 0 : index
    %c0_2 = arith.constant 0 : index
    %3 = vector.load %arg2[%c0, %c0_1, %c0_2] : memref<1x64x128xbf16, #tpu.memory_space<vmem>>, vector<1x64x128xbf16>
    %4 = vector.shape_cast %3 : vector<1x64x128xbf16> to vector<64x128xbf16>
    %5 = arith.extf %4 : vector<64x128xbf16> to vector<64x128xf32>
    %c0_3 = arith.constant 0 : index
    %c0_4 = arith.constant 0 : index
    %c0_5 = arith.constant 0 : index
    %6 = vector.load %arg3[%c0_3, %c0_4, %c0_5] : memref<1x1x128xf32, #tpu.memory_space<vmem>>, vector<1x1x128xf32>
    %7 = vector.shape_cast %6 : vector<1x1x128xf32> to vector<1x128xf32>
    %cst = arith.constant dense<0.000000e+00> : vector<128xf32>
    %8 = vector.multi_reduction <add>, %5, %cst [0] : vector<64x128xf32> to vector<128xf32>
    %9 = vector.shape_cast %8 : vector<128xf32> to vector<1x128xf32>
    %10 = arith.addf %7, %9 : vector<1x128xf32>
    %c0_6 = arith.constant 0 : index
    %c0_7 = arith.constant 0 : index
    %c0_8 = arith.constant 0 : index
    %11 = vector.load %arg3[%c0_6, %c0_7, %c0_8] : memref<1x1x128xf32, #tpu.memory_space<vmem>>, vector<1x1x128xf32>
    %12 = vector.shape_cast %11 : vector<1x1x128xf32> to vector<1x128xf32>
    %13 = vector.shape_cast %10 : vector<1x128xf32> to vector<1x1x128xf32>
    tpu.vector_store %arg3[%c0_6, %c0_7, %c0_8], %13 {strides = array<i32>} : memref<1x1x128xf32, #tpu.memory_space<vmem>>, vector<1x1x128xf32>,
    %c0_9 = arith.constant 0 : index
    %c0_10 = arith.constant 0 : index
    %c0_11 = arith.constant 0 : index
    %14 = vector.load %arg4[%c0_9, %c0_10, %c0_11] : memref<1x1x128xf32, #tpu.memory_space<vmem>>, vector<1x1x128xf32>
    %15 = vector.shape_cast %14 : vector<1x1x128xf32> to vector<1x128xf32>
    %16 = arith.mulf %5, %5 : vector<64x128xf32>
    %cst_12 = arith.constant dense<0.000000e+00> : vector<128xf32>
    %17 = vector.multi_reduction <add>, %16, %cst_12 [0] : vector<64x128xf32> to vector<128xf32>
    %18 = vector.shape_cast %17 : vector<128xf32> to vector<1x128xf32>
    %19 = arith.addf %15, %18 : vector<1x128xf32>
    %c0_13 = arith.constant 0 : index
    %c0_14 = arith.constant 0 : index
    %c0_15 = arith.constant 0 : index
    %20 = vector.load %arg4[%c0_13, %c0_14, %c0_15] : memref<1x1x128xf32, #tpu.memory_space<vmem>>, vector<1x1x128xf32>
    %21 = vector.shape_cast %20 : vector<1x1x128xf32> to vector<1x128xf32>
    %22 = vector.shape_cast %19 : vector<1x128xf32> to vector<1x1x128xf32>
    tpu.vector_store %arg4[%c0_13, %c0_14, %c0_15], %22 {strides = array<i32>} : memref<1x1x128xf32, #tpu.memory_space<vmem>>, vector<1x1x128xf32>,
    return
  }
  func.func @transform_0(%arg0: i32, %arg1: i32) -> (i32, i32, i32) {
    %c0_i32 = arith.constant 0 : i32
    %c0_i32_0 = arith.constant 0 : i32
    return %arg0, %arg1, %c0_i32 : i32, i32, i32
  }
  func.func @transform_1(%arg0: i32, %arg1: i32) -> (i32, i32, i32) {
    %c0_i32 = arith.constant 0 : i32
    %c0_i32_0 = arith.constant 0 : i32
    %c0_i32_1 = arith.constant 0 : i32
    return %arg0, %c0_i32, %c0_i32_0 : i32, i32, i32
  }
  func.func @transform_2(%arg0: i32, %arg1: i32) -> (i32, i32, i32) {
    %c0_i32 = arith.constant 0 : i32
    %c0_i32_0 = arith.constant 0 : i32
    %c0_i32_1 = arith.constant 0 : i32
    return %arg0, %c0_i32, %c0_i32_0 : i32, i32, i32
  }
}

module attributes {stable_mosaic.version = 11 : i64} {
  func.func @_in_apply_kernel(%arg0: i32, %arg1: i32, %arg2: memref<1x64x128xbf16, #tpu.memory_space<vmem>>, %arg3: memref<1x1x128xf32, #tpu.memory_space<vmem>>, %arg4: memref<1x1x128xf32, #tpu.memory_space<vmem>>, %arg5: memref<1x64x128xbf16, #tpu.memory_space<vmem>>) attributes {dimension_semantics = [#tpu.dimension_semantics<parallel>, #tpu.dimension_semantics<parallel>], iteration_bounds = array<i64: 2, 1>, scalar_prefetch = 0 : i64, scratch_operands = 0 : i64, tpu.core_type = #tpu.core_type<tc>, window_params = [{transform_indices = @transform_0, window_bounds = array<i64: 1, 64, 128>}, {transform_indices = @transform_1, window_bounds = array<i64: 1, 1, 128>}, {transform_indices = @transform_2, window_bounds = array<i64: 1, 1, 128>}, {transform_indices = @transform_3, window_bounds = array<i64: 1, 64, 128>}]} {
    %c0 = arith.constant 0 : index
    %c0_0 = arith.constant 0 : index
    %c0_1 = arith.constant 0 : index
    %0 = vector.load %arg3[%c0, %c0_0, %c0_1] : memref<1x1x128xf32, #tpu.memory_space<vmem>>, vector<1x1x128xf32>
    %1 = vector.shape_cast %0 : vector<1x1x128xf32> to vector<1x128xf32>
    %cst = arith.constant 1.562500e-02 : f32
    %2 = vector.broadcast %cst : f32 to vector<1x128xf32>
    %3 = arith.mulf %1, %2 : vector<1x128xf32>
    %c0_2 = arith.constant 0 : index
    %c0_3 = arith.constant 0 : index
    %c0_4 = arith.constant 0 : index
    %4 = vector.load %arg4[%c0_2, %c0_3, %c0_4] : memref<1x1x128xf32, #tpu.memory_space<vmem>>, vector<1x1x128xf32>
    %5 = vector.shape_cast %4 : vector<1x1x128xf32> to vector<1x128xf32>
    %cst_5 = arith.constant 1.562500e-02 : f32
    %6 = vector.broadcast %cst_5 : f32 to vector<1x128xf32>
    %7 = arith.mulf %5, %6 : vector<1x128xf32>
    %8 = arith.mulf %3, %3 : vector<1x128xf32>
    %9 = arith.subf %7, %8 : vector<1x128xf32>
    %cst_6 = arith.constant 0.000000e+00 : f32
    %10 = vector.broadcast %cst_6 : f32 to vector<1x128xf32>
    %11 = arith.maximumf %9, %10 : vector<1x128xf32>
    %cst_7 = arith.constant 9.99999974E-6 : f32
    %12 = vector.broadcast %cst_7 : f32 to vector<1x128xf32>
    %13 = arith.addf %11, %12 : vector<1x128xf32>
    %14 = math.rsqrt %13 : vector<1x128xf32>
    %c0_8 = arith.constant 0 : index
    %c0_9 = arith.constant 0 : index
    %c0_10 = arith.constant 0 : index
    %15 = vector.load %arg2[%c0_8, %c0_9, %c0_10] : memref<1x64x128xbf16, #tpu.memory_space<vmem>>, vector<1x64x128xbf16>
    %16 = vector.shape_cast %15 : vector<1x64x128xbf16> to vector<64x128xbf16>
    %17 = arith.extf %16 : vector<64x128xbf16> to vector<64x128xf32>
    %18 = vector.broadcast %3 : vector<1x128xf32> to vector<64x128xf32>
    %19 = arith.subf %17, %18 : vector<64x128xf32>
    %20 = vector.broadcast %14 : vector<1x128xf32> to vector<64x128xf32>
    %21 = arith.mulf %19, %20 : vector<64x128xf32>
    %22 = arith.truncf %21 : vector<64x128xf32> to vector<64x128xbf16>
    %c0_11 = arith.constant 0 : index
    %c0_12 = arith.constant 0 : index
    %c0_13 = arith.constant 0 : index
    %23 = vector.load %arg5[%c0_11, %c0_12, %c0_13] : memref<1x64x128xbf16, #tpu.memory_space<vmem>>, vector<1x64x128xbf16>
    %24 = vector.shape_cast %23 : vector<1x64x128xbf16> to vector<64x128xbf16>
    %25 = vector.shape_cast %22 : vector<64x128xbf16> to vector<1x64x128xbf16>
    tpu.vector_store %arg5[%c0_11, %c0_12, %c0_13], %25 {strides = array<i32>} : memref<1x64x128xbf16, #tpu.memory_space<vmem>>, vector<1x64x128xbf16>,
    return
  }
  func.func @transform_0(%arg0: i32, %arg1: i32) -> (i32, i32, i32) {
    %c0_i32 = arith.constant 0 : i32
    %c0_i32_0 = arith.constant 0 : i32
    return %arg0, %arg1, %c0_i32 : i32, i32, i32
  }
  func.func @transform_1(%arg0: i32, %arg1: i32) -> (i32, i32, i32) {
    %c0_i32 = arith.constant 0 : i32
    %c0_i32_0 = arith.constant 0 : i32
    %c0_i32_1 = arith.constant 0 : i32
    return %arg0, %c0_i32, %c0_i32_0 : i32, i32, i32
  }
  func.func @transform_2(%arg0: i32, %arg1: i32) -> (i32, i32, i32) {
    %c0_i32 = arith.constant 0 : i32
    %c0_i32_0 = arith.constant 0 : i32
    %c0_i32_1 = arith.constant 0 : i32
    return %arg0, %c0_i32, %c0_i32_0 : i32, i32, i32
  }
  func.func @transform_3(%arg0: i32, %arg1: i32) -> (i32, i32, i32) {
    %c0_i32 = arith.constant 0 : i32
    %c0_i32_0 = arith.constant 0 : i32
    return %arg0, %arg1, %c0_i32 : i32, i32, i32
  }
}

module attributes {stable_mosaic.version = 11 : i64} {
  func.func @_in_apply_kernel(%arg0: i32, %arg1: i32, %arg2: memref<1x64x128xbf16, #tpu.memory_space<vmem>>, %arg3: memref<1x1x128xf32, #tpu.memory_space<vmem>>, %arg4: memref<1x1x128xf32, #tpu.memory_space<vmem>>, %arg5: memref<1x64x128xbf16, #tpu.memory_space<vmem>>) attributes {dimension_semantics = [#tpu.dimension_semantics<parallel>, #tpu.dimension_semantics<parallel>], iteration_bounds = array<i64: 2, 1>, scalar_prefetch = 0 : i64, scratch_operands = 0 : i64, tpu.core_type = #tpu.core_type<tc>, window_params = [{transform_indices = @transform_0, window_bounds = array<i64: 1, 64, 128>}, {transform_indices = @transform_1, window_bounds = array<i64: 1, 1, 128>}, {transform_indices = @transform_2, window_bounds = array<i64: 1, 1, 128>}, {transform_indices = @transform_3, window_bounds = array<i64: 1, 64, 128>}]} {
    %c0 = arith.constant 0 : index
    %c0_0 = arith.constant 0 : index
    %c0_1 = arith.constant 0 : index
    %0 = vector.load %arg3[%c0, %c0_0, %c0_1] : memref<1x1x128xf32, #tpu.memory_space<vmem>>, vector<1x1x128xf32>
    %1 = vector.shape_cast %0 : vector<1x1x128xf32> to vector<1x128xf32>
    %cst = arith.constant 1.562500e-02 : f32
    %2 = vector.broadcast %cst : f32 to vector<1x128xf32>
    %3 = arith.mulf %1, %2 : vector<1x128xf32>
    %c0_2 = arith.constant 0 : index
    %c0_3 = arith.constant 0 : index
    %c0_4 = arith.constant 0 : index
    %4 = vector.load %arg4[%c0_2, %c0_3, %c0_4] : memref<1x1x128xf32, #tpu.memory_space<vmem>>, vector<1x1x128xf32>
    %5 = vector.shape_cast %4 : vector<1x1x128xf32> to vector<1x128xf32>
    %cst_5 = arith.constant 1.562500e-02 : f32
    %6 = vector.broadcast %cst_5 : f32 to vector<1x128xf32>
    %7 = arith.mulf %5, %6 : vector<1x128xf32>
    %8 = arith.mulf %3, %3 : vector<1x128xf32>
    %9 = arith.subf %7, %8 : vector<1x128xf32>
    %cst_6 = arith.constant 0.000000e+00 : f32
    %10 = vector.broadcast %cst_6 : f32 to vector<1x128xf32>
    %11 = arith.maximumf %9, %10 : vector<1x128xf32>
    %cst_7 = arith.constant 9.99999974E-6 : f32
    %12 = vector.broadcast %cst_7 : f32 to vector<1x128xf32>
    %13 = arith.addf %11, %12 : vector<1x128xf32>
    %14 = math.rsqrt %13 : vector<1x128xf32>
    %c0_8 = arith.constant 0 : index
    %c0_9 = arith.constant 0 : index
    %c0_10 = arith.constant 0 : index
    %15 = vector.load %arg2[%c0_8, %c0_9, %c0_10] : memref<1x64x128xbf16, #tpu.memory_space<vmem>>, vector<1x64x128xbf16>
    %16 = vector.shape_cast %15 : vector<1x64x128xbf16> to vector<64x128xbf16>
    %17 = arith.extf %16 : vector<64x128xbf16> to vector<64x128xf32>
    %18 = vector.broadcast %3 : vector<1x128xf32> to vector<64x128xf32>
    %19 = arith.subf %17, %18 : vector<64x128xf32>
    %20 = vector.broadcast %14 : vector<1x128xf32> to vector<64x128xf32>
    %21 = arith.mulf %19, %20 : vector<64x128xf32>
    %cst_11 = arith.constant 0.000000e+00 : f32
    %22 = vector.broadcast %cst_11 : f32 to vector<64x128xf32>
    %23 = arith.maximumf %21, %22 : vector<64x128xf32>
    %24 = arith.truncf %23 : vector<64x128xf32> to vector<64x128xbf16>
    %c0_12 = arith.constant 0 : index
    %c0_13 = arith.constant 0 : index
    %c0_14 = arith.constant 0 : index
    %25 = vector.load %arg5[%c0_12, %c0_13, %c0_14] : memref<1x64x128xbf16, #tpu.memory_space<vmem>>, vector<1x64x128xbf16>
    %26 = vector.shape_cast %25 : vector<1x64x128xbf16> to vector<64x128xbf16>
    %27 = vector.shape_cast %24 : vector<64x128xbf16> to vector<1x64x128xbf16>
    tpu.vector_store %arg5[%c0_12, %c0_13, %c0_14], %27 {strides = array<i32>} : memref<1x64x128xbf16, #tpu.memory_space<vmem>>, vector<1x64x128xbf16>,
    return
  }
  func.func @transform_0(%arg0: i32, %arg1: i32) -> (i32, i32, i32) {
    %c0_i32 = arith.constant 0 : i32
    %c0_i32_0 = arith.constant 0 : i32
    return %arg0, %arg1, %c0_i32 : i32, i32, i32
  }
  func.func @transform_1(%arg0: i32, %arg1: i32) -> (i32, i32, i32) {
    %c0_i32 = arith.constant 0 : i32
    %c0_i32_0 = arith.constant 0 : i32
    %c0_i32_1 = arith.constant 0 : i32
    return %arg0, %c0_i32, %c0_i32_0 : i32, i32, i32
  }
  func.func @transform_2(%arg0: i32, %arg1: i32) -> (i32, i32, i32) {
    %c0_i32 = arith.constant 0 : i32
    %c0_i32_0 = arith.constant 0 : i32
    %c0_i32_1 = arith.constant 0 : i32
    return %arg0, %c0_i32, %c0_i32_0 : i32, i32, i32
  }
  func.func @transform_3(%arg0: i32, %arg1: i32) -> (i32, i32, i32) {
    %c0_i32 = arith.constant 0 : i32
    %c0_i32_0 = arith.constant 0 : i32
    return %arg0, %arg1, %c0_i32 : i32, i32, i32
  }
}

module attributes {stable_mosaic.version = 11 : i64} {
  func.func @_conv_tap_kernel(%arg0: i32, %arg1: i32, %arg2: i32, %arg3: memref<1x2x9x128xbf16, #tpu.memory_space<vmem>>, %arg4: memref<9x128x128xbf16, #tpu.memory_space<vmem>>, %arg5: memref<1x128xf32, #tpu.memory_space<vmem>>, %arg6: memref<1x8x128xbf16, #tpu.memory_space<vmem>>, %arg7: memref<8x128xf32, #tpu.memory_space<vmem>>) attributes {dimension_semantics = [#tpu.dimension_semantics<parallel>, #tpu.dimension_semantics<parallel>, #tpu.dimension_semantics<arbitrary>], iteration_bounds = array<i64: 2, 8, 3>, scalar_prefetch = 0 : i64, scratch_operands = 1 : i64, tpu.core_type = #tpu.core_type<tc>, window_params = [{transform_indices = @transform_0, window_bounds = array<i64: 1, 2, 9, 128>}, {pipeline_mode = #tpu.pipeline_mode<synchronous>, transform_indices = @transform_1, window_bounds = array<i64: 9, 128, 128>}, {pipeline_mode = #tpu.pipeline_mode<synchronous>, transform_indices = @transform_2, window_bounds = array<i64: 1, 128>}, {transform_indices = @transform_3, window_bounds = array<i64: 1, 8, 128>}]} {
    %c0_i32 = arith.constant 0 : i32
    %0 = arith.cmpi eq, %arg2, %c0_i32 : i32
    %1 = arith.extui %0 : i1 to i32
    %c0_i32_0 = arith.constant 0 : i32
    %2 = arith.cmpi ne, %1, %c0_i32_0 : i32
    scf.if %2 {
      %cst_28 = arith.constant 0.000000e+00 : f32
      %35 = vector.broadcast %cst_28 : f32 to vector<8x128xf32>
      %c0_29 = arith.constant 0 : index
      %c0_30 = arith.constant 0 : index
      %36 = vector.load %arg7[%c0_29, %c0_30] : memref<8x128xf32, #tpu.memory_space<vmem>>, vector<8x128xf32>
      tpu.vector_store %arg7[%c0_29, %c0_30], %35 {strides = array<i32>} : memref<8x128xf32, #tpu.memory_space<vmem>>, vector<8x128xf32>,
    } else {
    }
    %c0 = arith.constant 0 : index
    %c0_1 = arith.constant 0 : index
    %3 = vector.load %arg7[%c0, %c0_1] : memref<8x128xf32, #tpu.memory_space<vmem>>, vector<8x128xf32>
    %c0_2 = arith.constant 0 : index
    %c0_3 = arith.constant 0 : index
    %c0_4 = arith.constant 0 : index
    %c0_5 = arith.constant 0 : index
    %4 = vector.load %arg3[%c0_2, %c0_3, %c0_4, %c0_5] : memref<1x2x9x128xbf16, #tpu.memory_space<vmem>>, vector<1x1x8x128xbf16>
    %5 = vector.shape_cast %4 : vector<1x1x8x128xbf16> to vector<8x128xbf16>
    %c3_i32 = arith.constant 3 : i32
    %6 = arith.muli %arg2, %c3_i32 : i32
    %c0_i32_6 = arith.constant 0 : i32
    %7 = arith.addi %6, %c0_i32_6 : i32
    %8 = arith.index_cast %7 : i32 to index
    %c0_7 = arith.constant 0 : index
    %c0_8 = arith.constant 0 : index
    %9 = vector.load %arg4[%8, %c0_7, %c0_8] : memref<9x128x128xbf16, #tpu.memory_space<vmem>>, vector<1x128x128xbf16>
    %10 = vector.shape_cast %9 : vector<1x128x128xbf16> to vector<128x128xbf16>
    %cst = arith.constant dense<0.000000e+00> : vector<8x128xf32>
    %11 = tpu.matmul %5, %10, %cst {dimension_numbers = #tpu.dot_dimension_numbers<[1], [0], [0], [1], [0, 0, 1, 1], [], []>} : vector<8x128xbf16>, vector<128x128xbf16>, vector<8x128xf32> -> vector<8x128xf32>
    %12 = arith.addf %3, %11 : vector<8x128xf32>
    %c0_9 = arith.constant 0 : index
    %c1 = arith.constant 1 : index
    %c0_10 = arith.constant 0 : index
    %c0_11 = arith.constant 0 : index
    %13 = vector.load %arg3[%c0_9, %c1, %c0_10, %c0_11] : memref<1x2x9x128xbf16, #tpu.memory_space<vmem>>, vector<1x1x8x128xbf16>
    %14 = vector.shape_cast %13 : vector<1x1x8x128xbf16> to vector<8x128xbf16>
    %c3_i32_12 = arith.constant 3 : i32
    %15 = arith.muli %arg2, %c3_i32_12 : i32
    %c1_i32 = arith.constant 1 : i32
    %16 = arith.addi %15, %c1_i32 : i32
    %17 = arith.index_cast %16 : i32 to index
    %c0_13 = arith.constant 0 : index
    %c0_14 = arith.constant 0 : index
    %18 = vector.load %arg4[%17, %c0_13, %c0_14] : memref<9x128x128xbf16, #tpu.memory_space<vmem>>, vector<1x128x128xbf16>
    %19 = vector.shape_cast %18 : vector<1x128x128xbf16> to vector<128x128xbf16>
    %cst_15 = arith.constant dense<0.000000e+00> : vector<8x128xf32>
    %20 = tpu.matmul %14, %19, %cst_15 {dimension_numbers = #tpu.dot_dimension_numbers<[1], [0], [0], [1], [0, 0, 1, 1], [], []>} : vector<8x128xbf16>, vector<128x128xbf16>, vector<8x128xf32> -> vector<8x128xf32>
    %21 = arith.addf %12, %20 : vector<8x128xf32>
    %c0_16 = arith.constant 0 : index
    %c0_17 = arith.constant 0 : index
    %c1_18 = arith.constant 1 : index
    %c0_19 = arith.constant 0 : index
    %22 = vector.load %arg3[%c0_16, %c0_17, %c1_18, %c0_19] : memref<1x2x9x128xbf16, #tpu.memory_space<vmem>>, vector<1x1x8x128xbf16>
    %23 = vector.shape_cast %22 : vector<1x1x8x128xbf16> to vector<8x128xbf16>
    %c3_i32_20 = arith.constant 3 : i32
    %24 = arith.muli %arg2, %c3_i32_20 : i32
    %c2_i32 = arith.constant 2 : i32
    %25 = arith.addi %24, %c2_i32 : i32
    %26 = arith.index_cast %25 : i32 to index
    %c0_21 = arith.constant 0 : index
    %c0_22 = arith.constant 0 : index
    %27 = vector.load %arg4[%26, %c0_21, %c0_22] : memref<9x128x128xbf16, #tpu.memory_space<vmem>>, vector<1x128x128xbf16>
    %28 = vector.shape_cast %27 : vector<1x128x128xbf16> to vector<128x128xbf16>
    %cst_23 = arith.constant dense<0.000000e+00> : vector<8x128xf32>
    %29 = tpu.matmul %23, %28, %cst_23 {dimension_numbers = #tpu.dot_dimension_numbers<[1], [0], [0], [1], [0, 0, 1, 1], [], []>} : vector<8x128xbf16>, vector<128x128xbf16>, vector<8x128xf32> -> vector<8x128xf32>
    %30 = arith.addf %21, %29 : vector<8x128xf32>
    %c0_24 = arith.constant 0 : index
    %c0_25 = arith.constant 0 : index
    %31 = vector.load %arg7[%c0_24, %c0_25] : memref<8x128xf32, #tpu.memory_space<vmem>>, vector<8x128xf32>
    tpu.vector_store %arg7[%c0_24, %c0_25], %30 {strides = array<i32>} : memref<8x128xf32, #tpu.memory_space<vmem>>, vector<8x128xf32>,
    %c2_i32_26 = arith.constant 2 : i32
    %32 = arith.cmpi eq, %arg2, %c2_i32_26 : i32
    %33 = arith.extui %32 : i1 to i32
    %c0_i32_27 = arith.constant 0 : i32
    %34 = arith.cmpi ne, %33, %c0_i32_27 : i32
    scf.if %34 {
      %c0_28 = arith.constant 0 : index
      %c0_29 = arith.constant 0 : index
      %35 = vector.load %arg7[%c0_28, %c0_29] : memref<8x128xf32, #tpu.memory_space<vmem>>, vector<8x128xf32>
      %c0_30 = arith.constant 0 : index
      %c0_31 = arith.constant 0 : index
      %36 = vector.load %arg5[%c0_30, %c0_31] : memref<1x128xf32, #tpu.memory_space<vmem>>, vector<1x128xf32>
      %37 = vector.broadcast %36 : vector<1x128xf32> to vector<8x128xf32>
      %38 = arith.addf %35, %37 : vector<8x128xf32>
      %39 = arith.truncf %38 : vector<8x128xf32> to vector<8x128xbf16>
      %c0_32 = arith.constant 0 : index
      %c0_33 = arith.constant 0 : index
      %c0_34 = arith.constant 0 : index
      %40 = vector.load %arg6[%c0_32, %c0_33, %c0_34] : memref<1x8x128xbf16, #tpu.memory_space<vmem>>, vector<1x8x128xbf16>
      %41 = vector.shape_cast %40 : vector<1x8x128xbf16> to vector<8x128xbf16>
      %42 = vector.shape_cast %39 : vector<8x128xbf16> to vector<1x8x128xbf16>
      tpu.vector_store %arg6[%c0_32, %c0_33, %c0_34], %42 {strides = array<i32>} : memref<1x8x128xbf16, #tpu.memory_space<vmem>>, vector<1x8x128xbf16>,
    } else {
    }
    return
  }
  func.func @transform_0(%arg0: i32, %arg1: i32, %arg2: i32) -> (i32, i32, i32, i32) {
    %c18_i32 = arith.constant 18 : i32
    %0 = arith.muli %arg0, %c18_i32 : i32
    %c2_i32 = arith.constant 2 : i32
    %1 = arith.muli %arg1, %c2_i32 : i32
    %2 = arith.addi %0, %1 : i32
    %3 = arith.addi %2, %arg2 : i32
    %c0_i32 = arith.constant 0 : i32
    %c0_i32_0 = arith.constant 0 : i32
    %c0_i32_1 = arith.constant 0 : i32
    %c0_i32_2 = arith.constant 0 : i32
    return %3, %c0_i32, %c0_i32_0, %c0_i32_1 : i32, i32, i32, i32
  }
  func.func @transform_1(%arg0: i32, %arg1: i32, %arg2: i32) -> (i32, i32, i32) {
    %c0_i32 = arith.constant 0 : i32
    %c0_i32_0 = arith.constant 0 : i32
    %c0_i32_1 = arith.constant 0 : i32
    %c0_i32_2 = arith.constant 0 : i32
    return %c0_i32, %c0_i32_0, %c0_i32_1 : i32, i32, i32
  }
  func.func @transform_2(%arg0: i32, %arg1: i32, %arg2: i32) -> (i32, i32) {
    %c0_i32 = arith.constant 0 : i32
    %c0_i32_0 = arith.constant 0 : i32
    %c0_i32_1 = arith.constant 0 : i32
    return %c0_i32, %c0_i32_0 : i32, i32
  }
  func.func @transform_3(%arg0: i32, %arg1: i32, %arg2: i32) -> (i32, i32, i32) {
    %c8_i32 = arith.constant 8 : i32
    %0 = arith.muli %arg0, %c8_i32 : i32
    %1 = arith.addi %0, %arg1 : i32
    %c0_i32 = arith.constant 0 : i32
    %c0_i32_0 = arith.constant 0 : i32
    %c0_i32_1 = arith.constant 0 : i32
    return %1, %c0_i32, %c0_i32_0 : i32, i32, i32
  }
}

module attributes {stable_mosaic.version = 11 : i64} {
  func.func @_conv_tap_kernel(%arg0: i32, %arg1: i32, %arg2: i32, %arg3: memref<1x1x10x128xbf16, #tpu.memory_space<vmem>>, %arg4: memref<9x128x128xbf16, #tpu.memory_space<vmem>>, %arg5: memref<1x128xf32, #tpu.memory_space<vmem>>, %arg6: memref<1x8x128xbf16, #tpu.memory_space<vmem>>, %arg7: memref<8x128xf32, #tpu.memory_space<vmem>>) attributes {dimension_semantics = [#tpu.dimension_semantics<parallel>, #tpu.dimension_semantics<parallel>, #tpu.dimension_semantics<arbitrary>], iteration_bounds = array<i64: 2, 8, 3>, scalar_prefetch = 0 : i64, scratch_operands = 1 : i64, tpu.core_type = #tpu.core_type<tc>, window_params = [{transform_indices = @transform_0, window_bounds = array<i64: 1, 1, 10, 128>}, {pipeline_mode = #tpu.pipeline_mode<synchronous>, transform_indices = @transform_1, window_bounds = array<i64: 9, 128, 128>}, {pipeline_mode = #tpu.pipeline_mode<synchronous>, transform_indices = @transform_2, window_bounds = array<i64: 1, 128>}, {transform_indices = @transform_3, window_bounds = array<i64: 1, 8, 128>}]} {
    %c0_i32 = arith.constant 0 : i32
    %0 = arith.cmpi eq, %arg2, %c0_i32 : i32
    %1 = arith.extui %0 : i1 to i32
    %c0_i32_0 = arith.constant 0 : i32
    %2 = arith.cmpi ne, %1, %c0_i32_0 : i32
    scf.if %2 {
      %cst_27 = arith.constant 0.000000e+00 : f32
      %35 = vector.broadcast %cst_27 : f32 to vector<8x128xf32>
      %c0_28 = arith.constant 0 : index
      %c0_29 = arith.constant 0 : index
      %36 = vector.load %arg7[%c0_28, %c0_29] : memref<8x128xf32, #tpu.memory_space<vmem>>, vector<8x128xf32>
      tpu.vector_store %arg7[%c0_28, %c0_29], %35 {strides = array<i32>} : memref<8x128xf32, #tpu.memory_space<vmem>>, vector<8x128xf32>,
    } else {
    }
    %c0 = arith.constant 0 : index
    %c0_1 = arith.constant 0 : index
    %3 = vector.load %arg7[%c0, %c0_1] : memref<8x128xf32, #tpu.memory_space<vmem>>, vector<8x128xf32>
    %c0_2 = arith.constant 0 : index
    %c0_3 = arith.constant 0 : index
    %c0_4 = arith.constant 0 : index
    %c0_5 = arith.constant 0 : index
    %4 = vector.load %arg3[%c0_2, %c0_3, %c0_4, %c0_5] : memref<1x1x10x128xbf16, #tpu.memory_space<vmem>>, vector<1x1x8x128xbf16>
    %5 = vector.shape_cast %4 : vector<1x1x8x128xbf16> to vector<8x128xbf16>
    %c3_i32 = arith.constant 3 : i32
    %6 = arith.muli %arg2, %c3_i32 : i32
    %c0_i32_6 = arith.constant 0 : i32
    %7 = arith.addi %6, %c0_i32_6 : i32
    %8 = arith.index_cast %7 : i32 to index
    %c0_7 = arith.constant 0 : index
    %c0_8 = arith.constant 0 : index
    %9 = vector.load %arg4[%8, %c0_7, %c0_8] : memref<9x128x128xbf16, #tpu.memory_space<vmem>>, vector<1x128x128xbf16>
    %10 = vector.shape_cast %9 : vector<1x128x128xbf16> to vector<128x128xbf16>
    %cst = arith.constant dense<0.000000e+00> : vector<8x128xf32>
    %11 = tpu.matmul %5, %10, %cst {dimension_numbers = #tpu.dot_dimension_numbers<[1], [0], [0], [1], [0, 0, 1, 1], [], []>} : vector<8x128xbf16>, vector<128x128xbf16>, vector<8x128xf32> -> vector<8x128xf32>
    %12 = arith.addf %3, %11 : vector<8x128xf32>
    %c0_9 = arith.constant 0 : index
    %c0_10 = arith.constant 0 : index
    %c1 = arith.constant 1 : index
    %c0_11 = arith.constant 0 : index
    %13 = vector.load %arg3[%c0_9, %c0_10, %c1, %c0_11] : memref<1x1x10x128xbf16, #tpu.memory_space<vmem>>, vector<1x1x8x128xbf16>
    %14 = vector.shape_cast %13 : vector<1x1x8x128xbf16> to vector<8x128xbf16>
    %c3_i32_12 = arith.constant 3 : i32
    %15 = arith.muli %arg2, %c3_i32_12 : i32
    %c1_i32 = arith.constant 1 : i32
    %16 = arith.addi %15, %c1_i32 : i32
    %17 = arith.index_cast %16 : i32 to index
    %c0_13 = arith.constant 0 : index
    %c0_14 = arith.constant 0 : index
    %18 = vector.load %arg4[%17, %c0_13, %c0_14] : memref<9x128x128xbf16, #tpu.memory_space<vmem>>, vector<1x128x128xbf16>
    %19 = vector.shape_cast %18 : vector<1x128x128xbf16> to vector<128x128xbf16>
    %cst_15 = arith.constant dense<0.000000e+00> : vector<8x128xf32>
    %20 = tpu.matmul %14, %19, %cst_15 {dimension_numbers = #tpu.dot_dimension_numbers<[1], [0], [0], [1], [0, 0, 1, 1], [], []>} : vector<8x128xbf16>, vector<128x128xbf16>, vector<8x128xf32> -> vector<8x128xf32>
    %21 = arith.addf %12, %20 : vector<8x128xf32>
    %c0_16 = arith.constant 0 : index
    %c0_17 = arith.constant 0 : index
    %c2 = arith.constant 2 : index
    %c0_18 = arith.constant 0 : index
    %22 = vector.load %arg3[%c0_16, %c0_17, %c2, %c0_18] : memref<1x1x10x128xbf16, #tpu.memory_space<vmem>>, vector<1x1x8x128xbf16>
    %23 = vector.shape_cast %22 : vector<1x1x8x128xbf16> to vector<8x128xbf16>
    %c3_i32_19 = arith.constant 3 : i32
    %24 = arith.muli %arg2, %c3_i32_19 : i32
    %c2_i32 = arith.constant 2 : i32
    %25 = arith.addi %24, %c2_i32 : i32
    %26 = arith.index_cast %25 : i32 to index
    %c0_20 = arith.constant 0 : index
    %c0_21 = arith.constant 0 : index
    %27 = vector.load %arg4[%26, %c0_20, %c0_21] : memref<9x128x128xbf16, #tpu.memory_space<vmem>>, vector<1x128x128xbf16>
    %28 = vector.shape_cast %27 : vector<1x128x128xbf16> to vector<128x128xbf16>
    %cst_22 = arith.constant dense<0.000000e+00> : vector<8x128xf32>
    %29 = tpu.matmul %23, %28, %cst_22 {dimension_numbers = #tpu.dot_dimension_numbers<[1], [0], [0], [1], [0, 0, 1, 1], [], []>} : vector<8x128xbf16>, vector<128x128xbf16>, vector<8x128xf32> -> vector<8x128xf32>
    %30 = arith.addf %21, %29 : vector<8x128xf32>
    %c0_23 = arith.constant 0 : index
    %c0_24 = arith.constant 0 : index
    %31 = vector.load %arg7[%c0_23, %c0_24] : memref<8x128xf32, #tpu.memory_space<vmem>>, vector<8x128xf32>
    tpu.vector_store %arg7[%c0_23, %c0_24], %30 {strides = array<i32>} : memref<8x128xf32, #tpu.memory_space<vmem>>, vector<8x128xf32>,
    %c2_i32_25 = arith.constant 2 : i32
    %32 = arith.cmpi eq, %arg2, %c2_i32_25 : i32
    %33 = arith.extui %32 : i1 to i32
    %c0_i32_26 = arith.constant 0 : i32
    %34 = arith.cmpi ne, %33, %c0_i32_26 : i32
    scf.if %34 {
      %c0_27 = arith.constant 0 : index
      %c0_28 = arith.constant 0 : index
      %35 = vector.load %arg7[%c0_27, %c0_28] : memref<8x128xf32, #tpu.memory_space<vmem>>, vector<8x128xf32>
      %c0_29 = arith.constant 0 : index
      %c0_30 = arith.constant 0 : index
      %36 = vector.load %arg5[%c0_29, %c0_30] : memref<1x128xf32, #tpu.memory_space<vmem>>, vector<1x128xf32>
      %37 = vector.broadcast %36 : vector<1x128xf32> to vector<8x128xf32>
      %38 = arith.addf %35, %37 : vector<8x128xf32>
      %39 = arith.truncf %38 : vector<8x128xf32> to vector<8x128xbf16>
      %c0_31 = arith.constant 0 : index
      %c0_32 = arith.constant 0 : index
      %c0_33 = arith.constant 0 : index
      %40 = vector.load %arg6[%c0_31, %c0_32, %c0_33] : memref<1x8x128xbf16, #tpu.memory_space<vmem>>, vector<1x8x128xbf16>
      %41 = vector.shape_cast %40 : vector<1x8x128xbf16> to vector<8x128xbf16>
      %42 = vector.shape_cast %39 : vector<8x128xbf16> to vector<1x8x128xbf16>
      tpu.vector_store %arg6[%c0_31, %c0_32, %c0_33], %42 {strides = array<i32>} : memref<1x8x128xbf16, #tpu.memory_space<vmem>>, vector<1x8x128xbf16>,
    } else {
    }
    return
  }
  func.func @transform_0(%arg0: i32, %arg1: i32, %arg2: i32) -> (i32, i32, i32, i32) {
    %c10_i32 = arith.constant 10 : i32
    %0 = arith.muli %arg0, %c10_i32 : i32
    %c1_i32 = arith.constant 1 : i32
    %1 = arith.muli %arg1, %c1_i32 : i32
    %2 = arith.addi %0, %1 : i32
    %3 = arith.addi %2, %arg2 : i32
    %c0_i32 = arith.constant 0 : i32
    %c0_i32_0 = arith.constant 0 : i32
    %c0_i32_1 = arith.constant 0 : i32
    %c0_i32_2 = arith.constant 0 : i32
    return %3, %c0_i32, %c0_i32_0, %c0_i32_1 : i32, i32, i32, i32
  }
  func.func @transform_1(%arg0: i32, %arg1: i32, %arg2: i32) -> (i32, i32, i32) {
    %c0_i32 = arith.constant 0 : i32
    %c0_i32_0 = arith.constant 0 : i32
    %c0_i32_1 = arith.constant 0 : i32
    %c0_i32_2 = arith.constant 0 : i32
    return %c0_i32, %c0_i32_0, %c0_i32_1 : i32, i32, i32
  }
  func.func @transform_2(%arg0: i32, %arg1: i32, %arg2: i32) -> (i32, i32) {
    %c0_i32 = arith.constant 0 : i32
    %c0_i32_0 = arith.constant 0 : i32
    %c0_i32_1 = arith.constant 0 : i32
    return %c0_i32, %c0_i32_0 : i32, i32
  }
  func.func @transform_3(%arg0: i32, %arg1: i32, %arg2: i32) -> (i32, i32, i32) {
    %c8_i32 = arith.constant 8 : i32
    %0 = arith.muli %arg0, %c8_i32 : i32
    %1 = arith.addi %0, %arg1 : i32
    %c0_i32 = arith.constant 0 : i32
    %c0_i32_0 = arith.constant 0 : i32
    %c0_i32_1 = arith.constant 0 : i32
    return %1, %c0_i32, %c0_i32_0 : i32, i32, i32
  }
}

module attributes {stable_mosaic.version = 11 : i64} {
  func.func @_in_apply_res_kernel(%arg0: i32, %arg1: i32, %arg2: memref<1x64x128xbf16, #tpu.memory_space<vmem>>, %arg3: memref<1x1x128xf32, #tpu.memory_space<vmem>>, %arg4: memref<1x1x128xf32, #tpu.memory_space<vmem>>, %arg5: memref<1x64x128xbf16, #tpu.memory_space<vmem>>, %arg6: memref<1x64x128xbf16, #tpu.memory_space<vmem>>) attributes {dimension_semantics = [#tpu.dimension_semantics<parallel>, #tpu.dimension_semantics<parallel>], iteration_bounds = array<i64: 2, 1>, scalar_prefetch = 0 : i64, scratch_operands = 0 : i64, tpu.core_type = #tpu.core_type<tc>, window_params = [{transform_indices = @transform_0, window_bounds = array<i64: 1, 64, 128>}, {transform_indices = @transform_1, window_bounds = array<i64: 1, 1, 128>}, {transform_indices = @transform_2, window_bounds = array<i64: 1, 1, 128>}, {transform_indices = @transform_3, window_bounds = array<i64: 1, 64, 128>}, {transform_indices = @transform_4, window_bounds = array<i64: 1, 64, 128>}]} {
    %c0 = arith.constant 0 : index
    %c0_0 = arith.constant 0 : index
    %c0_1 = arith.constant 0 : index
    %0 = vector.load %arg3[%c0, %c0_0, %c0_1] : memref<1x1x128xf32, #tpu.memory_space<vmem>>, vector<1x1x128xf32>
    %1 = vector.shape_cast %0 : vector<1x1x128xf32> to vector<1x128xf32>
    %cst = arith.constant 1.562500e-02 : f32
    %2 = vector.broadcast %cst : f32 to vector<1x128xf32>
    %3 = arith.mulf %1, %2 : vector<1x128xf32>
    %c0_2 = arith.constant 0 : index
    %c0_3 = arith.constant 0 : index
    %c0_4 = arith.constant 0 : index
    %4 = vector.load %arg4[%c0_2, %c0_3, %c0_4] : memref<1x1x128xf32, #tpu.memory_space<vmem>>, vector<1x1x128xf32>
    %5 = vector.shape_cast %4 : vector<1x1x128xf32> to vector<1x128xf32>
    %cst_5 = arith.constant 1.562500e-02 : f32
    %6 = vector.broadcast %cst_5 : f32 to vector<1x128xf32>
    %7 = arith.mulf %5, %6 : vector<1x128xf32>
    %8 = arith.mulf %3, %3 : vector<1x128xf32>
    %9 = arith.subf %7, %8 : vector<1x128xf32>
    %cst_6 = arith.constant 0.000000e+00 : f32
    %10 = vector.broadcast %cst_6 : f32 to vector<1x128xf32>
    %11 = arith.maximumf %9, %10 : vector<1x128xf32>
    %cst_7 = arith.constant 9.99999974E-6 : f32
    %12 = vector.broadcast %cst_7 : f32 to vector<1x128xf32>
    %13 = arith.addf %11, %12 : vector<1x128xf32>
    %14 = math.rsqrt %13 : vector<1x128xf32>
    %c0_8 = arith.constant 0 : index
    %c0_9 = arith.constant 0 : index
    %c0_10 = arith.constant 0 : index
    %15 = vector.load %arg2[%c0_8, %c0_9, %c0_10] : memref<1x64x128xbf16, #tpu.memory_space<vmem>>, vector<1x64x128xbf16>
    %16 = vector.shape_cast %15 : vector<1x64x128xbf16> to vector<64x128xbf16>
    %17 = arith.extf %16 : vector<64x128xbf16> to vector<64x128xf32>
    %18 = vector.broadcast %3 : vector<1x128xf32> to vector<64x128xf32>
    %19 = arith.subf %17, %18 : vector<64x128xf32>
    %20 = vector.broadcast %14 : vector<1x128xf32> to vector<64x128xf32>
    %21 = arith.mulf %19, %20 : vector<64x128xf32>
    %cst_11 = arith.constant 0.000000e+00 : f32
    %22 = vector.broadcast %cst_11 : f32 to vector<64x128xf32>
    %23 = arith.maximumf %21, %22 : vector<64x128xf32>
    %c0_12 = arith.constant 0 : index
    %c0_13 = arith.constant 0 : index
    %c0_14 = arith.constant 0 : index
    %24 = vector.load %arg5[%c0_12, %c0_13, %c0_14] : memref<1x64x128xbf16, #tpu.memory_space<vmem>>, vector<1x64x128xbf16>
    %25 = vector.shape_cast %24 : vector<1x64x128xbf16> to vector<64x128xbf16>
    %26 = arith.extf %25 : vector<64x128xbf16> to vector<64x128xf32>
    %27 = arith.addf %23, %26 : vector<64x128xf32>
    %cst_15 = arith.constant 0.000000e+00 : f32
    %28 = vector.broadcast %cst_15 : f32 to vector<64x128xf32>
    %29 = arith.maximumf %27, %28 : vector<64x128xf32>
    %30 = arith.truncf %29 : vector<64x128xf32> to vector<64x128xbf16>
    %c0_16 = arith.constant 0 : index
    %c0_17 = arith.constant 0 : index
    %c0_18 = arith.constant 0 : index
    %31 = vector.load %arg6[%c0_16, %c0_17, %c0_18] : memref<1x64x128xbf16, #tpu.memory_space<vmem>>, vector<1x64x128xbf16>
    %32 = vector.shape_cast %31 : vector<1x64x128xbf16> to vector<64x128xbf16>
    %33 = vector.shape_cast %30 : vector<64x128xbf16> to vector<1x64x128xbf16>
    tpu.vector_store %arg6[%c0_16, %c0_17, %c0_18], %33 {strides = array<i32>} : memref<1x64x128xbf16, #tpu.memory_space<vmem>>, vector<1x64x128xbf16>,
    return
  }
  func.func @transform_0(%arg0: i32, %arg1: i32) -> (i32, i32, i32) {
    %c0_i32 = arith.constant 0 : i32
    %c0_i32_0 = arith.constant 0 : i32
    return %arg0, %arg1, %c0_i32 : i32, i32, i32
  }
  func.func @transform_1(%arg0: i32, %arg1: i32) -> (i32, i32, i32) {
    %c0_i32 = arith.constant 0 : i32
    %c0_i32_0 = arith.constant 0 : i32
    %c0_i32_1 = arith.constant 0 : i32
    return %arg0, %c0_i32, %c0_i32_0 : i32, i32, i32
  }
  func.func @transform_2(%arg0: i32, %arg1: i32) -> (i32, i32, i32) {
    %c0_i32 = arith.constant 0 : i32
    %c0_i32_0 = arith.constant 0 : i32
    %c0_i32_1 = arith.constant 0 : i32
    return %arg0, %c0_i32, %c0_i32_0 : i32, i32, i32
  }
  func.func @transform_3(%arg0: i32, %arg1: i32) -> (i32, i32, i32) {
    %c0_i32 = arith.constant 0 : i32
    %c0_i32_0 = arith.constant 0 : i32
    return %arg0, %arg1, %c0_i32 : i32, i32, i32
  }
  func.func @transform_4(%arg0: i32, %arg1: i32) -> (i32, i32, i32) {
    %c0_i32 = arith.constant 0 : i32
    %c0_i32_0 = arith.constant 0 : i32
    return %arg0, %arg1, %c0_i32 : i32, i32, i32
  }
}

module attributes {stable_mosaic.version = 11 : i64} {
  func.func @_gemm_bias_kernel(%arg0: i32, %arg1: memref<256x128xbf16, #tpu.memory_space<vmem>>, %arg2: memref<128x256xbf16, #tpu.memory_space<vmem>>, %arg3: memref<1x256xf32, #tpu.memory_space<vmem>>, %arg4: memref<256x256xf32, #tpu.memory_space<vmem>>) attributes {dimension_semantics = [#tpu.dimension_semantics<parallel>], iteration_bounds = array<i64: 1>, scalar_prefetch = 0 : i64, scratch_operands = 0 : i64, tpu.core_type = #tpu.core_type<tc>, window_params = [{transform_indices = @transform_0, window_bounds = array<i64: 256, 128>}, {pipeline_mode = #tpu.pipeline_mode<synchronous>, transform_indices = @transform_1, window_bounds = array<i64: 128, 256>}, {pipeline_mode = #tpu.pipeline_mode<synchronous>, transform_indices = @transform_2, window_bounds = array<i64: 1, 256>}, {transform_indices = @transform_3, window_bounds = array<i64: 256, 256>}]} {
    %c0 = arith.constant 0 : index
    %c0_0 = arith.constant 0 : index
    %0 = vector.load %arg1[%c0, %c0_0] : memref<256x128xbf16, #tpu.memory_space<vmem>>, vector<256x128xbf16>
    %c0_1 = arith.constant 0 : index
    %c0_2 = arith.constant 0 : index
    %1 = vector.load %arg2[%c0_1, %c0_2] : memref<128x256xbf16, #tpu.memory_space<vmem>>, vector<128x256xbf16>
    %cst = arith.constant dense<0.000000e+00> : vector<256x256xf32>
    %2 = tpu.matmul %0, %1, %cst {dimension_numbers = #tpu.dot_dimension_numbers<[1], [0], [0], [1], [0, 0, 1, 1], [], []>} : vector<256x128xbf16>, vector<128x256xbf16>, vector<256x256xf32> -> vector<256x256xf32>
    %c0_3 = arith.constant 0 : index
    %c0_4 = arith.constant 0 : index
    %3 = vector.load %arg3[%c0_3, %c0_4] : memref<1x256xf32, #tpu.memory_space<vmem>>, vector<1x256xf32>
    %4 = vector.broadcast %3 : vector<1x256xf32> to vector<256x256xf32>
    %5 = arith.addf %2, %4 : vector<256x256xf32>
    %c0_5 = arith.constant 0 : index
    %c0_6 = arith.constant 0 : index
    %6 = vector.load %arg4[%c0_5, %c0_6] : memref<256x256xf32, #tpu.memory_space<vmem>>, vector<256x256xf32>
    tpu.vector_store %arg4[%c0_5, %c0_6], %5 {strides = array<i32>} : memref<256x256xf32, #tpu.memory_space<vmem>>, vector<256x256xf32>,
    return
  }
  func.func @transform_0(%arg0: i32) -> (i32, i32) {
    %c0_i32 = arith.constant 0 : i32
    %c0_i32_0 = arith.constant 0 : i32
    return %arg0, %c0_i32 : i32, i32
  }
  func.func @transform_1(%arg0: i32) -> (i32, i32) {
    %c0_i32 = arith.constant 0 : i32
    %c0_i32_0 = arith.constant 0 : i32
    %c0_i32_1 = arith.constant 0 : i32
    return %c0_i32, %c0_i32_0 : i32, i32
  }
  func.func @transform_2(%arg0: i32) -> (i32, i32) {
    %c0_i32 = arith.constant 0 : i32
    %c0_i32_0 = arith.constant 0 : i32
    %c0_i32_1 = arith.constant 0 : i32
    return %c0_i32, %c0_i32_0 : i32, i32
  }
  func.func @transform_3(%arg0: i32) -> (i32, i32) {
    %c0_i32 = arith.constant 0 : i32
    %c0_i32_0 = arith.constant 0 : i32
    return %arg0, %c0_i32 : i32, i32
  }
}

module attributes {stable_mosaic.version = 11 : i64} {
  func.func @_gemm_bias_kernel(%arg0: i32, %arg1: memref<256x128xbf16, #tpu.memory_space<vmem>>, %arg2: memref<128x256xbf16, #tpu.memory_space<vmem>>, %arg3: memref<1x256xf32, #tpu.memory_space<vmem>>, %arg4: memref<256x256xf32, #tpu.memory_space<vmem>>) attributes {dimension_semantics = [#tpu.dimension_semantics<parallel>], iteration_bounds = array<i64: 2>, scalar_prefetch = 0 : i64, scratch_operands = 0 : i64, tpu.core_type = #tpu.core_type<tc>, window_params = [{transform_indices = @transform_0, window_bounds = array<i64: 256, 128>}, {pipeline_mode = #tpu.pipeline_mode<synchronous>, transform_indices = @transform_1, window_bounds = array<i64: 128, 256>}, {pipeline_mode = #tpu.pipeline_mode<synchronous>, transform_indices = @transform_2, window_bounds = array<i64: 1, 256>}, {transform_indices = @transform_3, window_bounds = array<i64: 256, 256>}]} {
    %c0 = arith.constant 0 : index
    %c0_0 = arith.constant 0 : index
    %0 = vector.load %arg1[%c0, %c0_0] : memref<256x128xbf16, #tpu.memory_space<vmem>>, vector<256x128xbf16>
    %c0_1 = arith.constant 0 : index
    %c0_2 = arith.constant 0 : index
    %1 = vector.load %arg2[%c0_1, %c0_2] : memref<128x256xbf16, #tpu.memory_space<vmem>>, vector<128x256xbf16>
    %cst = arith.constant dense<0.000000e+00> : vector<256x256xf32>
    %2 = tpu.matmul %0, %1, %cst {dimension_numbers = #tpu.dot_dimension_numbers<[1], [0], [0], [1], [0, 0, 1, 1], [], []>} : vector<256x128xbf16>, vector<128x256xbf16>, vector<256x256xf32> -> vector<256x256xf32>
    %c0_3 = arith.constant 0 : index
    %c0_4 = arith.constant 0 : index
    %3 = vector.load %arg3[%c0_3, %c0_4] : memref<1x256xf32, #tpu.memory_space<vmem>>, vector<1x256xf32>
    %4 = vector.broadcast %3 : vector<1x256xf32> to vector<256x256xf32>
    %5 = arith.addf %2, %4 : vector<256x256xf32>
    %c0_5 = arith.constant 0 : index
    %c0_6 = arith.constant 0 : index
    %6 = vector.load %arg4[%c0_5, %c0_6] : memref<256x256xf32, #tpu.memory_space<vmem>>, vector<256x256xf32>
    tpu.vector_store %arg4[%c0_5, %c0_6], %5 {strides = array<i32>} : memref<256x256xf32, #tpu.memory_space<vmem>>, vector<256x256xf32>,
    return
  }
  func.func @transform_0(%arg0: i32) -> (i32, i32) {
    %c0_i32 = arith.constant 0 : i32
    %c0_i32_0 = arith.constant 0 : i32
    return %arg0, %c0_i32 : i32, i32
  }
  func.func @transform_1(%arg0: i32) -> (i32, i32) {
    %c0_i32 = arith.constant 0 : i32
    %c0_i32_0 = arith.constant 0 : i32
    %c0_i32_1 = arith.constant 0 : i32
    return %c0_i32, %c0_i32_0 : i32, i32
  }
  func.func @transform_2(%arg0: i32) -> (i32, i32) {
    %c0_i32 = arith.constant 0 : i32
    %c0_i32_0 = arith.constant 0 : i32
    %c0_i32_1 = arith.constant 0 : i32
    return %c0_i32, %c0_i32_0 : i32, i32
  }
  func.func @transform_3(%arg0: i32) -> (i32, i32) {
    %c0_i32 = arith.constant 0 : i32
    %c0_i32_0 = arith.constant 0 : i32
    return %arg0, %c0_i32 : i32, i32
  }
}

</mosaic_0001>

<llo_original>
// kernel: crestereo_forward.48
$region0: #{crestereo_forward.48}
  #allocation0 [shape = 'u32[]', space=smem, size = 0x4, offset = 0x4, fixed_abs, tag = 'smem constant byte address 0x4 - core index']
  #allocation1 [shape = 'u32[144,128]{1,0:T(1,128)}', space=vmem, size = 0x12000, scoped, tag = 'internal scratch']
  %s0 = inlined_call_operand.vmem [shape: bf16[2,256,128], index: 0, kind: input, shape index: {}]
  %s1 = inlined_call_operand.vmem [shape: f32[2,1,128], index: 1, kind: output, shape index: {0}]
  %s2 = inlined_call_operand.vmem [shape: f32[2,1,128], index: 2, kind: output, shape index: {1}]
  %3 = xla_tuple %s1, %s2
  %s4 = sld [smem:[#allocation0]]
  $region49: #{crestereo_forward.48} parent=0
    _
  %s6 = ssub.s32 1, %s4
  %s7 = scalar_select 0, %s6, %s4
  loop: start=0, step=1, limit=4
  $region2: #{crestereo_forward.48} parent=0 // loop_pre_header
    _
  $region3: #{crestereo_forward.48} parent=0 // loop_header
    %s9 = sphi 0, %s13
    %p10 = scmp.ge.s32.totalorder %s9, 4
    %s16 = sphi 0, %s28
    %s17 = sphi 0, %s24
    %s18 = sphi 0, %s16
    %s19 = sphi 0, %s17
    %s20 = sphi 0, %s18
    %s21 = sphi 0, %s19
    %s33 = sphi 0, %s35
    %s36 = sphi 0, %s33
    %s37 = sphi 0, %s36
    %s53 = sphi 0, %s37
    %s59 = sphi 0, %s61
    %s62 = sphi 0, %s59
    %s63 = sphi 0, %s62
    %s79 = sphi 0, %s63
    %s85 = sphi 0, %s87
    %s88 = sphi 0, %s85
    %s89 = sphi 0, %s88
    %s105 = sphi 0, %s89
  $region4: #{crestereo_forward.48} parent=0 // loop_header_branch
    %12 = sbr.rel (%p10) target = $region8
  $region5: #{crestereo_forward.48} parent=0 // loop_body
    %s14 = ssub.s32 %s9, 1
    %s15 = ssub.s32 %s9, 2
    %s22 = sadd.s32 1, %s17
    %p23 = scmp.ge.s32.totalorder %s22, 1
    %s24 = scalar_select %p23, 0, %s22
    %s25 = sadd.s32 1, %s16
    %s26 = scalar_select %p23, %s25, %s16
    %p27 = scmp.ge.s32.totalorder %s26, 2
    %s28 = scalar_select %p27, 0, %s26
    %s29 = ssub.s32 %s16, %s28
    %s30 = ssub.s32 %s17, %s24
    %s31 = sor.u32 %s29, %s30
    %p32 = scmp.eq.s32.totalorder %s31, 0
    %s34 = sadd.s32 %s33, 1
    %s35 = scalar_select %p32, %s33, %s34
    %p38 = pneg %p32
    %p39 = scmp.eq.s32.totalorder %s9, 1
    %p40 = por %p38, %p39
    %p41 = scmp.ne.s32.totalorder %s33, %s36
    %p42 = scmp.eq.s32.totalorder %s9, 0
    %p43 = por %p41, %p42
    %p44 = scmp.ne.s32.totalorder %s33, %s36
    %p45 = scmp.eq.s32.totalorder %s14, 1
    %p46 = por %p44, %p45
    %p47 = scmp.ne.s32.totalorder %s36, %s37
    %p48 = scmp.eq.s32.totalorder %s14, 0
    %p49 = por %p47, %p48
    %p50 = scmp.ne.s32.totalorder %s36, %s37
    %p51 = scmp.eq.s32.totalorder %s15, 1
    %p52 = por %p50, %p51
    %p54 = scmp.ne.s32.totalorder %s37, %s53
    %p55 = scmp.eq.s32.totalorder %s15, 0
    %p56 = por %p54, %p55
    %s57 = ssub.s32 %s16, %s28
    %p58 = scmp.eq.s32.totalorder %s57, 0
    %s60 = sadd.s32 %s59, 1
    %s61 = scalar_select %p58, %s59, %s60
    %p64 = pneg %p58
    %p65 = scmp.eq.s32.totalorder %s9, 1
    %p66 = por %p64, %p65
    %p67 = scmp.ne.s32.totalorder %s59, %s62
    %p68 = scmp.eq.s32.totalorder %s9, 0
    %p69 = por %p67, %p68
    %p70 = scmp.ne.s32.totalorder %s59, %s62
    %p71 = scmp.eq.s32.totalorder %s14, 1
    %p72 = por %p70, %p71
    %p73 = scmp.ne.s32.totalorder %s62, %s63
    %p74 = scmp.eq.s32.totalorder %s14, 0
    %p75 = por %p73, %p74
    %p76 = scmp.ne.s32.totalorder %s62, %s63
    %p77 = scmp.eq.s32.totalorder %s15, 1
    %p78 = por %p76, %p77
    %p80 = scmp.ne.s32.totalorder %s63, %s79
    %p81 = scmp.eq.s32.totalorder %s15, 0
    %p82 = por %p80, %p81
    %s83 = ssub.s32 %s16, %s28
    %p84 = scmp.eq.s32.totalorder %s83, 0
    %s86 = sadd.s32 %s85, 1
    %s87 = scalar_select %p84, %s85, %s86
    %p90 = pneg %p84
    %p91 = scmp.eq.s32.totalorder %s9, 1
    %p92 = por %p90, %p91
    %p93 = scmp.ne.s32.totalorder %s85, %s88
    %p94 = scmp.eq.s32.totalorder %s9, 0
    %p95 = por %p93, %p94
    %p96 = scmp.ne.s32.totalorder %s85, %s88
    %p97 = scmp.eq.s32.totalorder %s14, 1
    %p98 = por %p96, %p97
    %p99 = scmp.ne.s32.totalorder %s88, %s89
    %p100 = scmp.eq.s32.totalorder %s14, 0
    %p101 = por %p99, %p100
    %p102 = scmp.ne.s32.totalorder %s88, %s89
    %p103 = scmp.eq.s32.totalorder %s15, 1
    %p104 = por %p102, %p103
    %p106 = scmp.ne.s32.totalorder %s89, %s105
    %p107 = scmp.eq.s32.totalorder %s15, 0
    %p108 = por %p106, %p107
    %p109 = scmp.le.s32.totalorder 1, %s9
    %p110 = scmp.lt.s32.totalorder %s9, 3
    %p111 = pnand %p109, %p110
    %p112 = pneg %p111
    // Predicated region
    $region9: #{crestereo_forward.48} parent=5 // pred_check
      _
    $region10: #{crestereo_forward.48} parent=5 // pred_check_branch
      %114 = sbr.rel (%p111) target = $region12
    $region11: #{crestereo_forward.48} parent=5 // pred_region
      %s115 = ssub.s32 %s9, 1
    $region12: #{crestereo_forward.48} parent=5 // pred_fallthru
      _
    %p116 = scmp.lt.s32.totalorder %s9, 2
    // Predicated region
    $region13: #{crestereo_forward.48} parent=5 // pred_check
      %p117 = pneg %p116
    $region14: #{crestereo_forward.48} parent=5 // pred_check_branch
      %119 = sbr.rel (%p117) target = $region16
    $region15: #{crestereo_forward.48} parent=5 // pred_region
      // Predicated region
      $region17: #{crestereo_forward.48} parent=15 // pred_check
        %p120 = pneg %p43
      $region18: #{crestereo_forward.48} parent=15 // pred_check_branch
        %122 = sbr.rel (%p120) target = $region20
      $region19: #{crestereo_forward.48} parent=15 // pred_region
        %s123 = smul.u32 32, %s17
        %p124 = scmp.lt.s32.totalorder %s16, 1
        %s125 = scalar_select %p124, %s16, 1
        %p126 = scmp.lt.s32.totalorder %s123, 31
        %s127 = scalar_select %p126, %s123, 31
        %s128 = smul.addr %s125, 32
        %s129 = sadd.s32 %s127, %s128
        %s130 = smul.addr %s129, 4
        %s131 = scalar_lea.vmem %s0, %s130
        %s132 = smul.u32 32, %s17
      $region20: #{crestereo_forward.48} parent=15 // pred_fallthru
        _
    $region16: #{crestereo_forward.48} parent=5 // pred_fallthru
      _
    %p133 = scmp.le.s32.totalorder 1, %s9
    %p134 = scmp.lt.s32.totalorder %s9, 3
    %p135 = pnand %p133, %p134
    %p136 = pneg %p135
    // Predicated region
    $region21: #{crestereo_forward.48} parent=5 // pred_check
      _
    $region22: #{crestereo_forward.48} parent=5 // pred_check_branch
      %138 = sbr.rel (%p135) target = $region24
    $region23: #{crestereo_forward.48} parent=5 // pred_region
      %s139 = ssub.s32 %s9, 1
      %s140 = smul.u32 32, %s19
      %p141 = scmp.lt.s32.totalorder %s18, 1
      %s142 = scalar_select %p141, %s18, 1
      %p143 = scmp.lt.s32.totalorder %s140, 31
      %s144 = scalar_select %p143, %s140, 31
      %s145 = smul.addr %s142, 32
      %s146 = sadd.s32 %s144, %s145
      %s147 = smul.addr %s146, 4
      %s148 = scalar_lea.vmem %s0, %s147
      %p149 = pneg %p49
      %p150 = pneg %p46
      %p151 = pneg %p75
      %p152 = pneg %p72
      %p153 = scmp.lt.s32.totalorder %s18, 1
      %s154 = scalar_select %p153, %s18, 1
      %s155 = scalar_lea.vmem %s1, %s154
      %p156 = pneg %p101
      %p157 = pneg %p98
      %p158 = scmp.lt.s32.totalorder %s18, 1
      %s159 = scalar_select %p158, %s18, 1
      %s160 = scalar_lea.vmem %s2, %s159
      %s161 = smul.u32 32, %s19
      %p162 = scmp.lt.s32.totalorder %s18, 1
      %s163 = scalar_select %p162, %s18, 1
      %p164 = scmp.lt.s32.totalorder %s161, 31
      %s165 = scalar_select %p164, %s161, 31
      %s166 = smul.addr %s163, 32
      %s167 = sadd.s32 %s165, %s166
      %s168 = smul.addr %s167, 4
      %s169 = scalar_lea.vmem %s0, %s168
      %s170 = smul.u32 32, %s19
      %p171 = scmp.lt.s32.totalorder %s18, 1
      %s172 = scalar_select %p171, %s18, 1
      %s173 = scalar_lea.vmem %s1, %s172
      %p174 = scmp.lt.s32.totalorder %s18, 1
      %s175 = scalar_select %p174, %s18, 1
      %s176 = scalar_lea.vmem %s2, %s175
      %p177 = scmp.eq.s32.totalorder %s19, 0
      // Predicated region
      $region25: #{crestereo_forward.48} parent=23 // pred_check
        %p178 = pneg %p177
      $region26: #{crestereo_forward.48} parent=23 // pred_check_branch
        %180 = sbr.rel (%p178) target = $region28
      $region27: #{crestereo_forward.48} parent=23 // pred_region
        %181 = vst [vmem:[%s173] sm:$0x1] 0.0
        %182 = vst [vmem:[%s176] sm:$0x1] 0.0
      $region28: #{crestereo_forward.48} parent=23 // pred_fallthru
        _
      %v183 = vld [vmem:[%s169] sm:$0xf]
      %v184 = vld [vmem:[%s169 + $0x4] sm:$0xf]
      %v185 = vld [vmem:[%s169 + $0x8] sm:$0xf]
      %v186 = vld [vmem:[%s169 + $0xc] sm:$0xf]
      %v187 = vld [vmem:[%s169 + $0x10] sm:$0xf]
      %v188 = vld [vmem:[%s169 + $0x14] sm:$0xf]
      %v189 = vld [vmem:[%s169 + $0x18] sm:$0xf]
      %v190 = vld [vmem:[%s169 + $0x1c] sm:$0xf]
      %v191 = vld [vmem:[%s169 + $0x20] sm:$0xf]
      %v192 = vld [vmem:[%s169 + $0x24] sm:$0xf]
      %v193 = vld [vmem:[%s169 + $0x28] sm:$0xf]
      %v194 = vld [vmem:[%s169 + $0x2c] sm:$0xf]
      %v195 = vld [vmem:[%s169 + $0x30] sm:$0xf]
      %v196 = vld [vmem:[%s169 + $0x34] sm:$0xf]
      %v197 = vld [vmem:[%s169 + $0x38] sm:$0xf]
      %v198 = vld [vmem:[%s169 + $0x3c] sm:$0xf]
      %v199 = vld [vmem:[%s169 + $0x40] sm:$0xf]
      %v200 = vld [vmem:[%s169 + $0x44] sm:$0xf]
      %v201 = vld [vmem:[%s169 + $0x48] sm:$0xf]
      %v202 = vld [vmem:[%s169 + $0x4c] sm:$0xf]
      %v203 = vld [vmem:[%s169 + $0x50] sm:$0xf]
      %v204 = vld [vmem:[%s169 + $0x54] sm:$0xf]
      %v205 = vld [vmem:[%s169 + $0x58] sm:$0xf]
      %v206 = vld [vmem:[%s169 + $0x5c] sm:$0xf]
      %v207 = vld [vmem:[%s169 + $0x60] sm:$0xf]
      %v208 = vld [vmem:[%s169 + $0x64] sm:$0xf]
      %v209 = vld [vmem:[%s169 + $0x68] sm:$0xf]
      %v210 = vld [vmem:[%s169 + $0x6c] sm:$0xf]
      %v211 = vld [vmem:[%s169 + $0x70] sm:$0xf]
      %v212 = vld [vmem:[%s169 + $0x74] sm:$0xf]
      %v213 = vld [vmem:[%s169 + $0x78] sm:$0xf]
      %v214 = vld [vmem:[%s169 + $0x7c] sm:$0xf]
      %v215 = vunpack.c.l.bf16 %v183
      %v216 = vunpack.c.l.bf16 %v184
      %v217 = vunpack.c.l.bf16 %v185
      %v218 = vunpack.c.l.bf16 %v186
      %v219 = vunpack.c.l.bf16 %v187
      %v220 = vunpack.c.l.bf16 %v188
      %v221 = vunpack.c.l.bf16 %v189
      %v222 = vunpack.c.l.bf16 %v190
      %v223 = vunpack.c.l.bf16 %v191
      %v224 = vunpack.c.l.bf16 %v192
      %v225 = vunpack.c.l.bf16 %v193
      %v226 = vunpack.c.l.bf16 %v194
      %v227 = vunpack.c.l.bf16 %v195
      %v228 = vunpack.c.l.bf16 %v196
      %v229 = vunpack.c.l.bf16 %v197
      %v230 = vunpack.c.l.bf16 %v198
      %v231 = vunpack.c.l.bf16 %v199
      %v232 = vunpack.c.l.bf16 %v200
      %v233 = vunpack.c.l.bf16 %v201
      %v234 = vunpack.c.l.bf16 %v202
      %v235 = vunpack.c.l.bf16 %v203
      %v236 = vunpack.c.l.bf16 %v204
      %v237 = vunpack.c.l.bf16 %v205
      %v238 = vunpack.c.l.bf16 %v206
      %v239 = vunpack.c.l.bf16 %v207
      %v240 = vunpack.c.l.bf16 %v208
      %v241 = vunpack.c.l.bf16 %v209
      %v242 = vunpack.c.l.bf16 %v210
      %v243 = vunpack.c.l.bf16 %v211
      %v244 = vunpack.c.l.bf16 %v212
      %v245 = vunpack.c.l.bf16 %v213
      %v246 = vunpack.c.l.bf16 %v214
      %v247 = vld [vmem:[%s173] sm:$0x1]
      %v248 = vadd.f32 %v215, %v216
      %v249 = vadd.f32 %v248, %v217
      %v250 = vadd.f32 %v249, %v218
      %v251 = vadd.f32 %v250, %v219
      %v252 = vadd.f32 %v251, %v220
      %v253 = vadd.f32 %v252, %v221
      %v254 = vadd.f32 %v253, %v222
      %v255 = vadd.f32 %v254, %v223
      %v256 = vadd.f32 %v255, %v224
      %v257 = vadd.f32 %v256, %v225
      %v258 = vadd.f32 %v257, %v226
      %v259 = vadd.f32 %v258, %v227
      %v260 = vadd.f32 %v259, %v228
      %v261 = vadd.f32 %v260, %v229
      %v262 = vadd.f32 %v261, %v230
      %v263 = vadd.f32 %v262, %v231
      %v264 = vadd.f32 %v263, %v232
      %v265 = vadd.f32 %v264, %v233
      %v266 = vadd.f32 %v265, %v234
      %v267 = vadd.f32 %v266, %v235
      %v268 = vadd.f32 %v267, %v236
      %v269 = vadd.f32 %v268, %v237
      %v270 = vadd.f32 %v269, %v238
      %v271 = vadd.f32 %v270, %v239
      %v272 = vadd.f32 %v271, %v240
      %v273 = vadd.f32 %v272, %v241
      %v274 = vadd.f32 %v273, %v242
      %v275 = vadd.f32 %v274, %v243
      %v276 = vadd.f32 %v275, %v244
      %v277 = vadd.f32 %v276, %v245
      %v278 = vadd.f32 %v277, %v246
      %v279 = vrot.slane %v278, 4
      %v280 = vadd.f32 %v278, %v279
      %v281 = vrot.slane %v280, 2
      %v282 = vadd.f32 %v280, %v281
      %v283 = vrot.slane %v282, 1
      %v284 = vadd.f32 %v282, %v283
      %v285 = vadd.f32 %v247, %v284
      %286 = vst [vmem:[%s173] sm:$0x1] %v285
      %v287 = vld [vmem:[%s176] sm:$0x1]
      %v288 = vmul.f32 %v215, %v215
      %v289 = vmul.f32 %v216, %v216
      %v290 = vmul.f32 %v217, %v217
      %v291 = vmul.f32 %v218, %v218
      %v292 = vmul.f32 %v219, %v219
      %v293 = vmul.f32 %v220, %v220
      %v294 = vmul.f32 %v221, %v221
      %v295 = vmul.f32 %v222, %v222
      %v296 = vmul.f32 %v223, %v223
      %v297 = vmul.f32 %v224, %v224
      %v298 = vmul.f32 %v225, %v225
      %v299 = vmul.f32 %v226, %v226
      %v300 = vmul.f32 %v227, %v227
      %v301 = vmul.f32 %v228, %v228
      %v302 = vmul.f32 %v229, %v229
      %v303 = vmul.f32 %v230, %v230
      %v304 = vmul.f32 %v231, %v231
      %v305 = vmul.f32 %v232, %v232
      %v306 = vmul.f32 %v233, %v233
      %v307 = vmul.f32 %v234, %v234
      %v308 = vmul.f32 %v235, %v235
      %v309 = vmul.f32 %v236, %v236
      %v310 = vmul.f32 %v237, %v237
      %v311 = vmul.f32 %v238, %v238
      %v312 = vmul.f32 %v239, %v239
      %v313 = vmul.f32 %v240, %v240
      %v314 = vmul.f32 %v241, %v241
      %v315 = vmul.f32 %v242, %v242
      %v316 = vmul.f32 %v243, %v243
      %v317 = vmul.f32 %v244, %v244
      %v318 = vmul.f32 %v245, %v245
      %v319 = vmul.f32 %v246, %v246
      %v320 = vadd.f32 %v288, %v289
      %v321 = vadd.f32 %v320, %v290
      %v322 = vadd.f32 %v321, %v291
      %v323 = vadd.f32 %v322, %v292
      %v324 = vadd.f32 %v323, %v293
      %v325 = vadd.f32 %v324, %v294
      %v326 = vadd.f32 %v325, %v295
      %v327 = vadd.f32 %v326, %v296
      %v328 = vadd.f32 %v327, %v297
      %v329 = vadd.f32 %v328, %v298
      %v330 = vadd.f32 %v329, %v299
      %v331 = vadd.f32 %v330, %v300
      %v332 = vadd.f32 %v331, %v301
      %v333 = vadd.f32 %v332, %v302
      %v334 = vadd.f32 %v333, %v303
      %v335 = vadd.f32 %v334, %v304
      %v336 = vadd.f32 %v335, %v305
      %v337 = vadd.f32 %v336, %v306
      %v338 = vadd.f32 %v337, %v307
      %v339 = vadd.f32 %v338, %v308
      %v340 = vadd.f32 %v339, %v309
      %v341 = vadd.f32 %v340, %v310
      %v342 = vadd.f32 %v341, %v311
      %v343 = vadd.f32 %v342, %v312
      %v344 = vadd.f32 %v343, %v313
      %v345 = vadd.f32 %v344, %v314
      %v346 = vadd.f32 %v345, %v315
      %v347 = vadd.f32 %v346, %v316
      %v348 = vadd.f32 %v347, %v317
      %v349 = vadd.f32 %v348, %v318
      %v350 = vadd.f32 %v349, %v319
      %v351 = vrot.slane %v350, 4
      %v352 = vadd.f32 %v350, %v351
      %v353 = vrot.slane %v352, 2
      %v354 = vadd.f32 %v352, %v353
      %v355 = vrot.slane %v354, 1
      %v356 = vadd.f32 %v354, %v355
      %v357 = vadd.f32 %v287, %v356
      %358 = vst [vmem:[%s176] sm:$0x1] %v357
      %p359 = scmp.lt.s32.totalorder %s18, 1
      %s360 = scalar_select %p359, %s18, 1
      %s361 = scalar_lea.vmem %s1, %s360
      %p362 = scmp.lt.s32.totalorder %s18, 1
      %s363 = scalar_select %p362, %s18, 1
      %s364 = scalar_lea.vmem %s2, %s363
      // Predicated region
      $region29: #{crestereo_forward.48} parent=23 // pred_check
        %p365 = pneg %p72
      $region30: #{crestereo_forward.48} parent=23 // pred_check_branch
        %367 = sbr.rel (%p365) target = $region32
      $region31: #{crestereo_forward.48} parent=23 // pred_region
        _
      $region32: #{crestereo_forward.48} parent=23 // pred_fallthru
        _
      // Predicated region
      $region33: #{crestereo_forward.48} parent=23 // pred_check
        %p368 = pneg %p98
      $region34: #{crestereo_forward.48} parent=23 // pred_check_branch
        %370 = sbr.rel (%p368) target = $region36
      $region35: #{crestereo_forward.48} parent=23 // pred_region
        _
      $region36: #{crestereo_forward.48} parent=23 // pred_fallthru
        _
    $region24: #{crestereo_forward.48} parent=5 // pred_fallthru
      _
    %p371 = scmp.le.s32.totalorder 2, %s9
    // Predicated region
    $region37: #{crestereo_forward.48} parent=5 // pred_check
      %p372 = pneg %p371
    $region38: #{crestereo_forward.48} parent=5 // pred_check_branch
      %374 = sbr.rel (%p372) target = $region40
    $region39: #{crestereo_forward.48} parent=5 // pred_region
      %s375 = ssub.s32 %s9, 2
      // Predicated region
      $region41: #{crestereo_forward.48} parent=39 // pred_check
        %p376 = pneg %p78
      $region42: #{crestereo_forward.48} parent=39 // pred_check_branch
        %378 = sbr.rel (%p376) target = $region44
      $region43: #{crestereo_forward.48} parent=39 // pred_region
        %p379 = scmp.lt.s32.totalorder %s20, 1
        %s380 = scalar_select %p379, %s20, 1
        %s381 = scalar_lea.vmem %s1, %s380
      $region44: #{crestereo_forward.48} parent=39 // pred_fallthru
        _
      // Predicated region
      $region45: #{crestereo_forward.48} parent=39 // pred_check
        %p382 = pneg %p104
      $region46: #{crestereo_forward.48} parent=39 // pred_check_branch
        %384 = sbr.rel (%p382) target = $region48
      $region47: #{crestereo_forward.48} parent=39 // pred_region
        %p385 = scmp.lt.s32.totalorder %s20, 1
        %s386 = scalar_select %p385, %s20, 1
        %s387 = scalar_lea.vmem %s2, %s386
      $region48: #{crestereo_forward.48} parent=39 // pred_fallthru
        _
    $region40: #{crestereo_forward.48} parent=5 // pred_fallthru
      _
  $region6: #{crestereo_forward.48} parent=0 // loop_footer
    %s13 = sadd.s32 1, %s9
  $region7: #{crestereo_forward.48} parent=0 // loop_footer_branch
    %8 = sbr.rel target = $region3
  $region8: #{crestereo_forward.48} parent=0 // loop_exit
    _

// kernel: crestereo_forward.47
$region0: #{crestereo_forward.47}
  #allocation0 [shape = 'u32[]', space=smem, size = 0x4, offset = 0x4, fixed_abs, tag = 'smem constant byte address 0x4 - core index']
  #allocation1 [shape = 'u32[144,128]{1,0:T(1,128)}', space=vmem, size = 0x12000, scoped, tag = 'internal scratch']
  #allocation2 [shape = 'f32[16,128]{1,0:T(8,128)}', space=vmem, size = 0x2000, scoped, tag = 'scratch operand']
  %s0 = inlined_call_operand.vmem [shape: bf16[76,2,19,8], index: 0, kind: input, shape index: {}]
  %s1 = inlined_call_operand.vmem [shape: bf16[49,8,128], index: 1, kind: input, shape index: {}]
  %s2 = inlined_call_operand.vmem [shape: f32[1,128], index: 2, kind: input, shape index: {}]
  %s3 = inlined_call_operand.vmem [shape: bf16[32,16,128], index: 3, kind: output, shape index: {}]
  %s4 = sld [smem:[#allocation0]]
  $region53: #{crestereo_forward.47} parent=0
    _
  %s6 = ssub.s32 1, %s4
  %s7 = scalar_select 0, %s6, %s4
  loop: start=0, step=1, limit=226
  $region2: #{crestereo_forward.47} parent=0 // loop_pre_header
    _
  $region3: #{crestereo_forward.47} parent=0 // loop_header
    %s9 = sphi 0, %s13
    %p10 = scmp.ge.s32.totalorder %s9, 226
    %s16 = sphi 0, %s35
    %s17 = sphi 0, %s31
    %s18 = sphi 0, %s27
    %s19 = sphi 0, %s16
    %s20 = sphi 0, %s17
    %s21 = sphi 0, %s18
    %s22 = sphi 0, %s19
    %s23 = sphi 0, %s20
    %s24 = sphi 0, %s21
    %s46 = sphi 0, %s48
    %s49 = sphi 0, %s46
    %s50 = sphi 0, %s49
    %s66 = sphi 0, %s50
    %s70 = sphi 0, %s70
    %s72 = sphi 0, %s70
    %s73 = sphi 0, %s72
    %s87 = sphi 0, %s73
    %s91 = sphi 0, %s91
    %s93 = sphi 0, %s91
    %s94 = sphi 0, %s93
    %s108 = sphi 0, %s94
    %s118 = sphi 0, %s120
    %s121 = sphi 0, %s118
    %s122 = sphi 0, %s121
    %s138 = sphi 0, %s122
  $region4: #{crestereo_forward.47} parent=0 // loop_header_branch
    %12 = sbr.rel (%p10) target = $region8
  $region5: #{crestereo_forward.47} parent=0 // loop_body
    %s14 = ssub.s32 %s9, 1
    %s15 = ssub.s32 %s9, 2
    %s25 = sadd.s32 1, %s18
    %p26 = scmp.ge.s32.totalorder %s25, 7
    %s27 = scalar_select %p26, 0, %s25
    %s28 = sadd.s32 1, %s17
    %s29 = scalar_select %p26, %s28, %s17
    %p30 = scmp.ge.s32.totalorder %s29, 16
    %s31 = scalar_select %p30, 0, %s29
    %s32 = sadd.s32 1, %s16
    %s33 = scalar_select %p30, %s32, %s16
    %p34 = scmp.ge.s32.totalorder %s33, 2
    %s35 = scalar_select %p34, 0, %s33
    %s36 = smul.u32 %s16, 38
    %s37 = smul.u32 %s17, 2
    %s38 = sadd.s32 %s36, %s37
    %s39 = sadd.s32 %s38, %s18
    %s40 = smul.u32 %s35, 38
    %s41 = smul.u32 %s31, 2
    %s42 = sadd.s32 %s40, %s41
    %s43 = sadd.s32 %s42, %s27
    %s44 = ssub.s32 %s39, %s43
    %p45 = scmp.eq.s32.totalorder %s44, 0
    %s47 = sadd.s32 %s46, 1
    %s48 = scalar_select %p45, %s46, %s47
    %p51 = pneg %p45
    %p52 = scmp.eq.s32.totalorder %s9, 223
    %p53 = por %p51, %p52
    %p54 = scmp.ne.s32.totalorder %s46, %s49
    %p55 = scmp.eq.s32.totalorder %s9, 0
    %p56 = por %p54, %p55
    %p57 = scmp.ne.s32.totalorder %s46, %s49
    %p58 = scmp.eq.s32.totalorder %s14, 223
    %p59 = por %p57, %p58
    %p60 = scmp.ne.s32.totalorder %s49, %s50
    %p61 = scmp.eq.s32.totalorder %s14, 0
    %p62 = por %p60, %p61
    %p63 = scmp.ne.s32.totalorder %s49, %s50
    %p64 = scmp.eq.s32.totalorder %s15, 223
    %p65 = por %p63, %p64
    %p67 = scmp.ne.s32.totalorder %s50, %s66
    %p68 = scmp.eq.s32.totalorder %s15, 0
    %p69 = por %p67, %p68
    %s71 = sadd.s32 %s70, 1
    %p74 = scmp.eq.s32.totalorder %s9, 223
    %p75 = scmp.ne.s32.totalorder %s70, %s72
    %p76 = scmp.eq.s32.totalorder %s9, 0
    %p77 = por %p75, %p76
    %p78 = scmp.ne.s32.totalorder %s70, %s72
    %p79 = scmp.eq.s32.totalorder %s14, 223
    %p80 = por %p78, %p79
    %p81 = scmp.ne.s32.totalorder %s72, %s73
    %p82 = scmp.eq.s32.totalorder %s14, 0
    %p83 = por %p81, %p82
    %p84 = scmp.ne.s32.totalorder %s72, %s73
    %p85 = scmp.eq.s32.totalorder %s15, 223
    %p86 = por %p84, %p85
    %p88 = scmp.ne.s32.totalorder %s73, %s87
    %p89 = scmp.eq.s32.totalorder %s15, 0
    %p90 = por %p88, %p89
    %s92 = sadd.s32 %s91, 1
    %p95 = scmp.eq.s32.totalorder %s9, 223
    %p96 = scmp.ne.s32.totalorder %s91, %s93
    %p97 = scmp.eq.s32.totalorder %s9, 0
    %p98 = por %p96, %p97
    %p99 = scmp.ne.s32.totalorder %s91, %s93
    %p100 = scmp.eq.s32.totalorder %s14, 223
    %p101 = por %p99, %p100
    %p102 = scmp.ne.s32.totalorder %s93, %s94
    %p103 = scmp.eq.s32.totalorder %s14, 0
    %p104 = por %p102, %p103
    %p105 = scmp.ne.s32.totalorder %s93, %s94
    %p106 = scmp.eq.s32.totalorder %s15, 223
    %p107 = por %p105, %p106
    %p109 = scmp.ne.s32.totalorder %s94, %s108
    %p110 = scmp.eq.s32.totalorder %s15, 0
    %p111 = por %p109, %p110
    %s112 = smul.u32 %s16, 16
    %s113 = sadd.s32 %s112, %s17
    %s114 = smul.u32 %s35, 16
    %s115 = sadd.s32 %s114, %s31
    %s116 = ssub.s32 %s113, %s115
    %p117 = scmp.eq.s32.totalorder %s116, 0
    %s119 = sadd.s32 %s118, 1
    %s120 = scalar_select %p117, %s118, %s119
    %p123 = pneg %p117
    %p124 = scmp.eq.s32.totalorder %s9, 223
    %p125 = por %p123, %p124
    %p126 = scmp.ne.s32.totalorder %s118, %s121
    %p127 = scmp.eq.s32.totalorder %s9, 0
    %p128 = por %p126, %p127
    %p129 = scmp.ne.s32.totalorder %s118, %s121
    %p130 = scmp.eq.s32.totalorder %s14, 223
    %p131 = por %p129, %p130
    %p132 = scmp.ne.s32.totalorder %s121, %s122
    %p133 = scmp.eq.s32.totalorder %s14, 0
    %p134 = por %p132, %p133
    %p135 = scmp.ne.s32.totalorder %s121, %s122
    %p136 = scmp.eq.s32.totalorder %s15, 223
    %p137 = por %p135, %p136
    %p139 = scmp.ne.s32.totalorder %s122, %s138
    %p140 = scmp.eq.s32.totalorder %s15, 0
    %p141 = por %p139, %p140
    %p142 = scmp.le.s32.totalorder 1, %s9
    %p143 = scmp.lt.s32.totalorder %s9, 225
    %p144 = pnand %p142, %p143
    %p145 = pneg %p144
    // Predicated region
    $region9: #{crestereo_forward.47} parent=5 // pred_check
      _
    $region10: #{crestereo_forward.47} parent=5 // pred_check_branch
      %147 = sbr.rel (%p144) target = $region12
    $region11: #{crestereo_forward.47} parent=5 // pred_region
      %s148 = ssub.s32 %s9, 1
      // Predicated region
      $region13: #{crestereo_forward.47} parent=11 // pred_check
        %p149 = pneg %p83
      $region14: #{crestereo_forward.47} parent=11 // pred_check_branch
        %151 = sbr.rel (%p149) target = $region16
      $region15: #{crestereo_forward.47} parent=11 // pred_region
        _
      $region16: #{crestereo_forward.47} parent=11 // pred_fallthru
        _
      // Predicated region
      $region17: #{crestereo_forward.47} parent=11 // pred_check
        %p152 = pneg %p104
      $region18: #{crestereo_forward.47} parent=11 // pred_check_branch
        %154 = sbr.rel (%p152) target = $region20
      $region19: #{crestereo_forward.47} parent=11 // pred_region
        _
      $region20: #{crestereo_forward.47} parent=11 // pred_fallthru
        _
    $region12: #{crestereo_forward.47} parent=5 // pred_fallthru
      _
    %p155 = scmp.lt.s32.totalorder %s9, 224
    // Predicated region
    $region21: #{crestereo_forward.47} parent=5 // pred_check
      %p156 = pneg %p155
    $region22: #{crestereo_forward.47} parent=5 // pred_check_branch
      %158 = sbr.rel (%p156) target = $region24
    $region23: #{crestereo_forward.47} parent=5 // pred_region
      // Predicated region
      $region25: #{crestereo_forward.47} parent=23 // pred_check
        %p159 = pneg %p56
      $region26: #{crestereo_forward.47} parent=23 // pred_check_branch
        %161 = sbr.rel (%p159) target = $region28
      $region27: #{crestereo_forward.47} parent=23 // pred_region
        %s162 = smul.u32 %s16, 38
        %s163 = smul.u32 %s17, 2
        %s164 = sadd.s32 %s162, %s163
        %s165 = sadd.s32 %s164, %s18
        %p166 = scmp.lt.s32.totalorder %s165, 75
        %s167 = scalar_select %p166, %s165, 75
        %s168 = smul.addr %s167, 6
        %s169 = smul.addr %s168, 4
        %s170 = scalar_lea.vmem %s0, %s169
        %s171 = smul.u32 %s16, 38
        %s172 = smul.u32 %s17, 2
        %s173 = sadd.s32 %s171, %s172
        %s174 = sadd.s32 %s173, %s18
      $region28: #{crestereo_forward.47} parent=23 // pred_fallthru
        _
    $region24: #{crestereo_forward.47} parent=5 // pred_fallthru
      _
    %p175 = scmp.le.s32.totalorder 1, %s9
    %p176 = scmp.lt.s32.totalorder %s9, 225
    %p177 = pnand %p175, %p176
    %p178 = pneg %p177
    // Predicated region
    $region29: #{crestereo_forward.47} parent=5 // pred_check
      _
    $region30: #{crestereo_forward.47} parent=5 // pred_check_branch
      %180 = sbr.rel (%p177) target = $region32
    $region31: #{crestereo_forward.47} parent=5 // pred_region
      %s181 = ssub.s32 %s9, 1
      %s182 = smul.u32 %s19, 38
      %s183 = smul.u32 %s20, 2
      %s184 = sadd.s32 %s182, %s183
      %s185 = sadd.s32 %s184, %s21
      %p186 = scmp.lt.s32.totalorder %s185, 75
      %s187 = scalar_select %p186, %s185, 75
      %s188 = smul.addr %s187, 6
      %s189 = smul.addr %s188, 4
      %s190 = scalar_lea.vmem %s0, %s189
      %p191 = pneg %p62
      %p192 = pneg %p59
      %p193 = pneg %p83
      %p194 = pneg %p80
      %p195 = pneg %p104
      %p196 = pneg %p101
      %p197 = pneg %p134
      %p198 = pneg %p131
      %s199 = smul.u32 %s19, 16
      %s200 = sadd.s32 %s199, %s20
      %p201 = scmp.lt.s32.totalorder %s200, 31
      %s202 = scalar_select %p201, %s200, 31
      %s203 = smul.addr %s202, 2
      %s204 = smul.addr %s203, 4
      %s205 = scalar_lea.vmem %s3, %s204
      %s206 = smul.u32 %s19, 38
      %s207 = smul.u32 %s20, 2
      %s208 = sadd.s32 %s206, %s207
      %s209 = sadd.s32 %s208, %s21
      %p210 = scmp.lt.s32.totalorder %s209, 75
      %s211 = scalar_select %p210, %s209, 75
      %s212 = smul.addr %s211, 6
      %s213 = smul.addr %s212, 4
      %s214 = scalar_lea.vmem %s0, %s213
      %s215 = smul.u32 %s19, 38
      %s216 = smul.u32 %s20, 2
      %s217 = sadd.s32 %s215, %s216
      %s218 = sadd.s32 %s217, %s21
      %s219 = smul.u32 %s19, 16
      %s220 = sadd.s32 %s219, %s20
      %p221 = scmp.lt.s32.totalorder %s220, 31
      %s222 = scalar_select %p221, %s220, 31
      %s223 = smul.addr %s222, 2
      %s224 = smul.addr %s223, 4
      %s225 = scalar_lea.vmem %s3, %s224
      %s226 = smul.u32 %s19, 16
      %s227 = sadd.s32 %s226, %s20
      %p229 = scmp.eq.s32.totalorder %s21, 0
      // Predicated region
      $region33: #{crestereo_forward.47} parent=31 // pred_check
        %p230 = pneg %p229
      $region34: #{crestereo_forward.47} parent=31 // pred_check_branch
        %232 = sbr.rel (%p230) target = $region36
      $region35: #{crestereo_forward.47} parent=31 // pred_region
        %233 = vst [vmem:[#allocation2] sm:$0xff] 0.0
        %234 = vst [vmem:[#allocation2 + $0x8] sm:$0xff] 0.0
      $region36: #{crestereo_forward.47} parent=31 // pred_fallthru
        _
      %v235 = vld [vmem:[#allocation2] sm:$0xff]
      %v236 = vld [vmem:[#allocation2 + $0x8] sm:$0xff]
      %v237 = vld [vmem:[%s214] sm:$0xf]
      %v238 = vld [vmem:[%s214 + $0x4] sm:$0xf]
      %s239 = smul.u32 %s21, 7
      %s240 = smul.addr %s239, 4
      %s241 = scalar_lea.vmem %s1, %s240
      %v242 = vld [vmem:[%s241] sm:$0xf]
      %v245 = vunpack.c.l.b16 %v237
      %v246 = vunpack.c.l.b16 %v238
      %v247 = vpack.c.b16 %v246, %v245
      %vm248 = vcmask 64512
      %v250 = vsel %vm248, %v247, 0
      %vm252 = vcmask 1043456
      %v254 = vsel %vm252, %v242, 0
      %256 = vmatprep.subr.bf16.mxu0 0
      %257 = vmatpush1.bf16.msra.mxu0 0
      %258 = vmatprep.subr.bf16.mxu0 0
      %259 = vmatpush1.bf16.msra.mxu0 0
      %260 = vmatprep.subr.bf16.mxu0 0
      %261 = vmatpush1.bf16.msra.mxu0 0
      %262 = vmatprep.subr.bf16.mxu0 0
      %263 = vmatpush1.bf16.msra.mxu0 0
      %264 = vmatprep.subr.bf16.mxu0 0
      %265 = vmatpush1.bf16.msra.mxu0 0
      %266 = vmatprep.subr.bf16.mxu0 0
      %267 = vmatpush1.bf16.msra.mxu0 0
      %268 = vmatprep.subr.bf16.mxu0 0
      %269 = vmatpush1.bf16.msra.mxu0 0
      %270 = vmatprep.subr.bf16.mxu0 0
      %271 = vmatpush1.bf16.msra.mxu0 %v254
      %272 = vmatprep.subr.bf16.mxu0 0
      %273 = vmatpush2.bf16.msra.mxu0 0
      %274 = vmatprep.subr.bf16.mxu0 0
      %275 = vmatpush2.bf16.msra.mxu0 0
      %276 = vmatprep.subr.bf16.mxu0 0
      %277 = vmatpush2.bf16.msra.mxu0 0
      %278 = vmatprep.subr.bf16.mxu0 0
      %279 = vmatpush2.bf16.msra.mxu0 0
      %280 = vmatprep.subr.bf16.mxu0 0
      %281 = vmatpush2.bf16.msra.mxu0 0
      %282 = vmatprep.subr.bf16.mxu0 0
      %283 = vmatpush2.bf16.msra.mxu0 0
      %284 = vmatprep.subr.bf16.mxu0 0
      %285 = vmatpush2.bf16.msra.mxu0 0
      %286 = vmatprep.subr.bf16.mxu0 0
      %287 = vmatpush2.bf16.msra.mxu0 0
      %288 = vmatprep.mubr.bf16.mxu0 0
      %289 = vmatmul.mubr.bf16.gmra.mxu0 %v250
      %v290 = vpop.f32.mrf.mxu0
      %v291 = vadd.f32 0.0, %v290
      %v292 = vpop.f32.mrf.mxu0
      %v293 = vpop.f32.mrf.mxu0
      %v294 = vadd.f32 0.0, %v293
      %v295 = vpop.f32.mrf.mxu0
      %296 = vdwg.mxu0
      %v297 = vadd.f32 %v235, %v291
      %v298 = vadd.f32 %v236, %v294
      %s299 = scalar_lea.vmem %s214, 12
      %v300 = vld [vmem:[%s299] sm:$0xf]
      %v301 = vld [vmem:[%s299 + $0x4] sm:$0xf]
      %s302 = sadd.s32 %s239, 1
      %s303 = smul.addr %s302, 4
      %s304 = scalar_lea.vmem %s1, %s303
      %v305 = vld [vmem:[%s304] sm:$0xf]
      %v308 = vunpack.c.l.b16 %v300
      %v309 = vunpack.c.l.b16 %v301
      %v310 = vpack.c.b16 %v309, %v308
      %v312 = vsel %vm248, %v310, 0
      %v315 = vsel %vm252, %v305, 0
      %317 = vmatprep.subr.bf16.mxu0 0
      %318 = vmatpush1.bf16.msra.mxu0 0
      %319 = vmatprep.subr.bf16.mxu0 0
      %320 = vmatpush1.bf16.msra.mxu0 0
      %321 = vmatprep.subr.bf16.mxu0 0
      %322 = vmatpush1.bf16.msra.mxu0 0
      %323 = vmatprep.subr.bf16.mxu0 0
      %324 = vmatpush1.bf16.msra.mxu0 0
      %325 = vmatprep.subr.bf16.mxu0 0
      %326 = vmatpush1.bf16.msra.mxu0 0
      %327 = vmatprep.subr.bf16.mxu0 0
      %328 = vmatpush1.bf16.msra.mxu0 0
      %329 = vmatprep.subr.bf16.mxu0 0
      %330 = vmatpush1.bf16.msra.mxu0 0
      %331 = vmatprep.subr.bf16.mxu0 0
      %332 = vmatpush1.bf16.msra.mxu0 %v315
      %333 = vmatprep.subr.bf16.mxu0 0
      %334 = vmatpush2.bf16.msra.mxu0 0
      %335 = vmatprep.subr.bf16.mxu0 0
      %336 = vmatpush2.bf16.msra.mxu0 0
      %337 = vmatprep.subr.bf16.mxu0 0
      %338 = vmatpush2.bf16.msra.mxu0 0
      %339 = vmatprep.subr.bf16.mxu0 0
      %340 = vmatpush2.bf16.msra.mxu0 0
      %341 = vmatprep.subr.bf16.mxu0 0
      %342 = vmatpush2.bf16.msra.mxu0 0
      %343 = vmatprep.subr.bf16.mxu0 0
      %344 = vmatpush2.bf16.msra.mxu0 0
      %345 = vmatprep.subr.bf16.mxu0 0
      %346 = vmatpush2.bf16.msra.mxu0 0
      %347 = vmatprep.subr.bf16.mxu0 0
      %348 = vmatpush2.bf16.msra.mxu0 0
      %349 = vmatprep.mubr.bf16.mxu0 0
      %350 = vmatmul.mubr.bf16.gmra.mxu0 %v312
      %v351 = vpop.f32.mrf.mxu0
      %v352 = vadd.f32 0.0, %v351
      %v353 = vpop.f32.mrf.mxu0
      %v354 = vpop.f32.mrf.mxu0
      %v355 = vadd.f32 0.0, %v354
      %v356 = vpop.f32.mrf.mxu0
      %357 = vdwg.mxu0
      %v358 = vadd.f32 %v297, %v352
      %v359 = vadd.f32 %v298, %v355
      %v360 = vld [vmem:[%s214] sm:$0xf]
      %v361 = vld [vmem:[%s214 + $0x4] sm:$0xf]
      %v362 = vld [vmem:[%s214 + $0x8] sm:$0x1]
      %s363 = sadd.s32 %s239, 2
      %s364 = smul.addr %s363, 4
      %s365 = scalar_lea.vmem %s1, %s364
      %v366 = vld [vmem:[%s365] sm:$0xf]
      %v370 = vunpack.c.l.b16 %v360
      %v371 = vunpack.c.l.b16 %v361
      %v372 = vunpack.c.l.b16 %v362
      %v373 = vpack.c.b16 %v371, %v370
      %v374 = vpack.c.b16 %v372, %v372
      %vm375 = vsmask.f32 7424
      %v377 = vshrl.u32 %v373, 16
      %v379 = vshll.u32 %v373, 16
      %v381 = vrot.slane %v379, 1
      %v382 = vor.u32 %v377, %v381
      %v384 = vshll.u32 %v374, 16
      %v386 = vrot.slane %v384, 1
      %v387 = vsel %vm375, %v382, %v386
      %v389 = vsel %vm248, %v387, 0
      %v392 = vsel %vm252, %v366, 0
      %394 = vmatprep.subr.bf16.mxu0 0
      %395 = vmatpush1.bf16.msra.mxu0 0
      %396 = vmatprep.subr.bf16.mxu0 0
      %397 = vmatpush1.bf16.msra.mxu0 0
      %398 = vmatprep.subr.bf16.mxu0 0
      %399 = vmatpush1.bf16.msra.mxu0 0
      %400 = vmatprep.subr.bf16.mxu0 0
      %401 = vmatpush1.bf16.msra.mxu0 0
      %402 = vmatprep.subr.bf16.mxu0 0
      %403 = vmatpush1.bf16.msra.mxu0 0
      %404 = vmatprep.subr.bf16.mxu0 0
      %405 = vmatpush1.bf16.msra.mxu0 0
      %406 = vmatprep.subr.bf16.mxu0 0
      %407 = vmatpush1.bf16.msra.mxu0 0
      %408 = vmatprep.subr.bf16.mxu0 0
      %409 = vmatpush1.bf16.msra.mxu0 %v392
      %410 = vmatprep.subr.bf16.mxu0 0
      %411 = vmatpush2.bf16.msra.mxu0 0
      %412 = vmatprep.subr.bf16.mxu0 0
      %413 = vmatpush2.bf16.msra.mxu0 0
      %414 = vmatprep.subr.bf16.mxu0 0
      %415 = vmatpush2.bf16.msra.mxu0 0
      %416 = vmatprep.subr.bf16.mxu0 0
      %417 = vmatpush2.bf16.msra.mxu0 0
      %418 = vmatprep.subr.bf16.mxu0 0
      %419 = vmatpush2.bf16.msra.mxu0 0
      %420 = vmatprep.subr.bf16.mxu0 0
      %421 = vmatpush2.bf16.msra.mxu0 0
      %422 = vmatprep.subr.bf16.mxu0 0
      %423 = vmatpush2.bf16.msra.mxu0 0
      %424 = vmatprep.subr.bf16.mxu0 0
      %425 = vmatpush2.bf16.msra.mxu0 0
      %426 = vmatprep.mubr.bf16.mxu0 0
      %427 = vmatmul.mubr.bf16.gmra.mxu0 %v389
      %v428 = vpop.f32.mrf.mxu0
      %v429 = vadd.f32 0.0, %v428
      %v430 = vpop.f32.mrf.mxu0
      %v431 = vpop.f32.mrf.mxu0
      %v432 = vadd.f32 0.0, %v431
      %v433 = vpop.f32.mrf.mxu0
      %434 = vdwg.mxu0
      %v435 = vadd.f32 %v358, %v429
      %v436 = vadd.f32 %v359, %v432
      %v437 = vld [vmem:[%s299] sm:$0xf]
      %v438 = vld [vmem:[%s299 + $0x4] sm:$0xf]
      %v439 = vld [vmem:[%s299 + $0x8] sm:$0x1]
      %s440 = sadd.s32 %s239, 3
      %s441 = smul.addr %s440, 4
      %s442 = scalar_lea.vmem %s1, %s441
      %v443 = vld [vmem:[%s442] sm:$0xf]
      %v447 = vunpack.c.l.b16 %v437
      %v448 = vunpack.c.l.b16 %v438
      %v449 = vunpack.c.l.b16 %v439
      %v450 = vpack.c.b16 %v448, %v447
      %v451 = vpack.c.b16 %v449, %v449
      %v453 = vshrl.u32 %v450, 16
      %v455 = vshll.u32 %v450, 16
      %v457 = vrot.slane %v455, 1
      %v458 = vor.u32 %v453, %v457
      %v460 = vshll.u32 %v451, 16
      %v462 = vrot.slane %v460, 1
      %v463 = vsel %vm375, %v458, %v462
      %v465 = vsel %vm248, %v463, 0
      %v468 = vsel %vm252, %v443, 0
      %470 = vmatprep.subr.bf16.mxu0 0
      %471 = vmatpush1.bf16.msra.mxu0 0
      %472 = vmatprep.subr.bf16.mxu0 0
      %473 = vmatpush1.bf16.msra.mxu0 0
      %474 = vmatprep.subr.bf16.mxu0 0
      %475 = vmatpush1.bf16.msra.mxu0 0
      %476 = vmatprep.subr.bf16.mxu0 0
      %477 = vmatpush1.bf16.msra.mxu0 0
      %478 = vmatprep.subr.bf16.mxu0 0
      %479 = vmatpush1.bf16.msra.mxu0 0
      %480 = vmatprep.subr.bf16.mxu0 0
      %481 = vmatpush1.bf16.msra.mxu0 0
      %482 = vmatprep.subr.bf16.mxu0 0
      %483 = vmatpush1.bf16.msra.mxu0 0
      %484 = vmatprep.subr.bf16.mxu0 0
      %485 = vmatpush1.bf16.msra.mxu0 %v468
      %486 = vmatprep.subr.bf16.mxu0 0
      %487 = vmatpush2.bf16.msra.mxu0 0
      %488 = vmatprep.subr.bf16.mxu0 0
      %489 = vmatpush2.bf16.msra.mxu0 0
      %490 = vmatprep.subr.bf16.mxu0 0
      %491 = vmatpush2.bf16.msra.mxu0 0
      %492 = vmatprep.subr.bf16.mxu0 0
      %493 = vmatpush2.bf16.msra.mxu0 0
      %494 = vmatprep.subr.bf16.mxu0 0
      %495 = vmatpush2.bf16.msra.mxu0 0
      %496 = vmatprep.subr.bf16.mxu0 0
      %497 = vmatpush2.bf16.msra.mxu0 0
      %498 = vmatprep.subr.bf16.mxu0 0
      %499 = vmatpush2.bf16.msra.mxu0 0
      %500 = vmatprep.subr.bf16.mxu0 0
      %501 = vmatpush2.bf16.msra.mxu0 0
      %502 = vmatprep.mubr.bf16.mxu0 0
      %503 = vmatmul.mubr.bf16.gmra.mxu0 %v465
      %v504 = vpop.f32.mrf.mxu0
      %v505 = vadd.f32 0.0, %v504
      %v506 = vpop.f32.mrf.mxu0
      %v507 = vpop.f32.mrf.mxu0
      %v508 = vadd.f32 0.0, %v507
      %v509 = vpop.f32.mrf.mxu0
      %510 = vdwg.mxu0
      %v511 = vadd.f32 %v435, %v505
      %v512 = vadd.f32 %v436, %v508
      %v513 = vld [vmem:[%s214] sm:$0xe]
      %s514 = sadd.s32 %s239, 4
      %s515 = smul.addr %s514, 4
      %s516 = scalar_lea.vmem %s1, %s515
      %v517 = vld [vmem:[%s516] sm:$0xf]
      %v519 = vunpack.c.l.b16 %v513
      %v520 = vpack.c.b16 %v371, %v519
      %vm521 = vcmask 1046528
      %v522 = vrot.slane %v520, 1
      %v523 = vrot.slane %v374, 1
      %v524 = vsel %vm521, %v522, %v523
      %v526 = vsel %vm248, %v524, 0
      %v529 = vsel %vm252, %v517, 0
      %531 = vmatprep.subr.bf16.mxu0 0
      %532 = vmatpush1.bf16.msra.mxu0 0
      %533 = vmatprep.subr.bf16.mxu0 0
      %534 = vmatpush1.bf16.msra.mxu0 0
      %535 = vmatprep.subr.bf16.mxu0 0
      %536 = vmatpush1.bf16.msra.mxu0 0
      %537 = vmatprep.subr.bf16.mxu0 0
      %538 = vmatpush1.bf16.msra.mxu0 0
      %539 = vmatprep.subr.bf16.mxu0 0
      %540 = vmatpush1.bf16.msra.mxu0 0
      %541 = vmatprep.subr.bf16.mxu0 0
      %542 = vmatpush1.bf16.msra.mxu0 0
      %543 = vmatprep.subr.bf16.mxu0 0
      %544 = vmatpush1.bf16.msra.mxu0 0
      %545 = vmatprep.subr.bf16.mxu0 0
      %546 = vmatpush1.bf16.msra.mxu0 %v529
      %547 = vmatprep.subr.bf16.mxu0 0
      %548 = vmatpush2.bf16.msra.mxu0 0
      %549 = vmatprep.subr.bf16.mxu0 0
      %550 = vmatpush2.bf16.msra.mxu0 0
      %551 = vmatprep.subr.bf16.mxu0 0
      %552 = vmatpush2.bf16.msra.mxu0 0
      %553 = vmatprep.subr.bf16.mxu0 0
      %554 = vmatpush2.bf16.msra.mxu0 0
      %555 = vmatprep.subr.bf16.mxu0 0
      %556 = vmatpush2.bf16.msra.mxu0 0
      %557 = vmatprep.subr.bf16.mxu0 0
      %558 = vmatpush2.bf16.msra.mxu0 0
      %559 = vmatprep.subr.bf16.mxu0 0
      %560 = vmatpush2.bf16.msra.mxu0 0
      %561 = vmatprep.subr.bf16.mxu0 0
      %562 = vmatpush2.bf16.msra.mxu0 0
      %563 = vmatprep.mubr.bf16.mxu0 0
      %564 = vmatmul.mubr.bf16.gmra.mxu0 %v526
      %v565 = vpop.f32.mrf.mxu0
      %v566 = vadd.f32 0.0, %v565
      %v567 = vpop.f32.mrf.mxu0
      %v568 = vpop.f32.mrf.mxu0
      %v569 = vadd.f32 0.0, %v568
      %v570 = vpop.f32.mrf.mxu0
      %571 = vdwg.mxu0
      %v572 = vadd.f32 %v511, %v566
      %v573 = vadd.f32 %v512, %v569
      %v574 = vld [vmem:[%s299] sm:$0xe]
      %s575 = sadd.s32 %s239, 5
      %s576 = smul.addr %s575, 4
      %s577 = scalar_lea.vmem %s1, %s576
      %v578 = vld [vmem:[%s577] sm:$0xf]
      %v580 = vunpack.c.l.b16 %v574
      %v581 = vpack.c.b16 %v448, %v580
      %v582 = vrot.slane %v581, 1
      %v583 = vrot.slane %v451, 1
      %v584 = vsel %vm521, %v582, %v583
      %v586 = vsel %vm248, %v584, 0
      %v589 = vsel %vm252, %v578, 0
      %591 = vmatprep.subr.bf16.mxu0 0
      %592 = vmatpush1.bf16.msra.mxu0 0
      %593 = vmatprep.subr.bf16.mxu0 0
      %594 = vmatpush1.bf16.msra.mxu0 0
      %595 = vmatprep.subr.bf16.mxu0 0
      %596 = vmatpush1.bf16.msra.mxu0 0
      %597 = vmatprep.subr.bf16.mxu0 0
      %598 = vmatpush1.bf16.msra.mxu0 0
      %599 = vmatprep.subr.bf16.mxu0 0
      %600 = vmatpush1.bf16.msra.mxu0 0
      %601 = vmatprep.subr.bf16.mxu0 0
      %602 = vmatpush1.bf16.msra.mxu0 0
      %603 = vmatprep.subr.bf16.mxu0 0
      %604 = vmatpush1.bf16.msra.mxu0 0
      %605 = vmatprep.subr.bf16.mxu0 0
      %606 = vmatpush1.bf16.msra.mxu0 %v589
      %607 = vmatprep.subr.bf16.mxu0 0
      %608 = vmatpush2.bf16.msra.mxu0 0
      %609 = vmatprep.subr.bf16.mxu0 0
      %610 = vmatpush2.bf16.msra.mxu0 0
      %611 = vmatprep.subr.bf16.mxu0 0
      %612 = vmatpush2.bf16.msra.mxu0 0
      %613 = vmatprep.subr.bf16.mxu0 0
      %614 = vmatpush2.bf16.msra.mxu0 0
      %615 = vmatprep.subr.bf16.mxu0 0
      %616 = vmatpush2.bf16.msra.mxu0 0
      %617 = vmatprep.subr.bf16.mxu0 0
      %618 = vmatpush2.bf16.msra.mxu0 0
      %619 = vmatprep.subr.bf16.mxu0 0
      %620 = vmatpush2.bf16.msra.mxu0 0
      %621 = vmatprep.subr.bf16.mxu0 0
      %622 = vmatpush2.bf16.msra.mxu0 0
      %623 = vmatprep.mubr.bf16.mxu0 0
      %624 = vmatmul.mubr.bf16.gmra.mxu0 %v586
      %v625 = vpop.f32.mrf.mxu0
      %v626 = vadd.f32 0.0, %v625
      %v627 = vpop.f32.mrf.mxu0
      %v628 = vpop.f32.mrf.mxu0
      %v629 = vadd.f32 0.0, %v628
      %v630 = vpop.f32.mrf.mxu0
      %631 = vdwg.mxu0
      %v632 = vadd.f32 %v572, %v626
      %v633 = vadd.f32 %v573, %v629
      %v634 = vld [vmem:[%s214 + $0x8] sm:$0x3]
      %s635 = sadd.s32 %s239, 6
      %s636 = smul.addr %s635, 4
      %s637 = scalar_lea.vmem %s1, %s636
      %v638 = vld [vmem:[%s637] sm:$0xf]
      %v640 = vunpack.c.l.b16 %v634
      %v641 = vpack.c.b16 %v640, %v640
      %vm642 = vsmask.f32 6400
      %v644 = vshrl.u32 %v520, 16
      %v646 = vrot.slane %v644, 1
      %v647 = vshll.u32 %v520, 16
      %v649 = vrot.slane %v647, 2
      %v650 = vor.u32 %v646, %v649
      %v652 = vshrl.u32 %v641, 16
      %v654 = vrot.slane %v652, 1
      %v655 = vshll.u32 %v641, 16
      %v657 = vrot.slane %v655, 2
      %v658 = vor.u32 %v654, %v657
      %v659 = vsel %vm642, %v650, %v658
      %v661 = vsel %vm248, %v659, 0
      %v664 = vsel %vm252, %v638, 0
      %666 = vmatprep.subr.bf16.mxu0 0
      %667 = vmatpush1.bf16.msra.mxu0 0
      %668 = vmatprep.subr.bf16.mxu0 0
      %669 = vmatpush1.bf16.msra.mxu0 0
      %670 = vmatprep.subr.bf16.mxu0 0
      %671 = vmatpush1.bf16.msra.mxu0 0
      %672 = vmatprep.subr.bf16.mxu0 0
      %673 = vmatpush1.bf16.msra.mxu0 0
      %674 = vmatprep.subr.bf16.mxu0 0
      %675 = vmatpush1.bf16.msra.mxu0 0
      %676 = vmatprep.subr.bf16.mxu0 0
      %677 = vmatpush1.bf16.msra.mxu0 0
      %678 = vmatprep.subr.bf16.mxu0 0
      %679 = vmatpush1.bf16.msra.mxu0 0
      %680 = vmatprep.subr.bf16.mxu0 0
      %681 = vmatpush1.bf16.msra.mxu0 %v664
      %682 = vmatprep.subr.bf16.mxu0 0
      %683 = vmatpush2.bf16.msra.mxu0 0
      %684 = vmatprep.subr.bf16.mxu0 0
      %685 = vmatpush2.bf16.msra.mxu0 0
      %686 = vmatprep.subr.bf16.mxu0 0
      %687 = vmatpush2.bf16.msra.mxu0 0
      %688 = vmatprep.subr.bf16.mxu0 0
      %689 = vmatpush2.bf16.msra.mxu0 0
      %690 = vmatprep.subr.bf16.mxu0 0
      %691 = vmatpush2.bf16.msra.mxu0 0
      %692 = vmatprep.subr.bf16.mxu0 0
      %693 = vmatpush2.bf16.msra.mxu0 0
      %694 = vmatprep.subr.bf16.mxu0 0
      %695 = vmatpush2.bf16.msra.mxu0 0
      %696 = vmatprep.subr.bf16.mxu0 0
      %697 = vmatpush2.bf16.msra.mxu0 0
      %698 = vmatprep.mubr.bf16.mxu0 0
      %699 = vmatmul.mubr.bf16.gmra.mxu0 %v661
      %v700 = vpop.f32.mrf.mxu0
      %v701 = vadd.f32 0.0, %v700
      %v702 = vpop.f32.mrf.mxu0
      %v703 = vpop.f32.mrf.mxu0
      %v704 = vadd.f32 0.0, %v703
      %v705 = vpop.f32.mrf.mxu0
      %706 = vdwg.mxu0
      %v707 = vadd.f32 %v632, %v701
      %v708 = vadd.f32 %v633, %v704
      %709 = vst [vmem:[#allocation2] sm:$0xff] %v707
      %710 = vst [vmem:[#allocation2 + $0x8] sm:$0xff] %v708
      %p711 = scmp.eq.s32.totalorder %s21, 6
      // Predicated region
      $region37: #{crestereo_forward.47} parent=31 // pred_check
        %p712 = pneg %p711
      $region38: #{crestereo_forward.47} parent=31 // pred_check_branch
        %714 = sbr.rel (%p712) target = $region40
      $region39: #{crestereo_forward.47} parent=31 // pred_region
        %v715 = vld [vmem:[#allocation2] sm:$0xff]
        %v716 = vld [vmem:[#allocation2 + $0x8] sm:$0xff]
        %v717 = vld [vmem:[%s2] sm:$0x1]
        %v719 = vlaneseq
        %v720 = vshrl.u32 %v719, 7
        %v721 = vsub.s32 0, %v720
        %v722 = vrot.slane %v717, %v721
        %v724 = vadd.f32 %v715, %v722
        %v725 = vadd.f32 %v716, %v722
        %v726 = vpack.c.bf16 %v725, %v724
        %v728 = vunpack.c.l.b16 %v726
        %v729 = vunpack.c.h.b16 %v726
        %v730 = vpack.c.b16 %v728, %v728
        %v731 = vpack.c.b16 %v729, %v729
        %734 = vst [vmem:[%s225] sm:$0xf] %v730
        %735 = vst [vmem:[%s225 + $0x4] sm:$0xf] %v731
      $region40: #{crestereo_forward.47} parent=31 // pred_fallthru
        _
      %s736 = smul.u32 %s19, 16
      %s737 = sadd.s32 %s736, %s20
      %p738 = scmp.lt.s32.totalorder %s737, 31
      %s739 = scalar_select %p738, %s737, 31
      %s740 = smul.addr %s739, 2
      %s741 = smul.addr %s740, 4
      %s742 = scalar_lea.vmem %s3, %s741
      // Predicated region
      $region41: #{crestereo_forward.47} parent=31 // pred_check
        %p743 = pneg %p131
      $region42: #{crestereo_forward.47} parent=31 // pred_check_branch
        %745 = sbr.rel (%p743) target = $region44
      $region43: #{crestereo_forward.47} parent=31 // pred_region
        %s746 = smul.u32 %s19, 16
        %s747 = sadd.s32 %s746, %s20
      $region44: #{crestereo_forward.47} parent=31 // pred_fallthru
        _
    $region32: #{crestereo_forward.47} parent=5 // pred_fallthru
      _
    %p748 = scmp.le.s32.totalorder 2, %s9
    // Predicated region
    $region45: #{crestereo_forward.47} parent=5 // pred_check
      %p749 = pneg %p748
    $region46: #{crestereo_forward.47} parent=5 // pred_check_branch
      %751 = sbr.rel (%p749) target = $region48
    $region47: #{crestereo_forward.47} parent=5 // pred_region
      %s752 = ssub.s32 %s9, 2
      // Predicated region
      $region49: #{crestereo_forward.47} parent=47 // pred_check
        %p753 = pneg %p137
      $region50: #{crestereo_forward.47} parent=47 // pred_check_branch
        %755 = sbr.rel (%p753) target = $region52
      $region51: #{crestereo_forward.47} parent=47 // pred_region
        %s756 = smul.u32 %s22, 16
        %s757 = sadd.s32 %s756, %s23
        %p758 = scmp.lt.s32.totalorder %s757, 31
        %s759 = scalar_select %p758, %s757, 31
        %s760 = smul.addr %s759, 2
        %s761 = smul.addr %s760, 4
        %s762 = scalar_lea.vmem %s3, %s761
      $region52: #{crestereo_forward.47} parent=47 // pred_fallthru
        _
    $region48: #{crestereo_forward.47} parent=5 // pred_fallthru
      _
  $region6: #{crestereo_forward.47} parent=0 // loop_footer
    %s13 = sadd.s32 1, %s9
  $region7: #{crestereo_forward.47} parent=0 // loop_footer_branch
    %8 = sbr.rel target = $region3
  $region8: #{crestereo_forward.47} parent=0 // loop_exit
    _

// kernel: crestereo_forward.49
$region0: #{crestereo_forward.49}
  #allocation0 [shape = 'u32[]', space=smem, size = 0x4, offset = 0x4, fixed_abs, tag = 'smem constant byte address 0x4 - core index']
  #allocation1 [shape = 'u32[144,128]{1,0:T(1,128)}', space=vmem, size = 0x12000, scoped, tag = 'internal scratch']
  %s0 = inlined_call_operand.vmem [shape: bf16[2,256,128], index: 0, kind: input, shape index: {}]
  %s1 = inlined_call_operand.vmem [shape: f32[2,1,128], index: 1, kind: input, shape index: {}]
  %s2 = inlined_call_operand.vmem [shape: f32[2,1,128], index: 2, kind: input, shape index: {}]
  %s3 = inlined_call_operand.vmem [shape: bf16[2,256,128], index: 3, kind: output, shape index: {}]
  %s4 = sld [smem:[#allocation0]]
  $region45: #{crestereo_forward.49} parent=0
    _
  %s6 = ssub.s32 1, %s4
  %s7 = scalar_select 0, %s6, %s4
  loop: start=0, step=1, limit=4
  $region2: #{crestereo_forward.49} parent=0 // loop_pre_header
    _
  $region3: #{crestereo_forward.49} parent=0 // loop_header
    %s9 = sphi 0, %s13
    %p10 = scmp.ge.s32.totalorder %s9, 4
    %s16 = sphi 0, %s28
    %s17 = sphi 0, %s24
    %s18 = sphi 0, %s16
    %s19 = sphi 0, %s17
    %s20 = sphi 0, %s18
    %s21 = sphi 0, %s19
    %s33 = sphi 0, %s35
    %s36 = sphi 0, %s33
    %s37 = sphi 0, %s36
    %s53 = sphi 0, %s37
    %s59 = sphi 0, %s61
    %s62 = sphi 0, %s59
    %s63 = sphi 0, %s62
    %s79 = sphi 0, %s63
    %s85 = sphi 0, %s87
    %s88 = sphi 0, %s85
    %s89 = sphi 0, %s88
    %s105 = sphi 0, %s89
    %s113 = sphi 0, %s115
    %s116 = sphi 0, %s113
    %s117 = sphi 0, %s116
    %s133 = sphi 0, %s117
  $region4: #{crestereo_forward.49} parent=0 // loop_header_branch
    %12 = sbr.rel (%p10) target = $region8
  $region5: #{crestereo_forward.49} parent=0 // loop_body
    %s14 = ssub.s32 %s9, 1
    %s15 = ssub.s32 %s9, 2
    %s22 = sadd.s32 1, %s17
    %p23 = scmp.ge.s32.totalorder %s22, 1
    %s24 = scalar_select %p23, 0, %s22
    %s25 = sadd.s32 1, %s16
    %s26 = scalar_select %p23, %s25, %s16
    %p27 = scmp.ge.s32.totalorder %s26, 2
    %s28 = scalar_select %p27, 0, %s26
    %s29 = ssub.s32 %s16, %s28
    %s30 = ssub.s32 %s17, %s24
    %s31 = sor.u32 %s29, %s30
    %p32 = scmp.eq.s32.totalorder %s31, 0
    %s34 = sadd.s32 %s33, 1
    %s35 = scalar_select %p32, %s33, %s34
    %p38 = pneg %p32
    %p39 = scmp.eq.s32.totalorder %s9, 1
    %p40 = por %p38, %p39
    %p41 = scmp.ne.s32.totalorder %s33, %s36
    %p42 = scmp.eq.s32.totalorder %s9, 0
    %p43 = por %p41, %p42
    %p44 = scmp.ne.s32.totalorder %s33, %s36
    %p45 = scmp.eq.s32.totalorder %s14, 1
    %p46 = por %p44, %p45
    %p47 = scmp.ne.s32.totalorder %s36, %s37
    %p48 = scmp.eq.s32.totalorder %s14, 0
    %p49 = por %p47, %p48
    %p50 = scmp.ne.s32.totalorder %s36, %s37
    %p51 = scmp.eq.s32.totalorder %s15, 1
    %p52 = por %p50, %p51
    %p54 = scmp.ne.s32.totalorder %s37, %s53
    %p55 = scmp.eq.s32.totalorder %s15, 0
    %p56 = por %p54, %p55
    %s57 = ssub.s32 %s16, %s28
    %p58 = scmp.eq.s32.totalorder %s57, 0
    %s60 = sadd.s32 %s59, 1
    %s61 = scalar_select %p58, %s59, %s60
    %p64 = pneg %p58
    %p65 = scmp.eq.s32.totalorder %s9, 1
    %p66 = por %p64, %p65
    %p67 = scmp.ne.s32.totalorder %s59, %s62
    %p68 = scmp.eq.s32.totalorder %s9, 0
    %p69 = por %p67, %p68
    %p70 = scmp.ne.s32.totalorder %s59, %s62
    %p71 = scmp.eq.s32.totalorder %s14, 1
    %p72 = por %p70, %p71
    %p73 = scmp.ne.s32.totalorder %s62, %s63
    %p74 = scmp.eq.s32.totalorder %s14, 0
    %p75 = por %p73, %p74
    %p76 = scmp.ne.s32.totalorder %s62, %s63
    %p77 = scmp.eq.s32.totalorder %s15, 1
    %p78 = por %p76, %p77
    %p80 = scmp.ne.s32.totalorder %s63, %s79
    %p81 = scmp.eq.s32.totalorder %s15, 0
    %p82 = por %p80, %p81
    %s83 = ssub.s32 %s16, %s28
    %p84 = scmp.eq.s32.totalorder %s83, 0
    %s86 = sadd.s32 %s85, 1
    %s87 = scalar_select %p84, %s85, %s86
    %p90 = pneg %p84
    %p91 = scmp.eq.s32.totalorder %s9, 1
    %p92 = por %p90, %p91
    %p93 = scmp.ne.s32.totalorder %s85, %s88
    %p94 = scmp.eq.s32.totalorder %s9, 0
    %p95 = por %p93, %p94
    %p96 = scmp.ne.s32.totalorder %s85, %s88
    %p97 = scmp.eq.s32.totalorder %s14, 1
    %p98 = por %p96, %p97
    %p99 = scmp.ne.s32.totalorder %s88, %s89
    %p100 = scmp.eq.s32.totalorder %s14, 0
    %p101 = por %p99, %p100
    %p102 = scmp.ne.s32.totalorder %s88, %s89
    %p103 = scmp.eq.s32.totalorder %s15, 1
    %p104 = por %p102, %p103
    %p106 = scmp.ne.s32.totalorder %s89, %s105
    %p107 = scmp.eq.s32.totalorder %s15, 0
    %p108 = por %p106, %p107
    %s109 = ssub.s32 %s16, %s28
    %s110 = ssub.s32 %s17, %s24
    %s111 = sor.u32 %s109, %s110
    %p112 = scmp.eq.s32.totalorder %s111, 0
    %s114 = sadd.s32 %s113, 1
    %s115 = scalar_select %p112, %s113, %s114
    %p118 = pneg %p112
    %p119 = scmp.eq.s32.totalorder %s9, 1
    %p120 = por %p118, %p119
    %p121 = scmp.ne.s32.totalorder %s113, %s116
    %p122 = scmp.eq.s32.totalorder %s9, 0
    %p123 = por %p121, %p122
    %p124 = scmp.ne.s32.totalorder %s113, %s116
    %p125 = scmp.eq.s32.totalorder %s14, 1
    %p126 = por %p124, %p125
    %p127 = scmp.ne.s32.totalorder %s116, %s117
    %p128 = scmp.eq.s32.totalorder %s14, 0
    %p129 = por %p127, %p128
    %p130 = scmp.ne.s32.totalorder %s116, %s117
    %p131 = scmp.eq.s32.totalorder %s15, 1
    %p132 = por %p130, %p131
    %p134 = scmp.ne.s32.totalorder %s117, %s133
    %p135 = scmp.eq.s32.totalorder %s15, 0
    %p136 = por %p134, %p135
    %p137 = scmp.le.s32.totalorder 1, %s9
    %p138 = scmp.lt.s32.totalorder %s9, 3
    %p139 = pnand %p137, %p138
    %p140 = pneg %p139
    // Predicated region
    $region9: #{crestereo_forward.49} parent=5 // pred_check
      _
    $region10: #{crestereo_forward.49} parent=5 // pred_check_branch
      %142 = sbr.rel (%p139) target = $region12
    $region11: #{crestereo_forward.49} parent=5 // pred_region
      %s143 = ssub.s32 %s9, 1
    $region12: #{crestereo_forward.49} parent=5 // pred_fallthru
      _
    %p144 = scmp.lt.s32.totalorder %s9, 2
    // Predicated region
    $region13: #{crestereo_forward.49} parent=5 // pred_check
      %p145 = pneg %p144
    $region14: #{crestereo_forward.49} parent=5 // pred_check_branch
      %147 = sbr.rel (%p145) target = $region16
    $region15: #{crestereo_forward.49} parent=5 // pred_region
      // Predicated region
      $region17: #{crestereo_forward.49} parent=15 // pred_check
        %p148 = pneg %p43
      $region18: #{crestereo_forward.49} parent=15 // pred_check_branch
        %150 = sbr.rel (%p148) target = $region20
      $region19: #{crestereo_forward.49} parent=15 // pred_region
        %s151 = smul.u32 32, %s17
        %p152 = scmp.lt.s32.totalorder %s16, 1
        %s153 = scalar_select %p152, %s16, 1
        %p154 = scmp.lt.s32.totalorder %s151, 31
        %s155 = scalar_select %p154, %s151, 31
        %s156 = smul.addr %s153, 32
        %s157 = sadd.s32 %s155, %s156
        %s158 = smul.addr %s157, 4
        %s159 = scalar_lea.vmem %s0, %s158
        %s160 = smul.u32 32, %s17
      $region20: #{crestereo_forward.49} parent=15 // pred_fallthru
        _
      // Predicated region
      $region21: #{crestereo_forward.49} parent=15 // pred_check
        %p161 = pneg %p69
      $region22: #{crestereo_forward.49} parent=15 // pred_check_branch
        %163 = sbr.rel (%p161) target = $region24
      $region23: #{crestereo_forward.49} parent=15 // pred_region
        %p164 = scmp.lt.s32.totalorder %s16, 1
        %s165 = scalar_select %p164, %s16, 1
        %s166 = scalar_lea.vmem %s1, %s165
      $region24: #{crestereo_forward.49} parent=15 // pred_fallthru
        _
      // Predicated region
      $region25: #{crestereo_forward.49} parent=15 // pred_check
        %p167 = pneg %p95
      $region26: #{crestereo_forward.49} parent=15 // pred_check_branch
        %169 = sbr.rel (%p167) target = $region28
      $region27: #{crestereo_forward.49} parent=15 // pred_region
        %p170 = scmp.lt.s32.totalorder %s16, 1
        %s171 = scalar_select %p170, %s16, 1
        %s172 = scalar_lea.vmem %s2, %s171
      $region28: #{crestereo_forward.49} parent=15 // pred_fallthru
        _
    $region16: #{crestereo_forward.49} parent=5 // pred_fallthru
      _
    %p173 = scmp.le.s32.totalorder 1, %s9
    %p174 = scmp.lt.s32.totalorder %s9, 3
    %p175 = pnand %p173, %p174
    %p176 = pneg %p175
    // Predicated region
    $region29: #{crestereo_forward.49} parent=5 // pred_check
      _
    $region30: #{crestereo_forward.49} parent=5 // pred_check_branch
      %178 = sbr.rel (%p175) target = $region32
    $region31: #{crestereo_forward.49} parent=5 // pred_region
      %s179 = ssub.s32 %s9, 1
      %s180 = smul.u32 32, %s19
      %p181 = scmp.lt.s32.totalorder %s18, 1
      %s182 = scalar_select %p181, %s18, 1
      %p183 = scmp.lt.s32.totalorder %s180, 31
      %s184 = scalar_select %p183, %s180, 31
      %s185 = smul.addr %s182, 32
      %s186 = sadd.s32 %s184, %s185
      %s187 = smul.addr %s186, 4
      %s188 = scalar_lea.vmem %s0, %s187
      %p189 = pneg %p49
      %p190 = pneg %p46
      %p191 = scmp.lt.s32.totalorder %s18, 1
      %s192 = scalar_select %p191, %s18, 1
      %s193 = scalar_lea.vmem %s1, %s192
      %p194 = pneg %p75
      %p195 = pneg %p72
      %p196 = scmp.lt.s32.totalorder %s18, 1
      %s197 = scalar_select %p196, %s18, 1
      %s198 = scalar_lea.vmem %s2, %s197
      %p199 = pneg %p101
      %p200 = pneg %p98
      %p201 = pneg %p129
      %p202 = pneg %p126
      %s203 = smul.u32 32, %s19
      %p204 = scmp.lt.s32.totalorder %s18, 1
      %s205 = scalar_select %p204, %s18, 1
      %p206 = scmp.lt.s32.totalorder %s203, 31
      %s207 = scalar_select %p206, %s203, 31
      %s208 = smul.addr %s205, 32
      %s209 = sadd.s32 %s207, %s208
      %s210 = smul.addr %s209, 4
      %s211 = scalar_lea.vmem %s3, %s210
      %s212 = smul.u32 32, %s19
      %p213 = scmp.lt.s32.totalorder %s18, 1
      %s214 = scalar_select %p213, %s18, 1
      %p215 = scmp.lt.s32.totalorder %s212, 31
      %s216 = scalar_select %p215, %s212, 31
      %s217 = smul.addr %s214, 32
      %s218 = sadd.s32 %s216, %s217
      %s219 = smul.addr %s218, 4
      %s220 = scalar_lea.vmem %s0, %s219
      %s221 = smul.u32 32, %s19
      %p222 = scmp.lt.s32.totalorder %s18, 1
      %s223 = scalar_select %p222, %s18, 1
      %s224 = scalar_lea.vmem %s1, %s223
      %p225 = scmp.lt.s32.totalorder %s18, 1
      %s226 = scalar_select %p225, %s18, 1
      %s227 = scalar_lea.vmem %s2, %s226
      %s228 = smul.u32 32, %s19
      %p229 = scmp.lt.s32.totalorder %s18, 1
      %s230 = scalar_select %p229, %s18, 1
      %p231 = scmp.lt.s32.totalorder %s228, 31
      %s232 = scalar_select %p231, %s228, 31
      %s233 = smul.addr %s230, 32
      %s234 = sadd.s32 %s232, %s233
      %s235 = smul.addr %s234, 4
      %s236 = scalar_lea.vmem %s3, %s235
      %s237 = smul.u32 32, %s19
      %v238 = vld [vmem:[%s224] sm:$0x1]
      %v239 = vmul.f32 %v238, 0.00390625
      %v240 = vld [vmem:[%s227] sm:$0x1]
      %v241 = vmul.f32 %v240, 0.00390625
      %v242 = vmul.f32 %v239, %v239
      %v243 = vsub.f32 %v241, %v242
      %v244 = vmax.f32 %v243, 0.0
      %v245 = vadd.f32 %v244, 1e-05
      %v246 = vrsqrt.pop %v245
      %v247 = vld [vmem:[%s220] sm:$0xf]
      %v248 = vld [vmem:[%s220 + $0x4] sm:$0xf]
      %v249 = vld [vmem:[%s220 + $0x8] sm:$0xf]
      %v250 = vld [vmem:[%s220 + $0xc] sm:$0xf]
      %v251 = vld [vmem:[%s220 + $0x10] sm:$0xf]
      %v252 = vld [vmem:[%s220 + $0x14] sm:$0xf]
      %v253 = vld [vmem:[%s220 + $0x18] sm:$0xf]
      %v254 = vld [vmem:[%s220 + $0x1c] sm:$0xf]
      %v255 = vld [vmem:[%s220 + $0x20] sm:$0xf]
      %v256 = vld [vmem:[%s220 + $0x24] sm:$0xf]
      %v257 = vld [vmem:[%s220 + $0x28] sm:$0xf]
      %v258 = vld [vmem:[%s220 + $0x2c] sm:$0xf]
      %v259 = vld [vmem:[%s220 + $0x30] sm:$0xf]
      %v260 = vld [vmem:[%s220 + $0x34] sm:$0xf]
      %v261 = vld [vmem:[%s220 + $0x38] sm:$0xf]
      %v262 = vld [vmem:[%s220 + $0x3c] sm:$0xf]
      %v263 = vld [vmem:[%s220 + $0x40] sm:$0xf]
      %v264 = vld [vmem:[%s220 + $0x44] sm:$0xf]
      %v265 = vld [vmem:[%s220 + $0x48] sm:$0xf]
      %v266 = vld [vmem:[%s220 + $0x4c] sm:$0xf]
      %v267 = vld [vmem:[%s220 + $0x50] sm:$0xf]
      %v268 = vld [vmem:[%s220 + $0x54] sm:$0xf]
      %v269 = vld [vmem:[%s220 + $0x58] sm:$0xf]
      %v270 = vld [vmem:[%s220 + $0x5c] sm:$0xf]
      %v271 = vld [vmem:[%s220 + $0x60] sm:$0xf]
      %v272 = vld [vmem:[%s220 + $0x64] sm:$0xf]
      %v273 = vld [vmem:[%s220 + $0x68] sm:$0xf]
      %v274 = vld [vmem:[%s220 + $0x6c] sm:$0xf]
      %v275 = vld [vmem:[%s220 + $0x70] sm:$0xf]
      %v276 = vld [vmem:[%s220 + $0x74] sm:$0xf]
      %v277 = vld [vmem:[%s220 + $0x78] sm:$0xf]
      %v278 = vld [vmem:[%s220 + $0x7c] sm:$0xf]
      %v279 = vunpack.c.l.bf16 %v247
      %v280 = vunpack.c.l.bf16 %v248
      %v281 = vunpack.c.l.bf16 %v249
      %v282 = vunpack.c.l.bf16 %v250
      %v283 = vunpack.c.l.bf16 %v251
      %v284 = vunpack.c.l.bf16 %v252
      %v285 = vunpack.c.l.bf16 %v253
      %v286 = vunpack.c.l.bf16 %v254
      %v287 = vunpack.c.l.bf16 %v255
      %v288 = vunpack.c.l.bf16 %v256
      %v289 = vunpack.c.l.bf16 %v257
      %v290 = vunpack.c.l.bf16 %v258
      %v291 = vunpack.c.l.bf16 %v259
      %v292 = vunpack.c.l.bf16 %v260
      %v293 = vunpack.c.l.bf16 %v261
      %v294 = vunpack.c.l.bf16 %v262
      %v295 = vunpack.c.l.bf16 %v263
      %v296 = vunpack.c.l.bf16 %v264
      %v297 = vunpack.c.l.bf16 %v265
      %v298 = vunpack.c.l.bf16 %v266
      %v299 = vunpack.c.l.bf16 %v267
      %v300 = vunpack.c.l.bf16 %v268
      %v301 = vunpack.c.l.bf16 %v269
      %v302 = vunpack.c.l.bf16 %v270
      %v303 = vunpack.c.l.bf16 %v271
      %v304 = vunpack.c.l.bf16 %v272
      %v305 = vunpack.c.l.bf16 %v273
      %v306 = vunpack.c.l.bf16 %v274
      %v307 = vunpack.c.l.bf16 %v275
      %v308 = vunpack.c.l.bf16 %v276
      %v309 = vunpack.c.l.bf16 %v277
      %v310 = vunpack.c.l.bf16 %v278
      %v312 = vlaneseq
      %v313 = vshrl.u32 %v312, 7
      %v314 = vsub.s32 0, %v313
      %v315 = vrot.slane %v239, %v314
      %v317 = vsub.f32 %v279, %v315
      %v318 = vsub.f32 %v280, %v315
      %v319 = vsub.f32 %v281, %v315
      %v320 = vsub.f32 %v282, %v315
      %v321 = vsub.f32 %v283, %v315
      %v322 = vsub.f32 %v284, %v315
      %v323 = vsub.f32 %v285, %v315
      %v324 = vsub.f32 %v286, %v315
      %v325 = vsub.f32 %v287, %v315
      %v326 = vsub.f32 %v288, %v315
      %v327 = vsub.f32 %v289, %v315
      %v328 = vsub.f32 %v290, %v315
      %v329 = vsub.f32 %v291, %v315
      %v330 = vsub.f32 %v292, %v315
      %v331 = vsub.f32 %v293, %v315
      %v332 = vsub.f32 %v294, %v315
      %v333 = vsub.f32 %v295, %v315
      %v334 = vsub.f32 %v296, %v315
      %v335 = vsub.f32 %v297, %v315
      %v336 = vsub.f32 %v298, %v315
      %v337 = vsub.f32 %v299, %v315
      %v338 = vsub.f32 %v300, %v315
      %v339 = vsub.f32 %v301, %v315
      %v340 = vsub.f32 %v302, %v315
      %v341 = vsub.f32 %v303, %v315
      %v342 = vsub.f32 %v304, %v315
      %v343 = vsub.f32 %v305, %v315
      %v344 = vsub.f32 %v306, %v315
      %v345 = vsub.f32 %v307, %v315
      %v346 = vsub.f32 %v308, %v315
      %v347 = vsub.f32 %v309, %v315
      %v348 = vsub.f32 %v310, %v315
      %v350 = vlaneseq
      %v351 = vshrl.u32 %v350, 7
      %v352 = vsub.s32 0, %v351
      %v353 = vrot.slane %v246, %v352
      %v355 = vmul.f32 %v317, %v353
      %v356 = vmul.f32 %v318, %v353
      %v357 = vmul.f32 %v319, %v353
      %v358 = vmul.f32 %v320, %v353
      %v359 = vmul.f32 %v321, %v353
      %v360 = vmul.f32 %v322, %v353
      %v361 = vmul.f32 %v323, %v353
      %v362 = vmul.f32 %v324, %v353
      %v363 = vmul.f32 %v325, %v353
      %v364 = vmul.f32 %v326, %v353
      %v365 = vmul.f32 %v327, %v353
      %v366 = vmul.f32 %v328, %v353
      %v367 = vmul.f32 %v329, %v353
      %v368 = vmul.f32 %v330, %v353
      %v369 = vmul.f32 %v331, %v353
      %v370 = vmul.f32 %v332, %v353
      %v371 = vmul.f32 %v333, %v353
      %v372 = vmul.f32 %v334, %v353
      %v373 = vmul.f32 %v335, %v353
      %v374 = vmul.f32 %v336, %v353
      %v375 = vmul.f32 %v337, %v353
      %v376 = vmul.f32 %v338, %v353
      %v377 = vmul.f32 %v339, %v353
      %v378 = vmul.f32 %v340, %v353
      %v379 = vmul.f32 %v341, %v353
      %v380 = vmul.f32 %v342, %v353
      %v381 = vmul.f32 %v343, %v353
      %v382 = vmul.f32 %v344, %v353
      %v383 = vmul.f32 %v345, %v353
      %v384 = vmul.f32 %v346, %v353
      %v385 = vmul.f32 %v347, %v353
      %v386 = vmul.f32 %v348, %v353
      %v387 = vmax.f32 %v355, 0.0
      %v388 = vmax.f32 %v356, 0.0
      %v389 = vmax.f32 %v357, 0.0
      %v390 = vmax.f32 %v358, 0.0
      %v391 = vmax.f32 %v359, 0.0
      %v392 = vmax.f32 %v360, 0.0
      %v393 = vmax.f32 %v361, 0.0
      %v394 = vmax.f32 %v362, 0.0
      %v395 = vmax.f32 %v363, 0.0
      %v396 = vmax.f32 %v364, 0.0
      %v397 = vmax.f32 %v365, 0.0
      %v398 = vmax.f32 %v366, 0.0
      %v399 = vmax.f32 %v367, 0.0
      %v400 = vmax.f32 %v368, 0.0
      %v401 = vmax.f32 %v369, 0.0
      %v402 = vmax.f32 %v370, 0.0
      %v403 = vmax.f32 %v371, 0.0
      %v404 = vmax.f32 %v372, 0.0
      %v405 = vmax.f32 %v373, 0.0
      %v406 = vmax.f32 %v374, 0.0
      %v407 = vmax.f32 %v375, 0.0
      %v408 = vmax.f32 %v376, 0.0
      %v409 = vmax.f32 %v377, 0.0
      %v410 = vmax.f32 %v378, 0.0
      %v411 = vmax.f32 %v379, 0.0
      %v412 = vmax.f32 %v380, 0.0
      %v413 = vmax.f32 %v381, 0.0
      %v414 = vmax.f32 %v382, 0.0
      %v415 = vmax.f32 %v383, 0.0
      %v416 = vmax.f32 %v384, 0.0
      %v417 = vmax.f32 %v385, 0.0
      %v418 = vmax.f32 %v386, 0.0
      %v419 = vpack.c.bf16 %v388, %v387
      %v420 = vpack.c.bf16 %v390, %v389
      %v421 = vpack.c.bf16 %v392, %v391
      %v422 = vpack.c.bf16 %v394, %v393
      %v423 = vpack.c.bf16 %v396, %v395
      %v424 = vpack.c.bf16 %v398, %v397
      %v425 = vpack.c.bf16 %v400, %v399
      %v426 = vpack.c.bf16 %v402, %v401
      %v427 = vpack.c.bf16 %v404, %v403
      %v428 = vpack.c.bf16 %v406, %v405
      %v429 = vpack.c.bf16 %v408, %v407
      %v430 = vpack.c.bf16 %v410, %v409
      %v431 = vpack.c.bf16 %v412, %v411
      %v432 = vpack.c.bf16 %v414, %v413
      %v433 = vpack.c.bf16 %v416, %v415
      %v434 = vpack.c.bf16 %v418, %v417
      %v451 = vunpack.c.l.b16 %v419
      %v452 = vunpack.c.h.b16 %v419
      %v453 = vunpack.c.l.b16 %v420
      %v454 = vunpack.c.h.b16 %v420
      %v455 = vunpack.c.l.b16 %v421
      %v456 = vunpack.c.h.b16 %v421
      %v457 = vunpack.c.l.b16 %v422
      %v458 = vunpack.c.h.b16 %v422
      %v459 = vunpack.c.l.b16 %v423
      %v460 = vunpack.c.h.b16 %v423
      %v461 = vunpack.c.l.b16 %v424
      %v462 = vunpack.c.h.b16 %v424
      %v463 = vunpack.c.l.b16 %v425
      %v464 = vunpack.c.h.b16 %v425
      %v465 = vunpack.c.l.b16 %v426
      %v466 = vunpack.c.h.b16 %v426
      %v467 = vunpack.c.l.b16 %v427
      %v468 = vunpack.c.h.b16 %v427
      %v469 = vunpack.c.l.b16 %v428
      %v470 = vunpack.c.h.b16 %v428
      %v471 = vunpack.c.l.b16 %v429
      %v472 = vunpack.c.h.b16 %v429
      %v473 = vunpack.c.l.b16 %v430
      %v474 = vunpack.c.h.b16 %v430
      %v475 = vunpack.c.l.b16 %v431
      %v476 = vunpack.c.h.b16 %v431
      %v477 = vunpack.c.l.b16 %v432
      %v478 = vunpack.c.h.b16 %v432
      %v479 = vunpack.c.l.b16 %v433
      %v480 = vunpack.c.h.b16 %v433
      %v481 = vunpack.c.l.b16 %v434
      %v482 = vunpack.c.h.b16 %v434
      %v483 = vpack.c.b16 %v451, %v451
      %v484 = vpack.c.b16 %v452, %v452
      %v485 = vpack.c.b16 %v453, %v453
      %v486 = vpack.c.b16 %v454, %v454
      %v487 = vpack.c.b16 %v455, %v455
      %v488 = vpack.c.b16 %v456, %v456
      %v489 = vpack.c.b16 %v457, %v457
      %v490 = vpack.c.b16 %v458, %v458
      %v491 = vpack.c.b16 %v459, %v459
      %v492 = vpack.c.b16 %v460, %v460
      %v493 = vpack.c.b16 %v461, %v461
      %v494 = vpack.c.b16 %v462, %v462
      %v495 = vpack.c.b16 %v463, %v463
      %v496 = vpack.c.b16 %v464, %v464
      %v497 = vpack.c.b16 %v465, %v465
      %v498 = vpack.c.b16 %v466, %v466
      %v499 = vpack.c.b16 %v467, %v467
      %v500 = vpack.c.b16 %v468, %v468
      %v501 = vpack.c.b16 %v469, %v469
      %v502 = vpack.c.b16 %v470, %v470
      %v503 = vpack.c.b16 %v471, %v471
      %v504 = vpack.c.b16 %v472, %v472
      %v505 = vpack.c.b16 %v473, %v473
      %v506 = vpack.c.b16 %v474, %v474
      %v507 = vpack.c.b16 %v475, %v475
      %v508 = vpack.c.b16 %v476, %v476
      %v509 = vpack.c.b16 %v477, %v477
      %v510 = vpack.c.b16 %v478, %v478
      %v511 = vpack.c.b16 %v479, %v479
      %v512 = vpack.c.b16 %v480, %v480
      %v513 = vpack.c.b16 %v481, %v481
      %v514 = vpack.c.b16 %v482, %v482
      %547 = vst [vmem:[%s236] sm:$0xf] %v483
      %548 = vst [vmem:[%s236 + $0x4] sm:$0xf] %v484
      %549 = vst [vmem:[%s236 + $0x8] sm:$0xf] %v485
      %550 = vst [vmem:[%s236 + $0xc] sm:$0xf] %v486
      %551 = vst [vmem:[%s236 + $0x10] sm:$0xf] %v487
      %552 = vst [vmem:[%s236 + $0x14] sm:$0xf] %v488
      %553 = vst [vmem:[%s236 + $0x18] sm:$0xf] %v489
      %554 = vst [vmem:[%s236 + $0x1c] sm:$0xf] %v490
      %555 = vst [vmem:[%s236 + $0x20] sm:$0xf] %v491
      %556 = vst [vmem:[%s236 + $0x24] sm:$0xf] %v492
      %557 = vst [vmem:[%s236 + $0x28] sm:$0xf] %v493
      %558 = vst [vmem:[%s236 + $0x2c] sm:$0xf] %v494
      %559 = vst [vmem:[%s236 + $0x30] sm:$0xf] %v495
      %560 = vst [vmem:[%s236 + $0x34] sm:$0xf] %v496
      %561 = vst [vmem:[%s236 + $0x38] sm:$0xf] %v497
      %562 = vst [vmem:[%s236 + $0x3c] sm:$0xf] %v498
      %563 = vst [vmem:[%s236 + $0x40] sm:$0xf] %v499
      %564 = vst [vmem:[%s236 + $0x44] sm:$0xf] %v500
      %565 = vst [vmem:[%s236 + $0x48] sm:$0xf] %v501
      %566 = vst [vmem:[%s236 + $0x4c] sm:$0xf] %v502
      %567 = vst [vmem:[%s236 + $0x50] sm:$0xf] %v503
      %568 = vst [vmem:[%s236 + $0x54] sm:$0xf] %v504
      %569 = vst [vmem:[%s236 + $0x58] sm:$0xf] %v505
      %570 = vst [vmem:[%s236 + $0x5c] sm:$0xf] %v506
      %571 = vst [vmem:[%s236 + $0x60] sm:$0xf] %v507
      %572 = vst [vmem:[%s236 + $0x64] sm:$0xf] %v508
      %573 = vst [vmem:[%s236 + $0x68] sm:$0xf] %v509
      %574 = vst [vmem:[%s236 + $0x6c] sm:$0xf] %v510
      %575 = vst [vmem:[%s236 + $0x70] sm:$0xf] %v511
      %576 = vst [vmem:[%s236 + $0x74] sm:$0xf] %v512
      %577 = vst [vmem:[%s236 + $0x78] sm:$0xf] %v513
      %578 = vst [vmem:[%s236 + $0x7c] sm:$0xf] %v514
      %s579 = smul.u32 32, %s19
      %p580 = scmp.lt.s32.totalorder %s18, 1
      %s581 = scalar_select %p580, %s18, 1
      %p582 = scmp.lt.s32.totalorder %s579, 31
      %s583 = scalar_select %p582, %s579, 31
      %s584 = smul.addr %s581, 32
      %s585 = sadd.s32 %s583, %s584
      %s586 = smul.addr %s585, 4
      %s587 = scalar_lea.vmem %s3, %s586
      // Predicated region
      $region33: #{crestereo_forward.49} parent=31 // pred_check
        %p588 = pneg %p126
      $region34: #{crestereo_forward.49} parent=31 // pred_check_branch
        %590 = sbr.rel (%p588) target = $region36
      $region35: #{crestereo_forward.49} parent=31 // pred_region
        %s591 = smul.u32 32, %s19
      $region36: #{crestereo_forward.49} parent=31 // pred_fallthru
        _
    $region32: #{crestereo_forward.49} parent=5 // pred_fallthru
      _
    %p592 = scmp.le.s32.totalorder 2, %s9
    // Predicated region
    $region37: #{crestereo_forward.49} parent=5 // pred_check
      %p593 = pneg %p592
    $region38: #{crestereo_forward.49} parent=5 // pred_check_branch
      %595 = sbr.rel (%p593) target = $region40
    $region39: #{crestereo_forward.49} parent=5 // pred_region
      %s596 = ssub.s32 %s9, 2
      // Predicated region
      $region41: #{crestereo_forward.49} parent=39 // pred_check
        %p597 = pneg %p132
      $region42: #{crestereo_forward.49} parent=39 // pred_check_branch
        %599 = sbr.rel (%p597) target = $region44
      $region43: #{crestereo_forward.49} parent=39 // pred_region
        %s600 = smul.u32 32, %s21
        %p601 = scmp.lt.s32.totalorder %s20, 1
        %s602 = scalar_select %p601, %s20, 1
        %p603 = scmp.lt.s32.totalorder %s600, 31
        %s604 = scalar_select %p603, %s600, 31
        %s605 = smul.addr %s602, 32
        %s606 = sadd.s32 %s604, %s605
        %s607 = smul.addr %s606, 4
        %s608 = scalar_lea.vmem %s3, %s607
      $region44: #{crestereo_forward.49} parent=39 // pred_fallthru
        _
    $region40: #{crestereo_forward.49} parent=5 // pred_fallthru
      _
  $region6: #{crestereo_forward.49} parent=0 // loop_footer
    %s13 = sadd.s32 1, %s9
  $region7: #{crestereo_forward.49} parent=0 // loop_footer_branch
    %8 = sbr.rel target = $region3
  $region8: #{crestereo_forward.49} parent=0 // loop_exit
    _

// kernel: crestereo_forward.50
$region0: #{crestereo_forward.50}
  #allocation0 [shape = 'u32[]', space=smem, size = 0x4, offset = 0x4, fixed_abs, tag = 'smem constant byte address 0x4 - core index']
  #allocation1 [shape = 'u32[144,128]{1,0:T(1,128)}', space=vmem, size = 0x12000, scoped, tag = 'internal scratch']
  #allocation2 [shape = 'f32[16,128]{1,0:T(8,128)}', space=vmem, size = 0x2000, scoped, tag = 'scratch operand']
  %s0 = inlined_call_operand.vmem [shape: bf16[36,1,18,128], index: 0, kind: input, shape index: {}]
  %s1 = inlined_call_operand.vmem [shape: bf16[9,128,128], index: 1, kind: input, shape index: {}]
  %s2 = inlined_call_operand.vmem [shape: f32[1,128], index: 2, kind: input, shape index: {}]
  %s3 = inlined_call_operand.vmem [shape: bf16[32,16,128], index: 3, kind: output, shape index: {}]
  %s4 = sld [smem:[#allocation0]]
  $region53: #{crestereo_forward.50} parent=0
    _
  %s6 = ssub.s32 1, %s4
  %s7 = scalar_select 0, %s6, %s4
  loop: start=0, step=1, limit=98
  $region2: #{crestereo_forward.50} parent=0 // loop_pre_header
    _
  $region3: #{crestereo_forward.50} parent=0 // loop_header
    %s9 = sphi 0, %s13
    %p10 = scmp.ge.s32.totalorder %s9, 98
    %s16 = sphi 0, %s35
    %s17 = sphi 0, %s31
    %s18 = sphi 0, %s27
    %s19 = sphi 0, %s16
    %s20 = sphi 0, %s17
    %s21 = sphi 0, %s18
    %s22 = sphi 0, %s19
    %s23 = sphi 0, %s20
    %s24 = sphi 0, %s21
    %s44 = sphi 0, %s46
    %s47 = sphi 0, %s44
    %s48 = sphi 0, %s47
    %s64 = sphi 0, %s48
    %s68 = sphi 0, %s68
    %s70 = sphi 0, %s68
    %s71 = sphi 0, %s70
    %s85 = sphi 0, %s71
    %s89 = sphi 0, %s89
    %s91 = sphi 0, %s89
    %s92 = sphi 0, %s91
    %s106 = sphi 0, %s92
    %s116 = sphi 0, %s118
    %s119 = sphi 0, %s116
    %s120 = sphi 0, %s119
    %s136 = sphi 0, %s120
  $region4: #{crestereo_forward.50} parent=0 // loop_header_branch
    %12 = sbr.rel (%p10) target = $region8
  $region5: #{crestereo_forward.50} parent=0 // loop_body
    %s14 = ssub.s32 %s9, 1
    %s15 = ssub.s32 %s9, 2
    %s25 = sadd.s32 1, %s18
    %p26 = scmp.ge.s32.totalorder %s25, 3
    %s27 = scalar_select %p26, 0, %s25
    %s28 = sadd.s32 1, %s17
    %s29 = scalar_select %p26, %s28, %s17
    %p30 = scmp.ge.s32.totalorder %s29, 16
    %s31 = scalar_select %p30, 0, %s29
    %s32 = sadd.s32 1, %s16
    %s33 = scalar_select %p30, %s32, %s16
    %p34 = scmp.ge.s32.totalorder %s33, 2
    %s35 = scalar_select %p34, 0, %s33
    %s36 = smul.u32 %s16, 18
    %s37 = sadd.s32 %s36, %s17
    %s38 = sadd.s32 %s37, %s18
    %s39 = smul.u32 %s35, 18
    %s40 = sadd.s32 %s39, %s31
    %s41 = sadd.s32 %s40, %s27
    %s42 = ssub.s32 %s38, %s41
    %p43 = scmp.eq.s32.totalorder %s42, 0
    %s45 = sadd.s32 %s44, 1
    %s46 = scalar_select %p43, %s44, %s45
    %p49 = pneg %p43
    %p50 = scmp.eq.s32.totalorder %s9, 95
    %p51 = por %p49, %p50
    %p52 = scmp.ne.s32.totalorder %s44, %s47
    %p53 = scmp.eq.s32.totalorder %s9, 0
    %p54 = por %p52, %p53
    %p55 = scmp.ne.s32.totalorder %s44, %s47
    %p56 = scmp.eq.s32.totalorder %s14, 95
    %p57 = por %p55, %p56
    %p58 = scmp.ne.s32.totalorder %s47, %s48
    %p59 = scmp.eq.s32.totalorder %s14, 0
    %p60 = por %p58, %p59
    %p61 = scmp.ne.s32.totalorder %s47, %s48
    %p62 = scmp.eq.s32.totalorder %s15, 95
    %p63 = por %p61, %p62
    %p65 = scmp.ne.s32.totalorder %s48, %s64
    %p66 = scmp.eq.s32.totalorder %s15, 0
    %p67 = por %p65, %p66
    %s69 = sadd.s32 %s68, 1
    %p72 = scmp.eq.s32.totalorder %s9, 95
    %p73 = scmp.ne.s32.totalorder %s68, %s70
    %p74 = scmp.eq.s32.totalorder %s9, 0
    %p75 = por %p73, %p74
    %p76 = scmp.ne.s32.totalorder %s68, %s70
    %p77 = scmp.eq.s32.totalorder %s14, 95
    %p78 = por %p76, %p77
    %p79 = scmp.ne.s32.totalorder %s70, %s71
    %p80 = scmp.eq.s32.totalorder %s14, 0
    %p81 = por %p79, %p80
    %p82 = scmp.ne.s32.totalorder %s70, %s71
    %p83 = scmp.eq.s32.totalorder %s15, 95
    %p84 = por %p82, %p83
    %p86 = scmp.ne.s32.totalorder %s71, %s85
    %p87 = scmp.eq.s32.totalorder %s15, 0
    %p88 = por %p86, %p87
    %s90 = sadd.s32 %s89, 1
    %p93 = scmp.eq.s32.totalorder %s9, 95
    %p94 = scmp.ne.s32.totalorder %s89, %s91
    %p95 = scmp.eq.s32.totalorder %s9, 0
    %p96 = por %p94, %p95
    %p97 = scmp.ne.s32.totalorder %s89, %s91
    %p98 = scmp.eq.s32.totalorder %s14, 95
    %p99 = por %p97, %p98
    %p100 = scmp.ne.s32.totalorder %s91, %s92
    %p101 = scmp.eq.s32.totalorder %s14, 0
    %p102 = por %p100, %p101
    %p103 = scmp.ne.s32.totalorder %s91, %s92
    %p104 = scmp.eq.s32.totalorder %s15, 95
    %p105 = por %p103, %p104
    %p107 = scmp.ne.s32.totalorder %s92, %s106
    %p108 = scmp.eq.s32.totalorder %s15, 0
    %p109 = por %p107, %p108
    %s110 = smul.u32 %s16, 16
    %s111 = sadd.s32 %s110, %s17
    %s112 = smul.u32 %s35, 16
    %s113 = sadd.s32 %s112, %s31
    %s114 = ssub.s32 %s111, %s113
    %p115 = scmp.eq.s32.totalorder %s114, 0
    %s117 = sadd.s32 %s116, 1
    %s118 = scalar_select %p115, %s116, %s117
    %p121 = pneg %p115
    %p122 = scmp.eq.s32.totalorder %s9, 95
    %p123 = por %p121, %p122
    %p124 = scmp.ne.s32.totalorder %s116, %s119
    %p125 = scmp.eq.s32.totalorder %s9, 0
    %p126 = por %p124, %p125
    %p127 = scmp.ne.s32.totalorder %s116, %s119
    %p128 = scmp.eq.s32.totalorder %s14, 95
    %p129 = por %p127, %p128
    %p130 = scmp.ne.s32.totalorder %s119, %s120
    %p131 = scmp.eq.s32.totalorder %s14, 0
    %p132 = por %p130, %p131
    %p133 = scmp.ne.s32.totalorder %s119, %s120
    %p134 = scmp.eq.s32.totalorder %s15, 95
    %p135 = por %p133, %p134
    %p137 = scmp.ne.s32.totalorder %s120, %s136
    %p138 = scmp.eq.s32.totalorder %s15, 0
    %p139 = por %p137, %p138
    %p140 = scmp.le.s32.totalorder 1, %s9
    %p141 = scmp.lt.s32.totalorder %s9, 97
    %p142 = pnand %p140, %p141
    %p143 = pneg %p142
    // Predicated region
    $region9: #{crestereo_forward.50} parent=5 // pred_check
      _
    $region10: #{crestereo_forward.50} parent=5 // pred_check_branch
      %145 = sbr.rel (%p142) target = $region12
    $region11: #{crestereo_forward.50} parent=5 // pred_region
      %s146 = ssub.s32 %s9, 1
      // Predicated region
      $region13: #{crestereo_forward.50} parent=11 // pred_check
        %p147 = pneg %p81
      $region14: #{crestereo_forward.50} parent=11 // pred_check_branch
        %149 = sbr.rel (%p147) target = $region16
      $region15: #{crestereo_forward.50} parent=11 // pred_region
        _
      $region16: #{crestereo_forward.50} parent=11 // pred_fallthru
        _
      // Predicated region
      $region17: #{crestereo_forward.50} parent=11 // pred_check
        %p150 = pneg %p102
      $region18: #{crestereo_forward.50} parent=11 // pred_check_branch
        %152 = sbr.rel (%p150) target = $region20
      $region19: #{crestereo_forward.50} parent=11 // pred_region
        _
      $region20: #{crestereo_forward.50} parent=11 // pred_fallthru
        _
    $region12: #{crestereo_forward.50} parent=5 // pred_fallthru
      _
    %p153 = scmp.lt.s32.totalorder %s9, 96
    // Predicated region
    $region21: #{crestereo_forward.50} parent=5 // pred_check
      %p154 = pneg %p153
    $region22: #{crestereo_forward.50} parent=5 // pred_check_branch
      %156 = sbr.rel (%p154) target = $region24
    $region23: #{crestereo_forward.50} parent=5 // pred_region
      // Predicated region
      $region25: #{crestereo_forward.50} parent=23 // pred_check
        %p157 = pneg %p54
      $region26: #{crestereo_forward.50} parent=23 // pred_check_branch
        %159 = sbr.rel (%p157) target = $region28
      $region27: #{crestereo_forward.50} parent=23 // pred_region
        %s160 = smul.u32 %s16, 18
        %s161 = sadd.s32 %s160, %s17
        %s162 = sadd.s32 %s161, %s18
        %p163 = scmp.lt.s32.totalorder %s162, 35
        %s164 = scalar_select %p163, %s162, 35
        %s165 = smul.addr %s164, 3
        %s166 = smul.addr %s165, 4
        %s167 = scalar_lea.vmem %s0, %s166
        %s168 = smul.u32 %s16, 18
        %s169 = sadd.s32 %s168, %s17
        %s170 = sadd.s32 %s169, %s18
      $region28: #{crestereo_forward.50} parent=23 // pred_fallthru
        _
    $region24: #{crestereo_forward.50} parent=5 // pred_fallthru
      _
    %p171 = scmp.le.s32.totalorder 1, %s9
    %p172 = scmp.lt.s32.totalorder %s9, 97
    %p173 = pnand %p171, %p172
    %p174 = pneg %p173
    // Predicated region
    $region29: #{crestereo_forward.50} parent=5 // pred_check
      _
    $region30: #{crestereo_forward.50} parent=5 // pred_check_branch
      %176 = sbr.rel (%p173) target = $region32
    $region31: #{crestereo_forward.50} parent=5 // pred_region
      %s177 = ssub.s32 %s9, 1
      %s178 = smul.u32 %s19, 18
      %s179 = sadd.s32 %s178, %s20
      %s180 = sadd.s32 %s179, %s21
      %p181 = scmp.lt.s32.totalorder %s180, 35
      %s182 = scalar_select %p181, %s180, 35
      %s183 = smul.addr %s182, 3
      %s184 = smul.addr %s183, 4
      %s185 = scalar_lea.vmem %s0, %s184
      %p186 = pneg %p60
      %p187 = pneg %p57
      %p188 = pneg %p81
      %p189 = pneg %p78
      %p190 = pneg %p102
      %p191 = pneg %p99
      %p192 = pneg %p132
      %p193 = pneg %p129
      %s194 = smul.u32 %s19, 16
      %s195 = sadd.s32 %s194, %s20
      %p196 = scmp.lt.s32.totalorder %s195, 31
      %s197 = scalar_select %p196, %s195, 31
      %s198 = smul.addr %s197, 2
      %s199 = smul.addr %s198, 4
      %s200 = scalar_lea.vmem %s3, %s199
      %s201 = smul.u32 %s19, 18
      %s202 = sadd.s32 %s201, %s20
      %s203 = sadd.s32 %s202, %s21
      %p204 = scmp.lt.s32.totalorder %s203, 35
      %s205 = scalar_select %p204, %s203, 35
      %s206 = smul.addr %s205, 3
      %s207 = smul.addr %s206, 4
      %s208 = scalar_lea.vmem %s0, %s207
      %s209 = smul.u32 %s19, 18
      %s210 = sadd.s32 %s209, %s20
      %s211 = sadd.s32 %s210, %s21
      %s212 = smul.u32 %s19, 16
      %s213 = sadd.s32 %s212, %s20
      %p214 = scmp.lt.s32.totalorder %s213, 31
      %s215 = scalar_select %p214, %s213, 31
      %s216 = smul.addr %s215, 2
      %s217 = smul.addr %s216, 4
      %s218 = scalar_lea.vmem %s3, %s217
      %s219 = smul.u32 %s19, 16
      %s220 = sadd.s32 %s219, %s20
      %p222 = scmp.eq.s32.totalorder %s21, 0
      // Predicated region
      $region33: #{crestereo_forward.50} parent=31 // pred_check
        %p223 = pneg %p222
      $region34: #{crestereo_forward.50} parent=31 // pred_check_branch
        %225 = sbr.rel (%p223) target = $region36
      $region35: #{crestereo_forward.50} parent=31 // pred_region
        %226 = vst [vmem:[#allocation2] sm:$0xff] 0.0
        %227 = vst [vmem:[#allocation2 + $0x8] sm:$0xff] 0.0
      $region36: #{crestereo_forward.50} parent=31 // pred_fallthru
        _
      %v228 = vld [vmem:[#allocation2] sm:$0xff]
      %v229 = vld [vmem:[#allocation2 + $0x8] sm:$0xff]
      %v230 = vld [vmem:[%s208] sm:$0xf]
      %v231 = vld [vmem:[%s208 + $0x4] sm:$0xf]
      %s232 = smul.u32 %s21, 3
      %s233 = smul.u32 %s232, 16
      %s234 = smul.addr %s233, 4
      %s235 = scalar_lea.vmem %s1, %s234
      %v236 = vld [vmem:[%s235] sm:$0xf]
      %v237 = vld [vmem:[%s235 + $0x4] sm:$0xf]
      %v238 = vld [vmem:[%s235 + $0x8] sm:$0xf]
      %v239 = vld [vmem:[%s235 + $0xc] sm:$0xf]
      %v240 = vld [vmem:[%s235 + $0x10] sm:$0xf]
      %v241 = vld [vmem:[%s235 + $0x14] sm:$0xf]
      %v242 = vld [vmem:[%s235 + $0x18] sm:$0xf]
      %v243 = vld [vmem:[%s235 + $0x1c] sm:$0xf]
      %v244 = vld [vmem:[%s235 + $0x20] sm:$0xf]
      %v245 = vld [vmem:[%s235 + $0x24] sm:$0xf]
      %v246 = vld [vmem:[%s235 + $0x28] sm:$0xf]
      %v247 = vld [vmem:[%s235 + $0x2c] sm:$0xf]
      %v248 = vld [vmem:[%s235 + $0x30] sm:$0xf]
      %v249 = vld [vmem:[%s235 + $0x34] sm:$0xf]
      %v250 = vld [vmem:[%s235 + $0x38] sm:$0xf]
      %v251 = vld [vmem:[%s235 + $0x3c] sm:$0xf]
      %v254 = vunpack.c.l.b16 %v230
      %v255 = vunpack.c.l.b16 %v231
      %v256 = vpack.c.b16 %v255, %v254
      %v274 = vunpack.c.l.b16 %v236
      %v275 = vunpack.c.l.b16 %v237
      %v276 = vunpack.c.l.b16 %v238
      %v277 = vunpack.c.l.b16 %v239
      %v278 = vunpack.c.l.b16 %v240
      %v279 = vunpack.c.l.b16 %v241
      %v280 = vunpack.c.l.b16 %v242
      %v281 = vunpack.c.l.b16 %v243
      %v282 = vunpack.c.l.b16 %v244
      %v283 = vunpack.c.l.b16 %v245
      %v284 = vunpack.c.l.b16 %v246
      %v285 = vunpack.c.l.b16 %v247
      %v286 = vunpack.c.l.b16 %v248
      %v287 = vunpack.c.l.b16 %v249
      %v288 = vunpack.c.l.b16 %v250
      %v289 = vunpack.c.l.b16 %v251
      %v290 = vpack.c.b16 %v275, %v274
      %v291 = vpack.c.b16 %v277, %v276
      %v292 = vpack.c.b16 %v279, %v278
      %v293 = vpack.c.b16 %v281, %v280
      %v294 = vpack.c.b16 %v283, %v282
      %v295 = vpack.c.b16 %v285, %v284
      %v296 = vpack.c.b16 %v287, %v286
      %v297 = vpack.c.b16 %v289, %v288
      %306 = vmatprep.subr.bf16.mxu0 0
      %307 = vmatpush1.bf16.msra.mxu0 %v297
      %308 = vmatprep.subr.bf16.mxu0 0
      %309 = vmatpush1.bf16.msra.mxu0 %v296
      %310 = vmatprep.subr.bf16.mxu0 0
      %311 = vmatpush1.bf16.msra.mxu0 %v295
      %312 = vmatprep.subr.bf16.mxu0 0
      %313 = vmatpush1.bf16.msra.mxu0 %v294
      %314 = vmatprep.subr.bf16.mxu0 0
      %315 = vmatpush1.bf16.msra.mxu0 %v293
      %316 = vmatprep.subr.bf16.mxu0 0
      %317 = vmatpush1.bf16.msra.mxu0 %v292
      %318 = vmatprep.subr.bf16.mxu0 0
      %319 = vmatpush1.bf16.msra.mxu0 %v291
      %320 = vmatprep.subr.bf16.mxu0 0
      %321 = vmatpush1.bf16.msra.mxu0 %v290
      %322 = vmatprep.subr.bf16.mxu0 0
      %323 = vmatpush2.bf16.msra.mxu0 0
      %324 = vmatprep.subr.bf16.mxu0 0
      %325 = vmatpush2.bf16.msra.mxu0 0
      %326 = vmatprep.subr.bf16.mxu0 0
      %327 = vmatpush2.bf16.msra.mxu0 0
      %328 = vmatprep.subr.bf16.mxu0 0
      %329 = vmatpush2.bf16.msra.mxu0 0
      %330 = vmatprep.subr.bf16.mxu0 0
      %331 = vmatpush2.bf16.msra.mxu0 0
      %332 = vmatprep.subr.bf16.mxu0 0
      %333 = vmatpush2.bf16.msra.mxu0 0
      %334 = vmatprep.subr.bf16.mxu0 0
      %335 = vmatpush2.bf16.msra.mxu0 0
      %336 = vmatprep.subr.bf16.mxu0 0
      %337 = vmatpush2.bf16.msra.mxu0 0
      %338 = vmatprep.mubr.bf16.mxu0 0
      %339 = vmatmul.mubr.bf16.gmra.mxu0 %v256
      %v340 = vpop.f32.mrf.mxu0
      %v341 = vadd.f32 0.0, %v340
      %v342 = vpop.f32.mrf.mxu0
      %v343 = vpop.f32.mrf.mxu0
      %v344 = vadd.f32 0.0, %v343
      %v345 = vpop.f32.mrf.mxu0
      %346 = vdwg.mxu0
      %v347 = vadd.f32 %v228, %v341
      %v348 = vadd.f32 %v229, %v344
      %v349 = vld [vmem:[%s208] sm:$0xf]
      %v350 = vld [vmem:[%s208 + $0x4] sm:$0xf]
      %v351 = vld [vmem:[%s208 + $0x8] sm:$0x1]
      %s352 = sadd.s32 %s232, 1
      %s353 = smul.u32 %s352, 16
      %s354 = smul.addr %s353, 4
      %s355 = scalar_lea.vmem %s1, %s354
      %v356 = vld [vmem:[%s355] sm:$0xf]
      %v357 = vld [vmem:[%s355 + $0x4] sm:$0xf]
      %v358 = vld [vmem:[%s355 + $0x8] sm:$0xf]
      %v359 = vld [vmem:[%s355 + $0xc] sm:$0xf]
      %v360 = vld [vmem:[%s355 + $0x10] sm:$0xf]
      %v361 = vld [vmem:[%s355 + $0x14] sm:$0xf]
      %v362 = vld [vmem:[%s355 + $0x18] sm:$0xf]
      %v363 = vld [vmem:[%s355 + $0x1c] sm:$0xf]
      %v364 = vld [vmem:[%s355 + $0x20] sm:$0xf]
      %v365 = vld [vmem:[%s355 + $0x24] sm:$0xf]
      %v366 = vld [vmem:[%s355 + $0x28] sm:$0xf]
      %v367 = vld [vmem:[%s355 + $0x2c] sm:$0xf]
      %v368 = vld [vmem:[%s355 + $0x30] sm:$0xf]
      %v369 = vld [vmem:[%s355 + $0x34] sm:$0xf]
      %v370 = vld [vmem:[%s355 + $0x38] sm:$0xf]
      %v371 = vld [vmem:[%s355 + $0x3c] sm:$0xf]
      %v375 = vunpack.c.l.b16 %v349
      %v376 = vunpack.c.l.b16 %v350
      %v377 = vunpack.c.l.b16 %v351
      %v378 = vpack.c.b16 %v376, %v375
      %v379 = vpack.c.b16 %v377, %v377
      %vm380 = vsmask.f32 7424
      %v382 = vshrl.u32 %v378, 16
      %v384 = vshll.u32 %v378, 16
      %v386 = vrot.slane %v384, 1
      %v387 = vor.u32 %v382, %v386
      %v389 = vshll.u32 %v379, 16
      %v391 = vrot.slane %v389, 1
      %v392 = vsel %vm380, %v387, %v391
      %v410 = vunpack.c.l.b16 %v356
      %v411 = vunpack.c.l.b16 %v357
      %v412 = vunpack.c.l.b16 %v358
      %v413 = vunpack.c.l.b16 %v359
      %v414 = vunpack.c.l.b16 %v360
      %v415 = vunpack.c.l.b16 %v361
      %v416 = vunpack.c.l.b16 %v362
      %v417 = vunpack.c.l.b16 %v363
      %v418 = vunpack.c.l.b16 %v364
      %v419 = vunpack.c.l.b16 %v365
      %v420 = vunpack.c.l.b16 %v366
      %v421 = vunpack.c.l.b16 %v367
      %v422 = vunpack.c.l.b16 %v368
      %v423 = vunpack.c.l.b16 %v369
      %v424 = vunpack.c.l.b16 %v370
      %v425 = vunpack.c.l.b16 %v371
      %v426 = vpack.c.b16 %v411, %v410
      %v427 = vpack.c.b16 %v413, %v412
      %v428 = vpack.c.b16 %v415, %v414
      %v429 = vpack.c.b16 %v417, %v416
      %v430 = vpack.c.b16 %v419, %v418
      %v431 = vpack.c.b16 %v421, %v420
      %v432 = vpack.c.b16 %v423, %v422
      %v433 = vpack.c.b16 %v425, %v424
      %442 = vmatprep.subr.bf16.mxu0 0
      %443 = vmatpush1.bf16.msra.mxu0 %v433
      %444 = vmatprep.subr.bf16.mxu0 0
      %445 = vmatpush1.bf16.msra.mxu0 %v432
      %446 = vmatprep.subr.bf16.mxu0 0
      %447 = vmatpush1.bf16.msra.mxu0 %v431
      %448 = vmatprep.subr.bf16.mxu0 0
      %449 = vmatpush1.bf16.msra.mxu0 %v430
      %450 = vmatprep.subr.bf16.mxu0 0
      %451 = vmatpush1.bf16.msra.mxu0 %v429
      %452 = vmatprep.subr.bf16.mxu0 0
      %453 = vmatpush1.bf16.msra.mxu0 %v428
      %454 = vmatprep.subr.bf16.mxu0 0
      %455 = vmatpush1.bf16.msra.mxu0 %v427
      %456 = vmatprep.subr.bf16.mxu0 0
      %457 = vmatpush1.bf16.msra.mxu0 %v426
      %458 = vmatprep.subr.bf16.mxu0 0
      %459 = vmatpush2.bf16.msra.mxu0 0
      %460 = vmatprep.subr.bf16.mxu0 0
      %461 = vmatpush2.bf16.msra.mxu0 0
      %462 = vmatprep.subr.bf16.mxu0 0
      %463 = vmatpush2.bf16.msra.mxu0 0
      %464 = vmatprep.subr.bf16.mxu0 0
      %465 = vmatpush2.bf16.msra.mxu0 0
      %466 = vmatprep.subr.bf16.mxu0 0
      %467 = vmatpush2.bf16.msra.mxu0 0
      %468 = vmatprep.subr.bf16.mxu0 0
      %469 = vmatpush2.bf16.msra.mxu0 0
      %470 = vmatprep.subr.bf16.mxu0 0
      %471 = vmatpush2.bf16.msra.mxu0 0
      %472 = vmatprep.subr.bf16.mxu0 0
      %473 = vmatpush2.bf16.msra.mxu0 0
      %474 = vmatprep.mubr.bf16.mxu0 0
      %475 = vmatmul.mubr.bf16.gmra.mxu0 %v392
      %v476 = vpop.f32.mrf.mxu0
      %v477 = vadd.f32 0.0, %v476
      %v478 = vpop.f32.mrf.mxu0
      %v479 = vpop.f32.mrf.mxu0
      %v480 = vadd.f32 0.0, %v479
      %v481 = vpop.f32.mrf.mxu0
      %482 = vdwg.mxu0
      %v483 = vadd.f32 %v347, %v477
      %v484 = vadd.f32 %v348, %v480
      %v485 = vld [vmem:[%s208] sm:$0xe]
      %s486 = sadd.s32 %s232, 2
      %s487 = smul.u32 %s486, 16
      %s488 = smul.addr %s487, 4
      %s489 = scalar_lea.vmem %s1, %s488
      %v490 = vld [vmem:[%s489] sm:$0xf]
      %v491 = vld [vmem:[%s489 + $0x4] sm:$0xf]
      %v492 = vld [vmem:[%s489 + $0x8] sm:$0xf]
      %v493 = vld [vmem:[%s489 + $0xc] sm:$0xf]
      %v494 = vld [vmem:[%s489 + $0x10] sm:$0xf]
      %v495 = vld [vmem:[%s489 + $0x14] sm:$0xf]
      %v496 = vld [vmem:[%s489 + $0x18] sm:$0xf]
      %v497 = vld [vmem:[%s489 + $0x1c] sm:$0xf]
      %v498 = vld [vmem:[%s489 + $0x20] sm:$0xf]
      %v499 = vld [vmem:[%s489 + $0x24] sm:$0xf]
      %v500 = vld [vmem:[%s489 + $0x28] sm:$0xf]
      %v501 = vld [vmem:[%s489 + $0x2c] sm:$0xf]
      %v502 = vld [vmem:[%s489 + $0x30] sm:$0xf]
      %v503 = vld [vmem:[%s489 + $0x34] sm:$0xf]
      %v504 = vld [vmem:[%s489 + $0x38] sm:$0xf]
      %v505 = vld [vmem:[%s489 + $0x3c] sm:$0xf]
      %v507 = vunpack.c.l.b16 %v485
      %v508 = vpack.c.b16 %v376, %v507
      %vm509 = vcmask 1046528
      %v510 = vrot.slane %v508, 1
      %v511 = vrot.slane %v379, 1
      %v512 = vsel %vm509, %v510, %v511
      %v530 = vunpack.c.l.b16 %v490
      %v531 = vunpack.c.l.b16 %v491
      %v532 = vunpack.c.l.b16 %v492
      %v533 = vunpack.c.l.b16 %v493
      %v534 = vunpack.c.l.b16 %v494
      %v535 = vunpack.c.l.b16 %v495
      %v536 = vunpack.c.l.b16 %v496
      %v537 = vunpack.c.l.b16 %v497
      %v538 = vunpack.c.l.b16 %v498
      %v539 = vunpack.c.l.b16 %v499
      %v540 = vunpack.c.l.b16 %v500
      %v541 = vunpack.c.l.b16 %v501
      %v542 = vunpack.c.l.b16 %v502
      %v543 = vunpack.c.l.b16 %v503
      %v544 = vunpack.c.l.b16 %v504
      %v545 = vunpack.c.l.b16 %v505
      %v546 = vpack.c.b16 %v531, %v530
      %v547 = vpack.c.b16 %v533, %v532
      %v548 = vpack.c.b16 %v535, %v534
      %v549 = vpack.c.b16 %v537, %v536
      %v550 = vpack.c.b16 %v539, %v538
      %v551 = vpack.c.b16 %v541, %v540
      %v552 = vpack.c.b16 %v543, %v542
      %v553 = vpack.c.b16 %v545, %v544
      %562 = vmatprep.subr.bf16.mxu0 0
      %563 = vmatpush1.bf16.msra.mxu0 %v553
      %564 = vmatprep.subr.bf16.mxu0 0
      %565 = vmatpush1.bf16.msra.mxu0 %v552
      %566 = vmatprep.subr.bf16.mxu0 0
      %567 = vmatpush1.bf16.msra.mxu0 %v551
      %568 = vmatprep.subr.bf16.mxu0 0
      %569 = vmatpush1.bf16.msra.mxu0 %v550
      %570 = vmatprep.subr.bf16.mxu0 0
      %571 = vmatpush1.bf16.msra.mxu0 %v549
      %572 = vmatprep.subr.bf16.mxu0 0
      %573 = vmatpush1.bf16.msra.mxu0 %v548
      %574 = vmatprep.subr.bf16.mxu0 0
      %575 = vmatpush1.bf16.msra.mxu0 %v547
      %576 = vmatprep.subr.bf16.mxu0 0
      %577 = vmatpush1.bf16.msra.mxu0 %v546
      %578 = vmatprep.subr.bf16.mxu0 0
      %579 = vmatpush2.bf16.msra.mxu0 0
      %580 = vmatprep.subr.bf16.mxu0 0
      %581 = vmatpush2.bf16.msra.mxu0 0
      %582 = vmatprep.subr.bf16.mxu0 0
      %583 = vmatpush2.bf16.msra.mxu0 0
      %584 = vmatprep.subr.bf16.mxu0 0
      %585 = vmatpush2.bf16.msra.mxu0 0
      %586 = vmatprep.subr.bf16.mxu0 0
      %587 = vmatpush2.bf16.msra.mxu0 0
      %588 = vmatprep.subr.bf16.mxu0 0
      %589 = vmatpush2.bf16.msra.mxu0 0
      %590 = vmatprep.subr.bf16.mxu0 0
      %591 = vmatpush2.bf16.msra.mxu0 0
      %592 = vmatprep.subr.bf16.mxu0 0
      %593 = vmatpush2.bf16.msra.mxu0 0
      %594 = vmatprep.mubr.bf16.mxu0 0
      %595 = vmatmul.mubr.bf16.gmra.mxu0 %v512
      %v596 = vpop.f32.mrf.mxu0
      %v597 = vadd.f32 0.0, %v596
      %v598 = vpop.f32.mrf.mxu0
      %v599 = vpop.f32.mrf.mxu0
      %v600 = vadd.f32 0.0, %v599
      %v601 = vpop.f32.mrf.mxu0
      %602 = vdwg.mxu0
      %v603 = vadd.f32 %v483, %v597
      %v604 = vadd.f32 %v484, %v600
      %605 = vst [vmem:[#allocation2] sm:$0xff] %v603
      %606 = vst [vmem:[#allocation2 + $0x8] sm:$0xff] %v604
      %p607 = scmp.eq.s32.totalorder %s21, 2
      // Predicated region
      $region37: #{crestereo_forward.50} parent=31 // pred_check
        %p608 = pneg %p607
      $region38: #{crestereo_forward.50} parent=31 // pred_check_branch
        %610 = sbr.rel (%p608) target = $region40
      $region39: #{crestereo_forward.50} parent=31 // pred_region
        %v611 = vld [vmem:[#allocation2] sm:$0xff]
        %v612 = vld [vmem:[#allocation2 + $0x8] sm:$0xff]
        %v613 = vld [vmem:[%s2] sm:$0x1]
        %v615 = vlaneseq
        %v616 = vshrl.u32 %v615, 7
        %v617 = vsub.s32 0, %v616
        %v618 = vrot.slane %v613, %v617
        %v620 = vadd.f32 %v611, %v618
        %v621 = vadd.f32 %v612, %v618
        %v622 = vpack.c.bf16 %v621, %v620
        %v624 = vunpack.c.l.b16 %v622
        %v625 = vunpack.c.h.b16 %v622
        %v626 = vpack.c.b16 %v624, %v624
        %v627 = vpack.c.b16 %v625, %v625
        %630 = vst [vmem:[%s218] sm:$0xf] %v626
        %631 = vst [vmem:[%s218 + $0x4] sm:$0xf] %v627
      $region40: #{crestereo_forward.50} parent=31 // pred_fallthru
        _
      %s632 = smul.u32 %s19, 16
      %s633 = sadd.s32 %s632, %s20
      %p634 = scmp.lt.s32.totalorder %s633, 31
      %s635 = scalar_select %p634, %s633, 31
      %s636 = smul.addr %s635, 2
      %s637 = smul.addr %s636, 4
      %s638 = scalar_lea.vmem %s3, %s637
      // Predicated region
      $region41: #{crestereo_forward.50} parent=31 // pred_check
        %p639 = pneg %p129
      $region42: #{crestereo_forward.50} parent=31 // pred_check_branch
        %641 = sbr.rel (%p639) target = $region44
      $region43: #{crestereo_forward.50} parent=31 // pred_region
        %s642 = smul.u32 %s19, 16
        %s643 = sadd.s32 %s642, %s20
      $region44: #{crestereo_forward.50} parent=31 // pred_fallthru
        _
    $region32: #{crestereo_forward.50} parent=5 // pred_fallthru
      _
    %p644 = scmp.le.s32.totalorder 2, %s9
    // Predicated region
    $region45: #{crestereo_forward.50} parent=5 // pred_check
      %p645 = pneg %p644
    $region46: #{crestereo_forward.50} parent=5 // pred_check_branch
      %647 = sbr.rel (%p645) target = $region48
    $region47: #{crestereo_forward.50} parent=5 // pred_region
      %s648 = ssub.s32 %s9, 2
      // Predicated region
      $region49: #{crestereo_forward.50} parent=47 // pred_check
        %p649 = pneg %p135
      $region50: #{crestereo_forward.50} parent=47 // pred_check_branch
        %651 = sbr.rel (%p649) target = $region52
      $region51: #{crestereo_forward.50} parent=47 // pred_region
        %s652 = smul.u32 %s22, 16
        %s653 = sadd.s32 %s652, %s23
        %p654 = scmp.lt.s32.totalorder %s653, 31
        %s655 = scalar_select %p654, %s653, 31
        %s656 = smul.addr %s655, 2
        %s657 = smul.addr %s656, 4
        %s658 = scalar_lea.vmem %s3, %s657
      $region52: #{crestereo_forward.50} parent=47 // pred_fallthru
        _
    $region48: #{crestereo_forward.50} parent=5 // pred_fallthru
      _
  $region6: #{crestereo_forward.50} parent=0 // loop_footer
    %s13 = sadd.s32 1, %s9
  $region7: #{crestereo_forward.50} parent=0 // loop_footer_branch
    %8 = sbr.rel target = $region3
  $region8: #{crestereo_forward.50} parent=0 // loop_exit
    _

// kernel: crestereo_forward.55
$region0: #{crestereo_forward.55}
  #allocation0 [shape = 'u32[]', space=smem, size = 0x4, offset = 0x4, fixed_abs, tag = 'smem constant byte address 0x4 - core index']
  #allocation1 [shape = 'u32[144,128]{1,0:T(1,128)}', space=vmem, size = 0x12000, scoped, tag = 'internal scratch']
  %s0 = inlined_call_operand.vmem [shape: bf16[2,256,128], index: 0, kind: input, shape index: {}]
  %s1 = inlined_call_operand.vmem [shape: f32[2,1,128], index: 1, kind: input, shape index: {}]
  %s2 = inlined_call_operand.vmem [shape: f32[2,1,128], index: 2, kind: input, shape index: {}]
  %s3 = inlined_call_operand.vmem [shape: bf16[2,256,128], index: 3, kind: input, shape index: {}]
  %s4 = inlined_call_operand.vmem [shape: bf16[2,256,128], index: 4, kind: output, shape index: {}]
  %s5 = sld [smem:[#allocation0]]
  $region49: #{crestereo_forward.55} parent=0
    _
  %s7 = ssub.s32 1, %s5
  %s8 = scalar_select 0, %s7, %s5
  loop: start=0, step=1, limit=4
  $region2: #{crestereo_forward.55} parent=0 // loop_pre_header
    _
  $region3: #{crestereo_forward.55} parent=0 // loop_header
    %s10 = sphi 0, %s14
    %p11 = scmp.ge.s32.totalorder %s10, 4
    %s17 = sphi 0, %s29
    %s18 = sphi 0, %s25
    %s19 = sphi 0, %s17
    %s20 = sphi 0, %s18
    %s21 = sphi 0, %s19
    %s22 = sphi 0, %s20
    %s34 = sphi 0, %s36
    %s37 = sphi 0, %s34
    %s38 = sphi 0, %s37
    %s54 = sphi 0, %s38
    %s60 = sphi 0, %s62
    %s63 = sphi 0, %s60
    %s64 = sphi 0, %s63
    %s80 = sphi 0, %s64
    %s86 = sphi 0, %s88
    %s89 = sphi 0, %s86
    %s90 = sphi 0, %s89
    %s106 = sphi 0, %s90
    %s114 = sphi 0, %s116
    %s117 = sphi 0, %s114
    %s118 = sphi 0, %s117
    %s134 = sphi 0, %s118
    %s142 = sphi 0, %s144
    %s145 = sphi 0, %s142
    %s146 = sphi 0, %s145
    %s162 = sphi 0, %s146
  $region4: #{crestereo_forward.55} parent=0 // loop_header_branch
    %13 = sbr.rel (%p11) target = $region8
  $region5: #{crestereo_forward.55} parent=0 // loop_body
    %s15 = ssub.s32 %s10, 1
    %s16 = ssub.s32 %s10, 2
    %s23 = sadd.s32 1, %s18
    %p24 = scmp.ge.s32.totalorder %s23, 1
    %s25 = scalar_select %p24, 0, %s23
    %s26 = sadd.s32 1, %s17
    %s27 = scalar_select %p24, %s26, %s17
    %p28 = scmp.ge.s32.totalorder %s27, 2
    %s29 = scalar_select %p28, 0, %s27
    %s30 = ssub.s32 %s17, %s29
    %s31 = ssub.s32 %s18, %s25
    %s32 = sor.u32 %s30, %s31
    %p33 = scmp.eq.s32.totalorder %s32, 0
    %s35 = sadd.s32 %s34, 1
    %s36 = scalar_select %p33, %s34, %s35
    %p39 = pneg %p33
    %p40 = scmp.eq.s32.totalorder %s10, 1
    %p41 = por %p39, %p40
    %p42 = scmp.ne.s32.totalorder %s34, %s37
    %p43 = scmp.eq.s32.totalorder %s10, 0
    %p44 = por %p42, %p43
    %p45 = scmp.ne.s32.totalorder %s34, %s37
    %p46 = scmp.eq.s32.totalorder %s15, 1
    %p47 = por %p45, %p46
    %p48 = scmp.ne.s32.totalorder %s37, %s38
    %p49 = scmp.eq.s32.totalorder %s15, 0
    %p50 = por %p48, %p49
    %p51 = scmp.ne.s32.totalorder %s37, %s38
    %p52 = scmp.eq.s32.totalorder %s16, 1
    %p53 = por %p51, %p52
    %p55 = scmp.ne.s32.totalorder %s38, %s54
    %p56 = scmp.eq.s32.totalorder %s16, 0
    %p57 = por %p55, %p56
    %s58 = ssub.s32 %s17, %s29
    %p59 = scmp.eq.s32.totalorder %s58, 0
    %s61 = sadd.s32 %s60, 1
    %s62 = scalar_select %p59, %s60, %s61
    %p65 = pneg %p59
    %p66 = scmp.eq.s32.totalorder %s10, 1
    %p67 = por %p65, %p66
    %p68 = scmp.ne.s32.totalorder %s60, %s63
    %p69 = scmp.eq.s32.totalorder %s10, 0
    %p70 = por %p68, %p69
    %p71 = scmp.ne.s32.totalorder %s60, %s63
    %p72 = scmp.eq.s32.totalorder %s15, 1
    %p73 = por %p71, %p72
    %p74 = scmp.ne.s32.totalorder %s63, %s64
    %p75 = scmp.eq.s32.totalorder %s15, 0
    %p76 = por %p74, %p75
    %p77 = scmp.ne.s32.totalorder %s63, %s64
    %p78 = scmp.eq.s32.totalorder %s16, 1
    %p79 = por %p77, %p78
    %p81 = scmp.ne.s32.totalorder %s64, %s80
    %p82 = scmp.eq.s32.totalorder %s16, 0
    %p83 = por %p81, %p82
    %s84 = ssub.s32 %s17, %s29
    %p85 = scmp.eq.s32.totalorder %s84, 0
    %s87 = sadd.s32 %s86, 1
    %s88 = scalar_select %p85, %s86, %s87
    %p91 = pneg %p85
    %p92 = scmp.eq.s32.totalorder %s10, 1
    %p93 = por %p91, %p92
    %p94 = scmp.ne.s32.totalorder %s86, %s89
    %p95 = scmp.eq.s32.totalorder %s10, 0
    %p96 = por %p94, %p95
    %p97 = scmp.ne.s32.totalorder %s86, %s89
    %p98 = scmp.eq.s32.totalorder %s15, 1
    %p99 = por %p97, %p98
    %p100 = scmp.ne.s32.totalorder %s89, %s90
    %p101 = scmp.eq.s32.totalorder %s15, 0
    %p102 = por %p100, %p101
    %p103 = scmp.ne.s32.totalorder %s89, %s90
    %p104 = scmp.eq.s32.totalorder %s16, 1
    %p105 = por %p103, %p104
    %p107 = scmp.ne.s32.totalorder %s90, %s106
    %p108 = scmp.eq.s32.totalorder %s16, 0
    %p109 = por %p107, %p108
    %s110 = ssub.s32 %s17, %s29
    %s111 = ssub.s32 %s18, %s25
    %s112 = sor.u32 %s110, %s111
    %p113 = scmp.eq.s32.totalorder %s112, 0
    %s115 = sadd.s32 %s114, 1
    %s116 = scalar_select %p113, %s114, %s115
    %p119 = pneg %p113
    %p120 = scmp.eq.s32.totalorder %s10, 1
    %p121 = por %p119, %p120
    %p122 = scmp.ne.s32.totalorder %s114, %s117
    %p123 = scmp.eq.s32.totalorder %s10, 0
    %p124 = por %p122, %p123
    %p125 = scmp.ne.s32.totalorder %s114, %s117
    %p126 = scmp.eq.s32.totalorder %s15, 1
    %p127 = por %p125, %p126
    %p128 = scmp.ne.s32.totalorder %s117, %s118
    %p129 = scmp.eq.s32.totalorder %s15, 0
    %p130 = por %p128, %p129
    %p131 = scmp.ne.s32.totalorder %s117, %s118
    %p132 = scmp.eq.s32.totalorder %s16, 1
    %p133 = por %p131, %p132
    %p135 = scmp.ne.s32.totalorder %s118, %s134
    %p136 = scmp.eq.s32.totalorder %s16, 0
    %p137 = por %p135, %p136
    %s138 = ssub.s32 %s17, %s29
    %s139 = ssub.s32 %s18, %s25
    %s140 = sor.u32 %s138, %s139
    %p141 = scmp.eq.s32.totalorder %s140, 0
    %s143 = sadd.s32 %s142, 1
    %s144 = scalar_select %p141, %s142, %s143
    %p147 = pneg %p141
    %p148 = scmp.eq.s32.totalorder %s10, 1
    %p149 = por %p147, %p148
    %p150 = scmp.ne.s32.totalorder %s142, %s145
    %p151 = scmp.eq.s32.totalorder %s10, 0
    %p152 = por %p150, %p151
    %p153 = scmp.ne.s32.totalorder %s142, %s145
    %p154 = scmp.eq.s32.totalorder %s15, 1
    %p155 = por %p153, %p154
    %p156 = scmp.ne.s32.totalorder %s145, %s146
    %p157 = scmp.eq.s32.totalorder %s15, 0
    %p158 = por %p156, %p157
    %p159 = scmp.ne.s32.totalorder %s145, %s146
    %p160 = scmp.eq.s32.totalorder %s16, 1
    %p161 = por %p159, %p160
    %p163 = scmp.ne.s32.totalorder %s146, %s162
    %p164 = scmp.eq.s32.totalorder %s16, 0
    %p165 = por %p163, %p164
    %p166 = scmp.le.s32.totalorder 1, %s10
    %p167 = scmp.lt.s32.totalorder %s10, 3
    %p168 = pnand %p166, %p167
    %p169 = pneg %p168
    // Predicated region
    $region9: #{crestereo_forward.55} parent=5 // pred_check
      _
    $region10: #{crestereo_forward.55} parent=5 // pred_check_branch
      %171 = sbr.rel (%p168) target = $region12
    $region11: #{crestereo_forward.55} parent=5 // pred_region
      %s172 = ssub.s32 %s10, 1
    $region12: #{crestereo_forward.55} parent=5 // pred_fallthru
      _
    %p173 = scmp.lt.s32.totalorder %s10, 2
    // Predicated region
    $region13: #{crestereo_forward.55} parent=5 // pred_check
      %p174 = pneg %p173
    $region14: #{crestereo_forward.55} parent=5 // pred_check_branch
      %176 = sbr.rel (%p174) target = $region16
    $region15: #{crestereo_forward.55} parent=5 // pred_region
      // Predicated region
      $region17: #{crestereo_forward.55} parent=15 // pred_check
        %p177 = pneg %p44
      $region18: #{crestereo_forward.55} parent=15 // pred_check_branch
        %179 = sbr.rel (%p177) target = $region20
      $region19: #{crestereo_forward.55} parent=15 // pred_region
        %s180 = smul.u32 32, %s18
        %p181 = scmp.lt.s32.totalorder %s17, 1
        %s182 = scalar_select %p181, %s17, 1
        %p183 = scmp.lt.s32.totalorder %s180, 31
        %s184 = scalar_select %p183, %s180, 31
        %s185 = smul.addr %s182, 32
        %s186 = sadd.s32 %s184, %s185
        %s187 = smul.addr %s186, 4
        %s188 = scalar_lea.vmem %s0, %s187
        %s189 = smul.u32 32, %s18
      $region20: #{crestereo_forward.55} parent=15 // pred_fallthru
        _
      // Predicated region
      $region21: #{crestereo_forward.55} parent=15 // pred_check
        %p190 = pneg %p70
      $region22: #{crestereo_forward.55} parent=15 // pred_check_branch
        %192 = sbr.rel (%p190) target = $region24
      $region23: #{crestereo_forward.55} parent=15 // pred_region
        %p193 = scmp.lt.s32.totalorder %s17, 1
        %s194 = scalar_select %p193, %s17, 1
        %s195 = scalar_lea.vmem %s1, %s194
      $region24: #{crestereo_forward.55} parent=15 // pred_fallthru
        _
      // Predicated region
      $region25: #{crestereo_forward.55} parent=15 // pred_check
        %p196 = pneg %p96
      $region26: #{crestereo_forward.55} parent=15 // pred_check_branch
        %198 = sbr.rel (%p196) target = $region28
      $region27: #{crestereo_forward.55} parent=15 // pred_region
        %p199 = scmp.lt.s32.totalorder %s17, 1
        %s200 = scalar_select %p199, %s17, 1
        %s201 = scalar_lea.vmem %s2, %s200
      $region28: #{crestereo_forward.55} parent=15 // pred_fallthru
        _
      // Predicated region
      $region29: #{crestereo_forward.55} parent=15 // pred_check
        %p202 = pneg %p124
      $region30: #{crestereo_forward.55} parent=15 // pred_check_branch
        %204 = sbr.rel (%p202) target = $region32
      $region31: #{crestereo_forward.55} parent=15 // pred_region
        %s205 = smul.u32 32, %s18
        %p206 = scmp.lt.s32.totalorder %s17, 1
        %s207 = scalar_select %p206, %s17, 1
        %p208 = scmp.lt.s32.totalorder %s205, 31
        %s209 = scalar_select %p208, %s205, 31
        %s210 = smul.addr %s207, 32
        %s211 = sadd.s32 %s209, %s210
        %s212 = smul.addr %s211, 4
        %s213 = scalar_lea.vmem %s3, %s212
        %s214 = smul.u32 32, %s18
      $region32: #{crestereo_forward.55} parent=15 // pred_fallthru
        _
    $region16: #{crestereo_forward.55} parent=5 // pred_fallthru
      _
    %p215 = scmp.le.s32.totalorder 1, %s10
    %p216 = scmp.lt.s32.totalorder %s10, 3
    %p217 = pnand %p215, %p216
    %p218 = pneg %p217
    // Predicated region
    $region33: #{crestereo_forward.55} parent=5 // pred_check
      _
    $region34: #{crestereo_forward.55} parent=5 // pred_check_branch
      %220 = sbr.rel (%p217) target = $region36
    $region35: #{crestereo_forward.55} parent=5 // pred_region
      %s221 = ssub.s32 %s10, 1
      %s222 = smul.u32 32, %s20
      %p223 = scmp.lt.s32.totalorder %s19, 1
      %s224 = scalar_select %p223, %s19, 1
      %p225 = scmp.lt.s32.totalorder %s222, 31
      %s226 = scalar_select %p225, %s222, 31
      %s227 = smul.addr %s224, 32
      %s228 = sadd.s32 %s226, %s227
      %s229 = smul.addr %s228, 4
      %s230 = scalar_lea.vmem %s0, %s229
      %p231 = pneg %p50
      %p232 = pneg %p47
      %p233 = scmp.lt.s32.totalorder %s19, 1
      %s234 = scalar_select %p233, %s19, 1
      %s235 = scalar_lea.vmem %s1, %s234
      %p236 = pneg %p76
      %p237 = pneg %p73
      %p238 = scmp.lt.s32.totalorder %s19, 1
      %s239 = scalar_select %p238, %s19, 1
      %s240 = scalar_lea.vmem %s2, %s239
      %p241 = pneg %p102
      %p242 = pneg %p99
      %s243 = smul.u32 32, %s20
      %p244 = scmp.lt.s32.totalorder %s19, 1
      %s245 = scalar_select %p244, %s19, 1
      %p246 = scmp.lt.s32.totalorder %s243, 31
      %s247 = scalar_select %p246, %s243, 31
      %s248 = smul.addr %s245, 32
      %s249 = sadd.s32 %s247, %s248
      %s250 = smul.addr %s249, 4
      %s251 = scalar_lea.vmem %s3, %s250
      %p252 = pneg %p130
      %p253 = pneg %p127
      %p254 = pneg %p158
      %p255 = pneg %p155
      %s256 = smul.u32 32, %s20
      %p257 = scmp.lt.s32.totalorder %s19, 1
      %s258 = scalar_select %p257, %s19, 1
      %p259 = scmp.lt.s32.totalorder %s256, 31
      %s260 = scalar_select %p259, %s256, 31
      %s261 = smul.addr %s258, 32
      %s262 = sadd.s32 %s260, %s261
      %s263 = smul.addr %s262, 4
      %s264 = scalar_lea.vmem %s4, %s263
      %s265 = smul.u32 32, %s20
      %p266 = scmp.lt.s32.totalorder %s19, 1
      %s267 = scalar_select %p266, %s19, 1
      %p268 = scmp.lt.s32.totalorder %s265, 31
      %s269 = scalar_select %p268, %s265, 31
      %s270 = smul.addr %s267, 32
      %s271 = sadd.s32 %s269, %s270
      %s272 = smul.addr %s271, 4
      %s273 = scalar_lea.vmem %s0, %s272
      %s274 = smul.u32 32, %s20
      %p275 = scmp.lt.s32.totalorder %s19, 1
      %s276 = scalar_select %p275, %s19, 1
      %s277 = scalar_lea.vmem %s1, %s276
      %p278 = scmp.lt.s32.totalorder %s19, 1
      %s279 = scalar_select %p278, %s19, 1
      %s280 = scalar_lea.vmem %s2, %s279
      %s281 = smul.u32 32, %s20
      %p282 = scmp.lt.s32.totalorder %s19, 1
      %s283 = scalar_select %p282, %s19, 1
      %p284 = scmp.lt.s32.totalorder %s281, 31
      %s285 = scalar_select %p284, %s281, 31
      %s286 = smul.addr %s283, 32
      %s287 = sadd.s32 %s285, %s286
      %s288 = smul.addr %s287, 4
      %s289 = scalar_lea.vmem %s3, %s288
      %s290 = smul.u32 32, %s20
      %s291 = smul.u32 32, %s20
      %p292 = scmp.lt.s32.totalorder %s19, 1
      %s293 = scalar_select %p292, %s19, 1
      %p294 = scmp.lt.s32.totalorder %s291, 31
      %s295 = scalar_select %p294, %s291, 31
      %s296 = smul.addr %s293, 32
      %s297 = sadd.s32 %s295, %s296
      %s298 = smul.addr %s297, 4
      %s299 = scalar_lea.vmem %s4, %s298
      %s300 = smul.u32 32, %s20
      %v301 = vld [vmem:[%s277] sm:$0x1]
      %v302 = vmul.f32 %v301, 0.00390625
      %v303 = vld [vmem:[%s280] sm:$0x1]
      %v304 = vmul.f32 %v303, 0.00390625
      %v305 = vmul.f32 %v302, %v302
      %v306 = vsub.f32 %v304, %v305
      %v307 = vmax.f32 %v306, 0.0
      %v308 = vadd.f32 %v307, 1e-05
      %v309 = vrsqrt.pop %v308
      %v310 = vld [vmem:[%s273] sm:$0xf]
      %v311 = vld [vmem:[%s273 + $0x4] sm:$0xf]
      %v312 = vld [vmem:[%s273 + $0x8] sm:$0xf]
      %v313 = vld [vmem:[%s273 + $0xc] sm:$0xf]
      %v314 = vld [vmem:[%s273 + $0x10] sm:$0xf]
      %v315 = vld [vmem:[%s273 + $0x14] sm:$0xf]
      %v316 = vld [vmem:[%s273 + $0x18] sm:$0xf]
      %v317 = vld [vmem:[%s273 + $0x1c] sm:$0xf]
      %v318 = vld [vmem:[%s273 + $0x20] sm:$0xf]
      %v319 = vld [vmem:[%s273 + $0x24] sm:$0xf]
      %v320 = vld [vmem:[%s273 + $0x28] sm:$0xf]
      %v321 = vld [vmem:[%s273 + $0x2c] sm:$0xf]
      %v322 = vld [vmem:[%s273 + $0x30] sm:$0xf]
      %v323 = vld [vmem:[%s273 + $0x34] sm:$0xf]
      %v324 = vld [vmem:[%s273 + $0x38] sm:$0xf]
      %v325 = vld [vmem:[%s273 + $0x3c] sm:$0xf]
      %v326 = vld [vmem:[%s273 + $0x40] sm:$0xf]
      %v327 = vld [vmem:[%s273 + $0x44] sm:$0xf]
      %v328 = vld [vmem:[%s273 + $0x48] sm:$0xf]
      %v329 = vld [vmem:[%s273 + $0x4c] sm:$0xf]
      %v330 = vld [vmem:[%s273 + $0x50] sm:$0xf]
      %v331 = vld [vmem:[%s273 + $0x54] sm:$0xf]
      %v332 = vld [vmem:[%s273 + $0x58] sm:$0xf]
      %v333 = vld [vmem:[%s273 + $0x5c] sm:$0xf]
      %v334 = vld [vmem:[%s273 + $0x60] sm:$0xf]
      %v335 = vld [vmem:[%s273 + $0x64] sm:$0xf]
      %v336 = vld [vmem:[%s273 + $0x68] sm:$0xf]
      %v337 = vld [vmem:[%s273 + $0x6c] sm:$0xf]
      %v338 = vld [vmem:[%s273 + $0x70] sm:$0xf]
      %v339 = vld [vmem:[%s273 + $0x74] sm:$0xf]
      %v340 = vld [vmem:[%s273 + $0x78] sm:$0xf]
      %v341 = vld [vmem:[%s273 + $0x7c] sm:$0xf]
      %v342 = vunpack.c.l.bf16 %v310
      %v343 = vunpack.c.l.bf16 %v311
      %v344 = vunpack.c.l.bf16 %v312
      %v345 = vunpack.c.l.bf16 %v313
      %v346 = vunpack.c.l.bf16 %v314
      %v347 = vunpack.c.l.bf16 %v315
      %v348 = vunpack.c.l.bf16 %v316
      %v349 = vunpack.c.l.bf16 %v317
      %v350 = vunpack.c.l.bf16 %v318
      %v351 = vunpack.c.l.bf16 %v319
      %v352 = vunpack.c.l.bf16 %v320
      %v353 = vunpack.c.l.bf16 %v321
      %v354 = vunpack.c.l.bf16 %v322
      %v355 = vunpack.c.l.bf16 %v323
      %v356 = vunpack.c.l.bf16 %v324
      %v357 = vunpack.c.l.bf16 %v325
      %v358 = vunpack.c.l.bf16 %v326
      %v359 = vunpack.c.l.bf16 %v327
      %v360 = vunpack.c.l.bf16 %v328
      %v361 = vunpack.c.l.bf16 %v329
      %v362 = vunpack.c.l.bf16 %v330
      %v363 = vunpack.c.l.bf16 %v331
      %v364 = vunpack.c.l.bf16 %v332
      %v365 = vunpack.c.l.bf16 %v333
      %v366 = vunpack.c.l.bf16 %v334
      %v367 = vunpack.c.l.bf16 %v335
      %v368 = vunpack.c.l.bf16 %v336
      %v369 = vunpack.c.l.bf16 %v337
      %v370 = vunpack.c.l.bf16 %v338
      %v371 = vunpack.c.l.bf16 %v339
      %v372 = vunpack.c.l.bf16 %v340
      %v373 = vunpack.c.l.bf16 %v341
      %v375 = vlaneseq
      %v376 = vshrl.u32 %v375, 7
      %v377 = vsub.s32 0, %v376
      %v378 = vrot.slane %v302, %v377
      %v380 = vsub.f32 %v342, %v378
      %v381 = vsub.f32 %v343, %v378
      %v382 = vsub.f32 %v344, %v378
      %v383 = vsub.f32 %v345, %v378
      %v384 = vsub.f32 %v346, %v378
      %v385 = vsub.f32 %v347, %v378
      %v386 = vsub.f32 %v348, %v378
      %v387 = vsub.f32 %v349, %v378
      %v388 = vsub.f32 %v350, %v378
      %v389 = vsub.f32 %v351, %v378
      %v390 = vsub.f32 %v352, %v378
      %v391 = vsub.f32 %v353, %v378
      %v392 = vsub.f32 %v354, %v378
      %v393 = vsub.f32 %v355, %v378
      %v394 = vsub.f32 %v356, %v378
      %v395 = vsub.f32 %v357, %v378
      %v396 = vsub.f32 %v358, %v378
      %v397 = vsub.f32 %v359, %v378
      %v398 = vsub.f32 %v360, %v378
      %v399 = vsub.f32 %v361, %v378
      %v400 = vsub.f32 %v362, %v378
      %v401 = vsub.f32 %v363, %v378
      %v402 = vsub.f32 %v364, %v378
      %v403 = vsub.f32 %v365, %v378
      %v404 = vsub.f32 %v366, %v378
      %v405 = vsub.f32 %v367, %v378
      %v406 = vsub.f32 %v368, %v378
      %v407 = vsub.f32 %v369, %v378
      %v408 = vsub.f32 %v370, %v378
      %v409 = vsub.f32 %v371, %v378
      %v410 = vsub.f32 %v372, %v378
      %v411 = vsub.f32 %v373, %v378
      %v413 = vlaneseq
      %v414 = vshrl.u32 %v413, 7
      %v415 = vsub.s32 0, %v414
      %v416 = vrot.slane %v309, %v415
      %v418 = vmul.f32 %v380, %v416
      %v419 = vmul.f32 %v381, %v416
      %v420 = vmul.f32 %v382, %v416
      %v421 = vmul.f32 %v383, %v416
      %v422 = vmul.f32 %v384, %v416
      %v423 = vmul.f32 %v385, %v416
      %v424 = vmul.f32 %v386, %v416
      %v425 = vmul.f32 %v387, %v416
      %v426 = vmul.f32 %v388, %v416
      %v427 = vmul.f32 %v389, %v416
      %v428 = vmul.f32 %v390, %v416
      %v429 = vmul.f32 %v391, %v416
      %v430 = vmul.f32 %v392, %v416
      %v431 = vmul.f32 %v393, %v416
      %v432 = vmul.f32 %v394, %v416
      %v433 = vmul.f32 %v395, %v416
      %v434 = vmul.f32 %v396, %v416
      %v435 = vmul.f32 %v397, %v416
      %v436 = vmul.f32 %v398, %v416
      %v437 = vmul.f32 %v399, %v416
      %v438 = vmul.f32 %v400, %v416
      %v439 = vmul.f32 %v401, %v416
      %v440 = vmul.f32 %v402, %v416
      %v441 = vmul.f32 %v403, %v416
      %v442 = vmul.f32 %v404, %v416
      %v443 = vmul.f32 %v405, %v416
      %v444 = vmul.f32 %v406, %v416
      %v445 = vmul.f32 %v407, %v416
      %v446 = vmul.f32 %v408, %v416
      %v447 = vmul.f32 %v409, %v416
      %v448 = vmul.f32 %v410, %v416
      %v449 = vmul.f32 %v411, %v416
      %v450 = vmax.f32 %v418, 0.0
      %v451 = vmax.f32 %v419, 0.0
      %v452 = vmax.f32 %v420, 0.0
      %v453 = vmax.f32 %v421, 0.0
      %v454 = vmax.f32 %v422, 0.0
      %v455 = vmax.f32 %v423, 0.0
      %v456 = vmax.f32 %v424, 0.0
      %v457 = vmax.f32 %v425, 0.0
      %v458 = vmax.f32 %v426, 0.0
      %v459 = vmax.f32 %v427, 0.0
      %v460 = vmax.f32 %v428, 0.0
      %v461 = vmax.f32 %v429, 0.0
      %v462 = vmax.f32 %v430, 0.0
      %v463 = vmax.f32 %v431, 0.0
      %v464 = vmax.f32 %v432, 0.0
      %v465 = vmax.f32 %v433, 0.0
      %v466 = vmax.f32 %v434, 0.0
      %v467 = vmax.f32 %v435, 0.0
      %v468 = vmax.f32 %v436, 0.0
      %v469 = vmax.f32 %v437, 0.0
      %v470 = vmax.f32 %v438, 0.0
      %v471 = vmax.f32 %v439, 0.0
      %v472 = vmax.f32 %v440, 0.0
      %v473 = vmax.f32 %v441, 0.0
      %v474 = vmax.f32 %v442, 0.0
      %v475 = vmax.f32 %v443, 0.0
      %v476 = vmax.f32 %v444, 0.0
      %v477 = vmax.f32 %v445, 0.0
      %v478 = vmax.f32 %v446, 0.0
      %v479 = vmax.f32 %v447, 0.0
      %v480 = vmax.f32 %v448, 0.0
      %v481 = vmax.f32 %v449, 0.0
      %v482 = vld [vmem:[%s289] sm:$0xf]
      %v483 = vld [vmem:[%s289 + $0x4] sm:$0xf]
      %v484 = vld [vmem:[%s289 + $0x8] sm:$0xf]
      %v485 = vld [vmem:[%s289 + $0xc] sm:$0xf]
      %v486 = vld [vmem:[%s289 + $0x10] sm:$0xf]
      %v487 = vld [vmem:[%s289 + $0x14] sm:$0xf]
      %v488 = vld [vmem:[%s289 + $0x18] sm:$0xf]
      %v489 = vld [vmem:[%s289 + $0x1c] sm:$0xf]
      %v490 = vld [vmem:[%s289 + $0x20] sm:$0xf]
      %v491 = vld [vmem:[%s289 + $0x24] sm:$0xf]
      %v492 = vld [vmem:[%s289 + $0x28] sm:$0xf]
      %v493 = vld [vmem:[%s289 + $0x2c] sm:$0xf]
      %v494 = vld [vmem:[%s289 + $0x30] sm:$0xf]
      %v495 = vld [vmem:[%s289 + $0x34] sm:$0xf]
      %v496 = vld [vmem:[%s289 + $0x38] sm:$0xf]
      %v497 = vld [vmem:[%s289 + $0x3c] sm:$0xf]
      %v498 = vld [vmem:[%s289 + $0x40] sm:$0xf]
      %v499 = vld [vmem:[%s289 + $0x44] sm:$0xf]
      %v500 = vld [vmem:[%s289 + $0x48] sm:$0xf]
      %v501 = vld [vmem:[%s289 + $0x4c] sm:$0xf]
      %v502 = vld [vmem:[%s289 + $0x50] sm:$0xf]
      %v503 = vld [vmem:[%s289 + $0x54] sm:$0xf]
      %v504 = vld [vmem:[%s289 + $0x58] sm:$0xf]
      %v505 = vld [vmem:[%s289 + $0x5c] sm:$0xf]
      %v506 = vld [vmem:[%s289 + $0x60] sm:$0xf]
      %v507 = vld [vmem:[%s289 + $0x64] sm:$0xf]
      %v508 = vld [vmem:[%s289 + $0x68] sm:$0xf]
      %v509 = vld [vmem:[%s289 + $0x6c] sm:$0xf]
      %v510 = vld [vmem:[%s289 + $0x70] sm:$0xf]
      %v511 = vld [vmem:[%s289 + $0x74] sm:$0xf]
      %v512 = vld [vmem:[%s289 + $0x78] sm:$0xf]
      %v513 = vld [vmem:[%s289 + $0x7c] sm:$0xf]
      %v514 = vunpack.c.l.bf16 %v482
      %v515 = vunpack.c.l.bf16 %v483
      %v516 = vunpack.c.l.bf16 %v484
      %v517 = vunpack.c.l.bf16 %v485
      %v518 = vunpack.c.l.bf16 %v486
      %v519 = vunpack.c.l.bf16 %v487
      %v520 = vunpack.c.l.bf16 %v488
      %v521 = vunpack.c.l.bf16 %v489
      %v522 = vunpack.c.l.bf16 %v490
      %v523 = vunpack.c.l.bf16 %v491
      %v524 = vunpack.c.l.bf16 %v492
      %v525 = vunpack.c.l.bf16 %v493
      %v526 = vunpack.c.l.bf16 %v494
      %v527 = vunpack.c.l.bf16 %v495
      %v528 = vunpack.c.l.bf16 %v496
      %v529 = vunpack.c.l.bf16 %v497
      %v530 = vunpack.c.l.bf16 %v498
      %v531 = vunpack.c.l.bf16 %v499
      %v532 = vunpack.c.l.bf16 %v500
      %v533 = vunpack.c.l.bf16 %v501
      %v534 = vunpack.c.l.bf16 %v502
      %v535 = vunpack.c.l.bf16 %v503
      %v536 = vunpack.c.l.bf16 %v504
      %v537 = vunpack.c.l.bf16 %v505
      %v538 = vunpack.c.l.bf16 %v506
      %v539 = vunpack.c.l.bf16 %v507
      %v540 = vunpack.c.l.bf16 %v508
      %v541 = vunpack.c.l.bf16 %v509
      %v542 = vunpack.c.l.bf16 %v510
      %v543 = vunpack.c.l.bf16 %v511
      %v544 = vunpack.c.l.bf16 %v512
      %v545 = vunpack.c.l.bf16 %v513
      %v546 = vadd.f32 %v450, %v514
      %v547 = vadd.f32 %v451, %v515
      %v548 = vadd.f32 %v452, %v516
      %v549 = vadd.f32 %v453, %v517
      %v550 = vadd.f32 %v454, %v518
      %v551 = vadd.f32 %v455, %v519
      %v552 = vadd.f32 %v456, %v520
      %v553 = vadd.f32 %v457, %v521
      %v554 = vadd.f32 %v458, %v522
      %v555 = vadd.f32 %v459, %v523
      %v556 = vadd.f32 %v460, %v524
      %v557 = vadd.f32 %v461, %v525
      %v558 = vadd.f32 %v462, %v526
      %v559 = vadd.f32 %v463, %v527
      %v560 = vadd.f32 %v464, %v528
      %v561 = vadd.f32 %v465, %v529
      %v562 = vadd.f32 %v466, %v530
      %v563 = vadd.f32 %v467, %v531
      %v564 = vadd.f32 %v468, %v532
      %v565 = vadd.f32 %v469, %v533
      %v566 = vadd.f32 %v470, %v534
      %v567 = vadd.f32 %v471, %v535
      %v568 = vadd.f32 %v472, %v536
      %v569 = vadd.f32 %v473, %v537
      %v570 = vadd.f32 %v474, %v538
      %v571 = vadd.f32 %v475, %v539
      %v572 = vadd.f32 %v476, %v540
      %v573 = vadd.f32 %v477, %v541
      %v574 = vadd.f32 %v478, %v542
      %v575 = vadd.f32 %v479, %v543
      %v576 = vadd.f32 %v480, %v544
      %v577 = vadd.f32 %v481, %v545
      %v578 = vmax.f32 %v546, 0.0
      %v579 = vmax.f32 %v547, 0.0
      %v580 = vmax.f32 %v548, 0.0
      %v581 = vmax.f32 %v549, 0.0
      %v582 = vmax.f32 %v550, 0.0
      %v583 = vmax.f32 %v551, 0.0
      %v584 = vmax.f32 %v552, 0.0
      %v585 = vmax.f32 %v553, 0.0
      %v586 = vmax.f32 %v554, 0.0
      %v587 = vmax.f32 %v555, 0.0
      %v588 = vmax.f32 %v556, 0.0
      %v589 = vmax.f32 %v557, 0.0
      %v590 = vmax.f32 %v558, 0.0
      %v591 = vmax.f32 %v559, 0.0
      %v592 = vmax.f32 %v560, 0.0
      %v593 = vmax.f32 %v561, 0.0
      %v594 = vmax.f32 %v562, 0.0
      %v595 = vmax.f32 %v563, 0.0
      %v596 = vmax.f32 %v564, 0.0
      %v597 = vmax.f32 %v565, 0.0
      %v598 = vmax.f32 %v566, 0.0
      %v599 = vmax.f32 %v567, 0.0
      %v600 = vmax.f32 %v568, 0.0
      %v601 = vmax.f32 %v569, 0.0
      %v602 = vmax.f32 %v570, 0.0
      %v603 = vmax.f32 %v571, 0.0
      %v604 = vmax.f32 %v572, 0.0
      %v605 = vmax.f32 %v573, 0.0
      %v606 = vmax.f32 %v574, 0.0
      %v607 = vmax.f32 %v575, 0.0
      %v608 = vmax.f32 %v576, 0.0
      %v609 = vmax.f32 %v577, 0.0
      %v610 = vpack.c.bf16 %v579, %v578
      %v611 = vpack.c.bf16 %v581, %v580
      %v612 = vpack.c.bf16 %v583, %v582
      %v613 = vpack.c.bf16 %v585, %v584
      %v614 = vpack.c.bf16 %v587, %v586
      %v615 = vpack.c.bf16 %v589, %v588
      %v616 = vpack.c.bf16 %v591, %v590
      %v617 = vpack.c.bf16 %v593, %v592
      %v618 = vpack.c.bf16 %v595, %v594
      %v619 = vpack.c.bf16 %v597, %v596
      %v620 = vpack.c.bf16 %v599, %v598
      %v621 = vpack.c.bf16 %v601, %v600
      %v622 = vpack.c.bf16 %v603, %v602
      %v623 = vpack.c.bf16 %v605, %v604
      %v624 = vpack.c.bf16 %v607, %v606
      %v625 = vpack.c.bf16 %v609, %v608
      %v642 = vunpack.c.l.b16 %v610
      %v643 = vunpack.c.h.b16 %v610
      %v644 = vunpack.c.l.b16 %v611
      %v645 = vunpack.c.h.b16 %v611
      %v646 = vunpack.c.l.b16 %v612
      %v647 = vunpack.c.h.b16 %v612
      %v648 = vunpack.c.l.b16 %v613
      %v649 = vunpack.c.h.b16 %v613
      %v650 = vunpack.c.l.b16 %v614
      %v651 = vunpack.c.h.b16 %v614
      %v652 = vunpack.c.l.b16 %v615
      %v653 = vunpack.c.h.b16 %v615
      %v654 = vunpack.c.l.b16 %v616
      %v655 = vunpack.c.h.b16 %v616
      %v656 = vunpack.c.l.b16 %v617
      %v657 = vunpack.c.h.b16 %v617
      %v658 = vunpack.c.l.b16 %v618
      %v659 = vunpack.c.h.b16 %v618
      %v660 = vunpack.c.l.b16 %v619
      %v661 = vunpack.c.h.b16 %v619
      %v662 = vunpack.c.l.b16 %v620
      %v663 = vunpack.c.h.b16 %v620
      %v664 = vunpack.c.l.b16 %v621
      %v665 = vunpack.c.h.b16 %v621
      %v666 = vunpack.c.l.b16 %v622
      %v667 = vunpack.c.h.b16 %v622
      %v668 = vunpack.c.l.b16 %v623
      %v669 = vunpack.c.h.b16 %v623
      %v670 = vunpack.c.l.b16 %v624
      %v671 = vunpack.c.h.b16 %v624
      %v672 = vunpack.c.l.b16 %v625
      %v673 = vunpack.c.h.b16 %v625
      %v674 = vpack.c.b16 %v642, %v642
      %v675 = vpack.c.b16 %v643, %v643
      %v676 = vpack.c.b16 %v644, %v644
      %v677 = vpack.c.b16 %v645, %v645
      %v678 = vpack.c.b16 %v646, %v646
      %v679 = vpack.c.b16 %v647, %v647
      %v680 = vpack.c.b16 %v648, %v648
      %v681 = vpack.c.b16 %v649, %v649
      %v682 = vpack.c.b16 %v650, %v650
      %v683 = vpack.c.b16 %v651, %v651
      %v684 = vpack.c.b16 %v652, %v652
      %v685 = vpack.c.b16 %v653, %v653
      %v686 = vpack.c.b16 %v654, %v654
      %v687 = vpack.c.b16 %v655, %v655
      %v688 = vpack.c.b16 %v656, %v656
      %v689 = vpack.c.b16 %v657, %v657
      %v690 = vpack.c.b16 %v658, %v658
      %v691 = vpack.c.b16 %v659, %v659
      %v692 = vpack.c.b16 %v660, %v660
      %v693 = vpack.c.b16 %v661, %v661
      %v694 = vpack.c.b16 %v662, %v662
      %v695 = vpack.c.b16 %v663, %v663
      %v696 = vpack.c.b16 %v664, %v664
      %v697 = vpack.c.b16 %v665, %v665
      %v698 = vpack.c.b16 %v666, %v666
      %v699 = vpack.c.b16 %v667, %v667
      %v700 = vpack.c.b16 %v668, %v668
      %v701 = vpack.c.b16 %v669, %v669
      %v702 = vpack.c.b16 %v670, %v670
      %v703 = vpack.c.b16 %v671, %v671
      %v704 = vpack.c.b16 %v672, %v672
      %v705 = vpack.c.b16 %v673, %v673
      %738 = vst [vmem:[%s299] sm:$0xf] %v674
      %739 = vst [vmem:[%s299 + $0x4] sm:$0xf] %v675
      %740 = vst [vmem:[%s299 + $0x8] sm:$0xf] %v676
      %741 = vst [vmem:[%s299 + $0xc] sm:$0xf] %v677
      %742 = vst [vmem:[%s299 + $0x10] sm:$0xf] %v678
      %743 = vst [vmem:[%s299 + $0x14] sm:$0xf] %v679
      %744 = vst [vmem:[%s299 + $0x18] sm:$0xf] %v680
      %745 = vst [vmem:[%s299 + $0x1c] sm:$0xf] %v681
      %746 = vst [vmem:[%s299 + $0x20] sm:$0xf] %v682
      %747 = vst [vmem:[%s299 + $0x24] sm:$0xf] %v683
      %748 = vst [vmem:[%s299 + $0x28] sm:$0xf] %v684
      %749 = vst [vmem:[%s299 + $0x2c] sm:$0xf] %v685
      %750 = vst [vmem:[%s299 + $0x30] sm:$0xf] %v686
      %751 = vst [vmem:[%s299 + $0x34] sm:$0xf] %v687
      %752 = vst [vmem:[%s299 + $0x38] sm:$0xf] %v688
      %753 = vst [vmem:[%s299 + $0x3c] sm:$0xf] %v689
      %754 = vst [vmem:[%s299 + $0x40] sm:$0xf] %v690
      %755 = vst [vmem:[%s299 + $0x44] sm:$0xf] %v691
      %756 = vst [vmem:[%s299 + $0x48] sm:$0xf] %v692
      %757 = vst [vmem:[%s299 + $0x4c] sm:$0xf] %v693
      %758 = vst [vmem:[%s299 + $0x50] sm:$0xf] %v694
      %759 = vst [vmem:[%s299 + $0x54] sm:$0xf] %v695
      %760 = vst [vmem:[%s299 + $0x58] sm:$0xf] %v696
      %761 = vst [vmem:[%s299 + $0x5c] sm:$0xf] %v697
      %762 = vst [vmem:[%s299 + $0x60] sm:$0xf] %v698
      %763 = vst [vmem:[%s299 + $0x64] sm:$0xf] %v699
      %764 = vst [vmem:[%s299 + $0x68] sm:$0xf] %v700
      %765 = vst [vmem:[%s299 + $0x6c] sm:$0xf] %v701
      %766 = vst [vmem:[%s299 + $0x70] sm:$0xf] %v702
      %767 = vst [vmem:[%s299 + $0x74] sm:$0xf] %v703
      %768 = vst [vmem:[%s299 + $0x78] sm:$0xf] %v704
      %769 = vst [vmem:[%s299 + $0x7c] sm:$0xf] %v705
      %s770 = smul.u32 32, %s20
      %p771 = scmp.lt.s32.totalorder %s19, 1
      %s772 = scalar_select %p771, %s19, 1
      %p773 = scmp.lt.s32.totalorder %s770, 31
      %s774 = scalar_select %p773, %s770, 31
      %s775 = smul.addr %s772, 32
      %s776 = sadd.s32 %s774, %s775
      %s777 = smul.addr %s776, 4
      %s778 = scalar_lea.vmem %s4, %s777
      // Predicated region
      $region37: #{crestereo_forward.55} parent=35 // pred_check
        %p779 = pneg %p155
      $region38: #{crestereo_forward.55} parent=35 // pred_check_branch
        %781 = sbr.rel (%p779) target = $region40
      $region39: #{crestereo_forward.55} parent=35 // pred_region
        %s782 = smul.u32 32, %s20
      $region40: #{crestereo_forward.55} parent=35 // pred_fallthru
        _
    $region36: #{crestereo_forward.55} parent=5 // pred_fallthru
      _
    %p783 = scmp.le.s32.totalorder 2, %s10
    // Predicated region
    $region41: #{crestereo_forward.55} parent=5 // pred_check
      %p784 = pneg %p783
    $region42: #{crestereo_forward.55} parent=5 // pred_check_branch
      %786 = sbr.rel (%p784) target = $region44
    $region43: #{crestereo_forward.55} parent=5 // pred_region
      %s787 = ssub.s32 %s10, 2
      // Predicated region
      $region45: #{crestereo_forward.55} parent=43 // pred_check
        %p788 = pneg %p161
      $region46: #{crestereo_forward.55} parent=43 // pred_check_branch
        %790 = sbr.rel (%p788) target = $region48
      $region47: #{crestereo_forward.55} parent=43 // pred_region
        %s791 = smul.u32 32, %s22
        %p792 = scmp.lt.s32.totalorder %s21, 1
        %s793 = scalar_select %p792, %s21, 1
        %p794 = scmp.lt.s32.totalorder %s791, 31
        %s795 = scalar_select %p794, %s791, 31
        %s796 = smul.addr %s793, 32
        %s797 = sadd.s32 %s795, %s796
        %s798 = smul.addr %s797, 4
        %s799 = scalar_lea.vmem %s4, %s798
      $region48: #{crestereo_forward.55} parent=43 // pred_fallthru
        _
    $region44: #{crestereo_forward.55} parent=5 // pred_fallthru
      _
  $region6: #{crestereo_forward.55} parent=0 // loop_footer
    %s14 = sadd.s32 1, %s10
  $region7: #{crestereo_forward.55} parent=0 // loop_footer_branch
    %9 = sbr.rel target = $region3
  $region8: #{crestereo_forward.55} parent=0 // loop_exit
    _

// kernel: crestereo_forward.67
$region0: #{crestereo_forward.67}
  #allocation0 [shape = 'u32[]', space=smem, size = 0x4, offset = 0x4, fixed_abs, tag = 'smem constant byte address 0x4 - core index']
  #allocation1 [shape = 'u32[144,128]{1,0:T(1,128)}', space=vmem, size = 0x12000, scoped, tag = 'internal scratch']
  %s0 = inlined_call_operand.vmem [shape: bf16[256,128], index: 0, kind: input, shape index: {}]
  %s1 = inlined_call_operand.vmem [shape: bf16[128,128], index: 1, kind: input, shape index: {}]
  %s2 = inlined_call_operand.vmem [shape: f32[1,128], index: 2, kind: input, shape index: {}]
  %s3 = inlined_call_operand.vmem [shape: bf16[256,128], index: 3, kind: output, shape index: {}]
  %s4 = sld [smem:[#allocation0]]
  $region22: #{crestereo_forward.67} parent=0
    _
  %s6 = ssub.s32 1, %s4
  %s7 = scalar_select 0, %s6, %s4
  // Predicated region
  $region2: #{crestereo_forward.67} parent=0 // pred_check
    _
  $region3: #{crestereo_forward.67} parent=0 // pred_check_branch
    %9 = sbr.rel (0) target = $region5
  $region4: #{crestereo_forward.67} parent=0 // pred_region
    _
  $region5: #{crestereo_forward.67} parent=0 // pred_fallthru
    _
  // Predicated region
  $region6: #{crestereo_forward.67} parent=0 // pred_check
    _
  $region7: #{crestereo_forward.67} parent=0 // pred_check_branch
    %11 = sbr.rel (0) target = $region9
  $region8: #{crestereo_forward.67} parent=0 // pred_region
    _
  $region9: #{crestereo_forward.67} parent=0 // pred_fallthru
    _
  // Predicated region
  $region10: #{crestereo_forward.67} parent=0 // pred_check
    _
  $region11: #{crestereo_forward.67} parent=0 // pred_check_branch
    %13 = sbr.rel (0) target = $region13
  $region12: #{crestereo_forward.67} parent=0 // pred_region
    _
  $region13: #{crestereo_forward.67} parent=0 // pred_fallthru
    _
  %v15 = vld [vmem:[%s0] sm:$0xf]
  %v16 = vld [vmem:[%s0 + $0x4] sm:$0xf]
  %v17 = vld [vmem:[%s0 + $0x8] sm:$0xf]
  %v18 = vld [vmem:[%s0 + $0xc] sm:$0xf]
  %v19 = vld [vmem:[%s0 + $0x10] sm:$0xf]
  %v20 = vld [vmem:[%s0 + $0x14] sm:$0xf]
  %v21 = vld [vmem:[%s0 + $0x18] sm:$0xf]
  %v22 = vld [vmem:[%s0 + $0x1c] sm:$0xf]
  %v23 = vld [vmem:[%s0 + $0x20] sm:$0xf]
  %v24 = vld [vmem:[%s0 + $0x24] sm:$0xf]
  %v25 = vld [vmem:[%s0 + $0x28] sm:$0xf]
  %v26 = vld [vmem:[%s0 + $0x2c] sm:$0xf]
  %v27 = vld [vmem:[%s0 + $0x30] sm:$0xf]
  %v28 = vld [vmem:[%s0 + $0x34] sm:$0xf]
  %v29 = vld [vmem:[%s0 + $0x38] sm:$0xf]
  %v30 = vld [vmem:[%s0 + $0x3c] sm:$0xf]
  %v31 = vld [vmem:[%s0 + $0x40] sm:$0xf]
  %v32 = vld [vmem:[%s0 + $0x44] sm:$0xf]
  %v33 = vld [vmem:[%s0 + $0x48] sm:$0xf]
  %v34 = vld [vmem:[%s0 + $0x4c] sm:$0xf]
  %v35 = vld [vmem:[%s0 + $0x50] sm:$0xf]
  %v36 = vld [vmem:[%s0 + $0x54] sm:$0xf]
  %v37 = vld [vmem:[%s0 + $0x58] sm:$0xf]
  %v38 = vld [vmem:[%s0 + $0x5c] sm:$0xf]
  %v39 = vld [vmem:[%s0 + $0x60] sm:$0xf]
  %v40 = vld [vmem:[%s0 + $0x64] sm:$0xf]
  %v41 = vld [vmem:[%s0 + $0x68] sm:$0xf]
  %v42 = vld [vmem:[%s0 + $0x6c] sm:$0xf]
  %v43 = vld [vmem:[%s0 + $0x70] sm:$0xf]
  %v44 = vld [vmem:[%s0 + $0x74] sm:$0xf]
  %v45 = vld [vmem:[%s0 + $0x78] sm:$0xf]
  %v46 = vld [vmem:[%s0 + $0x7c] sm:$0xf]
  %v47 = vld [vmem:[%s1] sm:$0xf]
  %v48 = vld [vmem:[%s1 + $0x4] sm:$0xf]
  %v49 = vld [vmem:[%s1 + $0x8] sm:$0xf]
  %v50 = vld [vmem:[%s1 + $0xc] sm:$0xf]
  %v51 = vld [vmem:[%s1 + $0x10] sm:$0xf]
  %v52 = vld [vmem:[%s1 + $0x14] sm:$0xf]
  %v53 = vld [vmem:[%s1 + $0x18] sm:$0xf]
  %v54 = vld [vmem:[%s1 + $0x1c] sm:$0xf]
  %v55 = vld [vmem:[%s1 + $0x20] sm:$0xf]
  %v56 = vld [vmem:[%s1 + $0x24] sm:$0xf]
  %v57 = vld [vmem:[%s1 + $0x28] sm:$0xf]
  %v58 = vld [vmem:[%s1 + $0x2c] sm:$0xf]
  %v59 = vld [vmem:[%s1 + $0x30] sm:$0xf]
  %v60 = vld [vmem:[%s1 + $0x34] sm:$0xf]
  %v61 = vld [vmem:[%s1 + $0x38] sm:$0xf]
  %v62 = vld [vmem:[%s1 + $0x3c] sm:$0xf]
  %v63 = vld [vmem:[%s2] sm:$0x1]
  %v65 = vlaneseq
  %v66 = vshrl.u32 %v65, 7
  %v67 = vsub.s32 0, %v66
  %v68 = vrot.slane %v63, %v67
  %v102 = vunpack.c.l.b16 %v15
  %v103 = vunpack.c.l.b16 %v16
  %v104 = vunpack.c.l.b16 %v17
  %v105 = vunpack.c.l.b16 %v18
  %v106 = vunpack.c.l.b16 %v19
  %v107 = vunpack.c.l.b16 %v20
  %v108 = vunpack.c.l.b16 %v21
  %v109 = vunpack.c.l.b16 %v22
  %v110 = vunpack.c.l.b16 %v23
  %v111 = vunpack.c.l.b16 %v24
  %v112 = vunpack.c.l.b16 %v25
  %v113 = vunpack.c.l.b16 %v26
  %v114 = vunpack.c.l.b16 %v27
  %v115 = vunpack.c.l.b16 %v28
  %v116 = vunpack.c.l.b16 %v29
  %v117 = vunpack.c.l.b16 %v30
  %v118 = vunpack.c.l.b16 %v31
  %v119 = vunpack.c.l.b16 %v32
  %v120 = vunpack.c.l.b16 %v33
  %v121 = vunpack.c.l.b16 %v34
  %v122 = vunpack.c.l.b16 %v35
  %v123 = vunpack.c.l.b16 %v36
  %v124 = vunpack.c.l.b16 %v37
  %v125 = vunpack.c.l.b16 %v38
  %v126 = vunpack.c.l.b16 %v39
  %v127 = vunpack.c.l.b16 %v40
  %v128 = vunpack.c.l.b16 %v41
  %v129 = vunpack.c.l.b16 %v42
  %v130 = vunpack.c.l.b16 %v43
  %v131 = vunpack.c.l.b16 %v44
  %v132 = vunpack.c.l.b16 %v45
  %v133 = vunpack.c.l.b16 %v46
  %v134 = vpack.c.b16 %v103, %v102
  %v135 = vpack.c.b16 %v105, %v104
  %v136 = vpack.c.b16 %v107, %v106
  %v137 = vpack.c.b16 %v109, %v108
  %v138 = vpack.c.b16 %v111, %v110
  %v139 = vpack.c.b16 %v113, %v112
  %v140 = vpack.c.b16 %v115, %v114
  %v141 = vpack.c.b16 %v117, %v116
  %v142 = vpack.c.b16 %v119, %v118
  %v143 = vpack.c.b16 %v121, %v120
  %v144 = vpack.c.b16 %v123, %v122
  %v145 = vpack.c.b16 %v125, %v124
  %v146 = vpack.c.b16 %v127, %v126
  %v147 = vpack.c.b16 %v129, %v128
  %v148 = vpack.c.b16 %v131, %v130
  %v149 = vpack.c.b16 %v133, %v132
  %v182 = vunpack.c.l.b16 %v47
  %v183 = vunpack.c.l.b16 %v48
  %v184 = vunpack.c.l.b16 %v49
  %v185 = vunpack.c.l.b16 %v50
  %v186 = vunpack.c.l.b16 %v51
  %v187 = vunpack.c.l.b16 %v52
  %v188 = vunpack.c.l.b16 %v53
  %v189 = vunpack.c.l.b16 %v54
  %v190 = vunpack.c.l.b16 %v55
  %v191 = vunpack.c.l.b16 %v56
  %v192 = vunpack.c.l.b16 %v57
  %v193 = vunpack.c.l.b16 %v58
  %v194 = vunpack.c.l.b16 %v59
  %v195 = vunpack.c.l.b16 %v60
  %v196 = vunpack.c.l.b16 %v61
  %v197 = vunpack.c.l.b16 %v62
  %v198 = vpack.c.b16 %v183, %v182
  %v199 = vpack.c.b16 %v185, %v184
  %v200 = vpack.c.b16 %v187, %v186
  %v201 = vpack.c.b16 %v189, %v188
  %v202 = vpack.c.b16 %v191, %v190
  %v203 = vpack.c.b16 %v193, %v192
  %v204 = vpack.c.b16 %v195, %v194
  %v205 = vpack.c.b16 %v197, %v196
  %214 = vmatprep.subr.bf16.mxu0 0
  %215 = vmatpush1.bf16.msra.mxu0 %v205
  %216 = vmatprep.subr.bf16.mxu0 0
  %217 = vmatpush1.bf16.msra.mxu0 %v204
  %218 = vmatprep.subr.bf16.mxu0 0
  %219 = vmatpush1.bf16.msra.mxu0 %v203
  %220 = vmatprep.subr.bf16.mxu0 0
  %221 = vmatpush1.bf16.msra.mxu0 %v202
  %222 = vmatprep.subr.bf16.mxu0 0
  %223 = vmatpush1.bf16.msra.mxu0 %v201
  %224 = vmatprep.subr.bf16.mxu0 0
  %225 = vmatpush1.bf16.msra.mxu0 %v200
  %226 = vmatprep.subr.bf16.mxu0 0
  %227 = vmatpush1.bf16.msra.mxu0 %v199
  %228 = vmatprep.subr.bf16.mxu0 0
  %229 = vmatpush1.bf16.msra.mxu0 %v198
  %230 = vmatprep.subr.bf16.mxu0 0
  %231 = vmatpush2.bf16.msra.mxu0 0
  %232 = vmatprep.subr.bf16.mxu0 0
  %233 = vmatpush2.bf16.msra.mxu0 0
  %234 = vmatprep.subr.bf16.mxu0 0
  %235 = vmatpush2.bf16.msra.mxu0 0
  %236 = vmatprep.subr.bf16.mxu0 0
  %237 = vmatpush2.bf16.msra.mxu0 0
  %238 = vmatprep.subr.bf16.mxu0 0
  %239 = vmatpush2.bf16.msra.mxu0 0
  %240 = vmatprep.subr.bf16.mxu0 0
  %241 = vmatpush2.bf16.msra.mxu0 0
  %242 = vmatprep.subr.bf16.mxu0 0
  %243 = vmatpush2.bf16.msra.mxu0 0
  %244 = vmatprep.subr.bf16.mxu0 0
  %245 = vmatpush2.bf16.msra.mxu0 0
  %246 = vmatprep.mubr.bf16.mxu0 0
  %247 = vmatmul.mubr.bf16.gmra.mxu0 %v134
  %v248 = vpop.f32.mrf.mxu0
  %v249 = vadd.f32 %v68, %v248
  %v250 = vpop.f32.mrf.mxu0
  %v251 = vpop.f32.mrf.mxu0
  %v252 = vadd.f32 %v68, %v251
  %v253 = vpop.f32.mrf.mxu0
  %254 = vmatprep.mubr.bf16.mxu0 0
  %255 = vmatmul.mubr.bf16.gmra.mxu0 %v135
  %v256 = vpop.f32.mrf.mxu0
  %v257 = vadd.f32 %v68, %v256
  %v258 = vpop.f32.mrf.mxu0
  %v259 = vpop.f32.mrf.mxu0
  %v260 = vadd.f32 %v68, %v259
  %v261 = vpop.f32.mrf.mxu0
  %262 = vmatprep.mubr.bf16.mxu0 0
  %263 = vmatmul.mubr.bf16.gmra.mxu0 %v136
  %v264 = vpop.f32.mrf.mxu0
  %v265 = vadd.f32 %v68, %v264
  %v266 = vpop.f32.mrf.mxu0
  %v267 = vpop.f32.mrf.mxu0
  %v268 = vadd.f32 %v68, %v267
  %v269 = vpop.f32.mrf.mxu0
  %270 = vmatprep.mubr.bf16.mxu0 0
  %271 = vmatmul.mubr.bf16.gmra.mxu0 %v137
  %v272 = vpop.f32.mrf.mxu0
  %v273 = vadd.f32 %v68, %v272
  %v274 = vpop.f32.mrf.mxu0
  %v275 = vpop.f32.mrf.mxu0
  %v276 = vadd.f32 %v68, %v275
  %v277 = vpop.f32.mrf.mxu0
  %278 = vmatprep.mubr.bf16.mxu0 0
  %279 = vmatmul.mubr.bf16.gmra.mxu0 %v138
  %v280 = vpop.f32.mrf.mxu0
  %v281 = vadd.f32 %v68, %v280
  %v282 = vpop.f32.mrf.mxu0
  %v283 = vpop.f32.mrf.mxu0
  %v284 = vadd.f32 %v68, %v283
  %v285 = vpop.f32.mrf.mxu0
  %286 = vmatprep.mubr.bf16.mxu0 0
  %287 = vmatmul.mubr.bf16.gmra.mxu0 %v139
  %v288 = vpop.f32.mrf.mxu0
  %v289 = vadd.f32 %v68, %v288
  %v290 = vpop.f32.mrf.mxu0
  %v291 = vpop.f32.mrf.mxu0
  %v292 = vadd.f32 %v68, %v291
  %v293 = vpop.f32.mrf.mxu0
  %294 = vmatprep.mubr.bf16.mxu0 0
  %295 = vmatmul.mubr.bf16.gmra.mxu0 %v140
  %v296 = vpop.f32.mrf.mxu0
  %v297 = vadd.f32 %v68, %v296
  %v298 = vpop.f32.mrf.mxu0
  %v299 = vpop.f32.mrf.mxu0
  %v300 = vadd.f32 %v68, %v299
  %v301 = vpop.f32.mrf.mxu0
  %302 = vmatprep.mubr.bf16.mxu0 0
  %303 = vmatmul.mubr.bf16.gmra.mxu0 %v141
  %v304 = vpop.f32.mrf.mxu0
  %v305 = vadd.f32 %v68, %v304
  %v306 = vpop.f32.mrf.mxu0
  %v307 = vpop.f32.mrf.mxu0
  %v308 = vadd.f32 %v68, %v307
  %v309 = vpop.f32.mrf.mxu0
  %310 = vmatprep.mubr.bf16.mxu0 0
  %311 = vmatmul.mubr.bf16.gmra.mxu0 %v142
  %v312 = vpop.f32.mrf.mxu0
  %v313 = vadd.f32 %v68, %v312
  %v314 = vpop.f32.mrf.mxu0
  %v315 = vpop.f32.mrf.mxu0
  %v316 = vadd.f32 %v68, %v315
  %v317 = vpop.f32.mrf.mxu0
  %318 = vmatprep.mubr.bf16.mxu0 0
  %319 = vmatmul.mubr.bf16.gmra.mxu0 %v143
  %v320 = vpop.f32.mrf.mxu0
  %v321 = vadd.f32 %v68, %v320
  %v322 = vpop.f32.mrf.mxu0
  %v323 = vpop.f32.mrf.mxu0
  %v324 = vadd.f32 %v68, %v323
  %v325 = vpop.f32.mrf.mxu0
  %326 = vmatprep.mubr.bf16.mxu0 0
  %327 = vmatmul.mubr.bf16.gmra.mxu0 %v144
  %v328 = vpop.f32.mrf.mxu0
  %v329 = vadd.f32 %v68, %v328
  %v330 = vpop.f32.mrf.mxu0
  %v331 = vpop.f32.mrf.mxu0
  %v332 = vadd.f32 %v68, %v331
  %v333 = vpop.f32.mrf.mxu0
  %334 = vmatprep.mubr.bf16.mxu0 0
  %335 = vmatmul.mubr.bf16.gmra.mxu0 %v145
  %v336 = vpop.f32.mrf.mxu0
  %v337 = vadd.f32 %v68, %v336
  %v338 = vpop.f32.mrf.mxu0
  %v339 = vpop.f32.mrf.mxu0
  %v340 = vadd.f32 %v68, %v339
  %v341 = vpop.f32.mrf.mxu0
  %342 = vmatprep.mubr.bf16.mxu0 0
  %343 = vmatmul.mubr.bf16.gmra.mxu0 %v146
  %v344 = vpop.f32.mrf.mxu0
  %v345 = vadd.f32 %v68, %v344
  %v346 = vpop.f32.mrf.mxu0
  %v347 = vpop.f32.mrf.mxu0
  %v348 = vadd.f32 %v68, %v347
  %v349 = vpop.f32.mrf.mxu0
  %350 = vmatprep.mubr.bf16.mxu0 0
  %351 = vmatmul.mubr.bf16.gmra.mxu0 %v147
  %v352 = vpop.f32.mrf.mxu0
  %v353 = vadd.f32 %v68, %v352
  %v354 = vpop.f32.mrf.mxu0
  %v355 = vpop.f32.mrf.mxu0
  %v356 = vadd.f32 %v68, %v355
  %v357 = vpop.f32.mrf.mxu0
  %358 = vmatprep.mubr.bf16.mxu0 0
  %359 = vmatmul.mubr.bf16.gmra.mxu0 %v148
  %v360 = vpop.f32.mrf.mxu0
  %v361 = vadd.f32 %v68, %v360
  %v362 = vpop.f32.mrf.mxu0
  %v363 = vpop.f32.mrf.mxu0
  %v364 = vadd.f32 %v68, %v363
  %v365 = vpop.f32.mrf.mxu0
  %366 = vmatprep.mubr.bf16.mxu0 0
  %367 = vmatmul.mubr.bf16.gmra.mxu0 %v149
  %v368 = vpop.f32.mrf.mxu0
  %v369 = vadd.f32 %v68, %v368
  %v370 = vpop.f32.mrf.mxu0
  %v371 = vpop.f32.mrf.mxu0
  %v372 = vadd.f32 %v68, %v371
  %v373 = vpop.f32.mrf.mxu0
  %374 = vdwg.mxu0
  %v375 = vpack.c.bf16 %v252, %v249
  %v376 = vpack.c.bf16 %v260, %v257
  %v377 = vpack.c.bf16 %v268, %v265
  %v378 = vpack.c.bf16 %v276, %v273
  %v379 = vpack.c.bf16 %v284, %v281
  %v380 = vpack.c.bf16 %v292, %v289
  %v381 = vpack.c.bf16 %v300, %v297
  %v382 = vpack.c.bf16 %v308, %v305
  %v383 = vpack.c.bf16 %v316, %v313
  %v384 = vpack.c.bf16 %v324, %v321
  %v385 = vpack.c.bf16 %v332, %v329
  %v386 = vpack.c.bf16 %v340, %v337
  %v387 = vpack.c.bf16 %v348, %v345
  %v388 = vpack.c.bf16 %v356, %v353
  %v389 = vpack.c.bf16 %v364, %v361
  %v390 = vpack.c.bf16 %v372, %v369
  %v407 = vunpack.c.l.b16 %v375
  %v408 = vunpack.c.h.b16 %v375
  %v409 = vunpack.c.l.b16 %v376
  %v410 = vunpack.c.h.b16 %v376
  %v411 = vunpack.c.l.b16 %v377
  %v412 = vunpack.c.h.b16 %v377
  %v413 = vunpack.c.l.b16 %v378
  %v414 = vunpack.c.h.b16 %v378
  %v415 = vunpack.c.l.b16 %v379
  %v416 = vunpack.c.h.b16 %v379
  %v417 = vunpack.c.l.b16 %v380
  %v418 = vunpack.c.h.b16 %v380
  %v419 = vunpack.c.l.b16 %v381
  %v420 = vunpack.c.h.b16 %v381
  %v421 = vunpack.c.l.b16 %v382
  %v422 = vunpack.c.h.b16 %v382
  %v423 = vunpack.c.l.b16 %v383
  %v424 = vunpack.c.h.b16 %v383
  %v425 = vunpack.c.l.b16 %v384
  %v426 = vunpack.c.h.b16 %v384
  %v427 = vunpack.c.l.b16 %v385
  %v428 = vunpack.c.h.b16 %v385
  %v429 = vunpack.c.l.b16 %v386
  %v430 = vunpack.c.h.b16 %v386
  %v431 = vunpack.c.l.b16 %v387
  %v432 = vunpack.c.h.b16 %v387
  %v433 = vunpack.c.l.b16 %v388
  %v434 = vunpack.c.h.b16 %v388
  %v435 = vunpack.c.l.b16 %v389
  %v436 = vunpack.c.h.b16 %v389
  %v437 = vunpack.c.l.b16 %v390
  %v438 = vunpack.c.h.b16 %v390
  %v439 = vpack.c.b16 %v407, %v407
  %v440 = vpack.c.b16 %v408, %v408
  %v441 = vpack.c.b16 %v409, %v409
  %v442 = vpack.c.b16 %v410, %v410
  %v443 = vpack.c.b16 %v411, %v411
  %v444 = vpack.c.b16 %v412, %v412
  %v445 = vpack.c.b16 %v413, %v413
  %v446 = vpack.c.b16 %v414, %v414
  %v447 = vpack.c.b16 %v415, %v415
  %v448 = vpack.c.b16 %v416, %v416
  %v449 = vpack.c.b16 %v417, %v417
  %v450 = vpack.c.b16 %v418, %v418
  %v451 = vpack.c.b16 %v419, %v419
  %v452 = vpack.c.b16 %v420, %v420
  %v453 = vpack.c.b16 %v421, %v421
  %v454 = vpack.c.b16 %v422, %v422
  %v455 = vpack.c.b16 %v423, %v423
  %v456 = vpack.c.b16 %v424, %v424
  %v457 = vpack.c.b16 %v425, %v425
  %v458 = vpack.c.b16 %v426, %v426
  %v459 = vpack.c.b16 %v427, %v427
  %v460 = vpack.c.b16 %v428, %v428
  %v461 = vpack.c.b16 %v429, %v429
  %v462 = vpack.c.b16 %v430, %v430
  %v463 = vpack.c.b16 %v431, %v431
  %v464 = vpack.c.b16 %v432, %v432
  %v465 = vpack.c.b16 %v433, %v433
  %v466 = vpack.c.b16 %v434, %v434
  %v467 = vpack.c.b16 %v435, %v435
  %v468 = vpack.c.b16 %v436, %v436
  %v469 = vpack.c.b16 %v437, %v437
  %v470 = vpack.c.b16 %v438, %v438
  %503 = vst [vmem:[%s3] sm:$0xf] %v439
  %504 = vst [vmem:[%s3 + $0x4] sm:$0xf] %v440
  %505 = vst [vmem:[%s3 + $0x8] sm:$0xf] %v441
  %506 = vst [vmem:[%s3 + $0xc] sm:$0xf] %v442
  %507 = vst [vmem:[%s3 + $0x10] sm:$0xf] %v443
  %508 = vst [vmem:[%s3 + $0x14] sm:$0xf] %v444
  %509 = vst [vmem:[%s3 + $0x18] sm:$0xf] %v445
  %510 = vst [vmem:[%s3 + $0x1c] sm:$0xf] %v446
  %511 = vst [vmem:[%s3 + $0x20] sm:$0xf] %v447
  %512 = vst [vmem:[%s3 + $0x24] sm:$0xf] %v448
  %513 = vst [vmem:[%s3 + $0x28] sm:$0xf] %v449
  %514 = vst [vmem:[%s3 + $0x2c] sm:$0xf] %v450
  %515 = vst [vmem:[%s3 + $0x30] sm:$0xf] %v451
  %516 = vst [vmem:[%s3 + $0x34] sm:$0xf] %v452
  %517 = vst [vmem:[%s3 + $0x38] sm:$0xf] %v453
  %518 = vst [vmem:[%s3 + $0x3c] sm:$0xf] %v454
  %519 = vst [vmem:[%s3 + $0x40] sm:$0xf] %v455
  %520 = vst [vmem:[%s3 + $0x44] sm:$0xf] %v456
  %521 = vst [vmem:[%s3 + $0x48] sm:$0xf] %v457
  %522 = vst [vmem:[%s3 + $0x4c] sm:$0xf] %v458
  %523 = vst [vmem:[%s3 + $0x50] sm:$0xf] %v459
  %524 = vst [vmem:[%s3 + $0x54] sm:$0xf] %v460
  %525 = vst [vmem:[%s3 + $0x58] sm:$0xf] %v461
  %526 = vst [vmem:[%s3 + $0x5c] sm:$0xf] %v462
  %527 = vst [vmem:[%s3 + $0x60] sm:$0xf] %v463
  %528 = vst [vmem:[%s3 + $0x64] sm:$0xf] %v464
  %529 = vst [vmem:[%s3 + $0x68] sm:$0xf] %v465
  %530 = vst [vmem:[%s3 + $0x6c] sm:$0xf] %v466
  %531 = vst [vmem:[%s3 + $0x70] sm:$0xf] %v467
  %532 = vst [vmem:[%s3 + $0x74] sm:$0xf] %v468
  %533 = vst [vmem:[%s3 + $0x78] sm:$0xf] %v469
  %534 = vst [vmem:[%s3 + $0x7c] sm:$0xf] %v470
  // Predicated region
  $region14: #{crestereo_forward.67} parent=0 // pred_check
    _
  $region15: #{crestereo_forward.67} parent=0 // pred_check_branch
    %536 = sbr.rel (0) target = $region17
  $region16: #{crestereo_forward.67} parent=0 // pred_region
    _
  $region17: #{crestereo_forward.67} parent=0 // pred_fallthru
    _
  // Predicated region
  $region18: #{crestereo_forward.67} parent=0 // pred_check
    _
  $region19: #{crestereo_forward.67} parent=0 // pred_check_branch
    %538 = sbr.rel (0) target = $region21
  $region20: #{crestereo_forward.67} parent=0 // pred_region
    _
  $region21: #{crestereo_forward.67} parent=0 // pred_fallthru
    _

// kernel: crestereo_forward.68
$region0: #{crestereo_forward.68}
  #allocation0 [shape = 'u32[]', space=smem, size = 0x4, offset = 0x4, fixed_abs, tag = 'smem constant byte address 0x4 - core index']
  #allocation1 [shape = 'u32[144,128]{1,0:T(1,128)}', space=vmem, size = 0x12000, scoped, tag = 'internal scratch']
  %s0 = inlined_call_operand.vmem [shape: bf16[2,64,128], index: 0, kind: input, shape index: {}]
  %s1 = inlined_call_operand.vmem [shape: f32[2,1,128], index: 1, kind: output, shape index: {0}]
  %s2 = inlined_call_operand.vmem [shape: f32[2,1,128], index: 2, kind: output, shape index: {1}]
  %3 = xla_tuple %s1, %s2
  %s4 = sld [smem:[#allocation0]]
  $region49: #{crestereo_forward.68} parent=0
    _
  %s6 = ssub.s32 1, %s4
  %s7 = scalar_select 0, %s6, %s4
  loop: start=0, step=1, limit=4
  $region2: #{crestereo_forward.68} parent=0 // loop_pre_header
    _
  $region3: #{crestereo_forward.68} parent=0 // loop_header
    %s9 = sphi 0, %s13
    %p10 = scmp.ge.s32.totalorder %s9, 4
    %s16 = sphi 0, %s28
    %s17 = sphi 0, %s24
    %s18 = sphi 0, %s16
    %s19 = sphi 0, %s17
    %s20 = sphi 0, %s18
    %s21 = sphi 0, %s19
    %s33 = sphi 0, %s35
    %s36 = sphi 0, %s33
    %s37 = sphi 0, %s36
    %s53 = sphi 0, %s37
    %s59 = sphi 0, %s61
    %s62 = sphi 0, %s59
    %s63 = sphi 0, %s62
    %s79 = sphi 0, %s63
    %s85 = sphi 0, %s87
    %s88 = sphi 0, %s85
    %s89 = sphi 0, %s88
    %s105 = sphi 0, %s89
  $region4: #{crestereo_forward.68} parent=0 // loop_header_branch
    %12 = sbr.rel (%p10) target = $region8
  $region5: #{crestereo_forward.68} parent=0 // loop_body
    %s14 = ssub.s32 %s9, 1
    %s15 = ssub.s32 %s9, 2
    %s22 = sadd.s32 1, %s17
    %p23 = scmp.ge.s32.totalorder %s22, 1
    %s24 = scalar_select %p23, 0, %s22
    %s25 = sadd.s32 1, %s16
    %s26 = scalar_select %p23, %s25, %s16
    %p27 = scmp.ge.s32.totalorder %s26, 2
    %s28 = scalar_select %p27, 0, %s26
    %s29 = ssub.s32 %s16, %s28
    %s30 = ssub.s32 %s17, %s24
    %s31 = sor.u32 %s29, %s30
    %p32 = scmp.eq.s32.totalorder %s31, 0
    %s34 = sadd.s32 %s33, 1
    %s35 = scalar_select %p32, %s33, %s34
    %p38 = pneg %p32
    %p39 = scmp.eq.s32.totalorder %s9, 1
    %p40 = por %p38, %p39
    %p41 = scmp.ne.s32.totalorder %s33, %s36
    %p42 = scmp.eq.s32.totalorder %s9, 0
    %p43 = por %p41, %p42
    %p44 = scmp.ne.s32.totalorder %s33, %s36
    %p45 = scmp.eq.s32.totalorder %s14, 1
    %p46 = por %p44, %p45
    %p47 = scmp.ne.s32.totalorder %s36, %s37
    %p48 = scmp.eq.s32.totalorder %s14, 0
    %p49 = por %p47, %p48
    %p50 = scmp.ne.s32.totalorder %s36, %s37
    %p51 = scmp.eq.s32.totalorder %s15, 1
    %p52 = por %p50, %p51
    %p54 = scmp.ne.s32.totalorder %s37, %s53
    %p55 = scmp.eq.s32.totalorder %s15, 0
    %p56 = por %p54, %p55
    %s57 = ssub.s32 %s16, %s28
    %p58 = scmp.eq.s32.totalorder %s57, 0
    %s60 = sadd.s32 %s59, 1
    %s61 = scalar_select %p58, %s59, %s60
    %p64 = pneg %p58
    %p65 = scmp.eq.s32.totalorder %s9, 1
    %p66 = por %p64, %p65
    %p67 = scmp.ne.s32.totalorder %s59, %s62
    %p68 = scmp.eq.s32.totalorder %s9, 0
    %p69 = por %p67, %p68
    %p70 = scmp.ne.s32.totalorder %s59, %s62
    %p71 = scmp.eq.s32.totalorder %s14, 1
    %p72 = por %p70, %p71
    %p73 = scmp.ne.s32.totalorder %s62, %s63
    %p74 = scmp.eq.s32.totalorder %s14, 0
    %p75 = por %p73, %p74
    %p76 = scmp.ne.s32.totalorder %s62, %s63
    %p77 = scmp.eq.s32.totalorder %s15, 1
    %p78 = por %p76, %p77
    %p80 = scmp.ne.s32.totalorder %s63, %s79
    %p81 = scmp.eq.s32.totalorder %s15, 0
    %p82 = por %p80, %p81
    %s83 = ssub.s32 %s16, %s28
    %p84 = scmp.eq.s32.totalorder %s83, 0
    %s86 = sadd.s32 %s85, 1
    %s87 = scalar_select %p84, %s85, %s86
    %p90 = pneg %p84
    %p91 = scmp.eq.s32.totalorder %s9, 1
    %p92 = por %p90, %p91
    %p93 = scmp.ne.s32.totalorder %s85, %s88
    %p94 = scmp.eq.s32.totalorder %s9, 0
    %p95 = por %p93, %p94
    %p96 = scmp.ne.s32.totalorder %s85, %s88
    %p97 = scmp.eq.s32.totalorder %s14, 1
    %p98 = por %p96, %p97
    %p99 = scmp.ne.s32.totalorder %s88, %s89
    %p100 = scmp.eq.s32.totalorder %s14, 0
    %p101 = por %p99, %p100
    %p102 = scmp.ne.s32.totalorder %s88, %s89
    %p103 = scmp.eq.s32.totalorder %s15, 1
    %p104 = por %p102, %p103
    %p106 = scmp.ne.s32.totalorder %s89, %s105
    %p107 = scmp.eq.s32.totalorder %s15, 0
    %p108 = por %p106, %p107
    %p109 = scmp.le.s32.totalorder 1, %s9
    %p110 = scmp.lt.s32.totalorder %s9, 3
    %p111 = pnand %p109, %p110
    %p112 = pneg %p111
    // Predicated region
    $region9: #{crestereo_forward.68} parent=5 // pred_check
      _
    $region10: #{crestereo_forward.68} parent=5 // pred_check_branch
      %114 = sbr.rel (%p111) target = $region12
    $region11: #{crestereo_forward.68} parent=5 // pred_region
      %s115 = ssub.s32 %s9, 1
    $region12: #{crestereo_forward.68} parent=5 // pred_fallthru
      _
    %p116 = scmp.lt.s32.totalorder %s9, 2
    // Predicated region
    $region13: #{crestereo_forward.68} parent=5 // pred_check
      %p117 = pneg %p116
    $region14: #{crestereo_forward.68} parent=5 // pred_check_branch
      %119 = sbr.rel (%p117) target = $region16
    $region15: #{crestereo_forward.68} parent=5 // pred_region
      // Predicated region
      $region17: #{crestereo_forward.68} parent=15 // pred_check
        %p120 = pneg %p43
      $region18: #{crestereo_forward.68} parent=15 // pred_check_branch
        %122 = sbr.rel (%p120) target = $region20
      $region19: #{crestereo_forward.68} parent=15 // pred_region
        %s123 = smul.u32 8, %s17
        %p124 = scmp.lt.s32.totalorder %s16, 1
        %s125 = scalar_select %p124, %s16, 1
        %p126 = scmp.lt.s32.totalorder %s123, 7
        %s127 = scalar_select %p126, %s123, 7
        %s128 = smul.addr %s125, 8
        %s129 = sadd.s32 %s127, %s128
        %s130 = smul.addr %s129, 4
        %s131 = scalar_lea.vmem %s0, %s130
        %s132 = smul.u32 8, %s17
      $region20: #{crestereo_forward.68} parent=15 // pred_fallthru
        _
    $region16: #{crestereo_forward.68} parent=5 // pred_fallthru
      _
    %p133 = scmp.le.s32.totalorder 1, %s9
    %p134 = scmp.lt.s32.totalorder %s9, 3
    %p135 = pnand %p133, %p134
    %p136 = pneg %p135
    // Predicated region
    $region21: #{crestereo_forward.68} parent=5 // pred_check
      _
    $region22: #{crestereo_forward.68} parent=5 // pred_check_branch
      %138 = sbr.rel (%p135) target = $region24
    $region23: #{crestereo_forward.68} parent=5 // pred_region
      %s139 = ssub.s32 %s9, 1
      %s140 = smul.u32 8, %s19
      %p141 = scmp.lt.s32.totalorder %s18, 1
      %s142 = scalar_select %p141, %s18, 1
      %p143 = scmp.lt.s32.totalorder %s140, 7
      %s144 = scalar_select %p143, %s140, 7
      %s145 = smul.addr %s142, 8
      %s146 = sadd.s32 %s144, %s145
      %s147 = smul.addr %s146, 4
      %s148 = scalar_lea.vmem %s0, %s147
      %p149 = pneg %p49
      %p150 = pneg %p46
      %p151 = pneg %p75
      %p152 = pneg %p72
      %p153 = scmp.lt.s32.totalorder %s18, 1
      %s154 = scalar_select %p153, %s18, 1
      %s155 = scalar_lea.vmem %s1, %s154
      %p156 = pneg %p101
      %p157 = pneg %p98
      %p158 = scmp.lt.s32.totalorder %s18, 1
      %s159 = scalar_select %p158, %s18, 1
      %s160 = scalar_lea.vmem %s2, %s159
      %s161 = smul.u32 8, %s19
      %p162 = scmp.lt.s32.totalorder %s18, 1
      %s163 = scalar_select %p162, %s18, 1
      %p164 = scmp.lt.s32.totalorder %s161, 7
      %s165 = scalar_select %p164, %s161, 7
      %s166 = smul.addr %s163, 8
      %s167 = sadd.s32 %s165, %s166
      %s168 = smul.addr %s167, 4
      %s169 = scalar_lea.vmem %s0, %s168
      %s170 = smul.u32 8, %s19
      %p171 = scmp.lt.s32.totalorder %s18, 1
      %s172 = scalar_select %p171, %s18, 1
      %s173 = scalar_lea.vmem %s1, %s172
      %p174 = scmp.lt.s32.totalorder %s18, 1
      %s175 = scalar_select %p174, %s18, 1
      %s176 = scalar_lea.vmem %s2, %s175
      %p177 = scmp.eq.s32.totalorder %s19, 0
      // Predicated region
      $region25: #{crestereo_forward.68} parent=23 // pred_check
        %p178 = pneg %p177
      $region26: #{crestereo_forward.68} parent=23 // pred_check_branch
        %180 = sbr.rel (%p178) target = $region28
      $region27: #{crestereo_forward.68} parent=23 // pred_region
        %181 = vst [vmem:[%s173] sm:$0x1] 0.0
        %182 = vst [vmem:[%s176] sm:$0x1] 0.0
      $region28: #{crestereo_forward.68} parent=23 // pred_fallthru
        _
      %v183 = vld [vmem:[%s169] sm:$0xf]
      %v184 = vld [vmem:[%s169 + $0x4] sm:$0xf]
      %v185 = vld [vmem:[%s169 + $0x8] sm:$0xf]
      %v186 = vld [vmem:[%s169 + $0xc] sm:$0xf]
      %v187 = vld [vmem:[%s169 + $0x10] sm:$0xf]
      %v188 = vld [vmem:[%s169 + $0x14] sm:$0xf]
      %v189 = vld [vmem:[%s169 + $0x18] sm:$0xf]
      %v190 = vld [vmem:[%s169 + $0x1c] sm:$0xf]
      %v191 = vunpack.c.l.bf16 %v183
      %v192 = vunpack.c.l.bf16 %v184
      %v193 = vunpack.c.l.bf16 %v185
      %v194 = vunpack.c.l.bf16 %v186
      %v195 = vunpack.c.l.bf16 %v187
      %v196 = vunpack.c.l.bf16 %v188
      %v197 = vunpack.c.l.bf16 %v189
      %v198 = vunpack.c.l.bf16 %v190
      %v199 = vld [vmem:[%s173] sm:$0x1]
      %v200 = vadd.f32 %v191, %v192
      %v201 = vadd.f32 %v200, %v193
      %v202 = vadd.f32 %v201, %v194
      %v203 = vadd.f32 %v202, %v195
      %v204 = vadd.f32 %v203, %v196
      %v205 = vadd.f32 %v204, %v197
      %v206 = vadd.f32 %v205, %v198
      %v207 = vrot.slane %v206, 4
      %v208 = vadd.f32 %v206, %v207
      %v209 = vrot.slane %v208, 2
      %v210 = vadd.f32 %v208, %v209
      %v211 = vrot.slane %v210, 1
      %v212 = vadd.f32 %v210, %v211
      %v213 = vadd.f32 %v199, %v212
      %214 = vst [vmem:[%s173] sm:$0x1] %v213
      %v215 = vld [vmem:[%s176] sm:$0x1]
      %v216 = vmul.f32 %v191, %v191
      %v217 = vmul.f32 %v192, %v192
      %v218 = vmul.f32 %v193, %v193
      %v219 = vmul.f32 %v194, %v194
      %v220 = vmul.f32 %v195, %v195
      %v221 = vmul.f32 %v196, %v196
      %v222 = vmul.f32 %v197, %v197
      %v223 = vmul.f32 %v198, %v198
      %v224 = vadd.f32 %v216, %v217
      %v225 = vadd.f32 %v224, %v218
      %v226 = vadd.f32 %v225, %v219
      %v227 = vadd.f32 %v226, %v220
      %v228 = vadd.f32 %v227, %v221
      %v229 = vadd.f32 %v228, %v222
      %v230 = vadd.f32 %v229, %v223
      %v231 = vrot.slane %v230, 4
      %v232 = vadd.f32 %v230, %v231
      %v233 = vrot.slane %v232, 2
      %v234 = vadd.f32 %v232, %v233
      %v235 = vrot.slane %v234, 1
      %v236 = vadd.f32 %v234, %v235
      %v237 = vadd.f32 %v215, %v236
      %238 = vst [vmem:[%s176] sm:$0x1] %v237
      %p239 = scmp.lt.s32.totalorder %s18, 1
      %s240 = scalar_select %p239, %s18, 1
      %s241 = scalar_lea.vmem %s1, %s240
      %p242 = scmp.lt.s32.totalorder %s18, 1
      %s243 = scalar_select %p242, %s18, 1
      %s244 = scalar_lea.vmem %s2, %s243
      // Predicated region
      $region29: #{crestereo_forward.68} parent=23 // pred_check
        %p245 = pneg %p72
      $region30: #{crestereo_forward.68} parent=23 // pred_check_branch
        %247 = sbr.rel (%p245) target = $region32
      $region31: #{crestereo_forward.68} parent=23 // pred_region
        _
      $region32: #{crestereo_forward.68} parent=23 // pred_fallthru
        _
      // Predicated region
      $region33: #{crestereo_forward.68} parent=23 // pred_check
        %p248 = pneg %p98
      $region34: #{crestereo_forward.68} parent=23 // pred_check_branch
        %250 = sbr.rel (%p248) target = $region36
      $region35: #{crestereo_forward.68} parent=23 // pred_region
        _
      $region36: #{crestereo_forward.68} parent=23 // pred_fallthru
        _
    $region24: #{crestereo_forward.68} parent=5 // pred_fallthru
      _
    %p251 = scmp.le.s32.totalorder 2, %s9
    // Predicated region
    $region37: #{crestereo_forward.68} parent=5 // pred_check
      %p252 = pneg %p251
    $region38: #{crestereo_forward.68} parent=5 // pred_check_branch
      %254 = sbr.rel (%p252) target = $region40
    $region39: #{crestereo_forward.68} parent=5 // pred_region
      %s255 = ssub.s32 %s9, 2
      // Predicated region
      $region41: #{crestereo_forward.68} parent=39 // pred_check
        %p256 = pneg %p78
      $region42: #{crestereo_forward.68} parent=39 // pred_check_branch
        %258 = sbr.rel (%p256) target = $region44
      $region43: #{crestereo_forward.68} parent=39 // pred_region
        %p259 = scmp.lt.s32.totalorder %s20, 1
        %s260 = scalar_select %p259, %s20, 1
        %s261 = scalar_lea.vmem %s1, %s260
      $region44: #{crestereo_forward.68} parent=39 // pred_fallthru
        _
      // Predicated region
      $region45: #{crestereo_forward.68} parent=39 // pred_check
        %p262 = pneg %p104
      $region46: #{crestereo_forward.68} parent=39 // pred_check_branch
        %264 = sbr.rel (%p262) target = $region48
      $region47: #{crestereo_forward.68} parent=39 // pred_region
        %p265 = scmp.lt.s32.totalorder %s20, 1
        %s266 = scalar_select %p265, %s20, 1
        %s267 = scalar_lea.vmem %s2, %s266
      $region48: #{crestereo_forward.68} parent=39 // pred_fallthru
        _
    $region40: #{crestereo_forward.68} parent=5 // pred_fallthru
      _
  $region6: #{crestereo_forward.68} parent=0 // loop_footer
    %s13 = sadd.s32 1, %s9
  $region7: #{crestereo_forward.68} parent=0 // loop_footer_branch
    %8 = sbr.rel target = $region3
  $region8: #{crestereo_forward.68} parent=0 // loop_exit
    _

// kernel: crestereo_forward.69
$region0: #{crestereo_forward.69}
  #allocation0 [shape = 'u32[]', space=smem, size = 0x4, offset = 0x4, fixed_abs, tag = 'smem constant byte address 0x4 - core index']
  #allocation1 [shape = 'u32[144,128]{1,0:T(1,128)}', space=vmem, size = 0x12000, scoped, tag = 'internal scratch']
  %s0 = inlined_call_operand.vmem [shape: bf16[2,64,128], index: 0, kind: input, shape index: {}]
  %s1 = inlined_call_operand.vmem [shape: f32[2,1,128], index: 1, kind: input, shape index: {}]
  %s2 = inlined_call_operand.vmem [shape: f32[2,1,128], index: 2, kind: input, shape index: {}]
  %s3 = inlined_call_operand.vmem [shape: bf16[2,64,128], index: 3, kind: output, shape index: {}]
  %s4 = sld [smem:[#allocation0]]
  $region45: #{crestereo_forward.69} parent=0
    _
  %s6 = ssub.s32 1, %s4
  %s7 = scalar_select 0, %s6, %s4
  loop: start=0, step=1, limit=4
  $region2: #{crestereo_forward.69} parent=0 // loop_pre_header
    _
  $region3: #{crestereo_forward.69} parent=0 // loop_header
    %s9 = sphi 0, %s13
    %p10 = scmp.ge.s32.totalorder %s9, 4
    %s16 = sphi 0, %s28
    %s17 = sphi 0, %s24
    %s18 = sphi 0, %s16
    %s19 = sphi 0, %s17
    %s20 = sphi 0, %s18
    %s21 = sphi 0, %s19
    %s33 = sphi 0, %s35
    %s36 = sphi 0, %s33
    %s37 = sphi 0, %s36
    %s53 = sphi 0, %s37
    %s59 = sphi 0, %s61
    %s62 = sphi 0, %s59
    %s63 = sphi 0, %s62
    %s79 = sphi 0, %s63
    %s85 = sphi 0, %s87
    %s88 = sphi 0, %s85
    %s89 = sphi 0, %s88
    %s105 = sphi 0, %s89
    %s113 = sphi 0, %s115
    %s116 = sphi 0, %s113
    %s117 = sphi 0, %s116
    %s133 = sphi 0, %s117
  $region4: #{crestereo_forward.69} parent=0 // loop_header_branch
    %12 = sbr.rel (%p10) target = $region8
  $region5: #{crestereo_forward.69} parent=0 // loop_body
    %s14 = ssub.s32 %s9, 1
    %s15 = ssub.s32 %s9, 2
    %s22 = sadd.s32 1, %s17
    %p23 = scmp.ge.s32.totalorder %s22, 1
    %s24 = scalar_select %p23, 0, %s22
    %s25 = sadd.s32 1, %s16
    %s26 = scalar_select %p23, %s25, %s16
    %p27 = scmp.ge.s32.totalorder %s26, 2
    %s28 = scalar_select %p27, 0, %s26
    %s29 = ssub.s32 %s16, %s28
    %s30 = ssub.s32 %s17, %s24
    %s31 = sor.u32 %s29, %s30
    %p32 = scmp.eq.s32.totalorder %s31, 0
    %s34 = sadd.s32 %s33, 1
    %s35 = scalar_select %p32, %s33, %s34
    %p38 = pneg %p32
    %p39 = scmp.eq.s32.totalorder %s9, 1
    %p40 = por %p38, %p39
    %p41 = scmp.ne.s32.totalorder %s33, %s36
    %p42 = scmp.eq.s32.totalorder %s9, 0
    %p43 = por %p41, %p42
    %p44 = scmp.ne.s32.totalorder %s33, %s36
    %p45 = scmp.eq.s32.totalorder %s14, 1
    %p46 = por %p44, %p45
    %p47 = scmp.ne.s32.totalorder %s36, %s37
    %p48 = scmp.eq.s32.totalorder %s14, 0
    %p49 = por %p47, %p48
    %p50 = scmp.ne.s32.totalorder %s36, %s37
    %p51 = scmp.eq.s32.totalorder %s15, 1
    %p52 = por %p50, %p51
    %p54 = scmp.ne.s32.totalorder %s37, %s53
    %p55 = scmp.eq.s32.totalorder %s15, 0
    %p56 = por %p54, %p55
    %s57 = ssub.s32 %s16, %s28
    %p58 = scmp.eq.s32.totalorder %s57, 0
    %s60 = sadd.s32 %s59, 1
    %s61 = scalar_select %p58, %s59, %s60
    %p64 = pneg %p58
    %p65 = scmp.eq.s32.totalorder %s9, 1
    %p66 = por %p64, %p65
    %p67 = scmp.ne.s32.totalorder %s59, %s62
    %p68 = scmp.eq.s32.totalorder %s9, 0
    %p69 = por %p67, %p68
    %p70 = scmp.ne.s32.totalorder %s59, %s62
    %p71 = scmp.eq.s32.totalorder %s14, 1
    %p72 = por %p70, %p71
    %p73 = scmp.ne.s32.totalorder %s62, %s63
    %p74 = scmp.eq.s32.totalorder %s14, 0
    %p75 = por %p73, %p74
    %p76 = scmp.ne.s32.totalorder %s62, %s63
    %p77 = scmp.eq.s32.totalorder %s15, 1
    %p78 = por %p76, %p77
    %p80 = scmp.ne.s32.totalorder %s63, %s79
    %p81 = scmp.eq.s32.totalorder %s15, 0
    %p82 = por %p80, %p81
    %s83 = ssub.s32 %s16, %s28
    %p84 = scmp.eq.s32.totalorder %s83, 0
    %s86 = sadd.s32 %s85, 1
    %s87 = scalar_select %p84, %s85, %s86
    %p90 = pneg %p84
    %p91 = scmp.eq.s32.totalorder %s9, 1
    %p92 = por %p90, %p91
    %p93 = scmp.ne.s32.totalorder %s85, %s88
    %p94 = scmp.eq.s32.totalorder %s9, 0
    %p95 = por %p93, %p94
    %p96 = scmp.ne.s32.totalorder %s85, %s88
    %p97 = scmp.eq.s32.totalorder %s14, 1
    %p98 = por %p96, %p97
    %p99 = scmp.ne.s32.totalorder %s88, %s89
    %p100 = scmp.eq.s32.totalorder %s14, 0
    %p101 = por %p99, %p100
    %p102 = scmp.ne.s32.totalorder %s88, %s89
    %p103 = scmp.eq.s32.totalorder %s15, 1
    %p104 = por %p102, %p103
    %p106 = scmp.ne.s32.totalorder %s89, %s105
    %p107 = scmp.eq.s32.totalorder %s15, 0
    %p108 = por %p106, %p107
    %s109 = ssub.s32 %s16, %s28
    %s110 = ssub.s32 %s17, %s24
    %s111 = sor.u32 %s109, %s110
    %p112 = scmp.eq.s32.totalorder %s111, 0
    %s114 = sadd.s32 %s113, 1
    %s115 = scalar_select %p112, %s113, %s114
    %p118 = pneg %p112
    %p119 = scmp.eq.s32.totalorder %s9, 1
    %p120 = por %p118, %p119
    %p121 = scmp.ne.s32.totalorder %s113, %s116
    %p122 = scmp.eq.s32.totalorder %s9, 0
    %p123 = por %p121, %p122
    %p124 = scmp.ne.s32.totalorder %s113, %s116
    %p125 = scmp.eq.s32.totalorder %s14, 1
    %p126 = por %p124, %p125
    %p127 = scmp.ne.s32.totalorder %s116, %s117
    %p128 = scmp.eq.s32.totalorder %s14, 0
    %p129 = por %p127, %p128
    %p130 = scmp.ne.s32.totalorder %s116, %s117
    %p131 = scmp.eq.s32.totalorder %s15, 1
    %p132 = por %p130, %p131
    %p134 = scmp.ne.s32.totalorder %s117, %s133
    %p135 = scmp.eq.s32.totalorder %s15, 0
    %p136 = por %p134, %p135
    %p137 = scmp.le.s32.totalorder 1, %s9
    %p138 = scmp.lt.s32.totalorder %s9, 3
    %p139 = pnand %p137, %p138
    %p140 = pneg %p139
    // Predicated region
    $region9: #{crestereo_forward.69} parent=5 // pred_check
      _
    $region10: #{crestereo_forward.69} parent=5 // pred_check_branch
      %142 = sbr.rel (%p139) target = $region12
    $region11: #{crestereo_forward.69} parent=5 // pred_region
      %s143 = ssub.s32 %s9, 1
    $region12: #{crestereo_forward.69} parent=5 // pred_fallthru
      _
    %p144 = scmp.lt.s32.totalorder %s9, 2
    // Predicated region
    $region13: #{crestereo_forward.69} parent=5 // pred_check
      %p145 = pneg %p144
    $region14: #{crestereo_forward.69} parent=5 // pred_check_branch
      %147 = sbr.rel (%p145) target = $region16
    $region15: #{crestereo_forward.69} parent=5 // pred_region
      // Predicated region
      $region17: #{crestereo_forward.69} parent=15 // pred_check
        %p148 = pneg %p43
      $region18: #{crestereo_forward.69} parent=15 // pred_check_branch
        %150 = sbr.rel (%p148) target = $region20
      $region19: #{crestereo_forward.69} parent=15 // pred_region
        %s151 = smul.u32 8, %s17
        %p152 = scmp.lt.s32.totalorder %s16, 1
        %s153 = scalar_select %p152, %s16, 1
        %p154 = scmp.lt.s32.totalorder %s151, 7
        %s155 = scalar_select %p154, %s151, 7
        %s156 = smul.addr %s153, 8
        %s157 = sadd.s32 %s155, %s156
        %s158 = smul.addr %s157, 4
        %s159 = scalar_lea.vmem %s0, %s158
        %s160 = smul.u32 8, %s17
      $region20: #{crestereo_forward.69} parent=15 // pred_fallthru
        _
      // Predicated region
      $region21: #{crestereo_forward.69} parent=15 // pred_check
        %p161 = pneg %p69
      $region22: #{crestereo_forward.69} parent=15 // pred_check_branch
        %163 = sbr.rel (%p161) target = $region24
      $region23: #{crestereo_forward.69} parent=15 // pred_region
        %p164 = scmp.lt.s32.totalorder %s16, 1
        %s165 = scalar_select %p164, %s16, 1
        %s166 = scalar_lea.vmem %s1, %s165
      $region24: #{crestereo_forward.69} parent=15 // pred_fallthru
        _
      // Predicated region
      $region25: #{crestereo_forward.69} parent=15 // pred_check
        %p167 = pneg %p95
      $region26: #{crestereo_forward.69} parent=15 // pred_check_branch
        %169 = sbr.rel (%p167) target = $region28
      $region27: #{crestereo_forward.69} parent=15 // pred_region
        %p170 = scmp.lt.s32.totalorder %s16, 1
        %s171 = scalar_select %p170, %s16, 1
        %s172 = scalar_lea.vmem %s2, %s171
      $region28: #{crestereo_forward.69} parent=15 // pred_fallthru
        _
    $region16: #{crestereo_forward.69} parent=5 // pred_fallthru
      _
    %p173 = scmp.le.s32.totalorder 1, %s9
    %p174 = scmp.lt.s32.totalorder %s9, 3
    %p175 = pnand %p173, %p174
    %p176 = pneg %p175
    // Predicated region
    $region29: #{crestereo_forward.69} parent=5 // pred_check
      _
    $region30: #{crestereo_forward.69} parent=5 // pred_check_branch
      %178 = sbr.rel (%p175) target = $region32
    $region31: #{crestereo_forward.69} parent=5 // pred_region
      %s179 = ssub.s32 %s9, 1
      %s180 = smul.u32 8, %s19
      %p181 = scmp.lt.s32.totalorder %s18, 1
      %s182 = scalar_select %p181, %s18, 1
      %p183 = scmp.lt.s32.totalorder %s180, 7
      %s184 = scalar_select %p183, %s180, 7
      %s185 = smul.addr %s182, 8
      %s186 = sadd.s32 %s184, %s185
      %s187 = smul.addr %s186, 4
      %s188 = scalar_lea.vmem %s0, %s187
      %p189 = pneg %p49
      %p190 = pneg %p46
      %p191 = scmp.lt.s32.totalorder %s18, 1
      %s192 = scalar_select %p191, %s18, 1
      %s193 = scalar_lea.vmem %s1, %s192
      %p194 = pneg %p75
      %p195 = pneg %p72
      %p196 = scmp.lt.s32.totalorder %s18, 1
      %s197 = scalar_select %p196, %s18, 1
      %s198 = scalar_lea.vmem %s2, %s197
      %p199 = pneg %p101
      %p200 = pneg %p98
      %p201 = pneg %p129
      %p202 = pneg %p126
      %s203 = smul.u32 8, %s19
      %p204 = scmp.lt.s32.totalorder %s18, 1
      %s205 = scalar_select %p204, %s18, 1
      %p206 = scmp.lt.s32.totalorder %s203, 7
      %s207 = scalar_select %p206, %s203, 7
      %s208 = smul.addr %s205, 8
      %s209 = sadd.s32 %s207, %s208
      %s210 = smul.addr %s209, 4
      %s211 = scalar_lea.vmem %s3, %s210
      %s212 = smul.u32 8, %s19
      %p213 = scmp.lt.s32.totalorder %s18, 1
      %s214 = scalar_select %p213, %s18, 1
      %p215 = scmp.lt.s32.totalorder %s212, 7
      %s216 = scalar_select %p215, %s212, 7
      %s217 = smul.addr %s214, 8
      %s218 = sadd.s32 %s216, %s217
      %s219 = smul.addr %s218, 4
      %s220 = scalar_lea.vmem %s0, %s219
      %s221 = smul.u32 8, %s19
      %p222 = scmp.lt.s32.totalorder %s18, 1
      %s223 = scalar_select %p222, %s18, 1
      %s224 = scalar_lea.vmem %s1, %s223
      %p225 = scmp.lt.s32.totalorder %s18, 1
      %s226 = scalar_select %p225, %s18, 1
      %s227 = scalar_lea.vmem %s2, %s226
      %s228 = smul.u32 8, %s19
      %p229 = scmp.lt.s32.totalorder %s18, 1
      %s230 = scalar_select %p229, %s18, 1
      %p231 = scmp.lt.s32.totalorder %s228, 7
      %s232 = scalar_select %p231, %s228, 7
      %s233 = smul.addr %s230, 8
      %s234 = sadd.s32 %s232, %s233
      %s235 = smul.addr %s234, 4
      %s236 = scalar_lea.vmem %s3, %s235
      %s237 = smul.u32 8, %s19
      %v238 = vld [vmem:[%s224] sm:$0x1]
      %v239 = vmul.f32 %v238, 0.015625
      %v240 = vld [vmem:[%s227] sm:$0x1]
      %v241 = vmul.f32 %v240, 0.015625
      %v242 = vmul.f32 %v239, %v239
      %v243 = vsub.f32 %v241, %v242
      %v244 = vmax.f32 %v243, 0.0
      %v245 = vadd.f32 %v244, 1e-05
      %v246 = vrsqrt.pop %v245
      %v247 = vld [vmem:[%s220] sm:$0xf]
      %v248 = vld [vmem:[%s220 + $0x4] sm:$0xf]
      %v249 = vld [vmem:[%s220 + $0x8] sm:$0xf]
      %v250 = vld [vmem:[%s220 + $0xc] sm:$0xf]
      %v251 = vld [vmem:[%s220 + $0x10] sm:$0xf]
      %v252 = vld [vmem:[%s220 + $0x14] sm:$0xf]
      %v253 = vld [vmem:[%s220 + $0x18] sm:$0xf]
      %v254 = vld [vmem:[%s220 + $0x1c] sm:$0xf]
      %v255 = vunpack.c.l.bf16 %v247
      %v256 = vunpack.c.l.bf16 %v248
      %v257 = vunpack.c.l.bf16 %v249
      %v258 = vunpack.c.l.bf16 %v250
      %v259 = vunpack.c.l.bf16 %v251
      %v260 = vunpack.c.l.bf16 %v252
      %v261 = vunpack.c.l.bf16 %v253
      %v262 = vunpack.c.l.bf16 %v254
      %v264 = vlaneseq
      %v265 = vshrl.u32 %v264, 7
      %v266 = vsub.s32 0, %v265
      %v267 = vrot.slane %v239, %v266
      %v269 = vsub.f32 %v255, %v267
      %v270 = vsub.f32 %v256, %v267
      %v271 = vsub.f32 %v257, %v267
      %v272 = vsub.f32 %v258, %v267
      %v273 = vsub.f32 %v259, %v267
      %v274 = vsub.f32 %v260, %v267
      %v275 = vsub.f32 %v261, %v267
      %v276 = vsub.f32 %v262, %v267
      %v278 = vlaneseq
      %v279 = vshrl.u32 %v278, 7
      %v280 = vsub.s32 0, %v279
      %v281 = vrot.slane %v246, %v280
      %v283 = vmul.f32 %v269, %v281
      %v284 = vmul.f32 %v270, %v281
      %v285 = vmul.f32 %v271, %v281
      %v286 = vmul.f32 %v272, %v281
      %v287 = vmul.f32 %v273, %v281
      %v288 = vmul.f32 %v274, %v281
      %v289 = vmul.f32 %v275, %v281
      %v290 = vmul.f32 %v276, %v281
      %v291 = vpack.c.bf16 %v284, %v283
      %v292 = vpack.c.bf16 %v286, %v285
      %v293 = vpack.c.bf16 %v288, %v287
      %v294 = vpack.c.bf16 %v290, %v289
      %v299 = vunpack.c.l.b16 %v291
      %v300 = vunpack.c.h.b16 %v291
      %v301 = vunpack.c.l.b16 %v292
      %v302 = vunpack.c.h.b16 %v292
      %v303 = vunpack.c.l.b16 %v293
      %v304 = vunpack.c.h.b16 %v293
      %v305 = vunpack.c.l.b16 %v294
      %v306 = vunpack.c.h.b16 %v294
      %v307 = vpack.c.b16 %v299, %v299
      %v308 = vpack.c.b16 %v300, %v300
      %v309 = vpack.c.b16 %v301, %v301
      %v310 = vpack.c.b16 %v302, %v302
      %v311 = vpack.c.b16 %v303, %v303
      %v312 = vpack.c.b16 %v304, %v304
      %v313 = vpack.c.b16 %v305, %v305
      %v314 = vpack.c.b16 %v306, %v306
      %323 = vst [vmem:[%s236] sm:$0xf] %v307
      %324 = vst [vmem:[%s236 + $0x4] sm:$0xf] %v308
      %325 = vst [vmem:[%s236 + $0x8] sm:$0xf] %v309
      %326 = vst [vmem:[%s236 + $0xc] sm:$0xf] %v310
      %327 = vst [vmem:[%s236 + $0x10] sm:$0xf] %v311
      %328 = vst [vmem:[%s236 + $0x14] sm:$0xf] %v312
      %329 = vst [vmem:[%s236 + $0x18] sm:$0xf] %v313
      %330 = vst [vmem:[%s236 + $0x1c] sm:$0xf] %v314
      %s331 = smul.u32 8, %s19
      %p332 = scmp.lt.s32.totalorder %s18, 1
      %s333 = scalar_select %p332, %s18, 1
      %p334 = scmp.lt.s32.totalorder %s331, 7
      %s335 = scalar_select %p334, %s331, 7
      %s336 = smul.addr %s333, 8
      %s337 = sadd.s32 %s335, %s336
      %s338 = smul.addr %s337, 4
      %s339 = scalar_lea.vmem %s3, %s338
      // Predicated region
      $region33: #{crestereo_forward.69} parent=31 // pred_check
        %p340 = pneg %p126
      $region34: #{crestereo_forward.69} parent=31 // pred_check_branch
        %342 = sbr.rel (%p340) target = $region36
      $region35: #{crestereo_forward.69} parent=31 // pred_region
        %s343 = smul.u32 8, %s19
      $region36: #{crestereo_forward.69} parent=31 // pred_fallthru
        _
    $region32: #{crestereo_forward.69} parent=5 // pred_fallthru
      _
    %p344 = scmp.le.s32.totalorder 2, %s9
    // Predicated region
    $region37: #{crestereo_forward.69} parent=5 // pred_check
      %p345 = pneg %p344
    $region38: #{crestereo_forward.69} parent=5 // pred_check_branch
      %347 = sbr.rel (%p345) target = $region40
    $region39: #{crestereo_forward.69} parent=5 // pred_region
      %s348 = ssub.s32 %s9, 2
      // Predicated region
      $region41: #{crestereo_forward.69} parent=39 // pred_check
        %p349 = pneg %p132
      $region42: #{crestereo_forward.69} parent=39 // pred_check_branch
        %351 = sbr.rel (%p349) target = $region44
      $region43: #{crestereo_forward.69} parent=39 // pred_region
        %s352 = smul.u32 8, %s21
        %p353 = scmp.lt.s32.totalorder %s20, 1
        %s354 = scalar_select %p353, %s20, 1
        %p355 = scmp.lt.s32.totalorder %s352, 7
        %s356 = scalar_select %p355, %s352, 7
        %s357 = smul.addr %s354, 8
        %s358 = sadd.s32 %s356, %s357
        %s359 = smul.addr %s358, 4
        %s360 = scalar_lea.vmem %s3, %s359
      $region44: #{crestereo_forward.69} parent=39 // pred_fallthru
        _
    $region40: #{crestereo_forward.69} parent=5 // pred_fallthru
      _
  $region6: #{crestereo_forward.69} parent=0 // loop_footer
    %s13 = sadd.s32 1, %s9
  $region7: #{crestereo_forward.69} parent=0 // loop_footer_branch
    %8 = sbr.rel target = $region3
  $region8: #{crestereo_forward.69} parent=0 // loop_exit
    _

// kernel: crestereo_forward.65
$region0: #{crestereo_forward.65}
  #allocation0 [shape = 'u32[]', space=smem, size = 0x4, offset = 0x4, fixed_abs, tag = 'smem constant byte address 0x4 - core index']
  #allocation1 [shape = 'u32[144,128]{1,0:T(1,128)}', space=vmem, size = 0x12000, scoped, tag = 'internal scratch']
  %s0 = inlined_call_operand.vmem [shape: bf16[2,64,128], index: 0, kind: input, shape index: {}]
  %s1 = inlined_call_operand.vmem [shape: f32[2,1,128], index: 1, kind: input, shape index: {}]
  %s2 = inlined_call_operand.vmem [shape: f32[2,1,128], index: 2, kind: input, shape index: {}]
  %s3 = inlined_call_operand.vmem [shape: bf16[2,64,128], index: 3, kind: output, shape index: {}]
  %s4 = sld [smem:[#allocation0]]
  $region45: #{crestereo_forward.65} parent=0
    _
  %s6 = ssub.s32 1, %s4
  %s7 = scalar_select 0, %s6, %s4
  loop: start=0, step=1, limit=4
  $region2: #{crestereo_forward.65} parent=0 // loop_pre_header
    _
  $region3: #{crestereo_forward.65} parent=0 // loop_header
    %s9 = sphi 0, %s13
    %p10 = scmp.ge.s32.totalorder %s9, 4
    %s16 = sphi 0, %s28
    %s17 = sphi 0, %s24
    %s18 = sphi 0, %s16
    %s19 = sphi 0, %s17
    %s20 = sphi 0, %s18
    %s21 = sphi 0, %s19
    %s33 = sphi 0, %s35
    %s36 = sphi 0, %s33
    %s37 = sphi 0, %s36
    %s53 = sphi 0, %s37
    %s59 = sphi 0, %s61
    %s62 = sphi 0, %s59
    %s63 = sphi 0, %s62
    %s79 = sphi 0, %s63
    %s85 = sphi 0, %s87
    %s88 = sphi 0, %s85
    %s89 = sphi 0, %s88
    %s105 = sphi 0, %s89
    %s113 = sphi 0, %s115
    %s116 = sphi 0, %s113
    %s117 = sphi 0, %s116
    %s133 = sphi 0, %s117
  $region4: #{crestereo_forward.65} parent=0 // loop_header_branch
    %12 = sbr.rel (%p10) target = $region8
  $region5: #{crestereo_forward.65} parent=0 // loop_body
    %s14 = ssub.s32 %s9, 1
    %s15 = ssub.s32 %s9, 2
    %s22 = sadd.s32 1, %s17
    %p23 = scmp.ge.s32.totalorder %s22, 1
    %s24 = scalar_select %p23, 0, %s22
    %s25 = sadd.s32 1, %s16
    %s26 = scalar_select %p23, %s25, %s16
    %p27 = scmp.ge.s32.totalorder %s26, 2
    %s28 = scalar_select %p27, 0, %s26
    %s29 = ssub.s32 %s16, %s28
    %s30 = ssub.s32 %s17, %s24
    %s31 = sor.u32 %s29, %s30
    %p32 = scmp.eq.s32.totalorder %s31, 0
    %s34 = sadd.s32 %s33, 1
    %s35 = scalar_select %p32, %s33, %s34
    %p38 = pneg %p32
    %p39 = scmp.eq.s32.totalorder %s9, 1
    %p40 = por %p38, %p39
    %p41 = scmp.ne.s32.totalorder %s33, %s36
    %p42 = scmp.eq.s32.totalorder %s9, 0
    %p43 = por %p41, %p42
    %p44 = scmp.ne.s32.totalorder %s33, %s36
    %p45 = scmp.eq.s32.totalorder %s14, 1
    %p46 = por %p44, %p45
    %p47 = scmp.ne.s32.totalorder %s36, %s37
    %p48 = scmp.eq.s32.totalorder %s14, 0
    %p49 = por %p47, %p48
    %p50 = scmp.ne.s32.totalorder %s36, %s37
    %p51 = scmp.eq.s32.totalorder %s15, 1
    %p52 = por %p50, %p51
    %p54 = scmp.ne.s32.totalorder %s37, %s53
    %p55 = scmp.eq.s32.totalorder %s15, 0
    %p56 = por %p54, %p55
    %s57 = ssub.s32 %s16, %s28
    %p58 = scmp.eq.s32.totalorder %s57, 0
    %s60 = sadd.s32 %s59, 1
    %s61 = scalar_select %p58, %s59, %s60
    %p64 = pneg %p58
    %p65 = scmp.eq.s32.totalorder %s9, 1
    %p66 = por %p64, %p65
    %p67 = scmp.ne.s32.totalorder %s59, %s62
    %p68 = scmp.eq.s32.totalorder %s9, 0
    %p69 = por %p67, %p68
    %p70 = scmp.ne.s32.totalorder %s59, %s62
    %p71 = scmp.eq.s32.totalorder %s14, 1
    %p72 = por %p70, %p71
    %p73 = scmp.ne.s32.totalorder %s62, %s63
    %p74 = scmp.eq.s32.totalorder %s14, 0
    %p75 = por %p73, %p74
    %p76 = scmp.ne.s32.totalorder %s62, %s63
    %p77 = scmp.eq.s32.totalorder %s15, 1
    %p78 = por %p76, %p77
    %p80 = scmp.ne.s32.totalorder %s63, %s79
    %p81 = scmp.eq.s32.totalorder %s15, 0
    %p82 = por %p80, %p81
    %s83 = ssub.s32 %s16, %s28
    %p84 = scmp.eq.s32.totalorder %s83, 0
    %s86 = sadd.s32 %s85, 1
    %s87 = scalar_select %p84, %s85, %s86
    %p90 = pneg %p84
    %p91 = scmp.eq.s32.totalorder %s9, 1
    %p92 = por %p90, %p91
    %p93 = scmp.ne.s32.totalorder %s85, %s88
    %p94 = scmp.eq.s32.totalorder %s9, 0
    %p95 = por %p93, %p94
    %p96 = scmp.ne.s32.totalorder %s85, %s88
    %p97 = scmp.eq.s32.totalorder %s14, 1
    %p98 = por %p96, %p97
    %p99 = scmp.ne.s32.totalorder %s88, %s89
    %p100 = scmp.eq.s32.totalorder %s14, 0
    %p101 = por %p99, %p100
    %p102 = scmp.ne.s32.totalorder %s88, %s89
    %p103 = scmp.eq.s32.totalorder %s15, 1
    %p104 = por %p102, %p103
    %p106 = scmp.ne.s32.totalorder %s89, %s105
    %p107 = scmp.eq.s32.totalorder %s15, 0
    %p108 = por %p106, %p107
    %s109 = ssub.s32 %s16, %s28
    %s110 = ssub.s32 %s17, %s24
    %s111 = sor.u32 %s109, %s110
    %p112 = scmp.eq.s32.totalorder %s111, 0
    %s114 = sadd.s32 %s113, 1
    %s115 = scalar_select %p112, %s113, %s114
    %p118 = pneg %p112
    %p119 = scmp.eq.s32.totalorder %s9, 1
    %p120 = por %p118, %p119
    %p121 = scmp.ne.s32.totalorder %s113, %s116
    %p122 = scmp.eq.s32.totalorder %s9, 0
    %p123 = por %p121, %p122
    %p124 = scmp.ne.s32.totalorder %s113, %s116
    %p125 = scmp.eq.s32.totalorder %s14, 1
    %p126 = por %p124, %p125
    %p127 = scmp.ne.s32.totalorder %s116, %s117
    %p128 = scmp.eq.s32.totalorder %s14, 0
    %p129 = por %p127, %p128
    %p130 = scmp.ne.s32.totalorder %s116, %s117
    %p131 = scmp.eq.s32.totalorder %s15, 1
    %p132 = por %p130, %p131
    %p134 = scmp.ne.s32.totalorder %s117, %s133
    %p135 = scmp.eq.s32.totalorder %s15, 0
    %p136 = por %p134, %p135
    %p137 = scmp.le.s32.totalorder 1, %s9
    %p138 = scmp.lt.s32.totalorder %s9, 3
    %p139 = pnand %p137, %p138
    %p140 = pneg %p139
    // Predicated region
    $region9: #{crestereo_forward.65} parent=5 // pred_check
      _
    $region10: #{crestereo_forward.65} parent=5 // pred_check_branch
      %142 = sbr.rel (%p139) target = $region12
    $region11: #{crestereo_forward.65} parent=5 // pred_region
      %s143 = ssub.s32 %s9, 1
    $region12: #{crestereo_forward.65} parent=5 // pred_fallthru
      _
    %p144 = scmp.lt.s32.totalorder %s9, 2
    // Predicated region
    $region13: #{crestereo_forward.65} parent=5 // pred_check
      %p145 = pneg %p144
    $region14: #{crestereo_forward.65} parent=5 // pred_check_branch
      %147 = sbr.rel (%p145) target = $region16
    $region15: #{crestereo_forward.65} parent=5 // pred_region
      // Predicated region
      $region17: #{crestereo_forward.65} parent=15 // pred_check
        %p148 = pneg %p43
      $region18: #{crestereo_forward.65} parent=15 // pred_check_branch
        %150 = sbr.rel (%p148) target = $region20
      $region19: #{crestereo_forward.65} parent=15 // pred_region
        %s151 = smul.u32 8, %s17
        %p152 = scmp.lt.s32.totalorder %s16, 1
        %s153 = scalar_select %p152, %s16, 1
        %p154 = scmp.lt.s32.totalorder %s151, 7
        %s155 = scalar_select %p154, %s151, 7
        %s156 = smul.addr %s153, 8
        %s157 = sadd.s32 %s155, %s156
        %s158 = smul.addr %s157, 4
        %s159 = scalar_lea.vmem %s0, %s158
        %s160 = smul.u32 8, %s17
      $region20: #{crestereo_forward.65} parent=15 // pred_fallthru
        _
      // Predicated region
      $region21: #{crestereo_forward.65} parent=15 // pred_check
        %p161 = pneg %p69
      $region22: #{crestereo_forward.65} parent=15 // pred_check_branch
        %163 = sbr.rel (%p161) target = $region24
      $region23: #{crestereo_forward.65} parent=15 // pred_region
        %p164 = scmp.lt.s32.totalorder %s16, 1
        %s165 = scalar_select %p164, %s16, 1
        %s166 = scalar_lea.vmem %s1, %s165
      $region24: #{crestereo_forward.65} parent=15 // pred_fallthru
        _
      // Predicated region
      $region25: #{crestereo_forward.65} parent=15 // pred_check
        %p167 = pneg %p95
      $region26: #{crestereo_forward.65} parent=15 // pred_check_branch
        %169 = sbr.rel (%p167) target = $region28
      $region27: #{crestereo_forward.65} parent=15 // pred_region
        %p170 = scmp.lt.s32.totalorder %s16, 1
        %s171 = scalar_select %p170, %s16, 1
        %s172 = scalar_lea.vmem %s2, %s171
      $region28: #{crestereo_forward.65} parent=15 // pred_fallthru
        _
    $region16: #{crestereo_forward.65} parent=5 // pred_fallthru
      _
    %p173 = scmp.le.s32.totalorder 1, %s9
    %p174 = scmp.lt.s32.totalorder %s9, 3
    %p175 = pnand %p173, %p174
    %p176 = pneg %p175
    // Predicated region
    $region29: #{crestereo_forward.65} parent=5 // pred_check
      _
    $region30: #{crestereo_forward.65} parent=5 // pred_check_branch
      %178 = sbr.rel (%p175) target = $region32
    $region31: #{crestereo_forward.65} parent=5 // pred_region
      %s179 = ssub.s32 %s9, 1
      %s180 = smul.u32 8, %s19
      %p181 = scmp.lt.s32.totalorder %s18, 1
      %s182 = scalar_select %p181, %s18, 1
      %p183 = scmp.lt.s32.totalorder %s180, 7
      %s184 = scalar_select %p183, %s180, 7
      %s185 = smul.addr %s182, 8
      %s186 = sadd.s32 %s184, %s185
      %s187 = smul.addr %s186, 4
      %s188 = scalar_lea.vmem %s0, %s187
      %p189 = pneg %p49
      %p190 = pneg %p46
      %p191 = scmp.lt.s32.totalorder %s18, 1
      %s192 = scalar_select %p191, %s18, 1
      %s193 = scalar_lea.vmem %s1, %s192
      %p194 = pneg %p75
      %p195 = pneg %p72
      %p196 = scmp.lt.s32.totalorder %s18, 1
      %s197 = scalar_select %p196, %s18, 1
      %s198 = scalar_lea.vmem %s2, %s197
      %p199 = pneg %p101
      %p200 = pneg %p98
      %p201 = pneg %p129
      %p202 = pneg %p126
      %s203 = smul.u32 8, %s19
      %p204 = scmp.lt.s32.totalorder %s18, 1
      %s205 = scalar_select %p204, %s18, 1
      %p206 = scmp.lt.s32.totalorder %s203, 7
      %s207 = scalar_select %p206, %s203, 7
      %s208 = smul.addr %s205, 8
      %s209 = sadd.s32 %s207, %s208
      %s210 = smul.addr %s209, 4
      %s211 = scalar_lea.vmem %s3, %s210
      %s212 = smul.u32 8, %s19
      %p213 = scmp.lt.s32.totalorder %s18, 1
      %s214 = scalar_select %p213, %s18, 1
      %p215 = scmp.lt.s32.totalorder %s212, 7
      %s216 = scalar_select %p215, %s212, 7
      %s217 = smul.addr %s214, 8
      %s218 = sadd.s32 %s216, %s217
      %s219 = smul.addr %s218, 4
      %s220 = scalar_lea.vmem %s0, %s219
      %s221 = smul.u32 8, %s19
      %p222 = scmp.lt.s32.totalorder %s18, 1
      %s223 = scalar_select %p222, %s18, 1
      %s224 = scalar_lea.vmem %s1, %s223
      %p225 = scmp.lt.s32.totalorder %s18, 1
      %s226 = scalar_select %p225, %s18, 1
      %s227 = scalar_lea.vmem %s2, %s226
      %s228 = smul.u32 8, %s19
      %p229 = scmp.lt.s32.totalorder %s18, 1
      %s230 = scalar_select %p229, %s18, 1
      %p231 = scmp.lt.s32.totalorder %s228, 7
      %s232 = scalar_select %p231, %s228, 7
      %s233 = smul.addr %s230, 8
      %s234 = sadd.s32 %s232, %s233
      %s235 = smul.addr %s234, 4
      %s236 = scalar_lea.vmem %s3, %s235
      %s237 = smul.u32 8, %s19
      %v238 = vld [vmem:[%s224] sm:$0x1]
      %v239 = vmul.f32 %v238, 0.015625
      %v240 = vld [vmem:[%s227] sm:$0x1]
      %v241 = vmul.f32 %v240, 0.015625
      %v242 = vmul.f32 %v239, %v239
      %v243 = vsub.f32 %v241, %v242
      %v244 = vmax.f32 %v243, 0.0
      %v245 = vadd.f32 %v244, 1e-05
      %v246 = vrsqrt.pop %v245
      %v247 = vld [vmem:[%s220] sm:$0xf]
      %v248 = vld [vmem:[%s220 + $0x4] sm:$0xf]
      %v249 = vld [vmem:[%s220 + $0x8] sm:$0xf]
      %v250 = vld [vmem:[%s220 + $0xc] sm:$0xf]
      %v251 = vld [vmem:[%s220 + $0x10] sm:$0xf]
      %v252 = vld [vmem:[%s220 + $0x14] sm:$0xf]
      %v253 = vld [vmem:[%s220 + $0x18] sm:$0xf]
      %v254 = vld [vmem:[%s220 + $0x1c] sm:$0xf]
      %v255 = vunpack.c.l.bf16 %v247
      %v256 = vunpack.c.l.bf16 %v248
      %v257 = vunpack.c.l.bf16 %v249
      %v258 = vunpack.c.l.bf16 %v250
      %v259 = vunpack.c.l.bf16 %v251
      %v260 = vunpack.c.l.bf16 %v252
      %v261 = vunpack.c.l.bf16 %v253
      %v262 = vunpack.c.l.bf16 %v254
      %v264 = vlaneseq
      %v265 = vshrl.u32 %v264, 7
      %v266 = vsub.s32 0, %v265
      %v267 = vrot.slane %v239, %v266
      %v269 = vsub.f32 %v255, %v267
      %v270 = vsub.f32 %v256, %v267
      %v271 = vsub.f32 %v257, %v267
      %v272 = vsub.f32 %v258, %v267
      %v273 = vsub.f32 %v259, %v267
      %v274 = vsub.f32 %v260, %v267
      %v275 = vsub.f32 %v261, %v267
      %v276 = vsub.f32 %v262, %v267
      %v278 = vlaneseq
      %v279 = vshrl.u32 %v278, 7
      %v280 = vsub.s32 0, %v279
      %v281 = vrot.slane %v246, %v280
      %v283 = vmul.f32 %v269, %v281
      %v284 = vmul.f32 %v270, %v281
      %v285 = vmul.f32 %v271, %v281
      %v286 = vmul.f32 %v272, %v281
      %v287 = vmul.f32 %v273, %v281
      %v288 = vmul.f32 %v274, %v281
      %v289 = vmul.f32 %v275, %v281
      %v290 = vmul.f32 %v276, %v281
      %v291 = vmax.f32 %v283, 0.0
      %v292 = vmax.f32 %v284, 0.0
      %v293 = vmax.f32 %v285, 0.0
      %v294 = vmax.f32 %v286, 0.0
      %v295 = vmax.f32 %v287, 0.0
      %v296 = vmax.f32 %v288, 0.0
      %v297 = vmax.f32 %v289, 0.0
      %v298 = vmax.f32 %v290, 0.0
      %v299 = vpack.c.bf16 %v292, %v291
      %v300 = vpack.c.bf16 %v294, %v293
      %v301 = vpack.c.bf16 %v296, %v295
      %v302 = vpack.c.bf16 %v298, %v297
      %v307 = vunpack.c.l.b16 %v299
      %v308 = vunpack.c.h.b16 %v299
      %v309 = vunpack.c.l.b16 %v300
      %v310 = vunpack.c.h.b16 %v300
      %v311 = vunpack.c.l.b16 %v301
      %v312 = vunpack.c.h.b16 %v301
      %v313 = vunpack.c.l.b16 %v302
      %v314 = vunpack.c.h.b16 %v302
      %v315 = vpack.c.b16 %v307, %v307
      %v316 = vpack.c.b16 %v308, %v308
      %v317 = vpack.c.b16 %v309, %v309
      %v318 = vpack.c.b16 %v310, %v310
      %v319 = vpack.c.b16 %v311, %v311
      %v320 = vpack.c.b16 %v312, %v312
      %v321 = vpack.c.b16 %v313, %v313
      %v322 = vpack.c.b16 %v314, %v314
      %331 = vst [vmem:[%s236] sm:$0xf] %v315
      %332 = vst [vmem:[%s236 + $0x4] sm:$0xf] %v316
      %333 = vst [vmem:[%s236 + $0x8] sm:$0xf] %v317
      %334 = vst [vmem:[%s236 + $0xc] sm:$0xf] %v318
      %335 = vst [vmem:[%s236 + $0x10] sm:$0xf] %v319
      %336 = vst [vmem:[%s236 + $0x14] sm:$0xf] %v320
      %337 = vst [vmem:[%s236 + $0x18] sm:$0xf] %v321
      %338 = vst [vmem:[%s236 + $0x1c] sm:$0xf] %v322
      %s339 = smul.u32 8, %s19
      %p340 = scmp.lt.s32.totalorder %s18, 1
      %s341 = scalar_select %p340, %s18, 1
      %p342 = scmp.lt.s32.totalorder %s339, 7
      %s343 = scalar_select %p342, %s339, 7
      %s344 = smul.addr %s341, 8
      %s345 = sadd.s32 %s343, %s344
      %s346 = smul.addr %s345, 4
      %s347 = scalar_lea.vmem %s3, %s346
      // Predicated region
      $region33: #{crestereo_forward.65} parent=31 // pred_check
        %p348 = pneg %p126
      $region34: #{crestereo_forward.65} parent=31 // pred_check_branch
        %350 = sbr.rel (%p348) target = $region36
      $region35: #{crestereo_forward.65} parent=31 // pred_region
        %s351 = smul.u32 8, %s19
      $region36: #{crestereo_forward.65} parent=31 // pred_fallthru
        _
    $region32: #{crestereo_forward.65} parent=5 // pred_fallthru
      _
    %p352 = scmp.le.s32.totalorder 2, %s9
    // Predicated region
    $region37: #{crestereo_forward.65} parent=5 // pred_check
      %p353 = pneg %p352
    $region38: #{crestereo_forward.65} parent=5 // pred_check_branch
      %355 = sbr.rel (%p353) target = $region40
    $region39: #{crestereo_forward.65} parent=5 // pred_region
      %s356 = ssub.s32 %s9, 2
      // Predicated region
      $region41: #{crestereo_forward.65} parent=39 // pred_check
        %p357 = pneg %p132
      $region42: #{crestereo_forward.65} parent=39 // pred_check_branch
        %359 = sbr.rel (%p357) target = $region44
      $region43: #{crestereo_forward.65} parent=39 // pred_region
        %s360 = smul.u32 8, %s21
        %p361 = scmp.lt.s32.totalorder %s20, 1
        %s362 = scalar_select %p361, %s20, 1
        %p363 = scmp.lt.s32.totalorder %s360, 7
        %s364 = scalar_select %p363, %s360, 7
        %s365 = smul.addr %s362, 8
        %s366 = sadd.s32 %s364, %s365
        %s367 = smul.addr %s366, 4
        %s368 = scalar_lea.vmem %s3, %s367
      $region44: #{crestereo_forward.65} parent=39 // pred_fallthru
        _
    $region40: #{crestereo_forward.65} parent=5 // pred_fallthru
      _
  $region6: #{crestereo_forward.65} parent=0 // loop_footer
    %s13 = sadd.s32 1, %s9
  $region7: #{crestereo_forward.65} parent=0 // loop_footer_branch
    %8 = sbr.rel target = $region3
  $region8: #{crestereo_forward.65} parent=0 // loop_exit
    _

// kernel: crestereo_forward.63
$region0: #{crestereo_forward.63}
  #allocation0 [shape = 'u32[]', space=smem, size = 0x4, offset = 0x4, fixed_abs, tag = 'smem constant byte address 0x4 - core index']
  #allocation1 [shape = 'u32[144,128]{1,0:T(1,128)}', space=vmem, size = 0x12000, scoped, tag = 'internal scratch']
  #allocation2 [shape = 'f32[8,128]{1,0:T(8,128)}', space=vmem, size = 0x1000, scoped, tag = 'scratch operand']
  %s0 = inlined_call_operand.vmem [shape: bf16[36,2,9,128], index: 0, kind: input, shape index: {}]
  %s1 = inlined_call_operand.vmem [shape: bf16[9,128,128], index: 1, kind: input, shape index: {}]
  %s2 = inlined_call_operand.vmem [shape: f32[1,128], index: 2, kind: input, shape index: {}]
  %s3 = inlined_call_operand.vmem [shape: bf16[16,8,128], index: 3, kind: output, shape index: {}]
  %s4 = sld [smem:[#allocation0]]
  $region53: #{crestereo_forward.63} parent=0
    _
  %s6 = ssub.s32 1, %s4
  %s7 = scalar_select 0, %s6, %s4
  loop: start=0, step=1, limit=50
  $region2: #{crestereo_forward.63} parent=0 // loop_pre_header
    _
  $region3: #{crestereo_forward.63} parent=0 // loop_header
    %s9 = sphi 0, %s13
    %p10 = scmp.ge.s32.totalorder %s9, 50
    %s16 = sphi 0, %s35
    %s17 = sphi 0, %s31
    %s18 = sphi 0, %s27
    %s19 = sphi 0, %s16
    %s20 = sphi 0, %s17
    %s21 = sphi 0, %s18
    %s22 = sphi 0, %s19
    %s23 = sphi 0, %s20
    %s24 = sphi 0, %s21
    %s46 = sphi 0, %s48
    %s49 = sphi 0, %s46
    %s50 = sphi 0, %s49
    %s66 = sphi 0, %s50
    %s70 = sphi 0, %s70
    %s72 = sphi 0, %s70
    %s73 = sphi 0, %s72
    %s87 = sphi 0, %s73
    %s91 = sphi 0, %s91
    %s93 = sphi 0, %s91
    %s94 = sphi 0, %s93
    %s108 = sphi 0, %s94
    %s118 = sphi 0, %s120
    %s121 = sphi 0, %s118
    %s122 = sphi 0, %s121
    %s138 = sphi 0, %s122
  $region4: #{crestereo_forward.63} parent=0 // loop_header_branch
    %12 = sbr.rel (%p10) target = $region8
  $region5: #{crestereo_forward.63} parent=0 // loop_body
    %s14 = ssub.s32 %s9, 1
    %s15 = ssub.s32 %s9, 2
    %s25 = sadd.s32 1, %s18
    %p26 = scmp.ge.s32.totalorder %s25, 3
    %s27 = scalar_select %p26, 0, %s25
    %s28 = sadd.s32 1, %s17
    %s29 = scalar_select %p26, %s28, %s17
    %p30 = scmp.ge.s32.totalorder %s29, 8
    %s31 = scalar_select %p30, 0, %s29
    %s32 = sadd.s32 1, %s16
    %s33 = scalar_select %p30, %s32, %s16
    %p34 = scmp.ge.s32.totalorder %s33, 2
    %s35 = scalar_select %p34, 0, %s33
    %s36 = smul.u32 %s16, 18
    %s37 = smul.u32 %s17, 2
    %s38 = sadd.s32 %s36, %s37
    %s39 = sadd.s32 %s38, %s18
    %s40 = smul.u32 %s35, 18
    %s41 = smul.u32 %s31, 2
    %s42 = sadd.s32 %s40, %s41
    %s43 = sadd.s32 %s42, %s27
    %s44 = ssub.s32 %s39, %s43
    %p45 = scmp.eq.s32.totalorder %s44, 0
    %s47 = sadd.s32 %s46, 1
    %s48 = scalar_select %p45, %s46, %s47
    %p51 = pneg %p45
    %p52 = scmp.eq.s32.totalorder %s9, 47
    %p53 = por %p51, %p52
    %p54 = scmp.ne.s32.totalorder %s46, %s49
    %p55 = scmp.eq.s32.totalorder %s9, 0
    %p56 = por %p54, %p55
    %p57 = scmp.ne.s32.totalorder %s46, %s49
    %p58 = scmp.eq.s32.totalorder %s14, 47
    %p59 = por %p57, %p58
    %p60 = scmp.ne.s32.totalorder %s49, %s50
    %p61 = scmp.eq.s32.totalorder %s14, 0
    %p62 = por %p60, %p61
    %p63 = scmp.ne.s32.totalorder %s49, %s50
    %p64 = scmp.eq.s32.totalorder %s15, 47
    %p65 = por %p63, %p64
    %p67 = scmp.ne.s32.totalorder %s50, %s66
    %p68 = scmp.eq.s32.totalorder %s15, 0
    %p69 = por %p67, %p68
    %s71 = sadd.s32 %s70, 1
    %p74 = scmp.eq.s32.totalorder %s9, 47
    %p75 = scmp.ne.s32.totalorder %s70, %s72
    %p76 = scmp.eq.s32.totalorder %s9, 0
    %p77 = por %p75, %p76
    %p78 = scmp.ne.s32.totalorder %s70, %s72
    %p79 = scmp.eq.s32.totalorder %s14, 47
    %p80 = por %p78, %p79
    %p81 = scmp.ne.s32.totalorder %s72, %s73
    %p82 = scmp.eq.s32.totalorder %s14, 0
    %p83 = por %p81, %p82
    %p84 = scmp.ne.s32.totalorder %s72, %s73
    %p85 = scmp.eq.s32.totalorder %s15, 47
    %p86 = por %p84, %p85
    %p88 = scmp.ne.s32.totalorder %s73, %s87
    %p89 = scmp.eq.s32.totalorder %s15, 0
    %p90 = por %p88, %p89
    %s92 = sadd.s32 %s91, 1
    %p95 = scmp.eq.s32.totalorder %s9, 47
    %p96 = scmp.ne.s32.totalorder %s91, %s93
    %p97 = scmp.eq.s32.totalorder %s9, 0
    %p98 = por %p96, %p97
    %p99 = scmp.ne.s32.totalorder %s91, %s93
    %p100 = scmp.eq.s32.totalorder %s14, 47
    %p101 = por %p99, %p100
    %p102 = scmp.ne.s32.totalorder %s93, %s94
    %p103 = scmp.eq.s32.totalorder %s14, 0
    %p104 = por %p102, %p103
    %p105 = scmp.ne.s32.totalorder %s93, %s94
    %p106 = scmp.eq.s32.totalorder %s15, 47
    %p107 = por %p105, %p106
    %p109 = scmp.ne.s32.totalorder %s94, %s108
    %p110 = scmp.eq.s32.totalorder %s15, 0
    %p111 = por %p109, %p110
    %s112 = smul.u32 %s16, 8
    %s113 = sadd.s32 %s112, %s17
    %s114 = smul.u32 %s35, 8
    %s115 = sadd.s32 %s114, %s31
    %s116 = ssub.s32 %s113, %s115
    %p117 = scmp.eq.s32.totalorder %s116, 0
    %s119 = sadd.s32 %s118, 1
    %s120 = scalar_select %p117, %s118, %s119
    %p123 = pneg %p117
    %p124 = scmp.eq.s32.totalorder %s9, 47
    %p125 = por %p123, %p124
    %p126 = scmp.ne.s32.totalorder %s118, %s121
    %p127 = scmp.eq.s32.totalorder %s9, 0
    %p128 = por %p126, %p127
    %p129 = scmp.ne.s32.totalorder %s118, %s121
    %p130 = scmp.eq.s32.totalorder %s14, 47
    %p131 = por %p129, %p130
    %p132 = scmp.ne.s32.totalorder %s121, %s122
    %p133 = scmp.eq.s32.totalorder %s14, 0
    %p134 = por %p132, %p133
    %p135 = scmp.ne.s32.totalorder %s121, %s122
    %p136 = scmp.eq.s32.totalorder %s15, 47
    %p137 = por %p135, %p136
    %p139 = scmp.ne.s32.totalorder %s122, %s138
    %p140 = scmp.eq.s32.totalorder %s15, 0
    %p141 = por %p139, %p140
    %p142 = scmp.le.s32.totalorder 1, %s9
    %p143 = scmp.lt.s32.totalorder %s9, 49
    %p144 = pnand %p142, %p143
    %p145 = pneg %p144
    // Predicated region
    $region9: #{crestereo_forward.63} parent=5 // pred_check
      _
    $region10: #{crestereo_forward.63} parent=5 // pred_check_branch
      %147 = sbr.rel (%p144) target = $region12
    $region11: #{crestereo_forward.63} parent=5 // pred_region
      %s148 = ssub.s32 %s9, 1
      // Predicated region
      $region13: #{crestereo_forward.63} parent=11 // pred_check
        %p149 = pneg %p83
      $region14: #{crestereo_forward.63} parent=11 // pred_check_branch
        %151 = sbr.rel (%p149) target = $region16
      $region15: #{crestereo_forward.63} parent=11 // pred_region
        _
      $region16: #{crestereo_forward.63} parent=11 // pred_fallthru
        _
      // Predicated region
      $region17: #{crestereo_forward.63} parent=11 // pred_check
        %p152 = pneg %p104
      $region18: #{crestereo_forward.63} parent=11 // pred_check_branch
        %154 = sbr.rel (%p152) target = $region20
      $region19: #{crestereo_forward.63} parent=11 // pred_region
        _
      $region20: #{crestereo_forward.63} parent=11 // pred_fallthru
        _
    $region12: #{crestereo_forward.63} parent=5 // pred_fallthru
      _
    %p155 = scmp.lt.s32.totalorder %s9, 48
    // Predicated region
    $region21: #{crestereo_forward.63} parent=5 // pred_check
      %p156 = pneg %p155
    $region22: #{crestereo_forward.63} parent=5 // pred_check_branch
      %158 = sbr.rel (%p156) target = $region24
    $region23: #{crestereo_forward.63} parent=5 // pred_region
      // Predicated region
      $region25: #{crestereo_forward.63} parent=23 // pred_check
        %p159 = pneg %p56
      $region26: #{crestereo_forward.63} parent=23 // pred_check_branch
        %161 = sbr.rel (%p159) target = $region28
      $region27: #{crestereo_forward.63} parent=23 // pred_region
        %s162 = smul.u32 %s16, 18
        %s163 = smul.u32 %s17, 2
        %s164 = sadd.s32 %s162, %s163
        %s165 = sadd.s32 %s164, %s18
        %p166 = scmp.lt.s32.totalorder %s165, 35
        %s167 = scalar_select %p166, %s165, 35
        %s168 = smul.addr %s167, 4
        %s169 = smul.addr %s168, 4
        %s170 = scalar_lea.vmem %s0, %s169
        %s171 = smul.u32 %s16, 18
        %s172 = smul.u32 %s17, 2
        %s173 = sadd.s32 %s171, %s172
        %s174 = sadd.s32 %s173, %s18
      $region28: #{crestereo_forward.63} parent=23 // pred_fallthru
        _
    $region24: #{crestereo_forward.63} parent=5 // pred_fallthru
      _
    %p175 = scmp.le.s32.totalorder 1, %s9
    %p176 = scmp.lt.s32.totalorder %s9, 49
    %p177 = pnand %p175, %p176
    %p178 = pneg %p177
    // Predicated region
    $region29: #{crestereo_forward.63} parent=5 // pred_check
      _
    $region30: #{crestereo_forward.63} parent=5 // pred_check_branch
      %180 = sbr.rel (%p177) target = $region32
    $region31: #{crestereo_forward.63} parent=5 // pred_region
      %s181 = ssub.s32 %s9, 1
      %s182 = smul.u32 %s19, 18
      %s183 = smul.u32 %s20, 2
      %s184 = sadd.s32 %s182, %s183
      %s185 = sadd.s32 %s184, %s21
      %p186 = scmp.lt.s32.totalorder %s185, 35
      %s187 = scalar_select %p186, %s185, 35
      %s188 = smul.addr %s187, 4
      %s189 = smul.addr %s188, 4
      %s190 = scalar_lea.vmem %s0, %s189
      %p191 = pneg %p62
      %p192 = pneg %p59
      %p193 = pneg %p83
      %p194 = pneg %p80
      %p195 = pneg %p104
      %p196 = pneg %p101
      %p197 = pneg %p134
      %p198 = pneg %p131
      %s199 = smul.u32 %s19, 8
      %s200 = sadd.s32 %s199, %s20
      %p201 = scmp.lt.s32.totalorder %s200, 15
      %s202 = scalar_select %p201, %s200, 15
      %s203 = smul.addr %s202, 4
      %s204 = scalar_lea.vmem %s3, %s203
      %s205 = smul.u32 %s19, 18
      %s206 = smul.u32 %s20, 2
      %s207 = sadd.s32 %s205, %s206
      %s208 = sadd.s32 %s207, %s21
      %p209 = scmp.lt.s32.totalorder %s208, 35
      %s210 = scalar_select %p209, %s208, 35
      %s211 = smul.addr %s210, 4
      %s212 = smul.addr %s211, 4
      %s213 = scalar_lea.vmem %s0, %s212
      %s214 = smul.u32 %s19, 18
      %s215 = smul.u32 %s20, 2
      %s216 = sadd.s32 %s214, %s215
      %s217 = sadd.s32 %s216, %s21
      %s218 = smul.u32 %s19, 8
      %s219 = sadd.s32 %s218, %s20
      %p220 = scmp.lt.s32.totalorder %s219, 15
      %s221 = scalar_select %p220, %s219, 15
      %s222 = smul.addr %s221, 4
      %s223 = scalar_lea.vmem %s3, %s222
      %s224 = smul.u32 %s19, 8
      %s225 = sadd.s32 %s224, %s20
      %p227 = scmp.eq.s32.totalorder %s21, 0
      // Predicated region
      $region33: #{crestereo_forward.63} parent=31 // pred_check
        %p228 = pneg %p227
      $region34: #{crestereo_forward.63} parent=31 // pred_check_branch
        %230 = sbr.rel (%p228) target = $region36
      $region35: #{crestereo_forward.63} parent=31 // pred_region
        %231 = vst [vmem:[#allocation2] sm:$0xff] 0.0
      $region36: #{crestereo_forward.63} parent=31 // pred_fallthru
        _
      %v232 = vld [vmem:[#allocation2] sm:$0xff]
      %v233 = vld [vmem:[%s213] sm:$0xf]
      %s234 = smul.u32 %s21, 3
      %s235 = smul.u32 %s234, 16
      %s236 = smul.addr %s235, 4
      %s237 = scalar_lea.vmem %s1, %s236
      %v238 = vld [vmem:[%s237] sm:$0xf]
      %v239 = vld [vmem:[%s237 + $0x4] sm:$0xf]
      %v240 = vld [vmem:[%s237 + $0x8] sm:$0xf]
      %v241 = vld [vmem:[%s237 + $0xc] sm:$0xf]
      %v242 = vld [vmem:[%s237 + $0x10] sm:$0xf]
      %v243 = vld [vmem:[%s237 + $0x14] sm:$0xf]
      %v244 = vld [vmem:[%s237 + $0x18] sm:$0xf]
      %v245 = vld [vmem:[%s237 + $0x1c] sm:$0xf]
      %v246 = vld [vmem:[%s237 + $0x20] sm:$0xf]
      %v247 = vld [vmem:[%s237 + $0x24] sm:$0xf]
      %v248 = vld [vmem:[%s237 + $0x28] sm:$0xf]
      %v249 = vld [vmem:[%s237 + $0x2c] sm:$0xf]
      %v250 = vld [vmem:[%s237 + $0x30] sm:$0xf]
      %v251 = vld [vmem:[%s237 + $0x34] sm:$0xf]
      %v252 = vld [vmem:[%s237 + $0x38] sm:$0xf]
      %v253 = vld [vmem:[%s237 + $0x3c] sm:$0xf]
      %v270 = vunpack.c.l.b16 %v238
      %v271 = vunpack.c.l.b16 %v239
      %v272 = vunpack.c.l.b16 %v240
      %v273 = vunpack.c.l.b16 %v241
      %v274 = vunpack.c.l.b16 %v242
      %v275 = vunpack.c.l.b16 %v243
      %v276 = vunpack.c.l.b16 %v244
      %v277 = vunpack.c.l.b16 %v245
      %v278 = vunpack.c.l.b16 %v246
      %v279 = vunpack.c.l.b16 %v247
      %v280 = vunpack.c.l.b16 %v248
      %v281 = vunpack.c.l.b16 %v249
      %v282 = vunpack.c.l.b16 %v250
      %v283 = vunpack.c.l.b16 %v251
      %v284 = vunpack.c.l.b16 %v252
      %v285 = vunpack.c.l.b16 %v253
      %v286 = vpack.c.b16 %v271, %v270
      %v287 = vpack.c.b16 %v273, %v272
      %v288 = vpack.c.b16 %v275, %v274
      %v289 = vpack.c.b16 %v277, %v276
      %v290 = vpack.c.b16 %v279, %v278
      %v291 = vpack.c.b16 %v281, %v280
      %v292 = vpack.c.b16 %v283, %v282
      %v293 = vpack.c.b16 %v285, %v284
      %302 = vmatprep.subr.bf16.mxu0 0
      %303 = vmatpush1.bf16.msra.mxu0 %v293
      %304 = vmatprep.subr.bf16.mxu0 0
      %305 = vmatpush1.bf16.msra.mxu0 %v292
      %306 = vmatprep.subr.bf16.mxu0 0
      %307 = vmatpush1.bf16.msra.mxu0 %v291
      %308 = vmatprep.subr.bf16.mxu0 0
      %309 = vmatpush1.bf16.msra.mxu0 %v290
      %310 = vmatprep.subr.bf16.mxu0 0
      %311 = vmatpush1.bf16.msra.mxu0 %v289
      %312 = vmatprep.subr.bf16.mxu0 0
      %313 = vmatpush1.bf16.msra.mxu0 %v288
      %314 = vmatprep.subr.bf16.mxu0 0
      %315 = vmatpush1.bf16.msra.mxu0 %v287
      %316 = vmatprep.subr.bf16.mxu0 0
      %317 = vmatpush1.bf16.msra.mxu0 %v286
      %318 = vmatprep.subr.bf16.mxu0 0
      %319 = vmatpush2.bf16.msra.mxu0 0
      %320 = vmatprep.subr.bf16.mxu0 0
      %321 = vmatpush2.bf16.msra.mxu0 0
      %322 = vmatprep.subr.bf16.mxu0 0
      %323 = vmatpush2.bf16.msra.mxu0 0
      %324 = vmatprep.subr.bf16.mxu0 0
      %325 = vmatpush2.bf16.msra.mxu0 0
      %326 = vmatprep.subr.bf16.mxu0 0
      %327 = vmatpush2.bf16.msra.mxu0 0
      %328 = vmatprep.subr.bf16.mxu0 0
      %329 = vmatpush2.bf16.msra.mxu0 0
      %330 = vmatprep.subr.bf16.mxu0 0
      %331 = vmatpush2.bf16.msra.mxu0 0
      %332 = vmatprep.subr.bf16.mxu0 0
      %333 = vmatpush2.bf16.msra.mxu0 0
      %334 = vmatprep.mubr.bf16.mxu0 0
      %335 = vmatmul.mubr.bf16.gmra.mxu0 %v233
      %v336 = vpop.f32.mrf.mxu0
      %v337 = vadd.f32 0.0, %v336
      %v338 = vpop.f32.mrf.mxu0
      %v339 = vpop.f32.mrf.mxu0
      %v340 = vpop.f32.mrf.mxu0
      %341 = vdwg.mxu0
      %v342 = vadd.f32 %v232, %v337
      %s343 = scalar_lea.vmem %s213, 8
      %v344 = vld [vmem:[%s343] sm:$0xf]
      %s345 = sadd.s32 %s234, 1
      %s346 = smul.u32 %s345, 16
      %s347 = smul.addr %s346, 4
      %s348 = scalar_lea.vmem %s1, %s347
      %v349 = vld [vmem:[%s348] sm:$0xf]
      %v350 = vld [vmem:[%s348 + $0x4] sm:$0xf]
      %v351 = vld [vmem:[%s348 + $0x8] sm:$0xf]
      %v352 = vld [vmem:[%s348 + $0xc] sm:$0xf]
      %v353 = vld [vmem:[%s348 + $0x10] sm:$0xf]
      %v354 = vld [vmem:[%s348 + $0x14] sm:$0xf]
      %v355 = vld [vmem:[%s348 + $0x18] sm:$0xf]
      %v356 = vld [vmem:[%s348 + $0x1c] sm:$0xf]
      %v357 = vld [vmem:[%s348 + $0x20] sm:$0xf]
      %v358 = vld [vmem:[%s348 + $0x24] sm:$0xf]
      %v359 = vld [vmem:[%s348 + $0x28] sm:$0xf]
      %v360 = vld [vmem:[%s348 + $0x2c] sm:$0xf]
      %v361 = vld [vmem:[%s348 + $0x30] sm:$0xf]
      %v362 = vld [vmem:[%s348 + $0x34] sm:$0xf]
      %v363 = vld [vmem:[%s348 + $0x38] sm:$0xf]
      %v364 = vld [vmem:[%s348 + $0x3c] sm:$0xf]
      %v381 = vunpack.c.l.b16 %v349
      %v382 = vunpack.c.l.b16 %v350
      %v383 = vunpack.c.l.b16 %v351
      %v384 = vunpack.c.l.b16 %v352
      %v385 = vunpack.c.l.b16 %v353
      %v386 = vunpack.c.l.b16 %v354
      %v387 = vunpack.c.l.b16 %v355
      %v388 = vunpack.c.l.b16 %v356
      %v389 = vunpack.c.l.b16 %v357
      %v390 = vunpack.c.l.b16 %v358
      %v391 = vunpack.c.l.b16 %v359
      %v392 = vunpack.c.l.b16 %v360
      %v393 = vunpack.c.l.b16 %v361
      %v394 = vunpack.c.l.b16 %v362
      %v395 = vunpack.c.l.b16 %v363
      %v396 = vunpack.c.l.b16 %v364
      %v397 = vpack.c.b16 %v382, %v381
      %v398 = vpack.c.b16 %v384, %v383
      %v399 = vpack.c.b16 %v386, %v385
      %v400 = vpack.c.b16 %v388, %v387
      %v401 = vpack.c.b16 %v390, %v389
      %v402 = vpack.c.b16 %v392, %v391
      %v403 = vpack.c.b16 %v394, %v393
      %v404 = vpack.c.b16 %v396, %v395
      %413 = vmatprep.subr.bf16.mxu0 0
      %414 = vmatpush1.bf16.msra.mxu0 %v404
      %415 = vmatprep.subr.bf16.mxu0 0
      %416 = vmatpush1.bf16.msra.mxu0 %v403
      %417 = vmatprep.subr.bf16.mxu0 0
      %418 = vmatpush1.bf16.msra.mxu0 %v402
      %419 = vmatprep.subr.bf16.mxu0 0
      %420 = vmatpush1.bf16.msra.mxu0 %v401
      %421 = vmatprep.subr.bf16.mxu0 0
      %422 = vmatpush1.bf16.msra.mxu0 %v400
      %423 = vmatprep.subr.bf16.mxu0 0
      %424 = vmatpush1.bf16.msra.mxu0 %v399
      %425 = vmatprep.subr.bf16.mxu0 0
      %426 = vmatpush1.bf16.msra.mxu0 %v398
      %427 = vmatprep.subr.bf16.mxu0 0
      %428 = vmatpush1.bf16.msra.mxu0 %v397
      %429 = vmatprep.subr.bf16.mxu0 0
      %430 = vmatpush2.bf16.msra.mxu0 0
      %431 = vmatprep.subr.bf16.mxu0 0
      %432 = vmatpush2.bf16.msra.mxu0 0
      %433 = vmatprep.subr.bf16.mxu0 0
      %434 = vmatpush2.bf16.msra.mxu0 0
      %435 = vmatprep.subr.bf16.mxu0 0
      %436 = vmatpush2.bf16.msra.mxu0 0
      %437 = vmatprep.subr.bf16.mxu0 0
      %438 = vmatpush2.bf16.msra.mxu0 0
      %439 = vmatprep.subr.bf16.mxu0 0
      %440 = vmatpush2.bf16.msra.mxu0 0
      %441 = vmatprep.subr.bf16.mxu0 0
      %442 = vmatpush2.bf16.msra.mxu0 0
      %443 = vmatprep.subr.bf16.mxu0 0
      %444 = vmatpush2.bf16.msra.mxu0 0
      %445 = vmatprep.mubr.bf16.mxu0 0
      %446 = vmatmul.mubr.bf16.gmra.mxu0 %v344
      %v447 = vpop.f32.mrf.mxu0
      %v448 = vadd.f32 0.0, %v447
      %v449 = vpop.f32.mrf.mxu0
      %v450 = vpop.f32.mrf.mxu0
      %v451 = vpop.f32.mrf.mxu0
      %452 = vdwg.mxu0
      %v453 = vadd.f32 %v342, %v448
      %v454 = vld [vmem:[%s213] sm:$0xf]
      %v455 = vld [vmem:[%s213 + $0x4] sm:$0x1]
      %s456 = sadd.s32 %s234, 2
      %s457 = smul.u32 %s456, 16
      %s458 = smul.addr %s457, 4
      %s459 = scalar_lea.vmem %s1, %s458
      %v460 = vld [vmem:[%s459] sm:$0xf]
      %v461 = vld [vmem:[%s459 + $0x4] sm:$0xf]
      %v462 = vld [vmem:[%s459 + $0x8] sm:$0xf]
      %v463 = vld [vmem:[%s459 + $0xc] sm:$0xf]
      %v464 = vld [vmem:[%s459 + $0x10] sm:$0xf]
      %v465 = vld [vmem:[%s459 + $0x14] sm:$0xf]
      %v466 = vld [vmem:[%s459 + $0x18] sm:$0xf]
      %v467 = vld [vmem:[%s459 + $0x1c] sm:$0xf]
      %v468 = vld [vmem:[%s459 + $0x20] sm:$0xf]
      %v469 = vld [vmem:[%s459 + $0x24] sm:$0xf]
      %v470 = vld [vmem:[%s459 + $0x28] sm:$0xf]
      %v471 = vld [vmem:[%s459 + $0x2c] sm:$0xf]
      %v472 = vld [vmem:[%s459 + $0x30] sm:$0xf]
      %v473 = vld [vmem:[%s459 + $0x34] sm:$0xf]
      %v474 = vld [vmem:[%s459 + $0x38] sm:$0xf]
      %v475 = vld [vmem:[%s459 + $0x3c] sm:$0xf]
      %v478 = vunpack.c.l.b16 %v454
      %v479 = vunpack.c.l.b16 %v455
      %v480 = vpack.c.b16 %v479, %v478
      %v482 = vshrl.u32 %v480, 16
      %v484 = vshll.u32 %v480, 16
      %v486 = vrot.slane %v484, 1
      %v487 = vor.u32 %v482, %v486
      %v505 = vunpack.c.l.b16 %v460
      %v506 = vunpack.c.l.b16 %v461
      %v507 = vunpack.c.l.b16 %v462
      %v508 = vunpack.c.l.b16 %v463
      %v509 = vunpack.c.l.b16 %v464
      %v510 = vunpack.c.l.b16 %v465
      %v511 = vunpack.c.l.b16 %v466
      %v512 = vunpack.c.l.b16 %v467
      %v513 = vunpack.c.l.b16 %v468
      %v514 = vunpack.c.l.b16 %v469
      %v515 = vunpack.c.l.b16 %v470
      %v516 = vunpack.c.l.b16 %v471
      %v517 = vunpack.c.l.b16 %v472
      %v518 = vunpack.c.l.b16 %v473
      %v519 = vunpack.c.l.b16 %v474
      %v520 = vunpack.c.l.b16 %v475
      %v521 = vpack.c.b16 %v506, %v505
      %v522 = vpack.c.b16 %v508, %v507
      %v523 = vpack.c.b16 %v510, %v509
      %v524 = vpack.c.b16 %v512, %v511
      %v525 = vpack.c.b16 %v514, %v513
      %v526 = vpack.c.b16 %v516, %v515
      %v527 = vpack.c.b16 %v518, %v517
      %v528 = vpack.c.b16 %v520, %v519
      %537 = vmatprep.subr.bf16.mxu0 0
      %538 = vmatpush1.bf16.msra.mxu0 %v528
      %539 = vmatprep.subr.bf16.mxu0 0
      %540 = vmatpush1.bf16.msra.mxu0 %v527
      %541 = vmatprep.subr.bf16.mxu0 0
      %542 = vmatpush1.bf16.msra.mxu0 %v526
      %543 = vmatprep.subr.bf16.mxu0 0
      %544 = vmatpush1.bf16.msra.mxu0 %v525
      %545 = vmatprep.subr.bf16.mxu0 0
      %546 = vmatpush1.bf16.msra.mxu0 %v524
      %547 = vmatprep.subr.bf16.mxu0 0
      %548 = vmatpush1.bf16.msra.mxu0 %v523
      %549 = vmatprep.subr.bf16.mxu0 0
      %550 = vmatpush1.bf16.msra.mxu0 %v522
      %551 = vmatprep.subr.bf16.mxu0 0
      %552 = vmatpush1.bf16.msra.mxu0 %v521
      %553 = vmatprep.subr.bf16.mxu0 0
      %554 = vmatpush2.bf16.msra.mxu0 0
      %555 = vmatprep.subr.bf16.mxu0 0
      %556 = vmatpush2.bf16.msra.mxu0 0
      %557 = vmatprep.subr.bf16.mxu0 0
      %558 = vmatpush2.bf16.msra.mxu0 0
      %559 = vmatprep.subr.bf16.mxu0 0
      %560 = vmatpush2.bf16.msra.mxu0 0
      %561 = vmatprep.subr.bf16.mxu0 0
      %562 = vmatpush2.bf16.msra.mxu0 0
      %563 = vmatprep.subr.bf16.mxu0 0
      %564 = vmatpush2.bf16.msra.mxu0 0
      %565 = vmatprep.subr.bf16.mxu0 0
      %566 = vmatpush2.bf16.msra.mxu0 0
      %567 = vmatprep.subr.bf16.mxu0 0
      %568 = vmatpush2.bf16.msra.mxu0 0
      %569 = vmatprep.mubr.bf16.mxu0 0
      %570 = vmatmul.mubr.bf16.gmra.mxu0 %v487
      %v571 = vpop.f32.mrf.mxu0
      %v572 = vadd.f32 0.0, %v571
      %v573 = vpop.f32.mrf.mxu0
      %v574 = vpop.f32.mrf.mxu0
      %v575 = vpop.f32.mrf.mxu0
      %576 = vdwg.mxu0
      %v577 = vadd.f32 %v453, %v572
      %578 = vst [vmem:[#allocation2] sm:$0xff] %v577
      %p579 = scmp.eq.s32.totalorder %s21, 2
      // Predicated region
      $region37: #{crestereo_forward.63} parent=31 // pred_check
        %p580 = pneg %p579
      $region38: #{crestereo_forward.63} parent=31 // pred_check_branch
        %582 = sbr.rel (%p580) target = $region40
      $region39: #{crestereo_forward.63} parent=31 // pred_region
        %v583 = vld [vmem:[#allocation2] sm:$0xff]
        %v584 = vld [vmem:[%s2] sm:$0x1]
        %v586 = vlaneseq
        %v587 = vshrl.u32 %v586, 7
        %v588 = vsub.s32 0, %v587
        %v589 = vrot.slane %v584, %v588
        %v591 = vadd.f32 %v583, %v589
        %v592 = vpack.c.bf16 %v591, %v591
        %593 = vst [vmem:[%s223] sm:$0xf] %v592
      $region40: #{crestereo_forward.63} parent=31 // pred_fallthru
        _
      %s594 = smul.u32 %s19, 8
      %s595 = sadd.s32 %s594, %s20
      %p596 = scmp.lt.s32.totalorder %s595, 15
      %s597 = scalar_select %p596, %s595, 15
      %s598 = smul.addr %s597, 4
      %s599 = scalar_lea.vmem %s3, %s598
      // Predicated region
      $region41: #{crestereo_forward.63} parent=31 // pred_check
        %p600 = pneg %p131
      $region42: #{crestereo_forward.63} parent=31 // pred_check_branch
        %602 = sbr.rel (%p600) target = $region44
      $region43: #{crestereo_forward.63} parent=31 // pred_region
        %s603 = smul.u32 %s19, 8
        %s604 = sadd.s32 %s603, %s20
      $region44: #{crestereo_forward.63} parent=31 // pred_fallthru
        _
    $region32: #{crestereo_forward.63} parent=5 // pred_fallthru
      _
    %p605 = scmp.le.s32.totalorder 2, %s9
    // Predicated region
    $region45: #{crestereo_forward.63} parent=5 // pred_check
      %p606 = pneg %p605
    $region46: #{crestereo_forward.63} parent=5 // pred_check_branch
      %608 = sbr.rel (%p606) target = $region48
    $region47: #{crestereo_forward.63} parent=5 // pred_region
      %s609 = ssub.s32 %s9, 2
      // Predicated region
      $region49: #{crestereo_forward.63} parent=47 // pred_check
        %p610 = pneg %p137
      $region50: #{crestereo_forward.63} parent=47 // pred_check_branch
        %612 = sbr.rel (%p610) target = $region52
      $region51: #{crestereo_forward.63} parent=47 // pred_region
        %s613 = smul.u32 %s22, 8
        %s614 = sadd.s32 %s613, %s23
        %p615 = scmp.lt.s32.totalorder %s614, 15
        %s616 = scalar_select %p615, %s614, 15
        %s617 = smul.addr %s616, 4
        %s618 = scalar_lea.vmem %s3, %s617
      $region52: #{crestereo_forward.63} parent=47 // pred_fallthru
        _
    $region48: #{crestereo_forward.63} parent=5 // pred_fallthru
      _
  $region6: #{crestereo_forward.63} parent=0 // loop_footer
    %s13 = sadd.s32 1, %s9
  $region7: #{crestereo_forward.63} parent=0 // loop_footer_branch
    %8 = sbr.rel target = $region3
  $region8: #{crestereo_forward.63} parent=0 // loop_exit
    _

// kernel: crestereo_forward.71
$region0: #{crestereo_forward.71}
  #allocation0 [shape = 'u32[]', space=smem, size = 0x4, offset = 0x4, fixed_abs, tag = 'smem constant byte address 0x4 - core index']
  #allocation1 [shape = 'u32[144,128]{1,0:T(1,128)}', space=vmem, size = 0x12000, scoped, tag = 'internal scratch']
  %s0 = inlined_call_operand.vmem [shape: bf16[2,64,128], index: 0, kind: input, shape index: {}]
  %s1 = inlined_call_operand.vmem [shape: f32[2,1,128], index: 1, kind: input, shape index: {}]
  %s2 = inlined_call_operand.vmem [shape: f32[2,1,128], index: 2, kind: input, shape index: {}]
  %s3 = inlined_call_operand.vmem [shape: bf16[2,64,128], index: 3, kind: input, shape index: {}]
  %s4 = inlined_call_operand.vmem [shape: bf16[2,64,128], index: 4, kind: output, shape index: {}]
  %s5 = sld [smem:[#allocation0]]
  $region49: #{crestereo_forward.71} parent=0
    _
  %s7 = ssub.s32 1, %s5
  %s8 = scalar_select 0, %s7, %s5
  loop: start=0, step=1, limit=4
  $region2: #{crestereo_forward.71} parent=0 // loop_pre_header
    _
  $region3: #{crestereo_forward.71} parent=0 // loop_header
    %s10 = sphi 0, %s14
    %p11 = scmp.ge.s32.totalorder %s10, 4
    %s17 = sphi 0, %s29
    %s18 = sphi 0, %s25
    %s19 = sphi 0, %s17
    %s20 = sphi 0, %s18
    %s21 = sphi 0, %s19
    %s22 = sphi 0, %s20
    %s34 = sphi 0, %s36
    %s37 = sphi 0, %s34
    %s38 = sphi 0, %s37
    %s54 = sphi 0, %s38
    %s60 = sphi 0, %s62
    %s63 = sphi 0, %s60
    %s64 = sphi 0, %s63
    %s80 = sphi 0, %s64
    %s86 = sphi 0, %s88
    %s89 = sphi 0, %s86
    %s90 = sphi 0, %s89
    %s106 = sphi 0, %s90
    %s114 = sphi 0, %s116
    %s117 = sphi 0, %s114
    %s118 = sphi 0, %s117
    %s134 = sphi 0, %s118
    %s142 = sphi 0, %s144
    %s145 = sphi 0, %s142
    %s146 = sphi 0, %s145
    %s162 = sphi 0, %s146
  $region4: #{crestereo_forward.71} parent=0 // loop_header_branch
    %13 = sbr.rel (%p11) target = $region8
  $region5: #{crestereo_forward.71} parent=0 // loop_body
    %s15 = ssub.s32 %s10, 1
    %s16 = ssub.s32 %s10, 2
    %s23 = sadd.s32 1, %s18
    %p24 = scmp.ge.s32.totalorder %s23, 1
    %s25 = scalar_select %p24, 0, %s23
    %s26 = sadd.s32 1, %s17
    %s27 = scalar_select %p24, %s26, %s17
    %p28 = scmp.ge.s32.totalorder %s27, 2
    %s29 = scalar_select %p28, 0, %s27
    %s30 = ssub.s32 %s17, %s29
    %s31 = ssub.s32 %s18, %s25
    %s32 = sor.u32 %s30, %s31
    %p33 = scmp.eq.s32.totalorder %s32, 0
    %s35 = sadd.s32 %s34, 1
    %s36 = scalar_select %p33, %s34, %s35
    %p39 = pneg %p33
    %p40 = scmp.eq.s32.totalorder %s10, 1
    %p41 = por %p39, %p40
    %p42 = scmp.ne.s32.totalorder %s34, %s37
    %p43 = scmp.eq.s32.totalorder %s10, 0
    %p44 = por %p42, %p43
    %p45 = scmp.ne.s32.totalorder %s34, %s37
    %p46 = scmp.eq.s32.totalorder %s15, 1
    %p47 = por %p45, %p46
    %p48 = scmp.ne.s32.totalorder %s37, %s38
    %p49 = scmp.eq.s32.totalorder %s15, 0
    %p50 = por %p48, %p49
    %p51 = scmp.ne.s32.totalorder %s37, %s38
    %p52 = scmp.eq.s32.totalorder %s16, 1
    %p53 = por %p51, %p52
    %p55 = scmp.ne.s32.totalorder %s38, %s54
    %p56 = scmp.eq.s32.totalorder %s16, 0
    %p57 = por %p55, %p56
    %s58 = ssub.s32 %s17, %s29
    %p59 = scmp.eq.s32.totalorder %s58, 0
    %s61 = sadd.s32 %s60, 1
    %s62 = scalar_select %p59, %s60, %s61
    %p65 = pneg %p59
    %p66 = scmp.eq.s32.totalorder %s10, 1
    %p67 = por %p65, %p66
    %p68 = scmp.ne.s32.totalorder %s60, %s63
    %p69 = scmp.eq.s32.totalorder %s10, 0
    %p70 = por %p68, %p69
    %p71 = scmp.ne.s32.totalorder %s60, %s63
    %p72 = scmp.eq.s32.totalorder %s15, 1
    %p73 = por %p71, %p72
    %p74 = scmp.ne.s32.totalorder %s63, %s64
    %p75 = scmp.eq.s32.totalorder %s15, 0
    %p76 = por %p74, %p75
    %p77 = scmp.ne.s32.totalorder %s63, %s64
    %p78 = scmp.eq.s32.totalorder %s16, 1
    %p79 = por %p77, %p78
    %p81 = scmp.ne.s32.totalorder %s64, %s80
    %p82 = scmp.eq.s32.totalorder %s16, 0
    %p83 = por %p81, %p82
    %s84 = ssub.s32 %s17, %s29
    %p85 = scmp.eq.s32.totalorder %s84, 0
    %s87 = sadd.s32 %s86, 1
    %s88 = scalar_select %p85, %s86, %s87
    %p91 = pneg %p85
    %p92 = scmp.eq.s32.totalorder %s10, 1
    %p93 = por %p91, %p92
    %p94 = scmp.ne.s32.totalorder %s86, %s89
    %p95 = scmp.eq.s32.totalorder %s10, 0
    %p96 = por %p94, %p95
    %p97 = scmp.ne.s32.totalorder %s86, %s89
    %p98 = scmp.eq.s32.totalorder %s15, 1
    %p99 = por %p97, %p98
    %p100 = scmp.ne.s32.totalorder %s89, %s90
    %p101 = scmp.eq.s32.totalorder %s15, 0
    %p102 = por %p100, %p101
    %p103 = scmp.ne.s32.totalorder %s89, %s90
    %p104 = scmp.eq.s32.totalorder %s16, 1
    %p105 = por %p103, %p104
    %p107 = scmp.ne.s32.totalorder %s90, %s106
    %p108 = scmp.eq.s32.totalorder %s16, 0
    %p109 = por %p107, %p108
    %s110 = ssub.s32 %s17, %s29
    %s111 = ssub.s32 %s18, %s25
    %s112 = sor.u32 %s110, %s111
    %p113 = scmp.eq.s32.totalorder %s112, 0
    %s115 = sadd.s32 %s114, 1
    %s116 = scalar_select %p113, %s114, %s115
    %p119 = pneg %p113
    %p120 = scmp.eq.s32.totalorder %s10, 1
    %p121 = por %p119, %p120
    %p122 = scmp.ne.s32.totalorder %s114, %s117
    %p123 = scmp.eq.s32.totalorder %s10, 0
    %p124 = por %p122, %p123
    %p125 = scmp.ne.s32.totalorder %s114, %s117
    %p126 = scmp.eq.s32.totalorder %s15, 1
    %p127 = por %p125, %p126
    %p128 = scmp.ne.s32.totalorder %s117, %s118
    %p129 = scmp.eq.s32.totalorder %s15, 0
    %p130 = por %p128, %p129
    %p131 = scmp.ne.s32.totalorder %s117, %s118
    %p132 = scmp.eq.s32.totalorder %s16, 1
    %p133 = por %p131, %p132
    %p135 = scmp.ne.s32.totalorder %s118, %s134
    %p136 = scmp.eq.s32.totalorder %s16, 0
    %p137 = por %p135, %p136
    %s138 = ssub.s32 %s17, %s29
    %s139 = ssub.s32 %s18, %s25
    %s140 = sor.u32 %s138, %s139
    %p141 = scmp.eq.s32.totalorder %s140, 0
    %s143 = sadd.s32 %s142, 1
    %s144 = scalar_select %p141, %s142, %s143
    %p147 = pneg %p141
    %p148 = scmp.eq.s32.totalorder %s10, 1
    %p149 = por %p147, %p148
    %p150 = scmp.ne.s32.totalorder %s142, %s145
    %p151 = scmp.eq.s32.totalorder %s10, 0
    %p152 = por %p150, %p151
    %p153 = scmp.ne.s32.totalorder %s142, %s145
    %p154 = scmp.eq.s32.totalorder %s15, 1
    %p155 = por %p153, %p154
    %p156 = scmp.ne.s32.totalorder %s145, %s146
    %p157 = scmp.eq.s32.totalorder %s15, 0
    %p158 = por %p156, %p157
    %p159 = scmp.ne.s32.totalorder %s145, %s146
    %p160 = scmp.eq.s32.totalorder %s16, 1
    %p161 = por %p159, %p160
    %p163 = scmp.ne.s32.totalorder %s146, %s162
    %p164 = scmp.eq.s32.totalorder %s16, 0
    %p165 = por %p163, %p164
    %p166 = scmp.le.s32.totalorder 1, %s10
    %p167 = scmp.lt.s32.totalorder %s10, 3
    %p168 = pnand %p166, %p167
    %p169 = pneg %p168
    // Predicated region
    $region9: #{crestereo_forward.71} parent=5 // pred_check
      _
    $region10: #{crestereo_forward.71} parent=5 // pred_check_branch
      %171 = sbr.rel (%p168) target = $region12
    $region11: #{crestereo_forward.71} parent=5 // pred_region
      %s172 = ssub.s32 %s10, 1
    $region12: #{crestereo_forward.71} parent=5 // pred_fallthru
      _
    %p173 = scmp.lt.s32.totalorder %s10, 2
    // Predicated region
    $region13: #{crestereo_forward.71} parent=5 // pred_check
      %p174 = pneg %p173
    $region14: #{crestereo_forward.71} parent=5 // pred_check_branch
      %176 = sbr.rel (%p174) target = $region16
    $region15: #{crestereo_forward.71} parent=5 // pred_region
      // Predicated region
      $region17: #{crestereo_forward.71} parent=15 // pred_check
        %p177 = pneg %p44
      $region18: #{crestereo_forward.71} parent=15 // pred_check_branch
        %179 = sbr.rel (%p177) target = $region20
      $region19: #{crestereo_forward.71} parent=15 // pred_region
        %s180 = smul.u32 8, %s18
        %p181 = scmp.lt.s32.totalorder %s17, 1
        %s182 = scalar_select %p181, %s17, 1
        %p183 = scmp.lt.s32.totalorder %s180, 7
        %s184 = scalar_select %p183, %s180, 7
        %s185 = smul.addr %s182, 8
        %s186 = sadd.s32 %s184, %s185
        %s187 = smul.addr %s186, 4
        %s188 = scalar_lea.vmem %s0, %s187
        %s189 = smul.u32 8, %s18
      $region20: #{crestereo_forward.71} parent=15 // pred_fallthru
        _
      // Predicated region
      $region21: #{crestereo_forward.71} parent=15 // pred_check
        %p190 = pneg %p70
      $region22: #{crestereo_forward.71} parent=15 // pred_check_branch
        %192 = sbr.rel (%p190) target = $region24
      $region23: #{crestereo_forward.71} parent=15 // pred_region
        %p193 = scmp.lt.s32.totalorder %s17, 1
        %s194 = scalar_select %p193, %s17, 1
        %s195 = scalar_lea.vmem %s1, %s194
      $region24: #{crestereo_forward.71} parent=15 // pred_fallthru
        _
      // Predicated region
      $region25: #{crestereo_forward.71} parent=15 // pred_check
        %p196 = pneg %p96
      $region26: #{crestereo_forward.71} parent=15 // pred_check_branch
        %198 = sbr.rel (%p196) target = $region28
      $region27: #{crestereo_forward.71} parent=15 // pred_region
        %p199 = scmp.lt.s32.totalorder %s17, 1
        %s200 = scalar_select %p199, %s17, 1
        %s201 = scalar_lea.vmem %s2, %s200
      $region28: #{crestereo_forward.71} parent=15 // pred_fallthru
        _
      // Predicated region
      $region29: #{crestereo_forward.71} parent=15 // pred_check
        %p202 = pneg %p124
      $region30: #{crestereo_forward.71} parent=15 // pred_check_branch
        %204 = sbr.rel (%p202) target = $region32
      $region31: #{crestereo_forward.71} parent=15 // pred_region
        %s205 = smul.u32 8, %s18
        %p206 = scmp.lt.s32.totalorder %s17, 1
        %s207 = scalar_select %p206, %s17, 1
        %p208 = scmp.lt.s32.totalorder %s205, 7
        %s209 = scalar_select %p208, %s205, 7
        %s210 = smul.addr %s207, 8
        %s211 = sadd.s32 %s209, %s210
        %s212 = smul.addr %s211, 4
        %s213 = scalar_lea.vmem %s3, %s212
        %s214 = smul.u32 8, %s18
      $region32: #{crestereo_forward.71} parent=15 // pred_fallthru
        _
    $region16: #{crestereo_forward.71} parent=5 // pred_fallthru
      _
    %p215 = scmp.le.s32.totalorder 1, %s10
    %p216 = scmp.lt.s32.totalorder %s10, 3
    %p217 = pnand %p215, %p216
    %p218 = pneg %p217
    // Predicated region
    $region33: #{crestereo_forward.71} parent=5 // pred_check
      _
    $region34: #{crestereo_forward.71} parent=5 // pred_check_branch
      %220 = sbr.rel (%p217) target = $region36
    $region35: #{crestereo_forward.71} parent=5 // pred_region
      %s221 = ssub.s32 %s10, 1
      %s222 = smul.u32 8, %s20
      %p223 = scmp.lt.s32.totalorder %s19, 1
      %s224 = scalar_select %p223, %s19, 1
      %p225 = scmp.lt.s32.totalorder %s222, 7
      %s226 = scalar_select %p225, %s222, 7
      %s227 = smul.addr %s224, 8
      %s228 = sadd.s32 %s226, %s227
      %s229 = smul.addr %s228, 4
      %s230 = scalar_lea.vmem %s0, %s229
      %p231 = pneg %p50
      %p232 = pneg %p47
      %p233 = scmp.lt.s32.totalorder %s19, 1
      %s234 = scalar_select %p233, %s19, 1
      %s235 = scalar_lea.vmem %s1, %s234
      %p236 = pneg %p76
      %p237 = pneg %p73
      %p238 = scmp.lt.s32.totalorder %s19, 1
      %s239 = scalar_select %p238, %s19, 1
      %s240 = scalar_lea.vmem %s2, %s239
      %p241 = pneg %p102
      %p242 = pneg %p99
      %s243 = smul.u32 8, %s20
      %p244 = scmp.lt.s32.totalorder %s19, 1
      %s245 = scalar_select %p244, %s19, 1
      %p246 = scmp.lt.s32.totalorder %s243, 7
      %s247 = scalar_select %p246, %s243, 7
      %s248 = smul.addr %s245, 8
      %s249 = sadd.s32 %s247, %s248
      %s250 = smul.addr %s249, 4
      %s251 = scalar_lea.vmem %s3, %s250
      %p252 = pneg %p130
      %p253 = pneg %p127
      %p254 = pneg %p158
      %p255 = pneg %p155
      %s256 = smul.u32 8, %s20
      %p257 = scmp.lt.s32.totalorder %s19, 1
      %s258 = scalar_select %p257, %s19, 1
      %p259 = scmp.lt.s32.totalorder %s256, 7
      %s260 = scalar_select %p259, %s256, 7
      %s261 = smul.addr %s258, 8
      %s262 = sadd.s32 %s260, %s261
      %s263 = smul.addr %s262, 4
      %s264 = scalar_lea.vmem %s4, %s263
      %s265 = smul.u32 8, %s20
      %p266 = scmp.lt.s32.totalorder %s19, 1
      %s267 = scalar_select %p266, %s19, 1
      %p268 = scmp.lt.s32.totalorder %s265, 7
      %s269 = scalar_select %p268, %s265, 7
      %s270 = smul.addr %s267, 8
      %s271 = sadd.s32 %s269, %s270
      %s272 = smul.addr %s271, 4
      %s273 = scalar_lea.vmem %s0, %s272
      %s274 = smul.u32 8, %s20
      %p275 = scmp.lt.s32.totalorder %s19, 1
      %s276 = scalar_select %p275, %s19, 1
      %s277 = scalar_lea.vmem %s1, %s276
      %p278 = scmp.lt.s32.totalorder %s19, 1
      %s279 = scalar_select %p278, %s19, 1
      %s280 = scalar_lea.vmem %s2, %s279
      %s281 = smul.u32 8, %s20
      %p282 = scmp.lt.s32.totalorder %s19, 1
      %s283 = scalar_select %p282, %s19, 1
      %p284 = scmp.lt.s32.totalorder %s281, 7
      %s285 = scalar_select %p284, %s281, 7
      %s286 = smul.addr %s283, 8
      %s287 = sadd.s32 %s285, %s286
      %s288 = smul.addr %s287, 4
      %s289 = scalar_lea.vmem %s3, %s288
      %s290 = smul.u32 8, %s20
      %s291 = smul.u32 8, %s20
      %p292 = scmp.lt.s32.totalorder %s19, 1
      %s293 = scalar_select %p292, %s19, 1
      %p294 = scmp.lt.s32.totalorder %s291, 7
      %s295 = scalar_select %p294, %s291, 7
      %s296 = smul.addr %s293, 8
      %s297 = sadd.s32 %s295, %s296
      %s298 = smul.addr %s297, 4
      %s299 = scalar_lea.vmem %s4, %s298
      %s300 = smul.u32 8, %s20
      %v301 = vld [vmem:[%s277] sm:$0x1]
      %v302 = vmul.f32 %v301, 0.015625
      %v303 = vld [vmem:[%s280] sm:$0x1]
      %v304 = vmul.f32 %v303, 0.015625
      %v305 = vmul.f32 %v302, %v302
      %v306 = vsub.f32 %v304, %v305
      %v307 = vmax.f32 %v306, 0.0
      %v308 = vadd.f32 %v307, 1e-05
      %v309 = vrsqrt.pop %v308
      %v310 = vld [vmem:[%s273] sm:$0xf]
      %v311 = vld [vmem:[%s273 + $0x4] sm:$0xf]
      %v312 = vld [vmem:[%s273 + $0x8] sm:$0xf]
      %v313 = vld [vmem:[%s273 + $0xc] sm:$0xf]
      %v314 = vld [vmem:[%s273 + $0x10] sm:$0xf]
      %v315 = vld [vmem:[%s273 + $0x14] sm:$0xf]
      %v316 = vld [vmem:[%s273 + $0x18] sm:$0xf]
      %v317 = vld [vmem:[%s273 + $0x1c] sm:$0xf]
      %v318 = vunpack.c.l.bf16 %v310
      %v319 = vunpack.c.l.bf16 %v311
      %v320 = vunpack.c.l.bf16 %v312
      %v321 = vunpack.c.l.bf16 %v313
      %v322 = vunpack.c.l.bf16 %v314
      %v323 = vunpack.c.l.bf16 %v315
      %v324 = vunpack.c.l.bf16 %v316
      %v325 = vunpack.c.l.bf16 %v317
      %v327 = vlaneseq
      %v328 = vshrl.u32 %v327, 7
      %v329 = vsub.s32 0, %v328
      %v330 = vrot.slane %v302, %v329
      %v332 = vsub.f32 %v318, %v330
      %v333 = vsub.f32 %v319, %v330
      %v334 = vsub.f32 %v320, %v330
      %v335 = vsub.f32 %v321, %v330
      %v336 = vsub.f32 %v322, %v330
      %v337 = vsub.f32 %v323, %v330
      %v338 = vsub.f32 %v324, %v330
      %v339 = vsub.f32 %v325, %v330
      %v341 = vlaneseq
      %v342 = vshrl.u32 %v341, 7
      %v343 = vsub.s32 0, %v342
      %v344 = vrot.slane %v309, %v343
      %v346 = vmul.f32 %v332, %v344
      %v347 = vmul.f32 %v333, %v344
      %v348 = vmul.f32 %v334, %v344
      %v349 = vmul.f32 %v335, %v344
      %v350 = vmul.f32 %v336, %v344
      %v351 = vmul.f32 %v337, %v344
      %v352 = vmul.f32 %v338, %v344
      %v353 = vmul.f32 %v339, %v344
      %v354 = vmax.f32 %v346, 0.0
      %v355 = vmax.f32 %v347, 0.0
      %v356 = vmax.f32 %v348, 0.0
      %v357 = vmax.f32 %v349, 0.0
      %v358 = vmax.f32 %v350, 0.0
      %v359 = vmax.f32 %v351, 0.0
      %v360 = vmax.f32 %v352, 0.0
      %v361 = vmax.f32 %v353, 0.0
      %v362 = vld [vmem:[%s289] sm:$0xf]
      %v363 = vld [vmem:[%s289 + $0x4] sm:$0xf]
      %v364 = vld [vmem:[%s289 + $0x8] sm:$0xf]
      %v365 = vld [vmem:[%s289 + $0xc] sm:$0xf]
      %v366 = vld [vmem:[%s289 + $0x10] sm:$0xf]
      %v367 = vld [vmem:[%s289 + $0x14] sm:$0xf]
      %v368 = vld [vmem:[%s289 + $0x18] sm:$0xf]
      %v369 = vld [vmem:[%s289 + $0x1c] sm:$0xf]
      %v370 = vunpack.c.l.bf16 %v362
      %v371 = vunpack.c.l.bf16 %v363
      %v372 = vunpack.c.l.bf16 %v364
      %v373 = vunpack.c.l.bf16 %v365
      %v374 = vunpack.c.l.bf16 %v366
      %v375 = vunpack.c.l.bf16 %v367
      %v376 = vunpack.c.l.bf16 %v368
      %v377 = vunpack.c.l.bf16 %v369
      %v378 = vadd.f32 %v354, %v370
      %v379 = vadd.f32 %v355, %v371
      %v380 = vadd.f32 %v356, %v372
      %v381 = vadd.f32 %v357, %v373
      %v382 = vadd.f32 %v358, %v374
      %v383 = vadd.f32 %v359, %v375
      %v384 = vadd.f32 %v360, %v376
      %v385 = vadd.f32 %v361, %v377
      %v386 = vmax.f32 %v378, 0.0
      %v387 = vmax.f32 %v379, 0.0
      %v388 = vmax.f32 %v380, 0.0
      %v389 = vmax.f32 %v381, 0.0
      %v390 = vmax.f32 %v382, 0.0
      %v391 = vmax.f32 %v383, 0.0
      %v392 = vmax.f32 %v384, 0.0
      %v393 = vmax.f32 %v385, 0.0
      %v394 = vpack.c.bf16 %v387, %v386
      %v395 = vpack.c.bf16 %v389, %v388
      %v396 = vpack.c.bf16 %v391, %v390
      %v397 = vpack.c.bf16 %v393, %v392
      %v402 = vunpack.c.l.b16 %v394
      %v403 = vunpack.c.h.b16 %v394
      %v404 = vunpack.c.l.b16 %v395
      %v405 = vunpack.c.h.b16 %v395
      %v406 = vunpack.c.l.b16 %v396
      %v407 = vunpack.c.h.b16 %v396
      %v408 = vunpack.c.l.b16 %v397
      %v409 = vunpack.c.h.b16 %v397
      %v410 = vpack.c.b16 %v402, %v402
      %v411 = vpack.c.b16 %v403, %v403
      %v412 = vpack.c.b16 %v404, %v404
      %v413 = vpack.c.b16 %v405, %v405
      %v414 = vpack.c.b16 %v406, %v406
      %v415 = vpack.c.b16 %v407, %v407
      %v416 = vpack.c.b16 %v408, %v408
      %v417 = vpack.c.b16 %v409, %v409
      %426 = vst [vmem:[%s299] sm:$0xf] %v410
      %427 = vst [vmem:[%s299 + $0x4] sm:$0xf] %v411
      %428 = vst [vmem:[%s299 + $0x8] sm:$0xf] %v412
      %429 = vst [vmem:[%s299 + $0xc] sm:$0xf] %v413
      %430 = vst [vmem:[%s299 + $0x10] sm:$0xf] %v414
      %431 = vst [vmem:[%s299 + $0x14] sm:$0xf] %v415
      %432 = vst [vmem:[%s299 + $0x18] sm:$0xf] %v416
      %433 = vst [vmem:[%s299 + $0x1c] sm:$0xf] %v417
      %s434 = smul.u32 8, %s20
      %p435 = scmp.lt.s32.totalorder %s19, 1
      %s436 = scalar_select %p435, %s19, 1
      %p437 = scmp.lt.s32.totalorder %s434, 7
      %s438 = scalar_select %p437, %s434, 7
      %s439 = smul.addr %s436, 8
      %s440 = sadd.s32 %s438, %s439
      %s441 = smul.addr %s440, 4
      %s442 = scalar_lea.vmem %s4, %s441
      // Predicated region
      $region37: #{crestereo_forward.71} parent=35 // pred_check
        %p443 = pneg %p155
      $region38: #{crestereo_forward.71} parent=35 // pred_check_branch
        %445 = sbr.rel (%p443) target = $region40
      $region39: #{crestereo_forward.71} parent=35 // pred_region
        %s446 = smul.u32 8, %s20
      $region40: #{crestereo_forward.71} parent=35 // pred_fallthru
        _
    $region36: #{crestereo_forward.71} parent=5 // pred_fallthru
      _
    %p447 = scmp.le.s32.totalorder 2, %s10
    // Predicated region
    $region41: #{crestereo_forward.71} parent=5 // pred_check
      %p448 = pneg %p447
    $region42: #{crestereo_forward.71} parent=5 // pred_check_branch
      %450 = sbr.rel (%p448) target = $region44
    $region43: #{crestereo_forward.71} parent=5 // pred_region
      %s451 = ssub.s32 %s10, 2
      // Predicated region
      $region45: #{crestereo_forward.71} parent=43 // pred_check
        %p452 = pneg %p161
      $region46: #{crestereo_forward.71} parent=43 // pred_check_branch
        %454 = sbr.rel (%p452) target = $region48
      $region47: #{crestereo_forward.71} parent=43 // pred_region
        %s455 = smul.u32 8, %s22
        %p456 = scmp.lt.s32.totalorder %s21, 1
        %s457 = scalar_select %p456, %s21, 1
        %p458 = scmp.lt.s32.totalorder %s455, 7
        %s459 = scalar_select %p458, %s455, 7
        %s460 = smul.addr %s457, 8
        %s461 = sadd.s32 %s459, %s460
        %s462 = smul.addr %s461, 4
        %s463 = scalar_lea.vmem %s4, %s462
      $region48: #{crestereo_forward.71} parent=43 // pred_fallthru
        _
    $region44: #{crestereo_forward.71} parent=5 // pred_fallthru
      _
  $region6: #{crestereo_forward.71} parent=0 // loop_footer
    %s14 = sadd.s32 1, %s10
  $region7: #{crestereo_forward.71} parent=0 // loop_footer_branch
    %9 = sbr.rel target = $region3
  $region8: #{crestereo_forward.71} parent=0 // loop_exit
    _

// kernel: crestereo_forward.66
$region0: #{crestereo_forward.66}
  #allocation0 [shape = 'u32[]', space=smem, size = 0x4, offset = 0x4, fixed_abs, tag = 'smem constant byte address 0x4 - core index']
  #allocation1 [shape = 'u32[144,128]{1,0:T(1,128)}', space=vmem, size = 0x12000, scoped, tag = 'internal scratch']
  #allocation2 [shape = 'f32[8,128]{1,0:T(8,128)}', space=vmem, size = 0x1000, scoped, tag = 'scratch operand']
  %s0 = inlined_call_operand.vmem [shape: bf16[20,1,10,128], index: 0, kind: input, shape index: {}]
  %s1 = inlined_call_operand.vmem [shape: bf16[9,128,128], index: 1, kind: input, shape index: {}]
  %s2 = inlined_call_operand.vmem [shape: f32[1,128], index: 2, kind: input, shape index: {}]
  %s3 = inlined_call_operand.vmem [shape: bf16[16,8,128], index: 3, kind: output, shape index: {}]
  %s4 = sld [smem:[#allocation0]]
  $region53: #{crestereo_forward.66} parent=0
    _
  %s6 = ssub.s32 1, %s4
  %s7 = scalar_select 0, %s6, %s4
  loop: start=0, step=1, limit=50
  $region2: #{crestereo_forward.66} parent=0 // loop_pre_header
    _
  $region3: #{crestereo_forward.66} parent=0 // loop_header
    %s9 = sphi 0, %s13
    %p10 = scmp.ge.s32.totalorder %s9, 50
    %s16 = sphi 0, %s35
    %s17 = sphi 0, %s31
    %s18 = sphi 0, %s27
    %s19 = sphi 0, %s16
    %s20 = sphi 0, %s17
    %s21 = sphi 0, %s18
    %s22 = sphi 0, %s19
    %s23 = sphi 0, %s20
    %s24 = sphi 0, %s21
    %s44 = sphi 0, %s46
    %s47 = sphi 0, %s44
    %s48 = sphi 0, %s47
    %s64 = sphi 0, %s48
    %s68 = sphi 0, %s68
    %s70 = sphi 0, %s68
    %s71 = sphi 0, %s70
    %s85 = sphi 0, %s71
    %s89 = sphi 0, %s89
    %s91 = sphi 0, %s89
    %s92 = sphi 0, %s91
    %s106 = sphi 0, %s92
    %s116 = sphi 0, %s118
    %s119 = sphi 0, %s116
    %s120 = sphi 0, %s119
    %s136 = sphi 0, %s120
  $region4: #{crestereo_forward.66} parent=0 // loop_header_branch
    %12 = sbr.rel (%p10) target = $region8
  $region5: #{crestereo_forward.66} parent=0 // loop_body
    %s14 = ssub.s32 %s9, 1
    %s15 = ssub.s32 %s9, 2
    %s25 = sadd.s32 1, %s18
    %p26 = scmp.ge.s32.totalorder %s25, 3
    %s27 = scalar_select %p26, 0, %s25
    %s28 = sadd.s32 1, %s17
    %s29 = scalar_select %p26, %s28, %s17
    %p30 = scmp.ge.s32.totalorder %s29, 8
    %s31 = scalar_select %p30, 0, %s29
    %s32 = sadd.s32 1, %s16
    %s33 = scalar_select %p30, %s32, %s16
    %p34 = scmp.ge.s32.totalorder %s33, 2
    %s35 = scalar_select %p34, 0, %s33
    %s36 = smul.u32 %s16, 10
    %s37 = sadd.s32 %s36, %s17
    %s38 = sadd.s32 %s37, %s18
    %s39 = smul.u32 %s35, 10
    %s40 = sadd.s32 %s39, %s31
    %s41 = sadd.s32 %s40, %s27
    %s42 = ssub.s32 %s38, %s41
    %p43 = scmp.eq.s32.totalorder %s42, 0
    %s45 = sadd.s32 %s44, 1
    %s46 = scalar_select %p43, %s44, %s45
    %p49 = pneg %p43
    %p50 = scmp.eq.s32.totalorder %s9, 47
    %p51 = por %p49, %p50
    %p52 = scmp.ne.s32.totalorder %s44, %s47
    %p53 = scmp.eq.s32.totalorder %s9, 0
    %p54 = por %p52, %p53
    %p55 = scmp.ne.s32.totalorder %s44, %s47
    %p56 = scmp.eq.s32.totalorder %s14, 47
    %p57 = por %p55, %p56
    %p58 = scmp.ne.s32.totalorder %s47, %s48
    %p59 = scmp.eq.s32.totalorder %s14, 0
    %p60 = por %p58, %p59
    %p61 = scmp.ne.s32.totalorder %s47, %s48
    %p62 = scmp.eq.s32.totalorder %s15, 47
    %p63 = por %p61, %p62
    %p65 = scmp.ne.s32.totalorder %s48, %s64
    %p66 = scmp.eq.s32.totalorder %s15, 0
    %p67 = por %p65, %p66
    %s69 = sadd.s32 %s68, 1
    %p72 = scmp.eq.s32.totalorder %s9, 47
    %p73 = scmp.ne.s32.totalorder %s68, %s70
    %p74 = scmp.eq.s32.totalorder %s9, 0
    %p75 = por %p73, %p74
    %p76 = scmp.ne.s32.totalorder %s68, %s70
    %p77 = scmp.eq.s32.totalorder %s14, 47
    %p78 = por %p76, %p77
    %p79 = scmp.ne.s32.totalorder %s70, %s71
    %p80 = scmp.eq.s32.totalorder %s14, 0
    %p81 = por %p79, %p80
    %p82 = scmp.ne.s32.totalorder %s70, %s71
    %p83 = scmp.eq.s32.totalorder %s15, 47
    %p84 = por %p82, %p83
    %p86 = scmp.ne.s32.totalorder %s71, %s85
    %p87 = scmp.eq.s32.totalorder %s15, 0
    %p88 = por %p86, %p87
    %s90 = sadd.s32 %s89, 1
    %p93 = scmp.eq.s32.totalorder %s9, 47
    %p94 = scmp.ne.s32.totalorder %s89, %s91
    %p95 = scmp.eq.s32.totalorder %s9, 0
    %p96 = por %p94, %p95
    %p97 = scmp.ne.s32.totalorder %s89, %s91
    %p98 = scmp.eq.s32.totalorder %s14, 47
    %p99 = por %p97, %p98
    %p100 = scmp.ne.s32.totalorder %s91, %s92
    %p101 = scmp.eq.s32.totalorder %s14, 0
    %p102 = por %p100, %p101
    %p103 = scmp.ne.s32.totalorder %s91, %s92
    %p104 = scmp.eq.s32.totalorder %s15, 47
    %p105 = por %p103, %p104
    %p107 = scmp.ne.s32.totalorder %s92, %s106
    %p108 = scmp.eq.s32.totalorder %s15, 0
    %p109 = por %p107, %p108
    %s110 = smul.u32 %s16, 8
    %s111 = sadd.s32 %s110, %s17
    %s112 = smul.u32 %s35, 8
    %s113 = sadd.s32 %s112, %s31
    %s114 = ssub.s32 %s111, %s113
    %p115 = scmp.eq.s32.totalorder %s114, 0
    %s117 = sadd.s32 %s116, 1
    %s118 = scalar_select %p115, %s116, %s117
    %p121 = pneg %p115
    %p122 = scmp.eq.s32.totalorder %s9, 47
    %p123 = por %p121, %p122
    %p124 = scmp.ne.s32.totalorder %s116, %s119
    %p125 = scmp.eq.s32.totalorder %s9, 0
    %p126 = por %p124, %p125
    %p127 = scmp.ne.s32.totalorder %s116, %s119
    %p128 = scmp.eq.s32.totalorder %s14, 47
    %p129 = por %p127, %p128
    %p130 = scmp.ne.s32.totalorder %s119, %s120
    %p131 = scmp.eq.s32.totalorder %s14, 0
    %p132 = por %p130, %p131
    %p133 = scmp.ne.s32.totalorder %s119, %s120
    %p134 = scmp.eq.s32.totalorder %s15, 47
    %p135 = por %p133, %p134
    %p137 = scmp.ne.s32.totalorder %s120, %s136
    %p138 = scmp.eq.s32.totalorder %s15, 0
    %p139 = por %p137, %p138
    %p140 = scmp.le.s32.totalorder 1, %s9
    %p141 = scmp.lt.s32.totalorder %s9, 49
    %p142 = pnand %p140, %p141
    %p143 = pneg %p142
    // Predicated region
    $region9: #{crestereo_forward.66} parent=5 // pred_check
      _
    $region10: #{crestereo_forward.66} parent=5 // pred_check_branch
      %145 = sbr.rel (%p142) target = $region12
    $region11: #{crestereo_forward.66} parent=5 // pred_region
      %s146 = ssub.s32 %s9, 1
      // Predicated region
      $region13: #{crestereo_forward.66} parent=11 // pred_check
        %p147 = pneg %p81
      $region14: #{crestereo_forward.66} parent=11 // pred_check_branch
        %149 = sbr.rel (%p147) target = $region16
      $region15: #{crestereo_forward.66} parent=11 // pred_region
        _
      $region16: #{crestereo_forward.66} parent=11 // pred_fallthru
        _
      // Predicated region
      $region17: #{crestereo_forward.66} parent=11 // pred_check
        %p150 = pneg %p102
      $region18: #{crestereo_forward.66} parent=11 // pred_check_branch
        %152 = sbr.rel (%p150) target = $region20
      $region19: #{crestereo_forward.66} parent=11 // pred_region
        _
      $region20: #{crestereo_forward.66} parent=11 // pred_fallthru
        _
    $region12: #{crestereo_forward.66} parent=5 // pred_fallthru
      _
    %p153 = scmp.lt.s32.totalorder %s9, 48
    // Predicated region
    $region21: #{crestereo_forward.66} parent=5 // pred_check
      %p154 = pneg %p153
    $region22: #{crestereo_forward.66} parent=5 // pred_check_branch
      %156 = sbr.rel (%p154) target = $region24
    $region23: #{crestereo_forward.66} parent=5 // pred_region
      // Predicated region
      $region25: #{crestereo_forward.66} parent=23 // pred_check
        %p157 = pneg %p54
      $region26: #{crestereo_forward.66} parent=23 // pred_check_branch
        %159 = sbr.rel (%p157) target = $region28
      $region27: #{crestereo_forward.66} parent=23 // pred_region
        %s160 = smul.u32 %s16, 10
        %s161 = sadd.s32 %s160, %s17
        %s162 = sadd.s32 %s161, %s18
        %p163 = scmp.lt.s32.totalorder %s162, 19
        %s164 = scalar_select %p163, %s162, 19
        %s165 = smul.addr %s164, 2
        %s166 = smul.addr %s165, 4
        %s167 = scalar_lea.vmem %s0, %s166
        %s168 = smul.u32 %s16, 10
        %s169 = sadd.s32 %s168, %s17
        %s170 = sadd.s32 %s169, %s18
      $region28: #{crestereo_forward.66} parent=23 // pred_fallthru
        _
    $region24: #{crestereo_forward.66} parent=5 // pred_fallthru
      _
    %p171 = scmp.le.s32.totalorder 1, %s9
    %p172 = scmp.lt.s32.totalorder %s9, 49
    %p173 = pnand %p171, %p172
    %p174 = pneg %p173
    // Predicated region
    $region29: #{crestereo_forward.66} parent=5 // pred_check
      _
    $region30: #{crestereo_forward.66} parent=5 // pred_check_branch
      %176 = sbr.rel (%p173) target = $region32
    $region31: #{crestereo_forward.66} parent=5 // pred_region
      %s177 = ssub.s32 %s9, 1
      %s178 = smul.u32 %s19, 10
      %s179 = sadd.s32 %s178, %s20
      %s180 = sadd.s32 %s179, %s21
      %p181 = scmp.lt.s32.totalorder %s180, 19
      %s182 = scalar_select %p181, %s180, 19
      %s183 = smul.addr %s182, 2
      %s184 = smul.addr %s183, 4
      %s185 = scalar_lea.vmem %s0, %s184
      %p186 = pneg %p60
      %p187 = pneg %p57
      %p188 = pneg %p81
      %p189 = pneg %p78
      %p190 = pneg %p102
      %p191 = pneg %p99
      %p192 = pneg %p132
      %p193 = pneg %p129
      %s194 = smul.u32 %s19, 8
      %s195 = sadd.s32 %s194, %s20
      %p196 = scmp.lt.s32.totalorder %s195, 15
      %s197 = scalar_select %p196, %s195, 15
      %s198 = smul.addr %s197, 4
      %s199 = scalar_lea.vmem %s3, %s198
      %s200 = smul.u32 %s19, 10
      %s201 = sadd.s32 %s200, %s20
      %s202 = sadd.s32 %s201, %s21
      %p203 = scmp.lt.s32.totalorder %s202, 19
      %s204 = scalar_select %p203, %s202, 19
      %s205 = smul.addr %s204, 2
      %s206 = smul.addr %s205, 4
      %s207 = scalar_lea.vmem %s0, %s206
      %s208 = smul.u32 %s19, 10
      %s209 = sadd.s32 %s208, %s20
      %s210 = sadd.s32 %s209, %s21
      %s211 = smul.u32 %s19, 8
      %s212 = sadd.s32 %s211, %s20
      %p213 = scmp.lt.s32.totalorder %s212, 15
      %s214 = scalar_select %p213, %s212, 15
      %s215 = smul.addr %s214, 4
      %s216 = scalar_lea.vmem %s3, %s215
      %s217 = smul.u32 %s19, 8
      %s218 = sadd.s32 %s217, %s20
      %p220 = scmp.eq.s32.totalorder %s21, 0
      // Predicated region
      $region33: #{crestereo_forward.66} parent=31 // pred_check
        %p221 = pneg %p220
      $region34: #{crestereo_forward.66} parent=31 // pred_check_branch
        %223 = sbr.rel (%p221) target = $region36
      $region35: #{crestereo_forward.66} parent=31 // pred_region
        %224 = vst [vmem:[#allocation2] sm:$0xff] 0.0
      $region36: #{crestereo_forward.66} parent=31 // pred_fallthru
        _
      %v225 = vld [vmem:[#allocation2] sm:$0xff]
      %v226 = vld [vmem:[%s207] sm:$0xf]
      %s227 = smul.u32 %s21, 3
      %s228 = smul.u32 %s227, 16
      %s229 = smul.addr %s228, 4
      %s230 = scalar_lea.vmem %s1, %s229
      %v231 = vld [vmem:[%s230] sm:$0xf]
      %v232 = vld [vmem:[%s230 + $0x4] sm:$0xf]
      %v233 = vld [vmem:[%s230 + $0x8] sm:$0xf]
      %v234 = vld [vmem:[%s230 + $0xc] sm:$0xf]
      %v235 = vld [vmem:[%s230 + $0x10] sm:$0xf]
      %v236 = vld [vmem:[%s230 + $0x14] sm:$0xf]
      %v237 = vld [vmem:[%s230 + $0x18] sm:$0xf]
      %v238 = vld [vmem:[%s230 + $0x1c] sm:$0xf]
      %v239 = vld [vmem:[%s230 + $0x20] sm:$0xf]
      %v240 = vld [vmem:[%s230 + $0x24] sm:$0xf]
      %v241 = vld [vmem:[%s230 + $0x28] sm:$0xf]
      %v242 = vld [vmem:[%s230 + $0x2c] sm:$0xf]
      %v243 = vld [vmem:[%s230 + $0x30] sm:$0xf]
      %v244 = vld [vmem:[%s230 + $0x34] sm:$0xf]
      %v245 = vld [vmem:[%s230 + $0x38] sm:$0xf]
      %v246 = vld [vmem:[%s230 + $0x3c] sm:$0xf]
      %v263 = vunpack.c.l.b16 %v231
      %v264 = vunpack.c.l.b16 %v232
      %v265 = vunpack.c.l.b16 %v233
      %v266 = vunpack.c.l.b16 %v234
      %v267 = vunpack.c.l.b16 %v235
      %v268 = vunpack.c.l.b16 %v236
      %v269 = vunpack.c.l.b16 %v237
      %v270 = vunpack.c.l.b16 %v238
      %v271 = vunpack.c.l.b16 %v239
      %v272 = vunpack.c.l.b16 %v240
      %v273 = vunpack.c.l.b16 %v241
      %v274 = vunpack.c.l.b16 %v242
      %v275 = vunpack.c.l.b16 %v243
      %v276 = vunpack.c.l.b16 %v244
      %v277 = vunpack.c.l.b16 %v245
      %v278 = vunpack.c.l.b16 %v246
      %v279 = vpack.c.b16 %v264, %v263
      %v280 = vpack.c.b16 %v266, %v265
      %v281 = vpack.c.b16 %v268, %v267
      %v282 = vpack.c.b16 %v270, %v269
      %v283 = vpack.c.b16 %v272, %v271
      %v284 = vpack.c.b16 %v274, %v273
      %v285 = vpack.c.b16 %v276, %v275
      %v286 = vpack.c.b16 %v278, %v277
      %295 = vmatprep.subr.bf16.mxu0 0
      %296 = vmatpush1.bf16.msra.mxu0 %v286
      %297 = vmatprep.subr.bf16.mxu0 0
      %298 = vmatpush1.bf16.msra.mxu0 %v285
      %299 = vmatprep.subr.bf16.mxu0 0
      %300 = vmatpush1.bf16.msra.mxu0 %v284
      %301 = vmatprep.subr.bf16.mxu0 0
      %302 = vmatpush1.bf16.msra.mxu0 %v283
      %303 = vmatprep.subr.bf16.mxu0 0
      %304 = vmatpush1.bf16.msra.mxu0 %v282
      %305 = vmatprep.subr.bf16.mxu0 0
      %306 = vmatpush1.bf16.msra.mxu0 %v281
      %307 = vmatprep.subr.bf16.mxu0 0
      %308 = vmatpush1.bf16.msra.mxu0 %v280
      %309 = vmatprep.subr.bf16.mxu0 0
      %310 = vmatpush1.bf16.msra.mxu0 %v279
      %311 = vmatprep.subr.bf16.mxu0 0
      %312 = vmatpush2.bf16.msra.mxu0 0
      %313 = vmatprep.subr.bf16.mxu0 0
      %314 = vmatpush2.bf16.msra.mxu0 0
      %315 = vmatprep.subr.bf16.mxu0 0
      %316 = vmatpush2.bf16.msra.mxu0 0
      %317 = vmatprep.subr.bf16.mxu0 0
      %318 = vmatpush2.bf16.msra.mxu0 0
      %319 = vmatprep.subr.bf16.mxu0 0
      %320 = vmatpush2.bf16.msra.mxu0 0
      %321 = vmatprep.subr.bf16.mxu0 0
      %322 = vmatpush2.bf16.msra.mxu0 0
      %323 = vmatprep.subr.bf16.mxu0 0
      %324 = vmatpush2.bf16.msra.mxu0 0
      %325 = vmatprep.subr.bf16.mxu0 0
      %326 = vmatpush2.bf16.msra.mxu0 0
      %327 = vmatprep.mubr.bf16.mxu0 0
      %328 = vmatmul.mubr.bf16.gmra.mxu0 %v226
      %v329 = vpop.f32.mrf.mxu0
      %v330 = vadd.f32 0.0, %v329
      %v331 = vpop.f32.mrf.mxu0
      %v332 = vpop.f32.mrf.mxu0
      %v333 = vpop.f32.mrf.mxu0
      %334 = vdwg.mxu0
      %v335 = vadd.f32 %v225, %v330
      %v336 = vld [vmem:[%s207] sm:$0xf]
      %v337 = vld [vmem:[%s207 + $0x4] sm:$0x1]
      %s338 = sadd.s32 %s227, 1
      %s339 = smul.u32 %s338, 16
      %s340 = smul.addr %s339, 4
      %s341 = scalar_lea.vmem %s1, %s340
      %v342 = vld [vmem:[%s341] sm:$0xf]
      %v343 = vld [vmem:[%s341 + $0x4] sm:$0xf]
      %v344 = vld [vmem:[%s341 + $0x8] sm:$0xf]
      %v345 = vld [vmem:[%s341 + $0xc] sm:$0xf]
      %v346 = vld [vmem:[%s341 + $0x10] sm:$0xf]
      %v347 = vld [vmem:[%s341 + $0x14] sm:$0xf]
      %v348 = vld [vmem:[%s341 + $0x18] sm:$0xf]
      %v349 = vld [vmem:[%s341 + $0x1c] sm:$0xf]
      %v350 = vld [vmem:[%s341 + $0x20] sm:$0xf]
      %v351 = vld [vmem:[%s341 + $0x24] sm:$0xf]
      %v352 = vld [vmem:[%s341 + $0x28] sm:$0xf]
      %v353 = vld [vmem:[%s341 + $0x2c] sm:$0xf]
      %v354 = vld [vmem:[%s341 + $0x30] sm:$0xf]
      %v355 = vld [vmem:[%s341 + $0x34] sm:$0xf]
      %v356 = vld [vmem:[%s341 + $0x38] sm:$0xf]
      %v357 = vld [vmem:[%s341 + $0x3c] sm:$0xf]
      %v360 = vunpack.c.l.b16 %v336
      %v361 = vunpack.c.l.b16 %v337
      %v362 = vpack.c.b16 %v361, %v360
      %v364 = vshrl.u32 %v362, 16
      %v366 = vshll.u32 %v362, 16
      %v368 = vrot.slane %v366, 1
      %v369 = vor.u32 %v364, %v368
      %v387 = vunpack.c.l.b16 %v342
      %v388 = vunpack.c.l.b16 %v343
      %v389 = vunpack.c.l.b16 %v344
      %v390 = vunpack.c.l.b16 %v345
      %v391 = vunpack.c.l.b16 %v346
      %v392 = vunpack.c.l.b16 %v347
      %v393 = vunpack.c.l.b16 %v348
      %v394 = vunpack.c.l.b16 %v349
      %v395 = vunpack.c.l.b16 %v350
      %v396 = vunpack.c.l.b16 %v351
      %v397 = vunpack.c.l.b16 %v352
      %v398 = vunpack.c.l.b16 %v353
      %v399 = vunpack.c.l.b16 %v354
      %v400 = vunpack.c.l.b16 %v355
      %v401 = vunpack.c.l.b16 %v356
      %v402 = vunpack.c.l.b16 %v357
      %v403 = vpack.c.b16 %v388, %v387
      %v404 = vpack.c.b16 %v390, %v389
      %v405 = vpack.c.b16 %v392, %v391
      %v406 = vpack.c.b16 %v394, %v393
      %v407 = vpack.c.b16 %v396, %v395
      %v408 = vpack.c.b16 %v398, %v397
      %v409 = vpack.c.b16 %v400, %v399
      %v410 = vpack.c.b16 %v402, %v401
      %419 = vmatprep.subr.bf16.mxu0 0
      %420 = vmatpush1.bf16.msra.mxu0 %v410
      %421 = vmatprep.subr.bf16.mxu0 0
      %422 = vmatpush1.bf16.msra.mxu0 %v409
      %423 = vmatprep.subr.bf16.mxu0 0
      %424 = vmatpush1.bf16.msra.mxu0 %v408
      %425 = vmatprep.subr.bf16.mxu0 0
      %426 = vmatpush1.bf16.msra.mxu0 %v407
      %427 = vmatprep.subr.bf16.mxu0 0
      %428 = vmatpush1.bf16.msra.mxu0 %v406
      %429 = vmatprep.subr.bf16.mxu0 0
      %430 = vmatpush1.bf16.msra.mxu0 %v405
      %431 = vmatprep.subr.bf16.mxu0 0
      %432 = vmatpush1.bf16.msra.mxu0 %v404
      %433 = vmatprep.subr.bf16.mxu0 0
      %434 = vmatpush1.bf16.msra.mxu0 %v403
      %435 = vmatprep.subr.bf16.mxu0 0
      %436 = vmatpush2.bf16.msra.mxu0 0
      %437 = vmatprep.subr.bf16.mxu0 0
      %438 = vmatpush2.bf16.msra.mxu0 0
      %439 = vmatprep.subr.bf16.mxu0 0
      %440 = vmatpush2.bf16.msra.mxu0 0
      %441 = vmatprep.subr.bf16.mxu0 0
      %442 = vmatpush2.bf16.msra.mxu0 0
      %443 = vmatprep.subr.bf16.mxu0 0
      %444 = vmatpush2.bf16.msra.mxu0 0
      %445 = vmatprep.subr.bf16.mxu0 0
      %446 = vmatpush2.bf16.msra.mxu0 0
      %447 = vmatprep.subr.bf16.mxu0 0
      %448 = vmatpush2.bf16.msra.mxu0 0
      %449 = vmatprep.subr.bf16.mxu0 0
      %450 = vmatpush2.bf16.msra.mxu0 0
      %451 = vmatprep.mubr.bf16.mxu0 0
      %452 = vmatmul.mubr.bf16.gmra.mxu0 %v369
      %v453 = vpop.f32.mrf.mxu0
      %v454 = vadd.f32 0.0, %v453
      %v455 = vpop.f32.mrf.mxu0
      %v456 = vpop.f32.mrf.mxu0
      %v457 = vpop.f32.mrf.mxu0
      %458 = vdwg.mxu0
      %v459 = vadd.f32 %v335, %v454
      %v460 = vld [vmem:[%s207] sm:$0xe]
      %s461 = sadd.s32 %s227, 2
      %s462 = smul.u32 %s461, 16
      %s463 = smul.addr %s462, 4
      %s464 = scalar_lea.vmem %s1, %s463
      %v465 = vld [vmem:[%s464] sm:$0xf]
      %v466 = vld [vmem:[%s464 + $0x4] sm:$0xf]
      %v467 = vld [vmem:[%s464 + $0x8] sm:$0xf]
      %v468 = vld [vmem:[%s464 + $0xc] sm:$0xf]
      %v469 = vld [vmem:[%s464 + $0x10] sm:$0xf]
      %v470 = vld [vmem:[%s464 + $0x14] sm:$0xf]
      %v471 = vld [vmem:[%s464 + $0x18] sm:$0xf]
      %v472 = vld [vmem:[%s464 + $0x1c] sm:$0xf]
      %v473 = vld [vmem:[%s464 + $0x20] sm:$0xf]
      %v474 = vld [vmem:[%s464 + $0x24] sm:$0xf]
      %v475 = vld [vmem:[%s464 + $0x28] sm:$0xf]
      %v476 = vld [vmem:[%s464 + $0x2c] sm:$0xf]
      %v477 = vld [vmem:[%s464 + $0x30] sm:$0xf]
      %v478 = vld [vmem:[%s464 + $0x34] sm:$0xf]
      %v479 = vld [vmem:[%s464 + $0x38] sm:$0xf]
      %v480 = vld [vmem:[%s464 + $0x3c] sm:$0xf]
      %v482 = vunpack.c.l.b16 %v460
      %v483 = vpack.c.b16 %v361, %v482
      %v484 = vrot.slane %v483, 1
      %v502 = vunpack.c.l.b16 %v465
      %v503 = vunpack.c.l.b16 %v466
      %v504 = vunpack.c.l.b16 %v467
      %v505 = vunpack.c.l.b16 %v468
      %v506 = vunpack.c.l.b16 %v469
      %v507 = vunpack.c.l.b16 %v470
      %v508 = vunpack.c.l.b16 %v471
      %v509 = vunpack.c.l.b16 %v472
      %v510 = vunpack.c.l.b16 %v473
      %v511 = vunpack.c.l.b16 %v474
      %v512 = vunpack.c.l.b16 %v475
      %v513 = vunpack.c.l.b16 %v476
      %v514 = vunpack.c.l.b16 %v477
      %v515 = vunpack.c.l.b16 %v478
      %v516 = vunpack.c.l.b16 %v479
      %v517 = vunpack.c.l.b16 %v480
      %v518 = vpack.c.b16 %v503, %v502
      %v519 = vpack.c.b16 %v505, %v504
      %v520 = vpack.c.b16 %v507, %v506
      %v521 = vpack.c.b16 %v509, %v508
      %v522 = vpack.c.b16 %v511, %v510
      %v523 = vpack.c.b16 %v513, %v512
      %v524 = vpack.c.b16 %v515, %v514
      %v525 = vpack.c.b16 %v517, %v516
      %534 = vmatprep.subr.bf16.mxu0 0
      %535 = vmatpush1.bf16.msra.mxu0 %v525
      %536 = vmatprep.subr.bf16.mxu0 0
      %537 = vmatpush1.bf16.msra.mxu0 %v524
      %538 = vmatprep.subr.bf16.mxu0 0
      %539 = vmatpush1.bf16.msra.mxu0 %v523
      %540 = vmatprep.subr.bf16.mxu0 0
      %541 = vmatpush1.bf16.msra.mxu0 %v522
      %542 = vmatprep.subr.bf16.mxu0 0
      %543 = vmatpush1.bf16.msra.mxu0 %v521
      %544 = vmatprep.subr.bf16.mxu0 0
      %545 = vmatpush1.bf16.msra.mxu0 %v520
      %546 = vmatprep.subr.bf16.mxu0 0
      %547 = vmatpush1.bf16.msra.mxu0 %v519
      %548 = vmatprep.subr.bf16.mxu0 0
      %549 = vmatpush1.bf16.msra.mxu0 %v518
      %550 = vmatprep.subr.bf16.mxu0 0
      %551 = vmatpush2.bf16.msra.mxu0 0
      %552 = vmatprep.subr.bf16.mxu0 0
      %553 = vmatpush2.bf16.msra.mxu0 0
      %554 = vmatprep.subr.bf16.mxu0 0
      %555 = vmatpush2.bf16.msra.mxu0 0
      %556 = vmatprep.subr.bf16.mxu0 0
      %557 = vmatpush2.bf16.msra.mxu0 0
      %558 = vmatprep.subr.bf16.mxu0 0
      %559 = vmatpush2.bf16.msra.mxu0 0
      %560 = vmatprep.subr.bf16.mxu0 0
      %561 = vmatpush2.bf16.msra.mxu0 0
      %562 = vmatprep.subr.bf16.mxu0 0
      %563 = vmatpush2.bf16.msra.mxu0 0
      %564 = vmatprep.subr.bf16.mxu0 0
      %565 = vmatpush2.bf16.msra.mxu0 0
      %566 = vmatprep.mubr.bf16.mxu0 0
      %567 = vmatmul.mubr.bf16.gmra.mxu0 %v484
      %v568 = vpop.f32.mrf.mxu0
      %v569 = vadd.f32 0.0, %v568
      %v570 = vpop.f32.mrf.mxu0
      %v571 = vpop.f32.mrf.mxu0
      %v572 = vpop.f32.mrf.mxu0
      %573 = vdwg.mxu0
      %v574 = vadd.f32 %v459, %v569
      %575 = vst [vmem:[#allocation2] sm:$0xff] %v574
      %p576 = scmp.eq.s32.totalorder %s21, 2
      // Predicated region
      $region37: #{crestereo_forward.66} parent=31 // pred_check
        %p577 = pneg %p576
      $region38: #{crestereo_forward.66} parent=31 // pred_check_branch
        %579 = sbr.rel (%p577) target = $region40
      $region39: #{crestereo_forward.66} parent=31 // pred_region
        %v580 = vld [vmem:[#allocation2] sm:$0xff]
        %v581 = vld [vmem:[%s2] sm:$0x1]
        %v583 = vlaneseq
        %v584 = vshrl.u32 %v583, 7
        %v585 = vsub.s32 0, %v584
        %v586 = vrot.slane %v581, %v585
        %v588 = vadd.f32 %v580, %v586
        %v589 = vpack.c.bf16 %v588, %v588
        %590 = vst [vmem:[%s216] sm:$0xf] %v589
      $region40: #{crestereo_forward.66} parent=31 // pred_fallthru
        _
      %s591 = smul.u32 %s19, 8
      %s592 = sadd.s32 %s591, %s20
      %p593 = scmp.lt.s32.totalorder %s592, 15
      %s594 = scalar_select %p593, %s592, 15
      %s595 = smul.addr %s594, 4
      %s596 = scalar_lea.vmem %s3, %s595
      // Predicated region
      $region41: #{crestereo_forward.66} parent=31 // pred_check
        %p597 = pneg %p129
      $region42: #{crestereo_forward.66} parent=31 // pred_check_branch
        %599 = sbr.rel (%p597) target = $region44
      $region43: #{crestereo_forward.66} parent=31 // pred_region
        %s600 = smul.u32 %s19, 8
        %s601 = sadd.s32 %s600, %s20
      $region44: #{crestereo_forward.66} parent=31 // pred_fallthru
        _
    $region32: #{crestereo_forward.66} parent=5 // pred_fallthru
      _
    %p602 = scmp.le.s32.totalorder 2, %s9
    // Predicated region
    $region45: #{crestereo_forward.66} parent=5 // pred_check
      %p603 = pneg %p602
    $region46: #{crestereo_forward.66} parent=5 // pred_check_branch
      %605 = sbr.rel (%p603) target = $region48
    $region47: #{crestereo_forward.66} parent=5 // pred_region
      %s606 = ssub.s32 %s9, 2
      // Predicated region
      $region49: #{crestereo_forward.66} parent=47 // pred_check
        %p607 = pneg %p135
      $region50: #{crestereo_forward.66} parent=47 // pred_check_branch
        %609 = sbr.rel (%p607) target = $region52
      $region51: #{crestereo_forward.66} parent=47 // pred_region
        %s610 = smul.u32 %s22, 8
        %s611 = sadd.s32 %s610, %s23
        %p612 = scmp.lt.s32.totalorder %s611, 15
        %s613 = scalar_select %p612, %s611, 15
        %s614 = smul.addr %s613, 4
        %s615 = scalar_lea.vmem %s3, %s614
      $region52: #{crestereo_forward.66} parent=47 // pred_fallthru
        _
    $region48: #{crestereo_forward.66} parent=5 // pred_fallthru
      _
  $region6: #{crestereo_forward.66} parent=0 // loop_footer
    %s13 = sadd.s32 1, %s9
  $region7: #{crestereo_forward.66} parent=0 // loop_footer_branch
    %8 = sbr.rel target = $region3
  $region8: #{crestereo_forward.66} parent=0 // loop_exit
    _

// kernel: crestereo_forward.93
$region0: #{crestereo_forward.93}
  #allocation0 [shape = 'u32[]', space=smem, size = 0x4, offset = 0x4, fixed_abs, tag = 'smem constant byte address 0x4 - core index']
  #allocation1 [shape = 'u32[144,128]{1,0:T(1,128)}', space=vmem, size = 0x12000, scoped, tag = 'internal scratch']
  %s0 = inlined_call_operand.vmem [shape: bf16[256,128], index: 0, kind: input, shape index: {}]
  %s1 = inlined_call_operand.vmem [shape: bf16[128,256], index: 1, kind: input, shape index: {}]
  %s2 = inlined_call_operand.vmem [shape: f32[1,256], index: 2, kind: input, shape index: {}]
  %s3 = inlined_call_operand.vmem [shape: f32[256,256], index: 3, kind: output, shape index: {}]
  %s4 = sld [smem:[#allocation0]]
  $region22: #{crestereo_forward.93} parent=0
    _
  %s6 = ssub.s32 1, %s4
  %s7 = scalar_select 0, %s6, %s4
  // Predicated region
  $region2: #{crestereo_forward.93} parent=0 // pred_check
    _
  $region3: #{crestereo_forward.93} parent=0 // pred_check_branch
    %9 = sbr.rel (0) target = $region5
  $region4: #{crestereo_forward.93} parent=0 // pred_region
    _
  $region5: #{crestereo_forward.93} parent=0 // pred_fallthru
    _
  // Predicated region
  $region6: #{crestereo_forward.93} parent=0 // pred_check
    _
  $region7: #{crestereo_forward.93} parent=0 // pred_check_branch
    %11 = sbr.rel (0) target = $region9
  $region8: #{crestereo_forward.93} parent=0 // pred_region
    _
  $region9: #{crestereo_forward.93} parent=0 // pred_fallthru
    _
  // Predicated region
  $region10: #{crestereo_forward.93} parent=0 // pred_check
    _
  $region11: #{crestereo_forward.93} parent=0 // pred_check_branch
    %13 = sbr.rel (0) target = $region13
  $region12: #{crestereo_forward.93} parent=0 // pred_region
    _
  $region13: #{crestereo_forward.93} parent=0 // pred_fallthru
    _
  %v15 = vld [vmem:[%s0] sm:$0xf]
  %v16 = vld [vmem:[%s0 + $0x4] sm:$0xf]
  %v17 = vld [vmem:[%s0 + $0x8] sm:$0xf]
  %v18 = vld [vmem:[%s0 + $0xc] sm:$0xf]
  %v19 = vld [vmem:[%s0 + $0x10] sm:$0xf]
  %v20 = vld [vmem:[%s0 + $0x14] sm:$0xf]
  %v21 = vld [vmem:[%s0 + $0x18] sm:$0xf]
  %v22 = vld [vmem:[%s0 + $0x1c] sm:$0xf]
  %v23 = vld [vmem:[%s0 + $0x20] sm:$0xf]
  %v24 = vld [vmem:[%s0 + $0x24] sm:$0xf]
  %v25 = vld [vmem:[%s0 + $0x28] sm:$0xf]
  %v26 = vld [vmem:[%s0 + $0x2c] sm:$0xf]
  %v27 = vld [vmem:[%s0 + $0x30] sm:$0xf]
  %v28 = vld [vmem:[%s0 + $0x34] sm:$0xf]
  %v29 = vld [vmem:[%s0 + $0x38] sm:$0xf]
  %v30 = vld [vmem:[%s0 + $0x3c] sm:$0xf]
  %v31 = vld [vmem:[%s0 + $0x40] sm:$0xf]
  %v32 = vld [vmem:[%s0 + $0x44] sm:$0xf]
  %v33 = vld [vmem:[%s0 + $0x48] sm:$0xf]
  %v34 = vld [vmem:[%s0 + $0x4c] sm:$0xf]
  %v35 = vld [vmem:[%s0 + $0x50] sm:$0xf]
  %v36 = vld [vmem:[%s0 + $0x54] sm:$0xf]
  %v37 = vld [vmem:[%s0 + $0x58] sm:$0xf]
  %v38 = vld [vmem:[%s0 + $0x5c] sm:$0xf]
  %v39 = vld [vmem:[%s0 + $0x60] sm:$0xf]
  %v40 = vld [vmem:[%s0 + $0x64] sm:$0xf]
  %v41 = vld [vmem:[%s0 + $0x68] sm:$0xf]
  %v42 = vld [vmem:[%s0 + $0x6c] sm:$0xf]
  %v43 = vld [vmem:[%s0 + $0x70] sm:$0xf]
  %v44 = vld [vmem:[%s0 + $0x74] sm:$0xf]
  %v45 = vld [vmem:[%s0 + $0x78] sm:$0xf]
  %v46 = vld [vmem:[%s0 + $0x7c] sm:$0xf]
  %v47 = vld [vmem:[%s1] sm:$0xff]
  %v48 = vld [vmem:[%s1 + $0x8] sm:$0xff]
  %v49 = vld [vmem:[%s1 + $0x10] sm:$0xff]
  %v50 = vld [vmem:[%s1 + $0x18] sm:$0xff]
  %v51 = vld [vmem:[%s1 + $0x20] sm:$0xff]
  %v52 = vld [vmem:[%s1 + $0x28] sm:$0xff]
  %v53 = vld [vmem:[%s1 + $0x30] sm:$0xff]
  %v54 = vld [vmem:[%s1 + $0x38] sm:$0xff]
  %v55 = vld [vmem:[%s1 + $0x40] sm:$0xff]
  %v56 = vld [vmem:[%s1 + $0x48] sm:$0xff]
  %v57 = vld [vmem:[%s1 + $0x50] sm:$0xff]
  %v58 = vld [vmem:[%s1 + $0x58] sm:$0xff]
  %v59 = vld [vmem:[%s1 + $0x60] sm:$0xff]
  %v60 = vld [vmem:[%s1 + $0x68] sm:$0xff]
  %v61 = vld [vmem:[%s1 + $0x70] sm:$0xff]
  %v62 = vld [vmem:[%s1 + $0x78] sm:$0xff]
  %v63 = vld [vmem:[%s2] sm:$0x3]
  %v65 = vlaneseq
  %v66 = vshrl.u32 %v65, 7
  %v67 = vsub.s32 0, %v66
  %v68 = vrot.slane %v63, %v67
  %v69 = vlaneseq
  %v70 = vshrl.u32 %v69, 7
  %v71 = vsub.s32 1, %v70
  %v72 = vrot.slane %v63, %v71
  %v107 = vunpack.c.l.b16 %v15
  %v108 = vunpack.c.l.b16 %v16
  %v109 = vunpack.c.l.b16 %v17
  %v110 = vunpack.c.l.b16 %v18
  %v111 = vunpack.c.l.b16 %v19
  %v112 = vunpack.c.l.b16 %v20
  %v113 = vunpack.c.l.b16 %v21
  %v114 = vunpack.c.l.b16 %v22
  %v115 = vunpack.c.l.b16 %v23
  %v116 = vunpack.c.l.b16 %v24
  %v117 = vunpack.c.l.b16 %v25
  %v118 = vunpack.c.l.b16 %v26
  %v119 = vunpack.c.l.b16 %v27
  %v120 = vunpack.c.l.b16 %v28
  %v121 = vunpack.c.l.b16 %v29
  %v122 = vunpack.c.l.b16 %v30
  %v123 = vunpack.c.l.b16 %v31
  %v124 = vunpack.c.l.b16 %v32
  %v125 = vunpack.c.l.b16 %v33
  %v126 = vunpack.c.l.b16 %v34
  %v127 = vunpack.c.l.b16 %v35
  %v128 = vunpack.c.l.b16 %v36
  %v129 = vunpack.c.l.b16 %v37
  %v130 = vunpack.c.l.b16 %v38
  %v131 = vunpack.c.l.b16 %v39
  %v132 = vunpack.c.l.b16 %v40
  %v133 = vunpack.c.l.b16 %v41
  %v134 = vunpack.c.l.b16 %v42
  %v135 = vunpack.c.l.b16 %v43
  %v136 = vunpack.c.l.b16 %v44
  %v137 = vunpack.c.l.b16 %v45
  %v138 = vunpack.c.l.b16 %v46
  %v139 = vpack.c.b16 %v108, %v107
  %v140 = vpack.c.b16 %v110, %v109
  %v141 = vpack.c.b16 %v112, %v111
  %v142 = vpack.c.b16 %v114, %v113
  %v143 = vpack.c.b16 %v116, %v115
  %v144 = vpack.c.b16 %v118, %v117
  %v145 = vpack.c.b16 %v120, %v119
  %v146 = vpack.c.b16 %v122, %v121
  %v147 = vpack.c.b16 %v124, %v123
  %v148 = vpack.c.b16 %v126, %v125
  %v149 = vpack.c.b16 %v128, %v127
  %v150 = vpack.c.b16 %v130, %v129
  %v151 = vpack.c.b16 %v132, %v131
  %v152 = vpack.c.b16 %v134, %v133
  %v153 = vpack.c.b16 %v136, %v135
  %v154 = vpack.c.b16 %v138, %v137
  %v187 = vunpack.c.l.b16 %v47
  %v188 = vunpack.c.h.b16 %v47
  %v189 = vunpack.c.l.b16 %v48
  %v190 = vunpack.c.h.b16 %v48
  %v191 = vunpack.c.l.b16 %v49
  %v192 = vunpack.c.h.b16 %v49
  %v193 = vunpack.c.l.b16 %v50
  %v194 = vunpack.c.h.b16 %v50
  %v195 = vunpack.c.l.b16 %v51
  %v196 = vunpack.c.h.b16 %v51
  %v197 = vunpack.c.l.b16 %v52
  %v198 = vunpack.c.h.b16 %v52
  %v199 = vunpack.c.l.b16 %v53
  %v200 = vunpack.c.h.b16 %v53
  %v201 = vunpack.c.l.b16 %v54
  %v202 = vunpack.c.h.b16 %v54
  %v203 = vunpack.c.l.b16 %v55
  %v204 = vunpack.c.h.b16 %v55
  %v205 = vunpack.c.l.b16 %v56
  %v206 = vunpack.c.h.b16 %v56
  %v207 = vunpack.c.l.b16 %v57
  %v208 = vunpack.c.h.b16 %v57
  %v209 = vunpack.c.l.b16 %v58
  %v210 = vunpack.c.h.b16 %v58
  %v211 = vunpack.c.l.b16 %v59
  %v212 = vunpack.c.h.b16 %v59
  %v213 = vunpack.c.l.b16 %v60
  %v214 = vunpack.c.h.b16 %v60
  %v215 = vunpack.c.l.b16 %v61
  %v216 = vunpack.c.h.b16 %v61
  %v217 = vunpack.c.l.b16 %v62
  %v218 = vunpack.c.h.b16 %v62
  %v219 = vpack.c.b16 %v189, %v187
  %v220 = vpack.c.b16 %v190, %v188
  %v221 = vpack.c.b16 %v193, %v191
  %v222 = vpack.c.b16 %v194, %v192
  %v223 = vpack.c.b16 %v197, %v195
  %v224 = vpack.c.b16 %v198, %v196
  %v225 = vpack.c.b16 %v201, %v199
  %v226 = vpack.c.b16 %v202, %v200
  %v227 = vpack.c.b16 %v205, %v203
  %v228 = vpack.c.b16 %v206, %v204
  %v229 = vpack.c.b16 %v209, %v207
  %v230 = vpack.c.b16 %v210, %v208
  %v231 = vpack.c.b16 %v213, %v211
  %v232 = vpack.c.b16 %v214, %v212
  %v233 = vpack.c.b16 %v217, %v215
  %v234 = vpack.c.b16 %v218, %v216
  %251 = vmatprep.subr.bf16.mxu0 %v234
  %252 = vmatpush1.bf16.msra.mxu0 %v233
  %253 = vmatprep.subr.bf16.mxu0 %v232
  %254 = vmatpush1.bf16.msra.mxu0 %v231
  %255 = vmatprep.subr.bf16.mxu0 %v230
  %256 = vmatpush1.bf16.msra.mxu0 %v229
  %257 = vmatprep.subr.bf16.mxu0 %v228
  %258 = vmatpush1.bf16.msra.mxu0 %v227
  %259 = vmatprep.subr.bf16.mxu0 %v226
  %260 = vmatpush1.bf16.msra.mxu0 %v225
  %261 = vmatprep.subr.bf16.mxu0 %v224
  %262 = vmatpush1.bf16.msra.mxu0 %v223
  %263 = vmatprep.subr.bf16.mxu0 %v222
  %264 = vmatpush1.bf16.msra.mxu0 %v221
  %265 = vmatprep.subr.bf16.mxu0 %v220
  %266 = vmatpush1.bf16.msra.mxu0 %v219
  %267 = vmatprep.subr.bf16.mxu0 0
  %268 = vmatpush2.bf16.msra.mxu0 0
  %269 = vmatprep.subr.bf16.mxu0 0
  %270 = vmatpush2.bf16.msra.mxu0 0
  %271 = vmatprep.subr.bf16.mxu0 0
  %272 = vmatpush2.bf16.msra.mxu0 0
  %273 = vmatprep.subr.bf16.mxu0 0
  %274 = vmatpush2.bf16.msra.mxu0 0
  %275 = vmatprep.subr.bf16.mxu0 0
  %276 = vmatpush2.bf16.msra.mxu0 0
  %277 = vmatprep.subr.bf16.mxu0 0
  %278 = vmatpush2.bf16.msra.mxu0 0
  %279 = vmatprep.subr.bf16.mxu0 0
  %280 = vmatpush2.bf16.msra.mxu0 0
  %281 = vmatprep.subr.bf16.mxu0 0
  %282 = vmatpush2.bf16.msra.mxu0 0
  %283 = vmatprep.mubr.bf16.mxu0 0
  %284 = vmatmul.mubr.bf16.gmra.mxu0 %v139
  %v285 = vpop.f32.mrf.mxu0
  %v286 = vadd.f32 %v68, %v285
  %v287 = vpop.f32.mrf.mxu0
  %v288 = vadd.f32 %v72, %v287
  %v289 = vpop.f32.mrf.mxu0
  %v290 = vadd.f32 %v68, %v289
  %v291 = vpop.f32.mrf.mxu0
  %v292 = vadd.f32 %v72, %v291
  %293 = vmatprep.mubr.bf16.mxu0 0
  %294 = vmatmul.mubr.bf16.gmra.mxu0 %v140
  %v295 = vpop.f32.mrf.mxu0
  %v296 = vadd.f32 %v68, %v295
  %v297 = vpop.f32.mrf.mxu0
  %v298 = vadd.f32 %v72, %v297
  %v299 = vpop.f32.mrf.mxu0
  %v300 = vadd.f32 %v68, %v299
  %v301 = vpop.f32.mrf.mxu0
  %v302 = vadd.f32 %v72, %v301
  %303 = vmatprep.mubr.bf16.mxu0 0
  %304 = vmatmul.mubr.bf16.gmra.mxu0 %v141
  %v305 = vpop.f32.mrf.mxu0
  %v306 = vadd.f32 %v68, %v305
  %v307 = vpop.f32.mrf.mxu0
  %v308 = vadd.f32 %v72, %v307
  %v309 = vpop.f32.mrf.mxu0
  %v310 = vadd.f32 %v68, %v309
  %v311 = vpop.f32.mrf.mxu0
  %v312 = vadd.f32 %v72, %v311
  %313 = vmatprep.mubr.bf16.mxu0 0
  %314 = vmatmul.mubr.bf16.gmra.mxu0 %v142
  %v315 = vpop.f32.mrf.mxu0
  %v316 = vadd.f32 %v68, %v315
  %v317 = vpop.f32.mrf.mxu0
  %v318 = vadd.f32 %v72, %v317
  %v319 = vpop.f32.mrf.mxu0
  %v320 = vadd.f32 %v68, %v319
  %v321 = vpop.f32.mrf.mxu0
  %v322 = vadd.f32 %v72, %v321
  %323 = vmatprep.mubr.bf16.mxu0 0
  %324 = vmatmul.mubr.bf16.gmra.mxu0 %v143
  %v325 = vpop.f32.mrf.mxu0
  %v326 = vadd.f32 %v68, %v325
  %v327 = vpop.f32.mrf.mxu0
  %v328 = vadd.f32 %v72, %v327
  %v329 = vpop.f32.mrf.mxu0
  %v330 = vadd.f32 %v68, %v329
  %v331 = vpop.f32.mrf.mxu0
  %v332 = vadd.f32 %v72, %v331
  %333 = vmatprep.mubr.bf16.mxu0 0
  %334 = vmatmul.mubr.bf16.gmra.mxu0 %v144
  %v335 = vpop.f32.mrf.mxu0
  %v336 = vadd.f32 %v68, %v335
  %v337 = vpop.f32.mrf.mxu0
  %v338 = vadd.f32 %v72, %v337
  %v339 = vpop.f32.mrf.mxu0
  %v340 = vadd.f32 %v68, %v339
  %v341 = vpop.f32.mrf.mxu0
  %v342 = vadd.f32 %v72, %v341
  %343 = vmatprep.mubr.bf16.mxu0 0
  %344 = vmatmul.mubr.bf16.gmra.mxu0 %v145
  %v345 = vpop.f32.mrf.mxu0
  %v346 = vadd.f32 %v68, %v345
  %v347 = vpop.f32.mrf.mxu0
  %v348 = vadd.f32 %v72, %v347
  %v349 = vpop.f32.mrf.mxu0
  %v350 = vadd.f32 %v68, %v349
  %v351 = vpop.f32.mrf.mxu0
  %v352 = vadd.f32 %v72, %v351
  %353 = vmatprep.mubr.bf16.mxu0 0
  %354 = vmatmul.mubr.bf16.gmra.mxu0 %v146
  %v355 = vpop.f32.mrf.mxu0
  %v356 = vadd.f32 %v68, %v355
  %v357 = vpop.f32.mrf.mxu0
  %v358 = vadd.f32 %v72, %v357
  %v359 = vpop.f32.mrf.mxu0
  %v360 = vadd.f32 %v68, %v359
  %v361 = vpop.f32.mrf.mxu0
  %v362 = vadd.f32 %v72, %v361
  %363 = vmatprep.mubr.bf16.mxu0 0
  %364 = vmatmul.mubr.bf16.gmra.mxu0 %v147
  %v365 = vpop.f32.mrf.mxu0
  %v366 = vadd.f32 %v68, %v365
  %v367 = vpop.f32.mrf.mxu0
  %v368 = vadd.f32 %v72, %v367
  %v369 = vpop.f32.mrf.mxu0
  %v370 = vadd.f32 %v68, %v369
  %v371 = vpop.f32.mrf.mxu0
  %v372 = vadd.f32 %v72, %v371
  %373 = vmatprep.mubr.bf16.mxu0 0
  %374 = vmatmul.mubr.bf16.gmra.mxu0 %v148
  %v375 = vpop.f32.mrf.mxu0
  %v376 = vadd.f32 %v68, %v375
  %v377 = vpop.f32.mrf.mxu0
  %v378 = vadd.f32 %v72, %v377
  %v379 = vpop.f32.mrf.mxu0
  %v380 = vadd.f32 %v68, %v379
  %v381 = vpop.f32.mrf.mxu0
  %v382 = vadd.f32 %v72, %v381
  %383 = vmatprep.mubr.bf16.mxu0 0
  %384 = vmatmul.mubr.bf16.gmra.mxu0 %v149
  %v385 = vpop.f32.mrf.mxu0
  %v386 = vadd.f32 %v68, %v385
  %v387 = vpop.f32.mrf.mxu0
  %v388 = vadd.f32 %v72, %v387
  %v389 = vpop.f32.mrf.mxu0
  %v390 = vadd.f32 %v68, %v389
  %v391 = vpop.f32.mrf.mxu0
  %v392 = vadd.f32 %v72, %v391
  %393 = vmatprep.mubr.bf16.mxu0 0
  %394 = vmatmul.mubr.bf16.gmra.mxu0 %v150
  %v395 = vpop.f32.mrf.mxu0
  %v396 = vadd.f32 %v68, %v395
  %v397 = vpop.f32.mrf.mxu0
  %v398 = vadd.f32 %v72, %v397
  %v399 = vpop.f32.mrf.mxu0
  %v400 = vadd.f32 %v68, %v399
  %v401 = vpop.f32.mrf.mxu0
  %v402 = vadd.f32 %v72, %v401
  %403 = vmatprep.mubr.bf16.mxu0 0
  %404 = vmatmul.mubr.bf16.gmra.mxu0 %v151
  %v405 = vpop.f32.mrf.mxu0
  %v406 = vadd.f32 %v68, %v405
  %v407 = vpop.f32.mrf.mxu0
  %v408 = vadd.f32 %v72, %v407
  %v409 = vpop.f32.mrf.mxu0
  %v410 = vadd.f32 %v68, %v409
  %v411 = vpop.f32.mrf.mxu0
  %v412 = vadd.f32 %v72, %v411
  %413 = vmatprep.mubr.bf16.mxu0 0
  %414 = vmatmul.mubr.bf16.gmra.mxu0 %v152
  %v415 = vpop.f32.mrf.mxu0
  %v416 = vadd.f32 %v68, %v415
  %v417 = vpop.f32.mrf.mxu0
  %v418 = vadd.f32 %v72, %v417
  %v419 = vpop.f32.mrf.mxu0
  %v420 = vadd.f32 %v68, %v419
  %v421 = vpop.f32.mrf.mxu0
  %v422 = vadd.f32 %v72, %v421
  %423 = vmatprep.mubr.bf16.mxu0 0
  %424 = vmatmul.mubr.bf16.gmra.mxu0 %v153
  %v425 = vpop.f32.mrf.mxu0
  %v426 = vadd.f32 %v68, %v425
  %v427 = vpop.f32.mrf.mxu0
  %v428 = vadd.f32 %v72, %v427
  %v429 = vpop.f32.mrf.mxu0
  %v430 = vadd.f32 %v68, %v429
  %v431 = vpop.f32.mrf.mxu0
  %v432 = vadd.f32 %v72, %v431
  %433 = vmatprep.mubr.bf16.mxu0 0
  %434 = vmatmul.mubr.bf16.gmra.mxu0 %v154
  %v435 = vpop.f32.mrf.mxu0
  %v436 = vadd.f32 %v68, %v435
  %v437 = vpop.f32.mrf.mxu0
  %v438 = vadd.f32 %v72, %v437
  %v439 = vpop.f32.mrf.mxu0
  %v440 = vadd.f32 %v68, %v439
  %v441 = vpop.f32.mrf.mxu0
  %v442 = vadd.f32 %v72, %v441
  %443 = vdwg.mxu0
  %444 = vst [vmem:[%s3] sm:$0xff] %v286
  %445 = vst [vmem:[%s3 + $0x8] sm:$0xff] %v288
  %446 = vst [vmem:[%s3 + $0x10] sm:$0xff] %v290
  %447 = vst [vmem:[%s3 + $0x18] sm:$0xff] %v292
  %448 = vst [vmem:[%s3 + $0x20] sm:$0xff] %v296
  %449 = vst [vmem:[%s3 + $0x28] sm:$0xff] %v298
  %450 = vst [vmem:[%s3 + $0x30] sm:$0xff] %v300
  %451 = vst [vmem:[%s3 + $0x38] sm:$0xff] %v302
  %452 = vst [vmem:[%s3 + $0x40] sm:$0xff] %v306
  %453 = vst [vmem:[%s3 + $0x48] sm:$0xff] %v308
  %454 = vst [vmem:[%s3 + $0x50] sm:$0xff] %v310
  %455 = vst [vmem:[%s3 + $0x58] sm:$0xff] %v312
  %456 = vst [vmem:[%s3 + $0x60] sm:$0xff] %v316
  %457 = vst [vmem:[%s3 + $0x68] sm:$0xff] %v318
  %458 = vst [vmem:[%s3 + $0x70] sm:$0xff] %v320
  %459 = vst [vmem:[%s3 + $0x78] sm:$0xff] %v322
  %460 = vst [vmem:[%s3 + $0x80] sm:$0xff] %v326
  %461 = vst [vmem:[%s3 + $0x88] sm:$0xff] %v328
  %462 = vst [vmem:[%s3 + $0x90] sm:$0xff] %v330
  %463 = vst [vmem:[%s3 + $0x98] sm:$0xff] %v332
  %464 = vst [vmem:[%s3 + $0xa0] sm:$0xff] %v336
  %465 = vst [vmem:[%s3 + $0xa8] sm:$0xff] %v338
  %466 = vst [vmem:[%s3 + $0xb0] sm:$0xff] %v340
  %467 = vst [vmem:[%s3 + $0xb8] sm:$0xff] %v342
  %468 = vst [vmem:[%s3 + $0xc0] sm:$0xff] %v346
  %469 = vst [vmem:[%s3 + $0xc8] sm:$0xff] %v348
  %470 = vst [vmem:[%s3 + $0xd0] sm:$0xff] %v350
  %471 = vst [vmem:[%s3 + $0xd8] sm:$0xff] %v352
  %472 = vst [vmem:[%s3 + $0xe0] sm:$0xff] %v356
  %473 = vst [vmem:[%s3 + $0xe8] sm:$0xff] %v358
  %474 = vst [vmem:[%s3 + $0xf0] sm:$0xff] %v360
  %475 = vst [vmem:[%s3 + $0xf8] sm:$0xff] %v362
  %476 = vst [vmem:[%s3 + $0x100] sm:$0xff] %v366
  %477 = vst [vmem:[%s3 + $0x108] sm:$0xff] %v368
  %478 = vst [vmem:[%s3 + $0x110] sm:$0xff] %v370
  %479 = vst [vmem:[%s3 + $0x118] sm:$0xff] %v372
  %480 = vst [vmem:[%s3 + $0x120] sm:$0xff] %v376
  %481 = vst [vmem:[%s3 + $0x128] sm:$0xff] %v378
  %482 = vst [vmem:[%s3 + $0x130] sm:$0xff] %v380
  %483 = vst [vmem:[%s3 + $0x138] sm:$0xff] %v382
  %484 = vst [vmem:[%s3 + $0x140] sm:$0xff] %v386
  %485 = vst [vmem:[%s3 + $0x148] sm:$0xff] %v388
  %486 = vst [vmem:[%s3 + $0x150] sm:$0xff] %v390
  %487 = vst [vmem:[%s3 + $0x158] sm:$0xff] %v392
  %488 = vst [vmem:[%s3 + $0x160] sm:$0xff] %v396
  %489 = vst [vmem:[%s3 + $0x168] sm:$0xff] %v398
  %490 = vst [vmem:[%s3 + $0x170] sm:$0xff] %v400
  %491 = vst [vmem:[%s3 + $0x178] sm:$0xff] %v402
  %492 = vst [vmem:[%s3 + $0x180] sm:$0xff] %v406
  %493 = vst [vmem:[%s3 + $0x188] sm:$0xff] %v408
  %494 = vst [vmem:[%s3 + $0x190] sm:$0xff] %v410
  %495 = vst [vmem:[%s3 + $0x198] sm:$0xff] %v412
  %496 = vst [vmem:[%s3 + $0x1a0] sm:$0xff] %v416
  %497 = vst [vmem:[%s3 + $0x1a8] sm:$0xff] %v418
  %498 = vst [vmem:[%s3 + $0x1b0] sm:$0xff] %v420
  %499 = vst [vmem:[%s3 + $0x1b8] sm:$0xff] %v422
  %500 = vst [vmem:[%s3 + $0x1c0] sm:$0xff] %v426
  %501 = vst [vmem:[%s3 + $0x1c8] sm:$0xff] %v428
  %502 = vst [vmem:[%s3 + $0x1d0] sm:$0xff] %v430
  %503 = vst [vmem:[%s3 + $0x1d8] sm:$0xff] %v432
  %504 = vst [vmem:[%s3 + $0x1e0] sm:$0xff] %v436
  %505 = vst [vmem:[%s3 + $0x1e8] sm:$0xff] %v438
  %506 = vst [vmem:[%s3 + $0x1f0] sm:$0xff] %v440
  %507 = vst [vmem:[%s3 + $0x1f8] sm:$0xff] %v442
  // Predicated region
  $region14: #{crestereo_forward.93} parent=0 // pred_check
    _
  $region15: #{crestereo_forward.93} parent=0 // pred_check_branch
    %509 = sbr.rel (0) target = $region17
  $region16: #{crestereo_forward.93} parent=0 // pred_region
    _
  $region17: #{crestereo_forward.93} parent=0 // pred_fallthru
    _
  // Predicated region
  $region18: #{crestereo_forward.93} parent=0 // pred_check
    _
  $region19: #{crestereo_forward.93} parent=0 // pred_check_branch
    %511 = sbr.rel (0) target = $region21
  $region20: #{crestereo_forward.93} parent=0 // pred_region
    _
  $region21: #{crestereo_forward.93} parent=0 // pred_fallthru
    _

// kernel: crestereo_forward.62
$region0: #{crestereo_forward.62}
  #allocation0 [shape = 'u32[]', space=smem, size = 0x4, offset = 0x4, fixed_abs, tag = 'smem constant byte address 0x4 - core index']
  #allocation1 [shape = 'u32[144,128]{1,0:T(1,128)}', space=vmem, size = 0x12000, scoped, tag = 'internal scratch']
  %s0 = inlined_call_operand.vmem [shape: bf16[512,128], index: 0, kind: input, shape index: {}]
  %s1 = inlined_call_operand.vmem [shape: bf16[128,256], index: 1, kind: input, shape index: {}]
  %s2 = inlined_call_operand.vmem [shape: f32[1,256], index: 2, kind: input, shape index: {}]
  %s3 = inlined_call_operand.hbm [shape: f32[512,256], index: 3, kind: output, shape index: {}]
  %s4 = sld [smem:[#allocation0]]
  $region45: #{crestereo_forward.62} parent=0
    _
  %s6 = ssub.s32 1, %s4
  %s7 = scalar_select 0, %s6, %s4
  $region1: #{crestereo_forward.62} parent=0
    #allocation2 [shape = 'u8[524288]{0}', space=vmem, size = 0x80000, scoped, tag = 'output window, operand 0']
    #allocation3 [shape = 's32[2]{0}', space=sflag, size = 0x8, scoped, tag = 'scoped memory for crestereo_forward.62']
    %8 = vsyncpa [#allocation3], 0
    %s9 = scalar_lea.sflag [#allocation3], 1
    %10 = vsyncpa %s9, 0
    loop: start=0, step=1, limit=4
    $region2: #{crestereo_forward.62} parent=1 // loop_pre_header
      _
    $region3: #{crestereo_forward.62} parent=1 // loop_header
      %s12 = sphi 0, %s16
      %p13 = scmp.ge.s32.totalorder %s12, 4
      %s22 = sphi 0, %s24
      %s25 = sphi 0, %s22
      %s26 = sphi 0, %s25
      %s42 = sphi 0, %s26
      %s46 = sphi 0, %s46
      %s48 = sphi 0, %s46
      %s49 = sphi 0, %s48
      %s63 = sphi 0, %s49
      %s67 = sphi 0, %s67
      %s69 = sphi 0, %s67
      %s70 = sphi 0, %s69
      %s84 = sphi 0, %s70
      %s90 = sphi 0, %s92
      %s93 = sphi 0, %s90
      %s94 = sphi 0, %s93
      %s110 = sphi 0, %s94
    $region4: #{crestereo_forward.62} parent=1 // loop_header_branch
      %15 = sbr.rel (%p13) target = $region8
    $region5: #{crestereo_forward.62} parent=1 // loop_body
      %s17 = ssub.s32 %s12, 1
      %s18 = ssub.s32 %s12, 2
      %s19 = sadd.s32 %s12, 1
      %s20 = ssub.s32 %s12, %s19
      %p21 = scmp.eq.s32.totalorder %s20, 0
      %s23 = sadd.s32 %s22, 1
      %s24 = scalar_select %p21, %s22, %s23
      %p27 = pneg %p21
      %p28 = scmp.eq.s32.totalorder %s12, 1
      %p29 = por %p27, %p28
      %p30 = scmp.ne.s32.totalorder %s22, %s25
      %p31 = scmp.eq.s32.totalorder %s12, 0
      %p32 = por %p30, %p31
      %p33 = scmp.ne.s32.totalorder %s22, %s25
      %p34 = scmp.eq.s32.totalorder %s17, 1
      %p35 = por %p33, %p34
      %p36 = scmp.ne.s32.totalorder %s25, %s26
      %p37 = scmp.eq.s32.totalorder %s17, 0
      %p38 = por %p36, %p37
      %p39 = scmp.ne.s32.totalorder %s25, %s26
      %p40 = scmp.eq.s32.totalorder %s18, 1
      %p41 = por %p39, %p40
      %p43 = scmp.ne.s32.totalorder %s26, %s42
      %p44 = scmp.eq.s32.totalorder %s18, 0
      %p45 = por %p43, %p44
      %s47 = sadd.s32 %s46, 1
      %p50 = scmp.eq.s32.totalorder %s12, 1
      %p51 = scmp.ne.s32.totalorder %s46, %s48
      %p52 = scmp.eq.s32.totalorder %s12, 0
      %p53 = por %p51, %p52
      %p54 = scmp.ne.s32.totalorder %s46, %s48
      %p55 = scmp.eq.s32.totalorder %s17, 1
      %p56 = por %p54, %p55
      %p57 = scmp.ne.s32.totalorder %s48, %s49
      %p58 = scmp.eq.s32.totalorder %s17, 0
      %p59 = por %p57, %p58
      %p60 = scmp.ne.s32.totalorder %s48, %s49
      %p61 = scmp.eq.s32.totalorder %s18, 1
      %p62 = por %p60, %p61
      %p64 = scmp.ne.s32.totalorder %s49, %s63
      %p65 = scmp.eq.s32.totalorder %s18, 0
      %p66 = por %p64, %p65
      %s68 = sadd.s32 %s67, 1
      %p71 = scmp.eq.s32.totalorder %s12, 1
      %p72 = scmp.ne.s32.totalorder %s67, %s69
      %p73 = scmp.eq.s32.totalorder %s12, 0
      %p74 = por %p72, %p73
      %p75 = scmp.ne.s32.totalorder %s67, %s69
      %p76 = scmp.eq.s32.totalorder %s17, 1
      %p77 = por %p75, %p76
      %p78 = scmp.ne.s32.totalorder %s69, %s70
      %p79 = scmp.eq.s32.totalorder %s17, 0
      %p80 = por %p78, %p79
      %p81 = scmp.ne.s32.totalorder %s69, %s70
      %p82 = scmp.eq.s32.totalorder %s18, 1
      %p83 = por %p81, %p82
      %p85 = scmp.ne.s32.totalorder %s70, %s84
      %p86 = scmp.eq.s32.totalorder %s18, 0
      %p87 = por %p85, %p86
      %s88 = ssub.s32 %s12, %s19
      %p89 = scmp.eq.s32.totalorder %s88, 0
      %s91 = sadd.s32 %s90, 1
      %s92 = scalar_select %p89, %s90, %s91
      %p95 = pneg %p89
      %p96 = scmp.eq.s32.totalorder %s12, 1
      %p97 = por %p95, %p96
      %p98 = scmp.ne.s32.totalorder %s90, %s93
      %p99 = scmp.eq.s32.totalorder %s12, 0
      %p100 = por %p98, %p99
      %p101 = scmp.ne.s32.totalorder %s90, %s93
      %p102 = scmp.eq.s32.totalorder %s17, 1
      %p103 = por %p101, %p102
      %p104 = scmp.ne.s32.totalorder %s93, %s94
      %p105 = scmp.eq.s32.totalorder %s17, 0
      %p106 = por %p104, %p105
      %p107 = scmp.ne.s32.totalorder %s93, %s94
      %p108 = scmp.eq.s32.totalorder %s18, 1
      %p109 = por %p107, %p108
      %p111 = scmp.ne.s32.totalorder %s94, %s110
      %p112 = scmp.eq.s32.totalorder %s18, 0
      %p113 = por %p111, %p112
      %p114 = scmp.le.s32.totalorder 1, %s12
      %p115 = scmp.lt.s32.totalorder %s12, 3
      %p116 = pnand %p114, %p115
      %p117 = pneg %p116
      // Predicated region
      $region9: #{crestereo_forward.62} parent=5 // pred_check
        _
      $region10: #{crestereo_forward.62} parent=5 // pred_check_branch
        %119 = sbr.rel (%p116) target = $region12
      $region11: #{crestereo_forward.62} parent=5 // pred_region
        %s120 = ssub.s32 %s12, 1
        // Predicated region
        $region13: #{crestereo_forward.62} parent=11 // pred_check
          %p121 = pneg %p59
        $region14: #{crestereo_forward.62} parent=11 // pred_check_branch
          %123 = sbr.rel (%p121) target = $region16
        $region15: #{crestereo_forward.62} parent=11 // pred_region
          _
        $region16: #{crestereo_forward.62} parent=11 // pred_fallthru
          _
        // Predicated region
        $region17: #{crestereo_forward.62} parent=11 // pred_check
          %p124 = pneg %p80
        $region18: #{crestereo_forward.62} parent=11 // pred_check_branch
          %126 = sbr.rel (%p124) target = $region20
        $region19: #{crestereo_forward.62} parent=11 // pred_region
          _
        $region20: #{crestereo_forward.62} parent=11 // pred_fallthru
          _
      $region12: #{crestereo_forward.62} parent=5 // pred_fallthru
        _
      %p127 = scmp.lt.s32.totalorder %s12, 2
      // Predicated region
      $region21: #{crestereo_forward.62} parent=5 // pred_check
        %p128 = pneg %p127
      $region22: #{crestereo_forward.62} parent=5 // pred_check_branch
        %130 = sbr.rel (%p128) target = $region24
      $region23: #{crestereo_forward.62} parent=5 // pred_region
        // Predicated region
        $region25: #{crestereo_forward.62} parent=23 // pred_check
          %p131 = pneg %p32
        $region26: #{crestereo_forward.62} parent=23 // pred_check_branch
          %133 = sbr.rel (%p131) target = $region28
        $region27: #{crestereo_forward.62} parent=23 // pred_region
          %s134 = smul.u32 32, %s12
          %p135 = scmp.lt.s32.totalorder %s134, 63
          %s136 = scalar_select %p135, %s134, 63
          %s137 = smul.addr %s136, 4
          %s138 = scalar_lea.vmem %s0, %s137
          %s139 = smul.u32 32, %s12
        $region28: #{crestereo_forward.62} parent=23 // pred_fallthru
          _
      $region24: #{crestereo_forward.62} parent=5 // pred_fallthru
        _
      %p140 = scmp.le.s32.totalorder 1, %s12
      %p141 = scmp.lt.s32.totalorder %s12, 3
      %p142 = pnand %p140, %p141
      %p143 = pneg %p142
      // Predicated region
      $region29: #{crestereo_forward.62} parent=5 // pred_check
        _
      $region30: #{crestereo_forward.62} parent=5 // pred_check_branch
        %145 = sbr.rel (%p142) target = $region32
      $region31: #{crestereo_forward.62} parent=5 // pred_region
        %s146 = ssub.s32 %s12, 1
        %s147 = smul.u32 32, %s17
        %p148 = scmp.lt.s32.totalorder %s147, 63
        %s149 = scalar_select %p148, %s147, 63
        %s150 = smul.addr %s149, 4
        %s151 = scalar_lea.vmem %s0, %s150
        %p152 = pneg %p38
        %p153 = pneg %p35
        %p154 = pneg %p59
        %p155 = pneg %p56
        %p156 = pneg %p80
        %p157 = pneg %p77
        %p158 = pneg %p106
        %p159 = pneg %p103
        %s160 = sand.u32 %s93, 1
        %s161 = scalar_lea.sflag [#allocation3], %s160
        %s162 = sand.u32 %s93, 1
        %s163 = smul.addr %s162, 512
        %s164 = scalar_lea.vmem [#allocation2], %s163
        %s165 = smul.u32 32, %s17
        %p166 = scmp.lt.s32.totalorder %s165, 63
        %s167 = scalar_select %p166, %s165, 63
        %s168 = smul.addr %s167, 4
        %s169 = scalar_lea.vmem %s0, %s168
        %s170 = smul.u32 32, %s17
        %s171 = smul.u32 32, %s17
        %v173 = vld [vmem:[%s169] sm:$0xf]
        %v174 = vld [vmem:[%s169 + $0x4] sm:$0xf]
        %v175 = vld [vmem:[%s169 + $0x8] sm:$0xf]
        %v176 = vld [vmem:[%s169 + $0xc] sm:$0xf]
        %v177 = vld [vmem:[%s169 + $0x10] sm:$0xf]
        %v178 = vld [vmem:[%s169 + $0x14] sm:$0xf]
        %v179 = vld [vmem:[%s169 + $0x18] sm:$0xf]
        %v180 = vld [vmem:[%s169 + $0x1c] sm:$0xf]
        %v181 = vld [vmem:[%s169 + $0x20] sm:$0xf]
        %v182 = vld [vmem:[%s169 + $0x24] sm:$0xf]
        %v183 = vld [vmem:[%s169 + $0x28] sm:$0xf]
        %v184 = vld [vmem:[%s169 + $0x2c] sm:$0xf]
        %v185 = vld [vmem:[%s169 + $0x30] sm:$0xf]
        %v186 = vld [vmem:[%s169 + $0x34] sm:$0xf]
        %v187 = vld [vmem:[%s169 + $0x38] sm:$0xf]
        %v188 = vld [vmem:[%s169 + $0x3c] sm:$0xf]
        %v189 = vld [vmem:[%s169 + $0x40] sm:$0xf]
        %v190 = vld [vmem:[%s169 + $0x44] sm:$0xf]
        %v191 = vld [vmem:[%s169 + $0x48] sm:$0xf]
        %v192 = vld [vmem:[%s169 + $0x4c] sm:$0xf]
        %v193 = vld [vmem:[%s169 + $0x50] sm:$0xf]
        %v194 = vld [vmem:[%s169 + $0x54] sm:$0xf]
        %v195 = vld [vmem:[%s169 + $0x58] sm:$0xf]
        %v196 = vld [vmem:[%s169 + $0x5c] sm:$0xf]
        %v197 = vld [vmem:[%s169 + $0x60] sm:$0xf]
        %v198 = vld [vmem:[%s169 + $0x64] sm:$0xf]
        %v199 = vld [vmem:[%s169 + $0x68] sm:$0xf]
        %v200 = vld [vmem:[%s169 + $0x6c] sm:$0xf]
        %v201 = vld [vmem:[%s169 + $0x70] sm:$0xf]
        %v202 = vld [vmem:[%s169 + $0x74] sm:$0xf]
        %v203 = vld [vmem:[%s169 + $0x78] sm:$0xf]
        %v204 = vld [vmem:[%s169 + $0x7c] sm:$0xf]
        %v205 = vld [vmem:[%s1] sm:$0xff]
        %v206 = vld [vmem:[%s1 + $0x8] sm:$0xff]
        %v207 = vld [vmem:[%s1 + $0x10] sm:$0xff]
        %v208 = vld [vmem:[%s1 + $0x18] sm:$0xff]
        %v209 = vld [vmem:[%s1 + $0x20] sm:$0xff]
        %v210 = vld [vmem:[%s1 + $0x28] sm:$0xff]
        %v211 = vld [vmem:[%s1 + $0x30] sm:$0xff]
        %v212 = vld [vmem:[%s1 + $0x38] sm:$0xff]
        %v213 = vld [vmem:[%s1 + $0x40] sm:$0xff]
        %v214 = vld [vmem:[%s1 + $0x48] sm:$0xff]
        %v215 = vld [vmem:[%s1 + $0x50] sm:$0xff]
        %v216 = vld [vmem:[%s1 + $0x58] sm:$0xff]
        %v217 = vld [vmem:[%s1 + $0x60] sm:$0xff]
        %v218 = vld [vmem:[%s1 + $0x68] sm:$0xff]
        %v219 = vld [vmem:[%s1 + $0x70] sm:$0xff]
        %v220 = vld [vmem:[%s1 + $0x78] sm:$0xff]
        %v221 = vld [vmem:[%s2] sm:$0x3]
        %v223 = vlaneseq
        %v224 = vshrl.u32 %v223, 7
        %v225 = vsub.s32 0, %v224
        %v226 = vrot.slane %v221, %v225
        %v227 = vlaneseq
        %v228 = vshrl.u32 %v227, 7
        %v229 = vsub.s32 1, %v228
        %v230 = vrot.slane %v221, %v229
        %v265 = vunpack.c.l.b16 %v173
        %v266 = vunpack.c.l.b16 %v174
        %v267 = vunpack.c.l.b16 %v175
        %v268 = vunpack.c.l.b16 %v176
        %v269 = vunpack.c.l.b16 %v177
        %v270 = vunpack.c.l.b16 %v178
        %v271 = vunpack.c.l.b16 %v179
        %v272 = vunpack.c.l.b16 %v180
        %v273 = vunpack.c.l.b16 %v181
        %v274 = vunpack.c.l.b16 %v182
        %v275 = vunpack.c.l.b16 %v183
        %v276 = vunpack.c.l.b16 %v184
        %v277 = vunpack.c.l.b16 %v185
        %v278 = vunpack.c.l.b16 %v186
        %v279 = vunpack.c.l.b16 %v187
        %v280 = vunpack.c.l.b16 %v188
        %v281 = vunpack.c.l.b16 %v189
        %v282 = vunpack.c.l.b16 %v190
        %v283 = vunpack.c.l.b16 %v191
        %v284 = vunpack.c.l.b16 %v192
        %v285 = vunpack.c.l.b16 %v193
        %v286 = vunpack.c.l.b16 %v194
        %v287 = vunpack.c.l.b16 %v195
        %v288 = vunpack.c.l.b16 %v196
        %v289 = vunpack.c.l.b16 %v197
        %v290 = vunpack.c.l.b16 %v198
        %v291 = vunpack.c.l.b16 %v199
        %v292 = vunpack.c.l.b16 %v200
        %v293 = vunpack.c.l.b16 %v201
        %v294 = vunpack.c.l.b16 %v202
        %v295 = vunpack.c.l.b16 %v203
        %v296 = vunpack.c.l.b16 %v204
        %v297 = vpack.c.b16 %v266, %v265
        %v298 = vpack.c.b16 %v268, %v267
        %v299 = vpack.c.b16 %v270, %v269
        %v300 = vpack.c.b16 %v272, %v271
        %v301 = vpack.c.b16 %v274, %v273
        %v302 = vpack.c.b16 %v276, %v275
        %v303 = vpack.c.b16 %v278, %v277
        %v304 = vpack.c.b16 %v280, %v279
        %v305 = vpack.c.b16 %v282, %v281
        %v306 = vpack.c.b16 %v284, %v283
        %v307 = vpack.c.b16 %v286, %v285
        %v308 = vpack.c.b16 %v288, %v287
        %v309 = vpack.c.b16 %v290, %v289
        %v310 = vpack.c.b16 %v292, %v291
        %v311 = vpack.c.b16 %v294, %v293
        %v312 = vpack.c.b16 %v296, %v295
        %v345 = vunpack.c.l.b16 %v205
        %v346 = vunpack.c.h.b16 %v205
        %v347 = vunpack.c.l.b16 %v206
        %v348 = vunpack.c.h.b16 %v206
        %v349 = vunpack.c.l.b16 %v207
        %v350 = vunpack.c.h.b16 %v207
        %v351 = vunpack.c.l.b16 %v208
        %v352 = vunpack.c.h.b16 %v208
        %v353 = vunpack.c.l.b16 %v209
        %v354 = vunpack.c.h.b16 %v209
        %v355 = vunpack.c.l.b16 %v210
        %v356 = vunpack.c.h.b16 %v210
        %v357 = vunpack.c.l.b16 %v211
        %v358 = vunpack.c.h.b16 %v211
        %v359 = vunpack.c.l.b16 %v212
        %v360 = vunpack.c.h.b16 %v212
        %v361 = vunpack.c.l.b16 %v213
        %v362 = vunpack.c.h.b16 %v213
        %v363 = vunpack.c.l.b16 %v214
        %v364 = vunpack.c.h.b16 %v214
        %v365 = vunpack.c.l.b16 %v215
        %v366 = vunpack.c.h.b16 %v215
        %v367 = vunpack.c.l.b16 %v216
        %v368 = vunpack.c.h.b16 %v216
        %v369 = vunpack.c.l.b16 %v217
        %v370 = vunpack.c.h.b16 %v217
        %v371 = vunpack.c.l.b16 %v218
        %v372 = vunpack.c.h.b16 %v218
        %v373 = vunpack.c.l.b16 %v219
        %v374 = vunpack.c.h.b16 %v219
        %v375 = vunpack.c.l.b16 %v220
        %v376 = vunpack.c.h.b16 %v220
        %v377 = vpack.c.b16 %v347, %v345
        %v378 = vpack.c.b16 %v348, %v346
        %v379 = vpack.c.b16 %v351, %v349
        %v380 = vpack.c.b16 %v352, %v350
        %v381 = vpack.c.b16 %v355, %v353
        %v382 = vpack.c.b16 %v356, %v354
        %v383 = vpack.c.b16 %v359, %v357
        %v384 = vpack.c.b16 %v360, %v358
        %v385 = vpack.c.b16 %v363, %v361
        %v386 = vpack.c.b16 %v364, %v362
        %v387 = vpack.c.b16 %v367, %v365
        %v388 = vpack.c.b16 %v368, %v366
        %v389 = vpack.c.b16 %v371, %v369
        %v390 = vpack.c.b16 %v372, %v370
        %v391 = vpack.c.b16 %v375, %v373
        %v392 = vpack.c.b16 %v376, %v374
        %409 = vmatprep.subr.bf16.mxu0 %v392
        %410 = vmatpush1.bf16.msra.mxu0 %v391
        %411 = vmatprep.subr.bf16.mxu0 %v390
        %412 = vmatpush1.bf16.msra.mxu0 %v389
        %413 = vmatprep.subr.bf16.mxu0 %v388
        %414 = vmatpush1.bf16.msra.mxu0 %v387
        %415 = vmatprep.subr.bf16.mxu0 %v386
        %416 = vmatpush1.bf16.msra.mxu0 %v385
        %417 = vmatprep.subr.bf16.mxu0 %v384
        %418 = vmatpush1.bf16.msra.mxu0 %v383
        %419 = vmatprep.subr.bf16.mxu0 %v382
        %420 = vmatpush1.bf16.msra.mxu0 %v381
        %421 = vmatprep.subr.bf16.mxu0 %v380
        %422 = vmatpush1.bf16.msra.mxu0 %v379
        %423 = vmatprep.subr.bf16.mxu0 %v378
        %424 = vmatpush1.bf16.msra.mxu0 %v377
        %425 = vmatprep.subr.bf16.mxu0 0
        %426 = vmatpush2.bf16.msra.mxu0 0
        %427 = vmatprep.subr.bf16.mxu0 0
        %428 = vmatpush2.bf16.msra.mxu0 0
        %429 = vmatprep.subr.bf16.mxu0 0
        %430 = vmatpush2.bf16.msra.mxu0 0
        %431 = vmatprep.subr.bf16.mxu0 0
        %432 = vmatpush2.bf16.msra.mxu0 0
        %433 = vmatprep.subr.bf16.mxu0 0
        %434 = vmatpush2.bf16.msra.mxu0 0
        %435 = vmatprep.subr.bf16.mxu0 0
        %436 = vmatpush2.bf16.msra.mxu0 0
        %437 = vmatprep.subr.bf16.mxu0 0
        %438 = vmatpush2.bf16.msra.mxu0 0
        %439 = vmatprep.subr.bf16.mxu0 0
        %440 = vmatpush2.bf16.msra.mxu0 0
        %441 = vmatprep.mubr.bf16.mxu0 0
        %442 = vmatmul.mubr.bf16.gmra.mxu0 %v297
        %v443 = vpop.f32.mrf.mxu0
        %v444 = vadd.f32 %v226, %v443
        %v445 = vpop.f32.mrf.mxu0
        %v446 = vadd.f32 %v230, %v445
        %v447 = vpop.f32.mrf.mxu0
        %v448 = vadd.f32 %v226, %v447
        %v449 = vpop.f32.mrf.mxu0
        %v450 = vadd.f32 %v230, %v449
        %451 = vmatprep.mubr.bf16.mxu0 0
        %452 = vmatmul.mubr.bf16.gmra.mxu0 %v298
        %v453 = vpop.f32.mrf.mxu0
        %v454 = vadd.f32 %v226, %v453
        %v455 = vpop.f32.mrf.mxu0
        %v456 = vadd.f32 %v230, %v455
        %v457 = vpop.f32.mrf.mxu0
        %v458 = vadd.f32 %v226, %v457
        %v459 = vpop.f32.mrf.mxu0
        %v460 = vadd.f32 %v230, %v459
        %461 = vmatprep.mubr.bf16.mxu0 0
        %462 = vmatmul.mubr.bf16.gmra.mxu0 %v299
        %v463 = vpop.f32.mrf.mxu0
        %v464 = vadd.f32 %v226, %v463
        %v465 = vpop.f32.mrf.mxu0
        %v466 = vadd.f32 %v230, %v465
        %v467 = vpop.f32.mrf.mxu0
        %v468 = vadd.f32 %v226, %v467
        %v469 = vpop.f32.mrf.mxu0
        %v470 = vadd.f32 %v230, %v469
        %471 = vmatprep.mubr.bf16.mxu0 0
        %472 = vmatmul.mubr.bf16.gmra.mxu0 %v300
        %v473 = vpop.f32.mrf.mxu0
        %v474 = vadd.f32 %v226, %v473
        %v475 = vpop.f32.mrf.mxu0
        %v476 = vadd.f32 %v230, %v475
        %v477 = vpop.f32.mrf.mxu0
        %v478 = vadd.f32 %v226, %v477
        %v479 = vpop.f32.mrf.mxu0
        %v480 = vadd.f32 %v230, %v479
        %481 = vmatprep.mubr.bf16.mxu0 0
        %482 = vmatmul.mubr.bf16.gmra.mxu0 %v301
        %v483 = vpop.f32.mrf.mxu0
        %v484 = vadd.f32 %v226, %v483
        %v485 = vpop.f32.mrf.mxu0
        %v486 = vadd.f32 %v230, %v485
        %v487 = vpop.f32.mrf.mxu0
        %v488 = vadd.f32 %v226, %v487
        %v489 = vpop.f32.mrf.mxu0
        %v490 = vadd.f32 %v230, %v489
        %491 = vmatprep.mubr.bf16.mxu0 0
        %492 = vmatmul.mubr.bf16.gmra.mxu0 %v302
        %v493 = vpop.f32.mrf.mxu0
        %v494 = vadd.f32 %v226, %v493
        %v495 = vpop.f32.mrf.mxu0
        %v496 = vadd.f32 %v230, %v495
        %v497 = vpop.f32.mrf.mxu0
        %v498 = vadd.f32 %v226, %v497
        %v499 = vpop.f32.mrf.mxu0
        %v500 = vadd.f32 %v230, %v499
        %501 = vmatprep.mubr.bf16.mxu0 0
        %502 = vmatmul.mubr.bf16.gmra.mxu0 %v303
        %v503 = vpop.f32.mrf.mxu0
        %v504 = vadd.f32 %v226, %v503
        %v505 = vpop.f32.mrf.mxu0
        %v506 = vadd.f32 %v230, %v505
        %v507 = vpop.f32.mrf.mxu0
        %v508 = vadd.f32 %v226, %v507
        %v509 = vpop.f32.mrf.mxu0
        %v510 = vadd.f32 %v230, %v509
        %511 = vmatprep.mubr.bf16.mxu0 0
        %512 = vmatmul.mubr.bf16.gmra.mxu0 %v304
        %v513 = vpop.f32.mrf.mxu0
        %v514 = vadd.f32 %v226, %v513
        %v515 = vpop.f32.mrf.mxu0
        %v516 = vadd.f32 %v230, %v515
        %v517 = vpop.f32.mrf.mxu0
        %v518 = vadd.f32 %v226, %v517
        %v519 = vpop.f32.mrf.mxu0
        %v520 = vadd.f32 %v230, %v519
        %521 = vmatprep.mubr.bf16.mxu0 0
        %522 = vmatmul.mubr.bf16.gmra.mxu0 %v305
        %v523 = vpop.f32.mrf.mxu0
        %v524 = vadd.f32 %v226, %v523
        %v525 = vpop.f32.mrf.mxu0
        %v526 = vadd.f32 %v230, %v525
        %v527 = vpop.f32.mrf.mxu0
        %v528 = vadd.f32 %v226, %v527
        %v529 = vpop.f32.mrf.mxu0
        %v530 = vadd.f32 %v230, %v529
        %531 = vmatprep.mubr.bf16.mxu0 0
        %532 = vmatmul.mubr.bf16.gmra.mxu0 %v306
        %v533 = vpop.f32.mrf.mxu0
        %v534 = vadd.f32 %v226, %v533
        %v535 = vpop.f32.mrf.mxu0
        %v536 = vadd.f32 %v230, %v535
        %v537 = vpop.f32.mrf.mxu0
        %v538 = vadd.f32 %v226, %v537
        %v539 = vpop.f32.mrf.mxu0
        %v540 = vadd.f32 %v230, %v539
        %541 = vmatprep.mubr.bf16.mxu0 0
        %542 = vmatmul.mubr.bf16.gmra.mxu0 %v307
        %v543 = vpop.f32.mrf.mxu0
        %v544 = vadd.f32 %v226, %v543
        %v545 = vpop.f32.mrf.mxu0
        %v546 = vadd.f32 %v230, %v545
        %v547 = vpop.f32.mrf.mxu0
        %v548 = vadd.f32 %v226, %v547
        %v549 = vpop.f32.mrf.mxu0
        %v550 = vadd.f32 %v230, %v549
        %551 = vmatprep.mubr.bf16.mxu0 0
        %552 = vmatmul.mubr.bf16.gmra.mxu0 %v308
        %v553 = vpop.f32.mrf.mxu0
        %v554 = vadd.f32 %v226, %v553
        %v555 = vpop.f32.mrf.mxu0
        %v556 = vadd.f32 %v230, %v555
        %v557 = vpop.f32.mrf.mxu0
        %v558 = vadd.f32 %v226, %v557
        %v559 = vpop.f32.mrf.mxu0
        %v560 = vadd.f32 %v230, %v559
        %561 = vmatprep.mubr.bf16.mxu0 0
        %562 = vmatmul.mubr.bf16.gmra.mxu0 %v309
        %v563 = vpop.f32.mrf.mxu0
        %v564 = vadd.f32 %v226, %v563
        %v565 = vpop.f32.mrf.mxu0
        %v566 = vadd.f32 %v230, %v565
        %v567 = vpop.f32.mrf.mxu0
        %v568 = vadd.f32 %v226, %v567
        %v569 = vpop.f32.mrf.mxu0
        %v570 = vadd.f32 %v230, %v569
        %571 = vmatprep.mubr.bf16.mxu0 0
        %572 = vmatmul.mubr.bf16.gmra.mxu0 %v310
        %v573 = vpop.f32.mrf.mxu0
        %v574 = vadd.f32 %v226, %v573
        %v575 = vpop.f32.mrf.mxu0
        %v576 = vadd.f32 %v230, %v575
        %v577 = vpop.f32.mrf.mxu0
        %v578 = vadd.f32 %v226, %v577
        %v579 = vpop.f32.mrf.mxu0
        %v580 = vadd.f32 %v230, %v579
        %581 = vmatprep.mubr.bf16.mxu0 0
        %582 = vmatmul.mubr.bf16.gmra.mxu0 %v311
        %v583 = vpop.f32.mrf.mxu0
        %v584 = vadd.f32 %v226, %v583
        %v585 = vpop.f32.mrf.mxu0
        %v586 = vadd.f32 %v230, %v585
        %v587 = vpop.f32.mrf.mxu0
        %v588 = vadd.f32 %v226, %v587
        %v589 = vpop.f32.mrf.mxu0
        %v590 = vadd.f32 %v230, %v589
        %591 = vmatprep.mubr.bf16.mxu0 0
        %592 = vmatmul.mubr.bf16.gmra.mxu0 %v312
        %v593 = vpop.f32.mrf.mxu0
        %v594 = vadd.f32 %v226, %v593
        %v595 = vpop.f32.mrf.mxu0
        %v596 = vadd.f32 %v230, %v595
        %v597 = vpop.f32.mrf.mxu0
        %v598 = vadd.f32 %v226, %v597
        %v599 = vpop.f32.mrf.mxu0
        %v600 = vadd.f32 %v230, %v599
        %601 = vdwg.mxu0
        %602 = vst [vmem:[%s164] sm:$0xff] %v444
        %603 = vst [vmem:[%s164 + $0x8] sm:$0xff] %v446
        %604 = vst [vmem:[%s164 + $0x10] sm:$0xff] %v448
        %605 = vst [vmem:[%s164 + $0x18] sm:$0xff] %v450
        %606 = vst [vmem:[%s164 + $0x20] sm:$0xff] %v454
        %607 = vst [vmem:[%s164 + $0x28] sm:$0xff] %v456
        %608 = vst [vmem:[%s164 + $0x30] sm:$0xff] %v458
        %609 = vst [vmem:[%s164 + $0x38] sm:$0xff] %v460
        %610 = vst [vmem:[%s164 + $0x40] sm:$0xff] %v464
        %611 = vst [vmem:[%s164 + $0x48] sm:$0xff] %v466
        %612 = vst [vmem:[%s164 + $0x50] sm:$0xff] %v468
        %613 = vst [vmem:[%s164 + $0x58] sm:$0xff] %v470
        %614 = vst [vmem:[%s164 + $0x60] sm:$0xff] %v474
        %615 = vst [vmem:[%s164 + $0x68] sm:$0xff] %v476
        %616 = vst [vmem:[%s164 + $0x70] sm:$0xff] %v478
        %617 = vst [vmem:[%s164 + $0x78] sm:$0xff] %v480
        %618 = vst [vmem:[%s164 + $0x80] sm:$0xff] %v484
        %619 = vst [vmem:[%s164 + $0x88] sm:$0xff] %v486
        %620 = vst [vmem:[%s164 + $0x90] sm:$0xff] %v488
        %621 = vst [vmem:[%s164 + $0x98] sm:$0xff] %v490
        %622 = vst [vmem:[%s164 + $0xa0] sm:$0xff] %v494
        %623 = vst [vmem:[%s164 + $0xa8] sm:$0xff] %v496
        %624 = vst [vmem:[%s164 + $0xb0] sm:$0xff] %v498
        %625 = vst [vmem:[%s164 + $0xb8] sm:$0xff] %v500
        %626 = vst [vmem:[%s164 + $0xc0] sm:$0xff] %v504
        %627 = vst [vmem:[%s164 + $0xc8] sm:$0xff] %v506
        %628 = vst [vmem:[%s164 + $0xd0] sm:$0xff] %v508
        %629 = vst [vmem:[%s164 + $0xd8] sm:$0xff] %v510
        %630 = vst [vmem:[%s164 + $0xe0] sm:$0xff] %v514
        %631 = vst [vmem:[%s164 + $0xe8] sm:$0xff] %v516
        %632 = vst [vmem:[%s164 + $0xf0] sm:$0xff] %v518
        %633 = vst [vmem:[%s164 + $0xf8] sm:$0xff] %v520
        %634 = vst [vmem:[%s164 + $0x100] sm:$0xff] %v524
        %635 = vst [vmem:[%s164 + $0x108] sm:$0xff] %v526
        %636 = vst [vmem:[%s164 + $0x110] sm:$0xff] %v528
        %637 = vst [vmem:[%s164 + $0x118] sm:$0xff] %v530
        %638 = vst [vmem:[%s164 + $0x120] sm:$0xff] %v534
        %639 = vst [vmem:[%s164 + $0x128] sm:$0xff] %v536
        %640 = vst [vmem:[%s164 + $0x130] sm:$0xff] %v538
        %641 = vst [vmem:[%s164 + $0x138] sm:$0xff] %v540
        %642 = vst [vmem:[%s164 + $0x140] sm:$0xff] %v544
        %643 = vst [vmem:[%s164 + $0x148] sm:$0xff] %v546
        %644 = vst [vmem:[%s164 + $0x150] sm:$0xff] %v548
        %645 = vst [vmem:[%s164 + $0x158] sm:$0xff] %v550
        %646 = vst [vmem:[%s164 + $0x160] sm:$0xff] %v554
        %647 = vst [vmem:[%s164 + $0x168] sm:$0xff] %v556
        %648 = vst [vmem:[%s164 + $0x170] sm:$0xff] %v558
        %649 = vst [vmem:[%s164 + $0x178] sm:$0xff] %v560
        %650 = vst [vmem:[%s164 + $0x180] sm:$0xff] %v564
        %651 = vst [vmem:[%s164 + $0x188] sm:$0xff] %v566
        %652 = vst [vmem:[%s164 + $0x190] sm:$0xff] %v568
        %653 = vst [vmem:[%s164 + $0x198] sm:$0xff] %v570
        %654 = vst [vmem:[%s164 + $0x1a0] sm:$0xff] %v574
        %655 = vst [vmem:[%s164 + $0x1a8] sm:$0xff] %v576
        %656 = vst [vmem:[%s164 + $0x1b0] sm:$0xff] %v578
        %657 = vst [vmem:[%s164 + $0x1b8] sm:$0xff] %v580
        %658 = vst [vmem:[%s164 + $0x1c0] sm:$0xff] %v584
        %659 = vst [vmem:[%s164 + $0x1c8] sm:$0xff] %v586
        %660 = vst [vmem:[%s164 + $0x1d0] sm:$0xff] %v588
        %661 = vst [vmem:[%s164 + $0x1d8] sm:$0xff] %v590
        %662 = vst [vmem:[%s164 + $0x1e0] sm:$0xff] %v594
        %663 = vst [vmem:[%s164 + $0x1e8] sm:$0xff] %v596
        %664 = vst [vmem:[%s164 + $0x1f0] sm:$0xff] %v598
        %665 = vst [vmem:[%s164 + $0x1f8] sm:$0xff] %v600
        %s666 = sand.u32 %s93, 1
        %s667 = scalar_lea.sflag [#allocation3], %s666
        %s668 = sand.u32 %s93, 1
        %s669 = smul.addr %s668, 512
        %s670 = scalar_lea.vmem [#allocation2], %s669
        // Predicated region
        $region33: #{crestereo_forward.62} parent=31 // pred_check
          %p671 = pneg %p103
        $region34: #{crestereo_forward.62} parent=31 // pred_check_branch
          %673 = sbr.rel (%p671) target = $region36
        $region35: #{crestereo_forward.62} parent=31 // pred_region
          %s674 = smul.u32 32, %s17
          %s676 = ssub.s32 8192, 8192
          %677 = vsyncadd %s667, %s676
          %s678 = smul.addr %s674, 2
          %s679 = smul.addr %s678, 128
          %s680 = scalar_lea.hbm %s3, %s679
          %s681 = sshll.u32 %s670, 4
          %s682 = int_to_ptr.vmem [resolvable:$true] %s681
          %687 = dma.vmem_to_hbm [thread:$0]  %s682, 8192, %s680, %s667, 256, 256, 16
        $region36: #{crestereo_forward.62} parent=31 // pred_fallthru
          _
      $region32: #{crestereo_forward.62} parent=5 // pred_fallthru
        _
      %p688 = scmp.le.s32.totalorder 2, %s12
      // Predicated region
      $region37: #{crestereo_forward.62} parent=5 // pred_check
        %p689 = pneg %p688
      $region38: #{crestereo_forward.62} parent=5 // pred_check_branch
        %691 = sbr.rel (%p689) target = $region40
      $region39: #{crestereo_forward.62} parent=5 // pred_region
        %s692 = ssub.s32 %s12, 2
        // Predicated region
        $region41: #{crestereo_forward.62} parent=39 // pred_check
          %p693 = pneg %p109
        $region42: #{crestereo_forward.62} parent=39 // pred_check_branch
          %695 = sbr.rel (%p693) target = $region44
        $region43: #{crestereo_forward.62} parent=39 // pred_region
          %s696 = sand.u32 %s94, 1
          %s697 = scalar_lea.sflag [#allocation3], %s696
          %s698 = sand.u32 %s94, 1
          %s699 = smul.addr %s698, 512
          %s700 = scalar_lea.vmem [#allocation2], %s699
          %701 = dma.done %s697, 8192
        $region44: #{crestereo_forward.62} parent=39 // pred_fallthru
          _
      $region40: #{crestereo_forward.62} parent=5 // pred_fallthru
        _
    $region6: #{crestereo_forward.62} parent=1 // loop_footer
      %s16 = sadd.s32 1, %s12
    $region7: #{crestereo_forward.62} parent=1 // loop_footer_branch
      %11 = sbr.rel target = $region3
    $region8: #{crestereo_forward.62} parent=1 // loop_exit
      _
    %702 = vsyncpa [#allocation3], 1
    %s703 = scalar_lea.sflag [#allocation3], 1
    %704 = vsyncpa %s703, 1

</llo_original>
